<compile_context>
chip_gen: v7x
topology: tpu7x:2x2x1
jax: 0.10.0
libtpu: 0.0.40
codegen_flags: <defaults>
</compile_context>

<pallas_src>
import functools

import jax
import jax.numpy as jnp
import numpy as np
from jax import lax
from jax.experimental import pallas as pl
from jax.experimental.pallas import tpu as pltpu


# ---------------------------------------------------------------------------
# Host-side 0/1 selection matrices (pool decimation / nearest upsample).
# ---------------------------------------------------------------------------
def _pool_selection_matrices(H, W):
    """(4, (H//2)*(W//2), H*W): picks the 4 corners of each 2x2 window."""
    Ho, Wo = H // 2, W // 2
    P = np.zeros((4, Ho * Wo, H * W), np.float32)
    for a in range(2):
        for b in range(2):
            k = a * 2 + b
            for ho in range(Ho):
                for wo in range(Wo):
                    P[k, ho * Wo + wo, (2 * ho + a) * W + (2 * wo + b)] = 1.0
    return P


def _upsample_selection_matrix(h, w):
    """(2h*2w, h*w): nearest-neighbor x2 upsample as a gather-by-matmul."""
    S = np.zeros((2 * h * 2 * w, h * w), np.float32)
    for i in range(h):
        for j in range(w):
            src = i * w + j
            for a in range(2):
                for b in range(2):
                    S[(2 * i + a) * (2 * w) + (2 * j + b), src] = 1.0
    return S


# ---------------------------------------------------------------------------
# Fused forward kernel: whole autoencoder for one batch element, VMEM resident.
# refs = [x] + [w, b, sel]*L + [out] + [fmap_scratch]*L
# ---------------------------------------------------------------------------
def _fused_forward_kernel(*refs, layer_cfgs):
    L = len(layer_cfgs)
    x_ref = refs[0]
    layer_refs = [refs[1 + 3 * i: 4 + 3 * i] for i in range(L)]
    o_ref = refs[1 + 3 * L]
    fmap_refs = refs[2 + 3 * L:]

    cur = x_ref[0].astype(jnp.float32)                 # (H0*W0, C0), flat NHWC

    for li, cfg in enumerate(layer_cfgs):
        w_ref, b_ref, sel_ref = layer_refs[li]
        fmap = fmap_refs[li]
        Hin, Win = cfg["Hin"], cfg["Win"]
        Cin, Cout = cfg["Cin"], cfg["Cout"]
        base, rows = cfg["base"], cfg["rows"]
        M = Hin * Win

        if cfg["kind"] == "dec":
            # nearest 2x upsample: (M, M//4) 0/1 selection @ (M//4, Cin)
            cur = jnp.dot(sel_ref[...], cur.astype(jnp.bfloat16),
                          preferred_element_type=jnp.float32)

        # ---- 3x3 "same" conv ------------------------------------------------
        # Feature map lives flattened (row = h*Win + w) with zeroed halo rows,
        # so tap (dy, dx) is one contiguous static slice at offset
        # base + (dy-1)*Win + (dx-1).  The W wrap-around is masked out.
        fmap[0:base, :] = jnp.zeros((base, Cin), jnp.float32)
        fmap[base + M:rows, :] = jnp.zeros((rows - base - M, Cin), jnp.float32)
        fmap[base:base + M, :] = cur

        col = lax.broadcasted_iota(jnp.int32, (M, Cin), 0) % Win
        not_left = col != 0                 # dx == 0 taps read column w-1
        not_right = col != (Win - 1)        # dx == 2 taps read column w+1

        acc = jnp.zeros((M, Cout), jnp.float32)
        for t in range(9):                  # 9 accumulating MXU matmuls
            dy, dx = t // 3, t % 3
            start = base + (dy - 1) * Win + (dx - 1)
            patch = fmap[start:start + M, :]
            if dx == 0:
                patch = jnp.where(not_left, patch, 0.0)
            elif dx == 2:
                patch = jnp.where(not_right, patch, 0.0)
            acc = acc + jnp.dot(patch.astype(jnp.bfloat16), w_ref[t],
                                preferred_element_type=jnp.float32)
        acc = acc + b_ref[...]              # bias broadcast, hoisted (once/layer)

        if cfg["kind"] == "enc":
            # relu then 2x2/stride-2 maxpool: max of 4 selection matmuls.
            acc = jnp.maximum(acc, 0.0).astype(jnp.bfloat16)
            pooled = jnp.dot(sel_ref[0], acc, preferred_element_type=jnp.float32)
            for k in range(1, 4):
                pooled = jnp.maximum(
                    pooled,
                    jnp.dot(sel_ref[k], acc, preferred_element_type=jnp.float32))
            cur = pooled                    # (M//4, Cout)
        elif cfg["act"] == "relu":
            cur = jnp.maximum(acc, 0.0)
        else:                               # sigmoid output layer
            cur = jax.nn.sigmoid(acc)

    o_ref[0] = cur.astype(o_ref.dtype)      # single (H0*W0, C0) store per image


# ---------------------------------------------------------------------------
# Model wrapper: deterministic parameters + fused forward.
# ---------------------------------------------------------------------------
class CnnAutoencoderPallas:
    def __init__(self, scale=2, channel_maps=(), padding=1, kernel_size=3,
                 num_channels=3, img_width=16, img_height=16,
                 h_activation="relu", o_activation="sigmoid",
                 key=None, dtype=jnp.float32):
        assert kernel_size == 3 and padding == 1 and scale == 2
        if h_activation != "relu":
            raise Exception(f"Invalid hidden activation {h_activation}")
        if o_activation != "sigmoid":
            raise Exception(f"Invalid output activation {o_activation}")
        self.channel_maps = list(channel_maps)
        self.reversed_channel_maps = list(reversed(channel_maps))
        self.num_channels = num_channels
        self.img_width = img_width
        self.img_height = img_height
        self.dtype = dtype
        if key is None:
            key = jax.random.PRNGKey(0)

        # Conv2d params (OIHW f32 kept for the XLA reference).
        self.conv_w_oihw, self.conv_b = [], []
        for i in range(len(self.channel_maps) - 1):
            cin, cout = self.channel_maps[i], self.channel_maps[i + 1]
            key, kw, kb = jax.random.split(key, 3)
            bound = 1.0 / np.sqrt(cin * 9)
            self.conv_w_oihw.append(
                jax.random.uniform(kw, (cout, cin, 3, 3), dtype, -bound, bound))
            self.conv_b.append(jax.random.uniform(kb, (cout,), dtype, -bound, bound))

        # ConvTranspose2d(stride=1, p=1): store the equivalent regular-conv
        # OIHW weight (flip spatial, swap in/out channels).
        self.deconv_w_oihw, self.deconv_b = [], []
        for i in range(len(self.reversed_channel_maps) - 1):
            cin = self.reversed_channel_maps[i]
            cout = self.reversed_channel_maps[i + 1]
            key, kw, kb = jax.random.split(key, 3)
            bound = 1.0 / np.sqrt(cout * 9)
            wt = jax.random.uniform(kw, (cin, cout, 3, 3), dtype, -bound, bound)
            self.deconv_w_oihw.append(
                jnp.transpose(jnp.flip(wt, axis=(2, 3)), (1, 0, 2, 3)))
            self.deconv_b.append(jax.random.uniform(kb, (cout,), dtype, -bound, bound))

        self._build_plan()

    # Static per-layer plan for the fused kernel.
    def _build_plan(self):
        def packed(w_oihw):
            # (Cout, Cin, 3, 3) -> (9, Cin, Cout), tap order t = dy*3 + dx.
            cout, cin = w_oihw.shape[0], w_oihw.shape[1]
            return jnp.transpose(w_oihw, (2, 3, 1, 0)).reshape(
                9, cin, cout).astype(jnp.bfloat16)

        H, W = self.img_height, self.img_width
        self.layers = []        # (cfg, w_bf16 (9,Cin,Cout), bias f32 (1,Cout), sel bf16)

        for i in range(len(self.conv_w_oihw)):
            cin, cout = self.channel_maps[i], self.channel_maps[i + 1]
            assert H % 2 == 0 and W % 2 == 0
            cfg = dict(kind="enc", act="relu", Hin=H, Win=W, Cin=cin, Cout=cout,
                       base=W + 8, rows=(H + 2) * W + 16)
            sel = jnp.asarray(_pool_selection_matrices(H, W), jnp.bfloat16)
            self.layers.append(
                (cfg, packed(self.conv_w_oihw[i]),
                 self.conv_b[i].reshape(1, cout).astype(jnp.float32), sel))
            H, W = H // 2, W // 2

        self.latent_dim = H * W * self.channel_maps[-1]

        n_dec = len(self.deconv_w_oihw)
        for i in range(n_dec):
            cin = self.reversed_channel_maps[i]
            cout = self.reversed_channel_maps[i + 1]
            sel = jnp.asarray(_upsample_selection_matrix(H, W), jnp.bfloat16)
            H, W = 2 * H, 2 * W
            act = "relu" if i != n_dec - 1 else "sigmoid"
            cfg = dict(kind="dec", act=act, Hin=H, Win=W, Cin=cin, Cout=cout,
                       base=W + 8, rows=(H + 2) * W + 16)
            self.layers.append(
                (cfg, packed(self.deconv_w_oihw[i]),
                 self.deconv_b[i].reshape(1, cout).astype(jnp.float32), sel))

    def _fused_call(self, x_flat):
        N, M0, C0 = x_flat.shape
        in_specs = [pl.BlockSpec((1, M0, C0), lambda n: (n, 0, 0))]
        inputs = [x_flat]
        scratch_shapes = []
        for cfg, w, b, sel in self.layers:
            in_specs.append(pl.BlockSpec(w.shape, lambda n: (0, 0, 0)))
            in_specs.append(pl.BlockSpec(b.shape, lambda n: (0, 0)))
            in_specs.append(pl.BlockSpec(sel.shape,
                                         lambda n, nd=sel.ndim: (0,) * nd))
            inputs += [w, b, sel]
            scratch_shapes.append(pltpu.VMEM((cfg["rows"], cfg["Cin"]),
                                             jnp.float32))
        kernel = functools.partial(
            _fused_forward_kernel,
            layer_cfgs=tuple(cfg for cfg, _, _, _ in self.layers))
        return pl.pallas_call(
            kernel,
            out_shape=jax.ShapeDtypeStruct((N, M0, C0), x_flat.dtype),
            grid_spec=pltpu.PrefetchScalarGridSpec(
                num_scalar_prefetch=0,
                grid=(N,),
                in_specs=in_specs,
                out_specs=pl.BlockSpec((1, M0, C0), lambda n: (n, 0, 0)),
                scratch_shapes=scratch_shapes,
            ),
            compiler_params=pltpu.CompilerParams(
                dimension_semantics=("parallel",)),
        )(*inputs)

    def forward(self, x_nchw):
        N, C, H, W = x_nchw.shape
        assert C == self.num_channels == self.channel_maps[0]
        assert H == self.img_height and W == self.img_width
        x_flat = jnp.transpose(x_nchw, (0, 2, 3, 1)).reshape(N, H * W, C)  # glue
        y_flat = self._fused_call(x_flat)
        return jnp.transpose(y_flat.reshape(N, H, W, C), (0, 3, 1, 2))     # glue

    # TODO(synk): fit/save/load/errors/encode are training & host-IO routines
    # (optimizer, torch.save, BCELoss bookkeeping) — out of scope for a
    # forward-pass kernel.


# ---------------------------------------------------------------------------
# Pure-JAX (XLA) reference of the same forward pass, for validation.
# ---------------------------------------------------------------------------
def reference_forward(model, x_nchw):
    def conv_ref(x, w_oihw, b):
        y = lax.conv_general_dilated(
            x, w_oihw, (1, 1), [(1, 1), (1, 1)],
            dimension_numbers=("NCHW", "OIHW", "NCHW"),
            precision=lax.Precision.HIGHEST)
        return y + b.reshape(1, -1, 1, 1)

    x = x_nchw
    for w, b in zip(model.conv_w_oihw, model.conv_b):
        x = jnp.maximum(conv_ref(x, w, b), 0.0)
        x = lax.reduce_window(x, jnp.array(-jnp.inf, x.dtype), lax.max,
                              (1, 1, 2, 2), (1, 1, 2, 2), "VALID")
    n_dec = len(model.deconv_w_oihw)
    for i, (w, b) in enumerate(zip(model.deconv_w_oihw, model.deconv_b)):
        x = jnp.repeat(jnp.repeat(x, 2, axis=2), 2, axis=3)
        x = conv_ref(x, w, b)
        x = jnp.maximum(x, 0.0) if i != n_dec - 1 else jax.nn.sigmoid(x)
    return x


if __name__ == "__main__":
    key = jax.random.PRNGKey(0)
    k_param, k_x = jax.random.split(key)

    # N=2, num_channels=3, 16x16 imgs, channel_maps=[3, 8, 16] -> latent 4x4x16.
    model = CnnAutoencoderPallas(
        scale=2, channel_maps=[3, 8, 16], padding=1, kernel_size=3,
        num_channels=3, img_width=16, img_height=16,
        h_activation="relu", o_activation="sigmoid", key=k_param)

    x = jax.random.uniform(k_x, (2, 3, 16, 16), jnp.float32)

    y = model.forward(x)
    y = jax.block_until_ready(y)
    assert y.shape == x.shape and y.dtype == x.dtype

    y_ref = jax.block_until_ready(reference_forward(model, x))
    # Kernel uses bf16 matmul operands (f32 accumulate); reference is f32 HIGHEST.
    np.testing.assert_allclose(np.asarray(y), np.asarray(y_ref),
                               rtol=2e-2, atol=2e-2)

    print("KERNEL_OK")
</pallas_src>

<mosaic_0001>
module attributes {stable_mosaic.version = 11 : i64} {
  func.func @_fused_forward_kernel(%arg0: i32, %arg1: memref<1x256x3xf32, #tpu.memory_space<vmem>>, %arg2: memref<9x3x8xbf16, #tpu.memory_space<vmem>>, %arg3: memref<1x8xf32, #tpu.memory_space<vmem>>, %arg4: memref<4x64x256xbf16, #tpu.memory_space<vmem>>, %arg5: memref<9x8x16xbf16, #tpu.memory_space<vmem>>, %arg6: memref<1x16xf32, #tpu.memory_space<vmem>>, %arg7: memref<4x16x64xbf16, #tpu.memory_space<vmem>>, %arg8: memref<9x16x8xbf16, #tpu.memory_space<vmem>>, %arg9: memref<1x8xf32, #tpu.memory_space<vmem>>, %arg10: memref<64x16xbf16, #tpu.memory_space<vmem>>, %arg11: memref<9x8x3xbf16, #tpu.memory_space<vmem>>, %arg12: memref<1x3xf32, #tpu.memory_space<vmem>>, %arg13: memref<256x64xbf16, #tpu.memory_space<vmem>>, %arg14: memref<1x256x3xf32, #tpu.memory_space<vmem>>, %arg15: memref<304x3xf32, #tpu.memory_space<vmem>>, %arg16: memref<96x8xf32, #tpu.memory_space<vmem>>, %arg17: memref<96x16xf32, #tpu.memory_space<vmem>>, %arg18: memref<304x8xf32, #tpu.memory_space<vmem>>) attributes {dimension_semantics = [#tpu.dimension_semantics<parallel>], iteration_bounds = array<i64: 2>, scalar_prefetch = 0 : i64, scratch_operands = 4 : i64, tpu.core_type = #tpu.core_type<tc>, window_params = [{transform_indices = @transform_0, window_bounds = array<i64: 1, 256, 3>}, {pipeline_mode = #tpu.pipeline_mode<synchronous>, transform_indices = @transform_1, window_bounds = array<i64: 9, 3, 8>}, {pipeline_mode = #tpu.pipeline_mode<synchronous>, transform_indices = @transform_2, window_bounds = array<i64: 1, 8>}, {pipeline_mode = #tpu.pipeline_mode<synchronous>, transform_indices = @transform_3, window_bounds = array<i64: 4, 64, 256>}, {pipeline_mode = #tpu.pipeline_mode<synchronous>, transform_indices = @transform_4, window_bounds = array<i64: 9, 8, 16>}, {pipeline_mode = #tpu.pipeline_mode<synchronous>, transform_indices = @transform_5, window_bounds = array<i64: 1, 16>}, {pipeline_mode = #tpu.pipeline_mode<synchronous>, transform_indices = @transform_6, window_bounds = array<i64: 4, 16, 64>}, {pipeline_mode = #tpu.pipeline_mode<synchronous>, transform_indices = @transform_7, window_bounds = array<i64: 9, 16, 8>}, {pipeline_mode = #tpu.pipeline_mode<synchronous>, transform_indices = @transform_8, window_bounds = array<i64: 1, 8>}, {pipeline_mode = #tpu.pipeline_mode<synchronous>, transform_indices = @transform_9, window_bounds = array<i64: 64, 16>}, {pipeline_mode = #tpu.pipeline_mode<synchronous>, transform_indices = @transform_10, window_bounds = array<i64: 9, 8, 3>}, {pipeline_mode = #tpu.pipeline_mode<synchronous>, transform_indices = @transform_11, window_bounds = array<i64: 1, 3>}, {pipeline_mode = #tpu.pipeline_mode<synchronous>, transform_indices = @transform_12, window_bounds = array<i64: 256, 64>}, {transform_indices = @transform_13, window_bounds = array<i64: 1, 256, 3>}]} {
    %c0 = arith.constant 0 : index
    %c0_0 = arith.constant 0 : index
    %c0_1 = arith.constant 0 : index
    %0 = vector.load %arg1[%c0, %c0_0, %c0_1] : memref<1x256x3xf32, #tpu.memory_space<vmem>>, vector<1x256x3xf32>
    %1 = vector.shape_cast %0 : vector<1x256x3xf32> to vector<256x3xf32>
    %cst = arith.constant 0.000000e+00 : f32
    %2 = vector.broadcast %cst : f32 to vector<24x3xf32>
    %c0_2 = arith.constant 0 : index
    %c0_3 = arith.constant 0 : index
    %3 = vector.load %arg15[%c0_2, %c0_3] : memref<304x3xf32, #tpu.memory_space<vmem>>, vector<24x3xf32>
    tpu.vector_store %arg15[%c0_2, %c0_3], %2 {strides = array<i32>} : memref<304x3xf32, #tpu.memory_space<vmem>>, vector<24x3xf32>,
    %cst_4 = arith.constant 0.000000e+00 : f32
    %4 = vector.broadcast %cst_4 : f32 to vector<24x3xf32>
    %c280 = arith.constant 280 : index
    %c0_5 = arith.constant 0 : index
    %5 = vector.load %arg15[%c280, %c0_5] : memref<304x3xf32, #tpu.memory_space<vmem>>, vector<24x3xf32>
    tpu.vector_store %arg15[%c280, %c0_5], %4 {strides = array<i32>} : memref<304x3xf32, #tpu.memory_space<vmem>>, vector<24x3xf32>,
    %c24 = arith.constant 24 : index
    %c0_6 = arith.constant 0 : index
    %6 = vector.load %arg15[%c24, %c0_6] : memref<304x3xf32, #tpu.memory_space<vmem>>, vector<256x3xf32>
    tpu.vector_store %arg15[%c24, %c0_6], %1 {strides = array<i32>} : memref<304x3xf32, #tpu.memory_space<vmem>>, vector<256x3xf32>,
    %7 = tpu.iota {dimensions = array<i32: 0>} : vector<256x3xi32>
    %c16_i32 = arith.constant 16 : i32
    %c0_i32 = arith.constant 0 : i32
    %8 = arith.cmpi eq, %c16_i32, %c0_i32 : i32
    %c1_i32 = arith.constant 1 : i32
    %9 = arith.select %8, %c1_i32, %c16_i32 : i32
    %10 = vector.broadcast %9 : i32 to vector<256x3xi32>
    %11 = arith.remsi %7, %10 : vector<256x3xi32>
    %c0_i32_7 = arith.constant 0 : i32
    %12 = vector.broadcast %c0_i32_7 : i32 to vector<256x3xi32>
    %13 = arith.cmpi ne, %11, %12 : vector<256x3xi32>
    %c0_i32_8 = arith.constant 0 : i32
    %14 = vector.broadcast %c0_i32_8 : i32 to vector<256x3xi32>
    %15 = arith.cmpi slt, %11, %14 : vector<256x3xi32>
    %c0_i32_9 = arith.constant 0 : i32
    %16 = arith.cmpi slt, %9, %c0_i32_9 : i32
    %17 = vector.broadcast %16 : i1 to vector<256x3xi1>
    %18 = vector.broadcast %17 : vector<256x3xi1> to vector<256x3xi1>
    %19 = arith.xori %15, %18 : vector<256x3xi1>
    %20 = arith.andi %19, %13 : vector<256x3xi1>
    %21 = vector.broadcast %9 : i32 to vector<256x3xi32>
    %22 = arith.addi %11, %21 : vector<256x3xi32>
    %23 = arith.select %20, %22, %11 : vector<256x3xi1>, vector<256x3xi32>
    %c0_i32_10 = arith.constant 0 : i32
    %24 = vector.broadcast %c0_i32_10 : i32 to vector<256x3xi32>
    %25 = arith.cmpi ne, %23, %24 : vector<256x3xi32>
    %c15_i32 = arith.constant 15 : i32
    %26 = vector.broadcast %c15_i32 : i32 to vector<256x3xi32>
    %27 = arith.cmpi ne, %23, %26 : vector<256x3xi32>
    %cst_11 = arith.constant 0.000000e+00 : f32
    %28 = vector.broadcast %cst_11 : f32 to vector<256x8xf32>
    %c7 = arith.constant 7 : index
    %c0_12 = arith.constant 0 : index
    %29 = vector.load %arg15[%c7, %c0_12] : memref<304x3xf32, #tpu.memory_space<vmem>>, vector<256x3xf32>
    %cst_13 = arith.constant 0.000000e+00 : f32
    %30 = vector.broadcast %cst_13 : f32 to vector<256x3xf32>
    %31 = arith.select %25, %29, %30 : vector<256x3xi1>, vector<256x3xf32>
    %32 = arith.truncf %31 : vector<256x3xf32> to vector<256x3xbf16>
    %c0_14 = arith.constant 0 : index
    %c0_15 = arith.constant 0 : index
    %c0_16 = arith.constant 0 : index
    %33 = vector.load %arg2[%c0_14, %c0_15, %c0_16] : memref<9x3x8xbf16, #tpu.memory_space<vmem>>, vector<1x3x8xbf16>
    %34 = vector.shape_cast %33 : vector<1x3x8xbf16> to vector<3x8xbf16>
    %cst_17 = arith.constant dense<0.000000e+00> : vector<256x8xf32>
    %35 = tpu.matmul %32, %34, %cst_17 {dimension_numbers = #tpu.dot_dimension_numbers<[1], [0], [0], [1], [0, 0, 1, 1], [], []>} : vector<256x3xbf16>, vector<3x8xbf16>, vector<256x8xf32> -> vector<256x8xf32>
    %36 = arith.addf %28, %35 : vector<256x8xf32>
    %c8 = arith.constant 8 : index
    %c0_18 = arith.constant 0 : index
    %37 = vector.load %arg15[%c8, %c0_18] : memref<304x3xf32, #tpu.memory_space<vmem>>, vector<256x3xf32>
    %38 = arith.truncf %37 : vector<256x3xf32> to vector<256x3xbf16>
    %c1 = arith.constant 1 : index
    %c0_19 = arith.constant 0 : index
    %c0_20 = arith.constant 0 : index
    %39 = vector.load %arg2[%c1, %c0_19, %c0_20] : memref<9x3x8xbf16, #tpu.memory_space<vmem>>, vector<1x3x8xbf16>
    %40 = vector.shape_cast %39 : vector<1x3x8xbf16> to vector<3x8xbf16>
    %cst_21 = arith.constant dense<0.000000e+00> : vector<256x8xf32>
    %41 = tpu.matmul %38, %40, %cst_21 {dimension_numbers = #tpu.dot_dimension_numbers<[1], [0], [0], [1], [0, 0, 1, 1], [], []>} : vector<256x3xbf16>, vector<3x8xbf16>, vector<256x8xf32> -> vector<256x8xf32>
    %42 = arith.addf %36, %41 : vector<256x8xf32>
    %c9 = arith.constant 9 : index
    %c0_22 = arith.constant 0 : index
    %43 = vector.load %arg15[%c9, %c0_22] : memref<304x3xf32, #tpu.memory_space<vmem>>, vector<256x3xf32>
    %cst_23 = arith.constant 0.000000e+00 : f32
    %44 = vector.broadcast %cst_23 : f32 to vector<256x3xf32>
    %45 = arith.select %27, %43, %44 : vector<256x3xi1>, vector<256x3xf32>
    %46 = arith.truncf %45 : vector<256x3xf32> to vector<256x3xbf16>
    %c2 = arith.constant 2 : index
    %c0_24 = arith.constant 0 : index
    %c0_25 = arith.constant 0 : index
    %47 = vector.load %arg2[%c2, %c0_24, %c0_25] : memref<9x3x8xbf16, #tpu.memory_space<vmem>>, vector<1x3x8xbf16>
    %48 = vector.shape_cast %47 : vector<1x3x8xbf16> to vector<3x8xbf16>
    %cst_26 = arith.constant dense<0.000000e+00> : vector<256x8xf32>
    %49 = tpu.matmul %46, %48, %cst_26 {dimension_numbers = #tpu.dot_dimension_numbers<[1], [0], [0], [1], [0, 0, 1, 1], [], []>} : vector<256x3xbf16>, vector<3x8xbf16>, vector<256x8xf32> -> vector<256x8xf32>
    %50 = arith.addf %42, %49 : vector<256x8xf32>
    %c23 = arith.constant 23 : index
    %c0_27 = arith.constant 0 : index
    %51 = vector.load %arg15[%c23, %c0_27] : memref<304x3xf32, #tpu.memory_space<vmem>>, vector<256x3xf32>
    %cst_28 = arith.constant 0.000000e+00 : f32
    %52 = vector.broadcast %cst_28 : f32 to vector<256x3xf32>
    %53 = arith.select %25, %51, %52 : vector<256x3xi1>, vector<256x3xf32>
    %54 = arith.truncf %53 : vector<256x3xf32> to vector<256x3xbf16>
    %c3 = arith.constant 3 : index
    %c0_29 = arith.constant 0 : index
    %c0_30 = arith.constant 0 : index
    %55 = vector.load %arg2[%c3, %c0_29, %c0_30] : memref<9x3x8xbf16, #tpu.memory_space<vmem>>, vector<1x3x8xbf16>
    %56 = vector.shape_cast %55 : vector<1x3x8xbf16> to vector<3x8xbf16>
    %cst_31 = arith.constant dense<0.000000e+00> : vector<256x8xf32>
    %57 = tpu.matmul %54, %56, %cst_31 {dimension_numbers = #tpu.dot_dimension_numbers<[1], [0], [0], [1], [0, 0, 1, 1], [], []>} : vector<256x3xbf16>, vector<3x8xbf16>, vector<256x8xf32> -> vector<256x8xf32>
    %58 = arith.addf %50, %57 : vector<256x8xf32>
    %c24_32 = arith.constant 24 : index
    %c0_33 = arith.constant 0 : index
    %59 = vector.load %arg15[%c24_32, %c0_33] : memref<304x3xf32, #tpu.memory_space<vmem>>, vector<256x3xf32>
    %60 = arith.truncf %59 : vector<256x3xf32> to vector<256x3xbf16>
    %c4 = arith.constant 4 : index
    %c0_34 = arith.constant 0 : index
    %c0_35 = arith.constant 0 : index
    %61 = vector.load %arg2[%c4, %c0_34, %c0_35] : memref<9x3x8xbf16, #tpu.memory_space<vmem>>, vector<1x3x8xbf16>
    %62 = vector.shape_cast %61 : vector<1x3x8xbf16> to vector<3x8xbf16>
    %cst_36 = arith.constant dense<0.000000e+00> : vector<256x8xf32>
    %63 = tpu.matmul %60, %62, %cst_36 {dimension_numbers = #tpu.dot_dimension_numbers<[1], [0], [0], [1], [0, 0, 1, 1], [], []>} : vector<256x3xbf16>, vector<3x8xbf16>, vector<256x8xf32> -> vector<256x8xf32>
    %64 = arith.addf %58, %63 : vector<256x8xf32>
    %c25 = arith.constant 25 : index
    %c0_37 = arith.constant 0 : index
    %65 = vector.load %arg15[%c25, %c0_37] : memref<304x3xf32, #tpu.memory_space<vmem>>, vector<256x3xf32>
    %cst_38 = arith.constant 0.000000e+00 : f32
    %66 = vector.broadcast %cst_38 : f32 to vector<256x3xf32>
    %67 = arith.select %27, %65, %66 : vector<256x3xi1>, vector<256x3xf32>
    %68 = arith.truncf %67 : vector<256x3xf32> to vector<256x3xbf16>
    %c5 = arith.constant 5 : index
    %c0_39 = arith.constant 0 : index
    %c0_40 = arith.constant 0 : index
    %69 = vector.load %arg2[%c5, %c0_39, %c0_40] : memref<9x3x8xbf16, #tpu.memory_space<vmem>>, vector<1x3x8xbf16>
    %70 = vector.shape_cast %69 : vector<1x3x8xbf16> to vector<3x8xbf16>
    %cst_41 = arith.constant dense<0.000000e+00> : vector<256x8xf32>
    %71 = tpu.matmul %68, %70, %cst_41 {dimension_numbers = #tpu.dot_dimension_numbers<[1], [0], [0], [1], [0, 0, 1, 1], [], []>} : vector<256x3xbf16>, vector<3x8xbf16>, vector<256x8xf32> -> vector<256x8xf32>
    %72 = arith.addf %64, %71 : vector<256x8xf32>
    %c39 = arith.constant 39 : index
    %c0_42 = arith.constant 0 : index
    %73 = vector.load %arg15[%c39, %c0_42] : memref<304x3xf32, #tpu.memory_space<vmem>>, vector<256x3xf32>
    %cst_43 = arith.constant 0.000000e+00 : f32
    %74 = vector.broadcast %cst_43 : f32 to vector<256x3xf32>
    %75 = arith.select %25, %73, %74 : vector<256x3xi1>, vector<256x3xf32>
    %76 = arith.truncf %75 : vector<256x3xf32> to vector<256x3xbf16>
    %c6 = arith.constant 6 : index
    %c0_44 = arith.constant 0 : index
    %c0_45 = arith.constant 0 : index
    %77 = vector.load %arg2[%c6, %c0_44, %c0_45] : memref<9x3x8xbf16, #tpu.memory_space<vmem>>, vector<1x3x8xbf16>
    %78 = vector.shape_cast %77 : vector<1x3x8xbf16> to vector<3x8xbf16>
    %cst_46 = arith.constant dense<0.000000e+00> : vector<256x8xf32>
    %79 = tpu.matmul %76, %78, %cst_46 {dimension_numbers = #tpu.dot_dimension_numbers<[1], [0], [0], [1], [0, 0, 1, 1], [], []>} : vector<256x3xbf16>, vector<3x8xbf16>, vector<256x8xf32> -> vector<256x8xf32>
    %80 = arith.addf %72, %79 : vector<256x8xf32>
    %c40 = arith.constant 40 : index
    %c0_47 = arith.constant 0 : index
    %81 = vector.load %arg15[%c40, %c0_47] : memref<304x3xf32, #tpu.memory_space<vmem>>, vector<256x3xf32>
    %82 = arith.truncf %81 : vector<256x3xf32> to vector<256x3xbf16>
    %c7_48 = arith.constant 7 : index
    %c0_49 = arith.constant 0 : index
    %c0_50 = arith.constant 0 : index
    %83 = vector.load %arg2[%c7_48, %c0_49, %c0_50] : memref<9x3x8xbf16, #tpu.memory_space<vmem>>, vector<1x3x8xbf16>
    %84 = vector.shape_cast %83 : vector<1x3x8xbf16> to vector<3x8xbf16>
    %cst_51 = arith.constant dense<0.000000e+00> : vector<256x8xf32>
    %85 = tpu.matmul %82, %84, %cst_51 {dimension_numbers = #tpu.dot_dimension_numbers<[1], [0], [0], [1], [0, 0, 1, 1], [], []>} : vector<256x3xbf16>, vector<3x8xbf16>, vector<256x8xf32> -> vector<256x8xf32>
    %86 = arith.addf %80, %85 : vector<256x8xf32>
    %c41 = arith.constant 41 : index
    %c0_52 = arith.constant 0 : index
    %87 = vector.load %arg15[%c41, %c0_52] : memref<304x3xf32, #tpu.memory_space<vmem>>, vector<256x3xf32>
    %cst_53 = arith.constant 0.000000e+00 : f32
    %88 = vector.broadcast %cst_53 : f32 to vector<256x3xf32>
    %89 = arith.select %27, %87, %88 : vector<256x3xi1>, vector<256x3xf32>
    %90 = arith.truncf %89 : vector<256x3xf32> to vector<256x3xbf16>
    %c8_54 = arith.constant 8 : index
    %c0_55 = arith.constant 0 : index
    %c0_56 = arith.constant 0 : index
    %91 = vector.load %arg2[%c8_54, %c0_55, %c0_56] : memref<9x3x8xbf16, #tpu.memory_space<vmem>>, vector<1x3x8xbf16>
    %92 = vector.shape_cast %91 : vector<1x3x8xbf16> to vector<3x8xbf16>
    %cst_57 = arith.constant dense<0.000000e+00> : vector<256x8xf32>
    %93 = tpu.matmul %90, %92, %cst_57 {dimension_numbers = #tpu.dot_dimension_numbers<[1], [0], [0], [1], [0, 0, 1, 1], [], []>} : vector<256x3xbf16>, vector<3x8xbf16>, vector<256x8xf32> -> vector<256x8xf32>
    %94 = arith.addf %86, %93 : vector<256x8xf32>
    %c0_58 = arith.constant 0 : index
    %c0_59 = arith.constant 0 : index
    %95 = vector.load %arg3[%c0_58, %c0_59] : memref<1x8xf32, #tpu.memory_space<vmem>>, vector<1x8xf32>
    %96 = vector.broadcast %95 : vector<1x8xf32> to vector<256x8xf32>
    %97 = arith.addf %94, %96 : vector<256x8xf32>
    %cst_60 = arith.constant 0.000000e+00 : f32
    %98 = vector.broadcast %cst_60 : f32 to vector<256x8xf32>
    %99 = arith.maximumf %97, %98 : vector<256x8xf32>
    %100 = arith.truncf %99 : vector<256x8xf32> to vector<256x8xbf16>
    %c0_61 = arith.constant 0 : index
    %c0_62 = arith.constant 0 : index
    %c0_63 = arith.constant 0 : index
    %101 = vector.load %arg4[%c0_61, %c0_62, %c0_63] : memref<4x64x256xbf16, #tpu.memory_space<vmem>>, vector<1x64x256xbf16>
    %102 = vector.shape_cast %101 : vector<1x64x256xbf16> to vector<64x256xbf16>
    %cst_64 = arith.constant dense<0.000000e+00> : vector<64x8xf32>
    %103 = tpu.matmul %102, %100, %cst_64 {dimension_numbers = #tpu.dot_dimension_numbers<[1], [0], [0], [1], [0, 0, 1, 1], [], []>} : vector<64x256xbf16>, vector<256x8xbf16>, vector<64x8xf32> -> vector<64x8xf32>
    %c1_65 = arith.constant 1 : index
    %c0_66 = arith.constant 0 : index
    %c0_67 = arith.constant 0 : index
    %104 = vector.load %arg4[%c1_65, %c0_66, %c0_67] : memref<4x64x256xbf16, #tpu.memory_space<vmem>>, vector<1x64x256xbf16>
    %105 = vector.shape_cast %104 : vector<1x64x256xbf16> to vector<64x256xbf16>
    %cst_68 = arith.constant dense<0.000000e+00> : vector<64x8xf32>
    %106 = tpu.matmul %105, %100, %cst_68 {dimension_numbers = #tpu.dot_dimension_numbers<[1], [0], [0], [1], [0, 0, 1, 1], [], []>} : vector<64x256xbf16>, vector<256x8xbf16>, vector<64x8xf32> -> vector<64x8xf32>
    %107 = arith.maximumf %103, %106 : vector<64x8xf32>
    %c2_69 = arith.constant 2 : index
    %c0_70 = arith.constant 0 : index
    %c0_71 = arith.constant 0 : index
    %108 = vector.load %arg4[%c2_69, %c0_70, %c0_71] : memref<4x64x256xbf16, #tpu.memory_space<vmem>>, vector<1x64x256xbf16>
    %109 = vector.shape_cast %108 : vector<1x64x256xbf16> to vector<64x256xbf16>
    %cst_72 = arith.constant dense<0.000000e+00> : vector<64x8xf32>
    %110 = tpu.matmul %109, %100, %cst_72 {dimension_numbers = #tpu.dot_dimension_numbers<[1], [0], [0], [1], [0, 0, 1, 1], [], []>} : vector<64x256xbf16>, vector<256x8xbf16>, vector<64x8xf32> -> vector<64x8xf32>
    %111 = arith.maximumf %107, %110 : vector<64x8xf32>
    %c3_73 = arith.constant 3 : index
    %c0_74 = arith.constant 0 : index
    %c0_75 = arith.constant 0 : index
    %112 = vector.load %arg4[%c3_73, %c0_74, %c0_75] : memref<4x64x256xbf16, #tpu.memory_space<vmem>>, vector<1x64x256xbf16>
    %113 = vector.shape_cast %112 : vector<1x64x256xbf16> to vector<64x256xbf16>
    %cst_76 = arith.constant dense<0.000000e+00> : vector<64x8xf32>
    %114 = tpu.matmul %113, %100, %cst_76 {dimension_numbers = #tpu.dot_dimension_numbers<[1], [0], [0], [1], [0, 0, 1, 1], [], []>} : vector<64x256xbf16>, vector<256x8xbf16>, vector<64x8xf32> -> vector<64x8xf32>
    %115 = arith.maximumf %111, %114 : vector<64x8xf32>
    %cst_77 = arith.constant 0.000000e+00 : f32
    %116 = vector.broadcast %cst_77 : f32 to vector<16x8xf32>
    %c0_78 = arith.constant 0 : index
    %c0_79 = arith.constant 0 : index
    %117 = vector.load %arg16[%c0_78, %c0_79] : memref<96x8xf32, #tpu.memory_space<vmem>>, vector<16x8xf32>
    tpu.vector_store %arg16[%c0_78, %c0_79], %116 {strides = array<i32>} : memref<96x8xf32, #tpu.memory_space<vmem>>, vector<16x8xf32>,
    %cst_80 = arith.constant 0.000000e+00 : f32
    %118 = vector.broadcast %cst_80 : f32 to vector<16x8xf32>
    %c80 = arith.constant 80 : index
    %c0_81 = arith.constant 0 : index
    %119 = vector.load %arg16[%c80, %c0_81] : memref<96x8xf32, #tpu.memory_space<vmem>>, vector<16x8xf32>
    tpu.vector_store %arg16[%c80, %c0_81], %118 {strides = array<i32>} : memref<96x8xf32, #tpu.memory_space<vmem>>, vector<16x8xf32>,
    %c16 = arith.constant 16 : index
    %c0_82 = arith.constant 0 : index
    %120 = vector.load %arg16[%c16, %c0_82] : memref<96x8xf32, #tpu.memory_space<vmem>>, vector<64x8xf32>
    tpu.vector_store %arg16[%c16, %c0_82], %115 {strides = array<i32>} : memref<96x8xf32, #tpu.memory_space<vmem>>, vector<64x8xf32>,
    %121 = tpu.iota {dimensions = array<i32: 0>} : vector<64x8xi32>
    %c8_i32 = arith.constant 8 : i32
    %c0_i32_83 = arith.constant 0 : i32
    %122 = arith.cmpi eq, %c8_i32, %c0_i32_83 : i32
    %c1_i32_84 = arith.constant 1 : i32
    %123 = arith.select %122, %c1_i32_84, %c8_i32 : i32
    %124 = vector.broadcast %123 : i32 to vector<64x8xi32>
    %125 = arith.remsi %121, %124 : vector<64x8xi32>
    %c0_i32_85 = arith.constant 0 : i32
    %126 = vector.broadcast %c0_i32_85 : i32 to vector<64x8xi32>
    %127 = arith.cmpi ne, %125, %126 : vector<64x8xi32>
    %c0_i32_86 = arith.constant 0 : i32
    %128 = vector.broadcast %c0_i32_86 : i32 to vector<64x8xi32>
    %129 = arith.cmpi slt, %125, %128 : vector<64x8xi32>
    %c0_i32_87 = arith.constant 0 : i32
    %130 = arith.cmpi slt, %123, %c0_i32_87 : i32
    %131 = vector.broadcast %130 : i1 to vector<64x8xi1>
    %132 = vector.broadcast %131 : vector<64x8xi1> to vector<64x8xi1>
    %133 = arith.xori %129, %132 : vector<64x8xi1>
    %134 = arith.andi %133, %127 : vector<64x8xi1>
    %135 = vector.broadcast %123 : i32 to vector<64x8xi32>
    %136 = arith.addi %125, %135 : vector<64x8xi32>
    %137 = arith.select %134, %136, %125 : vector<64x8xi1>, vector<64x8xi32>
    %c0_i32_88 = arith.constant 0 : i32
    %138 = vector.broadcast %c0_i32_88 : i32 to vector<64x8xi32>
    %139 = arith.cmpi ne, %137, %138 : vector<64x8xi32>
    %c7_i32 = arith.constant 7 : i32
    %140 = vector.broadcast %c7_i32 : i32 to vector<64x8xi32>
    %141 = arith.cmpi ne, %137, %140 : vector<64x8xi32>
    %cst_89 = arith.constant 0.000000e+00 : f32
    %142 = vector.broadcast %cst_89 : f32 to vector<64x16xf32>
    %c7_90 = arith.constant 7 : index
    %c0_91 = arith.constant 0 : index
    %143 = vector.load %arg16[%c7_90, %c0_91] : memref<96x8xf32, #tpu.memory_space<vmem>>, vector<64x8xf32>
    %cst_92 = arith.constant 0.000000e+00 : f32
    %144 = vector.broadcast %cst_92 : f32 to vector<64x8xf32>
    %145 = arith.select %139, %143, %144 : vector<64x8xi1>, vector<64x8xf32>
    %146 = arith.truncf %145 : vector<64x8xf32> to vector<64x8xbf16>
    %c0_93 = arith.constant 0 : index
    %c0_94 = arith.constant 0 : index
    %c0_95 = arith.constant 0 : index
    %147 = vector.load %arg5[%c0_93, %c0_94, %c0_95] : memref<9x8x16xbf16, #tpu.memory_space<vmem>>, vector<1x8x16xbf16>
    %148 = vector.shape_cast %147 : vector<1x8x16xbf16> to vector<8x16xbf16>
    %cst_96 = arith.constant dense<0.000000e+00> : vector<64x16xf32>
    %149 = tpu.matmul %146, %148, %cst_96 {dimension_numbers = #tpu.dot_dimension_numbers<[1], [0], [0], [1], [0, 0, 1, 1], [], []>} : vector<64x8xbf16>, vector<8x16xbf16>, vector<64x16xf32> -> vector<64x16xf32>
    %150 = arith.addf %142, %149 : vector<64x16xf32>
    %c8_97 = arith.constant 8 : index
    %c0_98 = arith.constant 0 : index
    %151 = vector.load %arg16[%c8_97, %c0_98] : memref<96x8xf32, #tpu.memory_space<vmem>>, vector<64x8xf32>
    %152 = arith.truncf %151 : vector<64x8xf32> to vector<64x8xbf16>
    %c1_99 = arith.constant 1 : index
    %c0_100 = arith.constant 0 : index
    %c0_101 = arith.constant 0 : index
    %153 = vector.load %arg5[%c1_99, %c0_100, %c0_101] : memref<9x8x16xbf16, #tpu.memory_space<vmem>>, vector<1x8x16xbf16>
    %154 = vector.shape_cast %153 : vector<1x8x16xbf16> to vector<8x16xbf16>
    %cst_102 = arith.constant dense<0.000000e+00> : vector<64x16xf32>
    %155 = tpu.matmul %152, %154, %cst_102 {dimension_numbers = #tpu.dot_dimension_numbers<[1], [0], [0], [1], [0, 0, 1, 1], [], []>} : vector<64x8xbf16>, vector<8x16xbf16>, vector<64x16xf32> -> vector<64x16xf32>
    %156 = arith.addf %150, %155 : vector<64x16xf32>
    %c9_103 = arith.constant 9 : index
    %c0_104 = arith.constant 0 : index
    %157 = vector.load %arg16[%c9_103, %c0_104] : memref<96x8xf32, #tpu.memory_space<vmem>>, vector<64x8xf32>
    %cst_105 = arith.constant 0.000000e+00 : f32
    %158 = vector.broadcast %cst_105 : f32 to vector<64x8xf32>
    %159 = arith.select %141, %157, %158 : vector<64x8xi1>, vector<64x8xf32>
    %160 = arith.truncf %159 : vector<64x8xf32> to vector<64x8xbf16>
    %c2_106 = arith.constant 2 : index
    %c0_107 = arith.constant 0 : index
    %c0_108 = arith.constant 0 : index
    %161 = vector.load %arg5[%c2_106, %c0_107, %c0_108] : memref<9x8x16xbf16, #tpu.memory_space<vmem>>, vector<1x8x16xbf16>
    %162 = vector.shape_cast %161 : vector<1x8x16xbf16> to vector<8x16xbf16>
    %cst_109 = arith.constant dense<0.000000e+00> : vector<64x16xf32>
    %163 = tpu.matmul %160, %162, %cst_109 {dimension_numbers = #tpu.dot_dimension_numbers<[1], [0], [0], [1], [0, 0, 1, 1], [], []>} : vector<64x8xbf16>, vector<8x16xbf16>, vector<64x16xf32> -> vector<64x16xf32>
    %164 = arith.addf %156, %163 : vector<64x16xf32>
    %c15 = arith.constant 15 : index
    %c0_110 = arith.constant 0 : index
    %165 = vector.load %arg16[%c15, %c0_110] : memref<96x8xf32, #tpu.memory_space<vmem>>, vector<64x8xf32>
    %cst_111 = arith.constant 0.000000e+00 : f32
    %166 = vector.broadcast %cst_111 : f32 to vector<64x8xf32>
    %167 = arith.select %139, %165, %166 : vector<64x8xi1>, vector<64x8xf32>
    %168 = arith.truncf %167 : vector<64x8xf32> to vector<64x8xbf16>
    %c3_112 = arith.constant 3 : index
    %c0_113 = arith.constant 0 : index
    %c0_114 = arith.constant 0 : index
    %169 = vector.load %arg5[%c3_112, %c0_113, %c0_114] : memref<9x8x16xbf16, #tpu.memory_space<vmem>>, vector<1x8x16xbf16>
    %170 = vector.shape_cast %169 : vector<1x8x16xbf16> to vector<8x16xbf16>
    %cst_115 = arith.constant dense<0.000000e+00> : vector<64x16xf32>
    %171 = tpu.matmul %168, %170, %cst_115 {dimension_numbers = #tpu.dot_dimension_numbers<[1], [0], [0], [1], [0, 0, 1, 1], [], []>} : vector<64x8xbf16>, vector<8x16xbf16>, vector<64x16xf32> -> vector<64x16xf32>
    %172 = arith.addf %164, %171 : vector<64x16xf32>
    %c16_116 = arith.constant 16 : index
    %c0_117 = arith.constant 0 : index
    %173 = vector.load %arg16[%c16_116, %c0_117] : memref<96x8xf32, #tpu.memory_space<vmem>>, vector<64x8xf32>
    %174 = arith.truncf %173 : vector<64x8xf32> to vector<64x8xbf16>
    %c4_118 = arith.constant 4 : index
    %c0_119 = arith.constant 0 : index
    %c0_120 = arith.constant 0 : index
    %175 = vector.load %arg5[%c4_118, %c0_119, %c0_120] : memref<9x8x16xbf16, #tpu.memory_space<vmem>>, vector<1x8x16xbf16>
    %176 = vector.shape_cast %175 : vector<1x8x16xbf16> to vector<8x16xbf16>
    %cst_121 = arith.constant dense<0.000000e+00> : vector<64x16xf32>
    %177 = tpu.matmul %174, %176, %cst_121 {dimension_numbers = #tpu.dot_dimension_numbers<[1], [0], [0], [1], [0, 0, 1, 1], [], []>} : vector<64x8xbf16>, vector<8x16xbf16>, vector<64x16xf32> -> vector<64x16xf32>
    %178 = arith.addf %172, %177 : vector<64x16xf32>
    %c17 = arith.constant 17 : index
    %c0_122 = arith.constant 0 : index
    %179 = vector.load %arg16[%c17, %c0_122] : memref<96x8xf32, #tpu.memory_space<vmem>>, vector<64x8xf32>
    %cst_123 = arith.constant 0.000000e+00 : f32
    %180 = vector.broadcast %cst_123 : f32 to vector<64x8xf32>
    %181 = arith.select %141, %179, %180 : vector<64x8xi1>, vector<64x8xf32>
    %182 = arith.truncf %181 : vector<64x8xf32> to vector<64x8xbf16>
    %c5_124 = arith.constant 5 : index
    %c0_125 = arith.constant 0 : index
    %c0_126 = arith.constant 0 : index
    %183 = vector.load %arg5[%c5_124, %c0_125, %c0_126] : memref<9x8x16xbf16, #tpu.memory_space<vmem>>, vector<1x8x16xbf16>
    %184 = vector.shape_cast %183 : vector<1x8x16xbf16> to vector<8x16xbf16>
    %cst_127 = arith.constant dense<0.000000e+00> : vector<64x16xf32>
    %185 = tpu.matmul %182, %184, %cst_127 {dimension_numbers = #tpu.dot_dimension_numbers<[1], [0], [0], [1], [0, 0, 1, 1], [], []>} : vector<64x8xbf16>, vector<8x16xbf16>, vector<64x16xf32> -> vector<64x16xf32>
    %186 = arith.addf %178, %185 : vector<64x16xf32>
    %c23_128 = arith.constant 23 : index
    %c0_129 = arith.constant 0 : index
    %187 = vector.load %arg16[%c23_128, %c0_129] : memref<96x8xf32, #tpu.memory_space<vmem>>, vector<64x8xf32>
    %cst_130 = arith.constant 0.000000e+00 : f32
    %188 = vector.broadcast %cst_130 : f32 to vector<64x8xf32>
    %189 = arith.select %139, %187, %188 : vector<64x8xi1>, vector<64x8xf32>
    %190 = arith.truncf %189 : vector<64x8xf32> to vector<64x8xbf16>
    %c6_131 = arith.constant 6 : index
    %c0_132 = arith.constant 0 : index
    %c0_133 = arith.constant 0 : index
    %191 = vector.load %arg5[%c6_131, %c0_132, %c0_133] : memref<9x8x16xbf16, #tpu.memory_space<vmem>>, vector<1x8x16xbf16>
    %192 = vector.shape_cast %191 : vector<1x8x16xbf16> to vector<8x16xbf16>
    %cst_134 = arith.constant dense<0.000000e+00> : vector<64x16xf32>
    %193 = tpu.matmul %190, %192, %cst_134 {dimension_numbers = #tpu.dot_dimension_numbers<[1], [0], [0], [1], [0, 0, 1, 1], [], []>} : vector<64x8xbf16>, vector<8x16xbf16>, vector<64x16xf32> -> vector<64x16xf32>
    %194 = arith.addf %186, %193 : vector<64x16xf32>
    %c24_135 = arith.constant 24 : index
    %c0_136 = arith.constant 0 : index
    %195 = vector.load %arg16[%c24_135, %c0_136] : memref<96x8xf32, #tpu.memory_space<vmem>>, vector<64x8xf32>
    %196 = arith.truncf %195 : vector<64x8xf32> to vector<64x8xbf16>
    %c7_137 = arith.constant 7 : index
    %c0_138 = arith.constant 0 : index
    %c0_139 = arith.constant 0 : index
    %197 = vector.load %arg5[%c7_137, %c0_138, %c0_139] : memref<9x8x16xbf16, #tpu.memory_space<vmem>>, vector<1x8x16xbf16>
    %198 = vector.shape_cast %197 : vector<1x8x16xbf16> to vector<8x16xbf16>
    %cst_140 = arith.constant dense<0.000000e+00> : vector<64x16xf32>
    %199 = tpu.matmul %196, %198, %cst_140 {dimension_numbers = #tpu.dot_dimension_numbers<[1], [0], [0], [1], [0, 0, 1, 1], [], []>} : vector<64x8xbf16>, vector<8x16xbf16>, vector<64x16xf32> -> vector<64x16xf32>
    %200 = arith.addf %194, %199 : vector<64x16xf32>
    %c25_141 = arith.constant 25 : index
    %c0_142 = arith.constant 0 : index
    %201 = vector.load %arg16[%c25_141, %c0_142] : memref<96x8xf32, #tpu.memory_space<vmem>>, vector<64x8xf32>
    %cst_143 = arith.constant 0.000000e+00 : f32
    %202 = vector.broadcast %cst_143 : f32 to vector<64x8xf32>
    %203 = arith.select %141, %201, %202 : vector<64x8xi1>, vector<64x8xf32>
    %204 = arith.truncf %203 : vector<64x8xf32> to vector<64x8xbf16>
    %c8_144 = arith.constant 8 : index
    %c0_145 = arith.constant 0 : index
    %c0_146 = arith.constant 0 : index
    %205 = vector.load %arg5[%c8_144, %c0_145, %c0_146] : memref<9x8x16xbf16, #tpu.memory_space<vmem>>, vector<1x8x16xbf16>
    %206 = vector.shape_cast %205 : vector<1x8x16xbf16> to vector<8x16xbf16>
    %cst_147 = arith.constant dense<0.000000e+00> : vector<64x16xf32>
    %207 = tpu.matmul %204, %206, %cst_147 {dimension_numbers = #tpu.dot_dimension_numbers<[1], [0], [0], [1], [0, 0, 1, 1], [], []>} : vector<64x8xbf16>, vector<8x16xbf16>, vector<64x16xf32> -> vector<64x16xf32>
    %208 = arith.addf %200, %207 : vector<64x16xf32>
    %c0_148 = arith.constant 0 : index
    %c0_149 = arith.constant 0 : index
    %209 = vector.load %arg6[%c0_148, %c0_149] : memref<1x16xf32, #tpu.memory_space<vmem>>, vector<1x16xf32>
    %210 = vector.broadcast %209 : vector<1x16xf32> to vector<64x16xf32>
    %211 = arith.addf %208, %210 : vector<64x16xf32>
    %cst_150 = arith.constant 0.000000e+00 : f32
    %212 = vector.broadcast %cst_150 : f32 to vector<64x16xf32>
    %213 = arith.maximumf %211, %212 : vector<64x16xf32>
    %214 = arith.truncf %213 : vector<64x16xf32> to vector<64x16xbf16>
    %c0_151 = arith.constant 0 : index
    %c0_152 = arith.constant 0 : index
    %c0_153 = arith.constant 0 : index
    %215 = vector.load %arg7[%c0_151, %c0_152, %c0_153] : memref<4x16x64xbf16, #tpu.memory_space<vmem>>, vector<1x16x64xbf16>
    %216 = vector.shape_cast %215 : vector<1x16x64xbf16> to vector<16x64xbf16>
    %cst_154 = arith.constant dense<0.000000e+00> : vector<16x16xf32>
    %217 = tpu.matmul %216, %214, %cst_154 {dimension_numbers = #tpu.dot_dimension_numbers<[1], [0], [0], [1], [0, 0, 1, 1], [], []>} : vector<16x64xbf16>, vector<64x16xbf16>, vector<16x16xf32> -> vector<16x16xf32>
    %c1_155 = arith.constant 1 : index
    %c0_156 = arith.constant 0 : index
    %c0_157 = arith.constant 0 : index
    %218 = vector.load %arg7[%c1_155, %c0_156, %c0_157] : memref<4x16x64xbf16, #tpu.memory_space<vmem>>, vector<1x16x64xbf16>
    %219 = vector.shape_cast %218 : vector<1x16x64xbf16> to vector<16x64xbf16>
    %cst_158 = arith.constant dense<0.000000e+00> : vector<16x16xf32>
    %220 = tpu.matmul %219, %214, %cst_158 {dimension_numbers = #tpu.dot_dimension_numbers<[1], [0], [0], [1], [0, 0, 1, 1], [], []>} : vector<16x64xbf16>, vector<64x16xbf16>, vector<16x16xf32> -> vector<16x16xf32>
    %221 = arith.maximumf %217, %220 : vector<16x16xf32>
    %c2_159 = arith.constant 2 : index
    %c0_160 = arith.constant 0 : index
    %c0_161 = arith.constant 0 : index
    %222 = vector.load %arg7[%c2_159, %c0_160, %c0_161] : memref<4x16x64xbf16, #tpu.memory_space<vmem>>, vector<1x16x64xbf16>
    %223 = vector.shape_cast %222 : vector<1x16x64xbf16> to vector<16x64xbf16>
    %cst_162 = arith.constant dense<0.000000e+00> : vector<16x16xf32>
    %224 = tpu.matmul %223, %214, %cst_162 {dimension_numbers = #tpu.dot_dimension_numbers<[1], [0], [0], [1], [0, 0, 1, 1], [], []>} : vector<16x64xbf16>, vector<64x16xbf16>, vector<16x16xf32> -> vector<16x16xf32>
    %225 = arith.maximumf %221, %224 : vector<16x16xf32>
    %c3_163 = arith.constant 3 : index
    %c0_164 = arith.constant 0 : index
    %c0_165 = arith.constant 0 : index
    %226 = vector.load %arg7[%c3_163, %c0_164, %c0_165] : memref<4x16x64xbf16, #tpu.memory_space<vmem>>, vector<1x16x64xbf16>
    %227 = vector.shape_cast %226 : vector<1x16x64xbf16> to vector<16x64xbf16>
    %cst_166 = arith.constant dense<0.000000e+00> : vector<16x16xf32>
    %228 = tpu.matmul %227, %214, %cst_166 {dimension_numbers = #tpu.dot_dimension_numbers<[1], [0], [0], [1], [0, 0, 1, 1], [], []>} : vector<16x64xbf16>, vector<64x16xbf16>, vector<16x16xf32> -> vector<16x16xf32>
    %229 = arith.maximumf %225, %228 : vector<16x16xf32>
    %c0_167 = arith.constant 0 : index
    %c0_168 = arith.constant 0 : index
    %230 = vector.load %arg10[%c0_167, %c0_168] : memref<64x16xbf16, #tpu.memory_space<vmem>>, vector<64x16xbf16>
    %231 = arith.truncf %229 : vector<16x16xf32> to vector<16x16xbf16>
    %cst_169 = arith.constant dense<0.000000e+00> : vector<64x16xf32>
    %232 = tpu.matmul %230, %231, %cst_169 {dimension_numbers = #tpu.dot_dimension_numbers<[1], [0], [0], [1], [0, 0, 1, 1], [], []>} : vector<64x16xbf16>, vector<16x16xbf16>, vector<64x16xf32> -> vector<64x16xf32>
    %cst_170 = arith.constant 0.000000e+00 : f32
    %233 = vector.broadcast %cst_170 : f32 to vector<16x16xf32>
    %c0_171 = arith.constant 0 : index
    %c0_172 = arith.constant 0 : index
    %234 = vector.load %arg17[%c0_171, %c0_172] : memref<96x16xf32, #tpu.memory_space<vmem>>, vector<16x16xf32>
    tpu.vector_store %arg17[%c0_171, %c0_172], %233 {strides = array<i32>} : memref<96x16xf32, #tpu.memory_space<vmem>>, vector<16x16xf32>,
    %cst_173 = arith.constant 0.000000e+00 : f32
    %235 = vector.broadcast %cst_173 : f32 to vector<16x16xf32>
    %c80_174 = arith.constant 80 : index
    %c0_175 = arith.constant 0 : index
    %236 = vector.load %arg17[%c80_174, %c0_175] : memref<96x16xf32, #tpu.memory_space<vmem>>, vector<16x16xf32>
    tpu.vector_store %arg17[%c80_174, %c0_175], %235 {strides = array<i32>} : memref<96x16xf32, #tpu.memory_space<vmem>>, vector<16x16xf32>,
    %c16_176 = arith.constant 16 : index
    %c0_177 = arith.constant 0 : index
    %237 = vector.load %arg17[%c16_176, %c0_177] : memref<96x16xf32, #tpu.memory_space<vmem>>, vector<64x16xf32>
    tpu.vector_store %arg17[%c16_176, %c0_177], %232 {strides = array<i32>} : memref<96x16xf32, #tpu.memory_space<vmem>>, vector<64x16xf32>,
    %238 = tpu.iota {dimensions = array<i32: 0>} : vector<64x16xi32>
    %c8_i32_178 = arith.constant 8 : i32
    %c0_i32_179 = arith.constant 0 : i32
    %239 = arith.cmpi eq, %c8_i32_178, %c0_i32_179 : i32
    %c1_i32_180 = arith.constant 1 : i32
    %240 = arith.select %239, %c1_i32_180, %c8_i32_178 : i32
    %241 = vector.broadcast %240 : i32 to vector<64x16xi32>
    %242 = arith.remsi %238, %241 : vector<64x16xi32>
    %c0_i32_181 = arith.constant 0 : i32
    %243 = vector.broadcast %c0_i32_181 : i32 to vector<64x16xi32>
    %244 = arith.cmpi ne, %242, %243 : vector<64x16xi32>
    %c0_i32_182 = arith.constant 0 : i32
    %245 = vector.broadcast %c0_i32_182 : i32 to vector<64x16xi32>
    %246 = arith.cmpi slt, %242, %245 : vector<64x16xi32>
    %c0_i32_183 = arith.constant 0 : i32
    %247 = arith.cmpi slt, %240, %c0_i32_183 : i32
    %248 = vector.broadcast %247 : i1 to vector<64x16xi1>
    %249 = vector.broadcast %248 : vector<64x16xi1> to vector<64x16xi1>
    %250 = arith.xori %246, %249 : vector<64x16xi1>
    %251 = arith.andi %250, %244 : vector<64x16xi1>
    %252 = vector.broadcast %240 : i32 to vector<64x16xi32>
    %253 = arith.addi %242, %252 : vector<64x16xi32>
    %254 = arith.select %251, %253, %242 : vector<64x16xi1>, vector<64x16xi32>
    %c0_i32_184 = arith.constant 0 : i32
    %255 = vector.broadcast %c0_i32_184 : i32 to vector<64x16xi32>
    %256 = arith.cmpi ne, %254, %255 : vector<64x16xi32>
    %c7_i32_185 = arith.constant 7 : i32
    %257 = vector.broadcast %c7_i32_185 : i32 to vector<64x16xi32>
    %258 = arith.cmpi ne, %254, %257 : vector<64x16xi32>
    %cst_186 = arith.constant 0.000000e+00 : f32
    %259 = vector.broadcast %cst_186 : f32 to vector<64x8xf32>
    %c7_187 = arith.constant 7 : index
    %c0_188 = arith.constant 0 : index
    %260 = vector.load %arg17[%c7_187, %c0_188] : memref<96x16xf32, #tpu.memory_space<vmem>>, vector<64x16xf32>
    %cst_189 = arith.constant 0.000000e+00 : f32
    %261 = vector.broadcast %cst_189 : f32 to vector<64x16xf32>
    %262 = arith.select %256, %260, %261 : vector<64x16xi1>, vector<64x16xf32>
    %263 = arith.truncf %262 : vector<64x16xf32> to vector<64x16xbf16>
    %c0_190 = arith.constant 0 : index
    %c0_191 = arith.constant 0 : index
    %c0_192 = arith.constant 0 : index
    %264 = vector.load %arg8[%c0_190, %c0_191, %c0_192] : memref<9x16x8xbf16, #tpu.memory_space<vmem>>, vector<1x16x8xbf16>
    %265 = vector.shape_cast %264 : vector<1x16x8xbf16> to vector<16x8xbf16>
    %cst_193 = arith.constant dense<0.000000e+00> : vector<64x8xf32>
    %266 = tpu.matmul %263, %265, %cst_193 {dimension_numbers = #tpu.dot_dimension_numbers<[1], [0], [0], [1], [0, 0, 1, 1], [], []>} : vector<64x16xbf16>, vector<16x8xbf16>, vector<64x8xf32> -> vector<64x8xf32>
    %267 = arith.addf %259, %266 : vector<64x8xf32>
    %c8_194 = arith.constant 8 : index
    %c0_195 = arith.constant 0 : index
    %268 = vector.load %arg17[%c8_194, %c0_195] : memref<96x16xf32, #tpu.memory_space<vmem>>, vector<64x16xf32>
    %269 = arith.truncf %268 : vector<64x16xf32> to vector<64x16xbf16>
    %c1_196 = arith.constant 1 : index
    %c0_197 = arith.constant 0 : index
    %c0_198 = arith.constant 0 : index
    %270 = vector.load %arg8[%c1_196, %c0_197, %c0_198] : memref<9x16x8xbf16, #tpu.memory_space<vmem>>, vector<1x16x8xbf16>
    %271 = vector.shape_cast %270 : vector<1x16x8xbf16> to vector<16x8xbf16>
    %cst_199 = arith.constant dense<0.000000e+00> : vector<64x8xf32>
    %272 = tpu.matmul %269, %271, %cst_199 {dimension_numbers = #tpu.dot_dimension_numbers<[1], [0], [0], [1], [0, 0, 1, 1], [], []>} : vector<64x16xbf16>, vector<16x8xbf16>, vector<64x8xf32> -> vector<64x8xf32>
    %273 = arith.addf %267, %272 : vector<64x8xf32>
    %c9_200 = arith.constant 9 : index
    %c0_201 = arith.constant 0 : index
    %274 = vector.load %arg17[%c9_200, %c0_201] : memref<96x16xf32, #tpu.memory_space<vmem>>, vector<64x16xf32>
    %cst_202 = arith.constant 0.000000e+00 : f32
    %275 = vector.broadcast %cst_202 : f32 to vector<64x16xf32>
    %276 = arith.select %258, %274, %275 : vector<64x16xi1>, vector<64x16xf32>
    %277 = arith.truncf %276 : vector<64x16xf32> to vector<64x16xbf16>
    %c2_203 = arith.constant 2 : index
    %c0_204 = arith.constant 0 : index
    %c0_205 = arith.constant 0 : index
    %278 = vector.load %arg8[%c2_203, %c0_204, %c0_205] : memref<9x16x8xbf16, #tpu.memory_space<vmem>>, vector<1x16x8xbf16>
    %279 = vector.shape_cast %278 : vector<1x16x8xbf16> to vector<16x8xbf16>
    %cst_206 = arith.constant dense<0.000000e+00> : vector<64x8xf32>
    %280 = tpu.matmul %277, %279, %cst_206 {dimension_numbers = #tpu.dot_dimension_numbers<[1], [0], [0], [1], [0, 0, 1, 1], [], []>} : vector<64x16xbf16>, vector<16x8xbf16>, vector<64x8xf32> -> vector<64x8xf32>
    %281 = arith.addf %273, %280 : vector<64x8xf32>
    %c15_207 = arith.constant 15 : index
    %c0_208 = arith.constant 0 : index
    %282 = vector.load %arg17[%c15_207, %c0_208] : memref<96x16xf32, #tpu.memory_space<vmem>>, vector<64x16xf32>
    %cst_209 = arith.constant 0.000000e+00 : f32
    %283 = vector.broadcast %cst_209 : f32 to vector<64x16xf32>
    %284 = arith.select %256, %282, %283 : vector<64x16xi1>, vector<64x16xf32>
    %285 = arith.truncf %284 : vector<64x16xf32> to vector<64x16xbf16>
    %c3_210 = arith.constant 3 : index
    %c0_211 = arith.constant 0 : index
    %c0_212 = arith.constant 0 : index
    %286 = vector.load %arg8[%c3_210, %c0_211, %c0_212] : memref<9x16x8xbf16, #tpu.memory_space<vmem>>, vector<1x16x8xbf16>
    %287 = vector.shape_cast %286 : vector<1x16x8xbf16> to vector<16x8xbf16>
    %cst_213 = arith.constant dense<0.000000e+00> : vector<64x8xf32>
    %288 = tpu.matmul %285, %287, %cst_213 {dimension_numbers = #tpu.dot_dimension_numbers<[1], [0], [0], [1], [0, 0, 1, 1], [], []>} : vector<64x16xbf16>, vector<16x8xbf16>, vector<64x8xf32> -> vector<64x8xf32>
    %289 = arith.addf %281, %288 : vector<64x8xf32>
    %c16_214 = arith.constant 16 : index
    %c0_215 = arith.constant 0 : index
    %290 = vector.load %arg17[%c16_214, %c0_215] : memref<96x16xf32, #tpu.memory_space<vmem>>, vector<64x16xf32>
    %291 = arith.truncf %290 : vector<64x16xf32> to vector<64x16xbf16>
    %c4_216 = arith.constant 4 : index
    %c0_217 = arith.constant 0 : index
    %c0_218 = arith.constant 0 : index
    %292 = vector.load %arg8[%c4_216, %c0_217, %c0_218] : memref<9x16x8xbf16, #tpu.memory_space<vmem>>, vector<1x16x8xbf16>
    %293 = vector.shape_cast %292 : vector<1x16x8xbf16> to vector<16x8xbf16>
    %cst_219 = arith.constant dense<0.000000e+00> : vector<64x8xf32>
    %294 = tpu.matmul %291, %293, %cst_219 {dimension_numbers = #tpu.dot_dimension_numbers<[1], [0], [0], [1], [0, 0, 1, 1], [], []>} : vector<64x16xbf16>, vector<16x8xbf16>, vector<64x8xf32> -> vector<64x8xf32>
    %295 = arith.addf %289, %294 : vector<64x8xf32>
    %c17_220 = arith.constant 17 : index
    %c0_221 = arith.constant 0 : index
    %296 = vector.load %arg17[%c17_220, %c0_221] : memref<96x16xf32, #tpu.memory_space<vmem>>, vector<64x16xf32>
    %cst_222 = arith.constant 0.000000e+00 : f32
    %297 = vector.broadcast %cst_222 : f32 to vector<64x16xf32>
    %298 = arith.select %258, %296, %297 : vector<64x16xi1>, vector<64x16xf32>
    %299 = arith.truncf %298 : vector<64x16xf32> to vector<64x16xbf16>
    %c5_223 = arith.constant 5 : index
    %c0_224 = arith.constant 0 : index
    %c0_225 = arith.constant 0 : index
    %300 = vector.load %arg8[%c5_223, %c0_224, %c0_225] : memref<9x16x8xbf16, #tpu.memory_space<vmem>>, vector<1x16x8xbf16>
    %301 = vector.shape_cast %300 : vector<1x16x8xbf16> to vector<16x8xbf16>
    %cst_226 = arith.constant dense<0.000000e+00> : vector<64x8xf32>
    %302 = tpu.matmul %299, %301, %cst_226 {dimension_numbers = #tpu.dot_dimension_numbers<[1], [0], [0], [1], [0, 0, 1, 1], [], []>} : vector<64x16xbf16>, vector<16x8xbf16>, vector<64x8xf32> -> vector<64x8xf32>
    %303 = arith.addf %295, %302 : vector<64x8xf32>
    %c23_227 = arith.constant 23 : index
    %c0_228 = arith.constant 0 : index
    %304 = vector.load %arg17[%c23_227, %c0_228] : memref<96x16xf32, #tpu.memory_space<vmem>>, vector<64x16xf32>
    %cst_229 = arith.constant 0.000000e+00 : f32
    %305 = vector.broadcast %cst_229 : f32 to vector<64x16xf32>
    %306 = arith.select %256, %304, %305 : vector<64x16xi1>, vector<64x16xf32>
    %307 = arith.truncf %306 : vector<64x16xf32> to vector<64x16xbf16>
    %c6_230 = arith.constant 6 : index
    %c0_231 = arith.constant 0 : index
    %c0_232 = arith.constant 0 : index
    %308 = vector.load %arg8[%c6_230, %c0_231, %c0_232] : memref<9x16x8xbf16, #tpu.memory_space<vmem>>, vector<1x16x8xbf16>
    %309 = vector.shape_cast %308 : vector<1x16x8xbf16> to vector<16x8xbf16>
    %cst_233 = arith.constant dense<0.000000e+00> : vector<64x8xf32>
    %310 = tpu.matmul %307, %309, %cst_233 {dimension_numbers = #tpu.dot_dimension_numbers<[1], [0], [0], [1], [0, 0, 1, 1], [], []>} : vector<64x16xbf16>, vector<16x8xbf16>, vector<64x8xf32> -> vector<64x8xf32>
    %311 = arith.addf %303, %310 : vector<64x8xf32>
    %c24_234 = arith.constant 24 : index
    %c0_235 = arith.constant 0 : index
    %312 = vector.load %arg17[%c24_234, %c0_235] : memref<96x16xf32, #tpu.memory_space<vmem>>, vector<64x16xf32>
    %313 = arith.truncf %312 : vector<64x16xf32> to vector<64x16xbf16>
    %c7_236 = arith.constant 7 : index
    %c0_237 = arith.constant 0 : index
    %c0_238 = arith.constant 0 : index
    %314 = vector.load %arg8[%c7_236, %c0_237, %c0_238] : memref<9x16x8xbf16, #tpu.memory_space<vmem>>, vector<1x16x8xbf16>
    %315 = vector.shape_cast %314 : vector<1x16x8xbf16> to vector<16x8xbf16>
    %cst_239 = arith.constant dense<0.000000e+00> : vector<64x8xf32>
    %316 = tpu.matmul %313, %315, %cst_239 {dimension_numbers = #tpu.dot_dimension_numbers<[1], [0], [0], [1], [0, 0, 1, 1], [], []>} : vector<64x16xbf16>, vector<16x8xbf16>, vector<64x8xf32> -> vector<64x8xf32>
    %317 = arith.addf %311, %316 : vector<64x8xf32>
    %c25_240 = arith.constant 25 : index
    %c0_241 = arith.constant 0 : index
    %318 = vector.load %arg17[%c25_240, %c0_241] : memref<96x16xf32, #tpu.memory_space<vmem>>, vector<64x16xf32>
    %cst_242 = arith.constant 0.000000e+00 : f32
    %319 = vector.broadcast %cst_242 : f32 to vector<64x16xf32>
    %320 = arith.select %258, %318, %319 : vector<64x16xi1>, vector<64x16xf32>
    %321 = arith.truncf %320 : vector<64x16xf32> to vector<64x16xbf16>
    %c8_243 = arith.constant 8 : index
    %c0_244 = arith.constant 0 : index
    %c0_245 = arith.constant 0 : index
    %322 = vector.load %arg8[%c8_243, %c0_244, %c0_245] : memref<9x16x8xbf16, #tpu.memory_space<vmem>>, vector<1x16x8xbf16>
    %323 = vector.shape_cast %322 : vector<1x16x8xbf16> to vector<16x8xbf16>
    %cst_246 = arith.constant dense<0.000000e+00> : vector<64x8xf32>
    %324 = tpu.matmul %321, %323, %cst_246 {dimension_numbers = #tpu.dot_dimension_numbers<[1], [0], [0], [1], [0, 0, 1, 1], [], []>} : vector<64x16xbf16>, vector<16x8xbf16>, vector<64x8xf32> -> vector<64x8xf32>
    %325 = arith.addf %317, %324 : vector<64x8xf32>
    %c0_247 = arith.constant 0 : index
    %c0_248 = arith.constant 0 : index
    %326 = vector.load %arg9[%c0_247, %c0_248] : memref<1x8xf32, #tpu.memory_space<vmem>>, vector<1x8xf32>
    %327 = vector.broadcast %326 : vector<1x8xf32> to vector<64x8xf32>
    %328 = arith.addf %325, %327 : vector<64x8xf32>
    %cst_249 = arith.constant 0.000000e+00 : f32
    %329 = vector.broadcast %cst_249 : f32 to vector<64x8xf32>
    %330 = arith.maximumf %328, %329 : vector<64x8xf32>
    %c0_250 = arith.constant 0 : index
    %c0_251 = arith.constant 0 : index
    %331 = vector.load %arg13[%c0_250, %c0_251] : memref<256x64xbf16, #tpu.memory_space<vmem>>, vector<256x64xbf16>
    %332 = arith.truncf %330 : vector<64x8xf32> to vector<64x8xbf16>
    %cst_252 = arith.constant dense<0.000000e+00> : vector<256x8xf32>
    %333 = tpu.matmul %331, %332, %cst_252 {dimension_numbers = #tpu.dot_dimension_numbers<[1], [0], [0], [1], [0, 0, 1, 1], [], []>} : vector<256x64xbf16>, vector<64x8xbf16>, vector<256x8xf32> -> vector<256x8xf32>
    %cst_253 = arith.constant 0.000000e+00 : f32
    %334 = vector.broadcast %cst_253 : f32 to vector<24x8xf32>
    %c0_254 = arith.constant 0 : index
    %c0_255 = arith.constant 0 : index
    %335 = vector.load %arg18[%c0_254, %c0_255] : memref<304x8xf32, #tpu.memory_space<vmem>>, vector<24x8xf32>
    tpu.vector_store %arg18[%c0_254, %c0_255], %334 {strides = array<i32>} : memref<304x8xf32, #tpu.memory_space<vmem>>, vector<24x8xf32>,
    %cst_256 = arith.constant 0.000000e+00 : f32
    %336 = vector.broadcast %cst_256 : f32 to vector<24x8xf32>
    %c280_257 = arith.constant 280 : index
    %c0_258 = arith.constant 0 : index
    %337 = vector.load %arg18[%c280_257, %c0_258] : memref<304x8xf32, #tpu.memory_space<vmem>>, vector<24x8xf32>
    tpu.vector_store %arg18[%c280_257, %c0_258], %336 {strides = array<i32>} : memref<304x8xf32, #tpu.memory_space<vmem>>, vector<24x8xf32>,
    %c24_259 = arith.constant 24 : index
    %c0_260 = arith.constant 0 : index
    %338 = vector.load %arg18[%c24_259, %c0_260] : memref<304x8xf32, #tpu.memory_space<vmem>>, vector<256x8xf32>
    tpu.vector_store %arg18[%c24_259, %c0_260], %333 {strides = array<i32>} : memref<304x8xf32, #tpu.memory_space<vmem>>, vector<256x8xf32>,
    %339 = tpu.iota {dimensions = array<i32: 0>} : vector<256x8xi32>
    %c16_i32_261 = arith.constant 16 : i32
    %c0_i32_262 = arith.constant 0 : i32
    %340 = arith.cmpi eq, %c16_i32_261, %c0_i32_262 : i32
    %c1_i32_263 = arith.constant 1 : i32
    %341 = arith.select %340, %c1_i32_263, %c16_i32_261 : i32
    %342 = vector.broadcast %341 : i32 to vector<256x8xi32>
    %343 = arith.remsi %339, %342 : vector<256x8xi32>
    %c0_i32_264 = arith.constant 0 : i32
    %344 = vector.broadcast %c0_i32_264 : i32 to vector<256x8xi32>
    %345 = arith.cmpi ne, %343, %344 : vector<256x8xi32>
    %c0_i32_265 = arith.constant 0 : i32
    %346 = vector.broadcast %c0_i32_265 : i32 to vector<256x8xi32>
    %347 = arith.cmpi slt, %343, %346 : vector<256x8xi32>
    %c0_i32_266 = arith.constant 0 : i32
    %348 = arith.cmpi slt, %341, %c0_i32_266 : i32
    %349 = vector.broadcast %348 : i1 to vector<256x8xi1>
    %350 = vector.broadcast %349 : vector<256x8xi1> to vector<256x8xi1>
    %351 = arith.xori %347, %350 : vector<256x8xi1>
    %352 = arith.andi %351, %345 : vector<256x8xi1>
    %353 = vector.broadcast %341 : i32 to vector<256x8xi32>
    %354 = arith.addi %343, %353 : vector<256x8xi32>
    %355 = arith.select %352, %354, %343 : vector<256x8xi1>, vector<256x8xi32>
    %c0_i32_267 = arith.constant 0 : i32
    %356 = vector.broadcast %c0_i32_267 : i32 to vector<256x8xi32>
    %357 = arith.cmpi ne, %355, %356 : vector<256x8xi32>
    %c15_i32_268 = arith.constant 15 : i32
    %358 = vector.broadcast %c15_i32_268 : i32 to vector<256x8xi32>
    %359 = arith.cmpi ne, %355, %358 : vector<256x8xi32>
    %cst_269 = arith.constant 0.000000e+00 : f32
    %360 = vector.broadcast %cst_269 : f32 to vector<256x3xf32>
    %c7_270 = arith.constant 7 : index
    %c0_271 = arith.constant 0 : index
    %361 = vector.load %arg18[%c7_270, %c0_271] : memref<304x8xf32, #tpu.memory_space<vmem>>, vector<256x8xf32>
    %cst_272 = arith.constant 0.000000e+00 : f32
    %362 = vector.broadcast %cst_272 : f32 to vector<256x8xf32>
    %363 = arith.select %357, %361, %362 : vector<256x8xi1>, vector<256x8xf32>
    %364 = arith.truncf %363 : vector<256x8xf32> to vector<256x8xbf16>
    %c0_273 = arith.constant 0 : index
    %c0_274 = arith.constant 0 : index
    %c0_275 = arith.constant 0 : index
    %365 = vector.load %arg11[%c0_273, %c0_274, %c0_275] : memref<9x8x3xbf16, #tpu.memory_space<vmem>>, vector<1x8x3xbf16>
    %366 = vector.shape_cast %365 : vector<1x8x3xbf16> to vector<8x3xbf16>
    %cst_276 = arith.constant dense<0.000000e+00> : vector<256x3xf32>
    %367 = tpu.matmul %364, %366, %cst_276 {dimension_numbers = #tpu.dot_dimension_numbers<[1], [0], [0], [1], [0, 0, 1, 1], [], []>} : vector<256x8xbf16>, vector<8x3xbf16>, vector<256x3xf32> -> vector<256x3xf32>
    %368 = arith.addf %360, %367 : vector<256x3xf32>
    %c8_277 = arith.constant 8 : index
    %c0_278 = arith.constant 0 : index
    %369 = vector.load %arg18[%c8_277, %c0_278] : memref<304x8xf32, #tpu.memory_space<vmem>>, vector<256x8xf32>
    %370 = arith.truncf %369 : vector<256x8xf32> to vector<256x8xbf16>
    %c1_279 = arith.constant 1 : index
    %c0_280 = arith.constant 0 : index
    %c0_281 = arith.constant 0 : index
    %371 = vector.load %arg11[%c1_279, %c0_280, %c0_281] : memref<9x8x3xbf16, #tpu.memory_space<vmem>>, vector<1x8x3xbf16>
    %372 = vector.shape_cast %371 : vector<1x8x3xbf16> to vector<8x3xbf16>
    %cst_282 = arith.constant dense<0.000000e+00> : vector<256x3xf32>
    %373 = tpu.matmul %370, %372, %cst_282 {dimension_numbers = #tpu.dot_dimension_numbers<[1], [0], [0], [1], [0, 0, 1, 1], [], []>} : vector<256x8xbf16>, vector<8x3xbf16>, vector<256x3xf32> -> vector<256x3xf32>
    %374 = arith.addf %368, %373 : vector<256x3xf32>
    %c9_283 = arith.constant 9 : index
    %c0_284 = arith.constant 0 : index
    %375 = vector.load %arg18[%c9_283, %c0_284] : memref<304x8xf32, #tpu.memory_space<vmem>>, vector<256x8xf32>
    %cst_285 = arith.constant 0.000000e+00 : f32
    %376 = vector.broadcast %cst_285 : f32 to vector<256x8xf32>
    %377 = arith.select %359, %375, %376 : vector<256x8xi1>, vector<256x8xf32>
    %378 = arith.truncf %377 : vector<256x8xf32> to vector<256x8xbf16>
    %c2_286 = arith.constant 2 : index
    %c0_287 = arith.constant 0 : index
    %c0_288 = arith.constant 0 : index
    %379 = vector.load %arg11[%c2_286, %c0_287, %c0_288] : memref<9x8x3xbf16, #tpu.memory_space<vmem>>, vector<1x8x3xbf16>
    %380 = vector.shape_cast %379 : vector<1x8x3xbf16> to vector<8x3xbf16>
    %cst_289 = arith.constant dense<0.000000e+00> : vector<256x3xf32>
    %381 = tpu.matmul %378, %380, %cst_289 {dimension_numbers = #tpu.dot_dimension_numbers<[1], [0], [0], [1], [0, 0, 1, 1], [], []>} : vector<256x8xbf16>, vector<8x3xbf16>, vector<256x3xf32> -> vector<256x3xf32>
    %382 = arith.addf %374, %381 : vector<256x3xf32>
    %c23_290 = arith.constant 23 : index
    %c0_291 = arith.constant 0 : index
    %383 = vector.load %arg18[%c23_290, %c0_291] : memref<304x8xf32, #tpu.memory_space<vmem>>, vector<256x8xf32>
    %cst_292 = arith.constant 0.000000e+00 : f32
    %384 = vector.broadcast %cst_292 : f32 to vector<256x8xf32>
    %385 = arith.select %357, %383, %384 : vector<256x8xi1>, vector<256x8xf32>
    %386 = arith.truncf %385 : vector<256x8xf32> to vector<256x8xbf16>
    %c3_293 = arith.constant 3 : index
    %c0_294 = arith.constant 0 : index
    %c0_295 = arith.constant 0 : index
    %387 = vector.load %arg11[%c3_293, %c0_294, %c0_295] : memref<9x8x3xbf16, #tpu.memory_space<vmem>>, vector<1x8x3xbf16>
    %388 = vector.shape_cast %387 : vector<1x8x3xbf16> to vector<8x3xbf16>
    %cst_296 = arith.constant dense<0.000000e+00> : vector<256x3xf32>
    %389 = tpu.matmul %386, %388, %cst_296 {dimension_numbers = #tpu.dot_dimension_numbers<[1], [0], [0], [1], [0, 0, 1, 1], [], []>} : vector<256x8xbf16>, vector<8x3xbf16>, vector<256x3xf32> -> vector<256x3xf32>
    %390 = arith.addf %382, %389 : vector<256x3xf32>
    %c24_297 = arith.constant 24 : index
    %c0_298 = arith.constant 0 : index
    %391 = vector.load %arg18[%c24_297, %c0_298] : memref<304x8xf32, #tpu.memory_space<vmem>>, vector<256x8xf32>
    %392 = arith.truncf %391 : vector<256x8xf32> to vector<256x8xbf16>
    %c4_299 = arith.constant 4 : index
    %c0_300 = arith.constant 0 : index
    %c0_301 = arith.constant 0 : index
    %393 = vector.load %arg11[%c4_299, %c0_300, %c0_301] : memref<9x8x3xbf16, #tpu.memory_space<vmem>>, vector<1x8x3xbf16>
    %394 = vector.shape_cast %393 : vector<1x8x3xbf16> to vector<8x3xbf16>
    %cst_302 = arith.constant dense<0.000000e+00> : vector<256x3xf32>
    %395 = tpu.matmul %392, %394, %cst_302 {dimension_numbers = #tpu.dot_dimension_numbers<[1], [0], [0], [1], [0, 0, 1, 1], [], []>} : vector<256x8xbf16>, vector<8x3xbf16>, vector<256x3xf32> -> vector<256x3xf32>
    %396 = arith.addf %390, %395 : vector<256x3xf32>
    %c25_303 = arith.constant 25 : index
    %c0_304 = arith.constant 0 : index
    %397 = vector.load %arg18[%c25_303, %c0_304] : memref<304x8xf32, #tpu.memory_space<vmem>>, vector<256x8xf32>
    %cst_305 = arith.constant 0.000000e+00 : f32
    %398 = vector.broadcast %cst_305 : f32 to vector<256x8xf32>
    %399 = arith.select %359, %397, %398 : vector<256x8xi1>, vector<256x8xf32>
    %400 = arith.truncf %399 : vector<256x8xf32> to vector<256x8xbf16>
    %c5_306 = arith.constant 5 : index
    %c0_307 = arith.constant 0 : index
    %c0_308 = arith.constant 0 : index
    %401 = vector.load %arg11[%c5_306, %c0_307, %c0_308] : memref<9x8x3xbf16, #tpu.memory_space<vmem>>, vector<1x8x3xbf16>
    %402 = vector.shape_cast %401 : vector<1x8x3xbf16> to vector<8x3xbf16>
    %cst_309 = arith.constant dense<0.000000e+00> : vector<256x3xf32>
    %403 = tpu.matmul %400, %402, %cst_309 {dimension_numbers = #tpu.dot_dimension_numbers<[1], [0], [0], [1], [0, 0, 1, 1], [], []>} : vector<256x8xbf16>, vector<8x3xbf16>, vector<256x3xf32> -> vector<256x3xf32>
    %404 = arith.addf %396, %403 : vector<256x3xf32>
    %c39_310 = arith.constant 39 : index
    %c0_311 = arith.constant 0 : index
    %405 = vector.load %arg18[%c39_310, %c0_311] : memref<304x8xf32, #tpu.memory_space<vmem>>, vector<256x8xf32>
    %cst_312 = arith.constant 0.000000e+00 : f32
    %406 = vector.broadcast %cst_312 : f32 to vector<256x8xf32>
    %407 = arith.select %357, %405, %406 : vector<256x8xi1>, vector<256x8xf32>
    %408 = arith.truncf %407 : vector<256x8xf32> to vector<256x8xbf16>
    %c6_313 = arith.constant 6 : index
    %c0_314 = arith.constant 0 : index
    %c0_315 = arith.constant 0 : index
    %409 = vector.load %arg11[%c6_313, %c0_314, %c0_315] : memref<9x8x3xbf16, #tpu.memory_space<vmem>>, vector<1x8x3xbf16>
    %410 = vector.shape_cast %409 : vector<1x8x3xbf16> to vector<8x3xbf16>
    %cst_316 = arith.constant dense<0.000000e+00> : vector<256x3xf32>
    %411 = tpu.matmul %408, %410, %cst_316 {dimension_numbers = #tpu.dot_dimension_numbers<[1], [0], [0], [1], [0, 0, 1, 1], [], []>} : vector<256x8xbf16>, vector<8x3xbf16>, vector<256x3xf32> -> vector<256x3xf32>
    %412 = arith.addf %404, %411 : vector<256x3xf32>
    %c40_317 = arith.constant 40 : index
    %c0_318 = arith.constant 0 : index
    %413 = vector.load %arg18[%c40_317, %c0_318] : memref<304x8xf32, #tpu.memory_space<vmem>>, vector<256x8xf32>
    %414 = arith.truncf %413 : vector<256x8xf32> to vector<256x8xbf16>
    %c7_319 = arith.constant 7 : index
    %c0_320 = arith.constant 0 : index
    %c0_321 = arith.constant 0 : index
    %415 = vector.load %arg11[%c7_319, %c0_320, %c0_321] : memref<9x8x3xbf16, #tpu.memory_space<vmem>>, vector<1x8x3xbf16>
    %416 = vector.shape_cast %415 : vector<1x8x3xbf16> to vector<8x3xbf16>
    %cst_322 = arith.constant dense<0.000000e+00> : vector<256x3xf32>
    %417 = tpu.matmul %414, %416, %cst_322 {dimension_numbers = #tpu.dot_dimension_numbers<[1], [0], [0], [1], [0, 0, 1, 1], [], []>} : vector<256x8xbf16>, vector<8x3xbf16>, vector<256x3xf32> -> vector<256x3xf32>
    %418 = arith.addf %412, %417 : vector<256x3xf32>
    %c41_323 = arith.constant 41 : index
    %c0_324 = arith.constant 0 : index
    %419 = vector.load %arg18[%c41_323, %c0_324] : memref<304x8xf32, #tpu.memory_space<vmem>>, vector<256x8xf32>
    %cst_325 = arith.constant 0.000000e+00 : f32
    %420 = vector.broadcast %cst_325 : f32 to vector<256x8xf32>
    %421 = arith.select %359, %419, %420 : vector<256x8xi1>, vector<256x8xf32>
    %422 = arith.truncf %421 : vector<256x8xf32> to vector<256x8xbf16>
    %c8_326 = arith.constant 8 : index
    %c0_327 = arith.constant 0 : index
    %c0_328 = arith.constant 0 : index
    %423 = vector.load %arg11[%c8_326, %c0_327, %c0_328] : memref<9x8x3xbf16, #tpu.memory_space<vmem>>, vector<1x8x3xbf16>
    %424 = vector.shape_cast %423 : vector<1x8x3xbf16> to vector<8x3xbf16>
    %cst_329 = arith.constant dense<0.000000e+00> : vector<256x3xf32>
    %425 = tpu.matmul %422, %424, %cst_329 {dimension_numbers = #tpu.dot_dimension_numbers<[1], [0], [0], [1], [0, 0, 1, 1], [], []>} : vector<256x8xbf16>, vector<8x3xbf16>, vector<256x3xf32> -> vector<256x3xf32>
    %426 = arith.addf %418, %425 : vector<256x3xf32>
    %c0_330 = arith.constant 0 : index
    %c0_331 = arith.constant 0 : index
    %427 = vector.load %arg12[%c0_330, %c0_331] : memref<1x3xf32, #tpu.memory_space<vmem>>, vector<1x3xf32>
    %428 = vector.broadcast %427 : vector<1x3xf32> to vector<256x3xf32>
    %429 = arith.addf %426, %428 : vector<256x3xf32>
    %430 = arith.negf %429 : vector<256x3xf32>
    %431 = math.exp %430 : vector<256x3xf32>
    %cst_332 = arith.constant 1.000000e+00 : f32
    %432 = vector.broadcast %cst_332 : f32 to vector<256x3xf32>
    %433 = arith.addf %432, %431 : vector<256x3xf32>
    %434 = arith.divf %432, %433 : vector<256x3xf32>
    %c0_333 = arith.constant 0 : index
    %c0_334 = arith.constant 0 : index
    %c0_335 = arith.constant 0 : index
    %435 = vector.load %arg14[%c0_333, %c0_334, %c0_335] : memref<1x256x3xf32, #tpu.memory_space<vmem>>, vector<1x256x3xf32>
    %436 = vector.shape_cast %435 : vector<1x256x3xf32> to vector<256x3xf32>
    %437 = vector.shape_cast %434 : vector<256x3xf32> to vector<1x256x3xf32>
    tpu.vector_store %arg14[%c0_333, %c0_334, %c0_335], %437 {strides = array<i32>} : memref<1x256x3xf32, #tpu.memory_space<vmem>>, vector<1x256x3xf32>,
    return
  }
  func.func @transform_0(%arg0: i32) -> (i32, i32, i32) {
    %c0_i32 = arith.constant 0 : i32
    %c0_i32_0 = arith.constant 0 : i32
    %c0_i32_1 = arith.constant 0 : i32
    return %arg0, %c0_i32, %c0_i32_0 : i32, i32, i32
  }
  func.func @transform_1(%arg0: i32) -> (i32, i32, i32) {
    %c0_i32 = arith.constant 0 : i32
    %c0_i32_0 = arith.constant 0 : i32
    %c0_i32_1 = arith.constant 0 : i32
    %c0_i32_2 = arith.constant 0 : i32
    return %c0_i32, %c0_i32_0, %c0_i32_1 : i32, i32, i32
  }
  func.func @transform_2(%arg0: i32) -> (i32, i32) {
    %c0_i32 = arith.constant 0 : i32
    %c0_i32_0 = arith.constant 0 : i32
    %c0_i32_1 = arith.constant 0 : i32
    return %c0_i32, %c0_i32_0 : i32, i32
  }
  func.func @transform_3(%arg0: i32) -> (i32, i32, i32) {
    %c0_i32 = arith.constant 0 : i32
    %c0_i32_0 = arith.constant 0 : i32
    %c0_i32_1 = arith.constant 0 : i32
    %c0_i32_2 = arith.constant 0 : i32
    return %c0_i32, %c0_i32_0, %c0_i32_1 : i32, i32, i32
  }
  func.func @transform_4(%arg0: i32) -> (i32, i32, i32) {
    %c0_i32 = arith.constant 0 : i32
    %c0_i32_0 = arith.constant 0 : i32
    %c0_i32_1 = arith.constant 0 : i32
    %c0_i32_2 = arith.constant 0 : i32
    return %c0_i32, %c0_i32_0, %c0_i32_1 : i32, i32, i32
  }
  func.func @transform_5(%arg0: i32) -> (i32, i32) {
    %c0_i32 = arith.constant 0 : i32
    %c0_i32_0 = arith.constant 0 : i32
    %c0_i32_1 = arith.constant 0 : i32
    return %c0_i32, %c0_i32_0 : i32, i32
  }
  func.func @transform_6(%arg0: i32) -> (i32, i32, i32) {
    %c0_i32 = arith.constant 0 : i32
    %c0_i32_0 = arith.constant 0 : i32
    %c0_i32_1 = arith.constant 0 : i32
    %c0_i32_2 = arith.constant 0 : i32
    return %c0_i32, %c0_i32_0, %c0_i32_1 : i32, i32, i32
  }
  func.func @transform_7(%arg0: i32) -> (i32, i32, i32) {
    %c0_i32 = arith.constant 0 : i32
    %c0_i32_0 = arith.constant 0 : i32
    %c0_i32_1 = arith.constant 0 : i32
    %c0_i32_2 = arith.constant 0 : i32
    return %c0_i32, %c0_i32_0, %c0_i32_1 : i32, i32, i32
  }
  func.func @transform_8(%arg0: i32) -> (i32, i32) {
    %c0_i32 = arith.constant 0 : i32
    %c0_i32_0 = arith.constant 0 : i32
    %c0_i32_1 = arith.constant 0 : i32
    return %c0_i32, %c0_i32_0 : i32, i32
  }
  func.func @transform_9(%arg0: i32) -> (i32, i32) {
    %c0_i32 = arith.constant 0 : i32
    %c0_i32_0 = arith.constant 0 : i32
    %c0_i32_1 = arith.constant 0 : i32
    return %c0_i32, %c0_i32_0 : i32, i32
  }
  func.func @transform_10(%arg0: i32) -> (i32, i32, i32) {
    %c0_i32 = arith.constant 0 : i32
    %c0_i32_0 = arith.constant 0 : i32
    %c0_i32_1 = arith.constant 0 : i32
    %c0_i32_2 = arith.constant 0 : i32
    return %c0_i32, %c0_i32_0, %c0_i32_1 : i32, i32, i32
  }
  func.func @transform_11(%arg0: i32) -> (i32, i32) {
    %c0_i32 = arith.constant 0 : i32
    %c0_i32_0 = arith.constant 0 : i32
    %c0_i32_1 = arith.constant 0 : i32
    return %c0_i32, %c0_i32_0 : i32, i32
  }
  func.func @transform_12(%arg0: i32) -> (i32, i32) {
    %c0_i32 = arith.constant 0 : i32
    %c0_i32_0 = arith.constant 0 : i32
    %c0_i32_1 = arith.constant 0 : i32
    return %c0_i32, %c0_i32_0 : i32, i32
  }
  func.func @transform_13(%arg0: i32) -> (i32, i32, i32) {
    %c0_i32 = arith.constant 0 : i32
    %c0_i32_0 = arith.constant 0 : i32
    %c0_i32_1 = arith.constant 0 : i32
    return %arg0, %c0_i32, %c0_i32_0 : i32, i32, i32
  }
}

</mosaic_0001>

<llo_original>
// kernel: tpu_custom_call.1
$region0: #{tpu_custom_call.1}
  #allocation0 [shape = 'u32[]', space=smem, size = 0x4, offset = 0x4, fixed_abs, tag = 'smem constant byte address 0x4 - core index']
  #allocation1 [shape = 'u32[144,128]{1,0:T(1,128)}', space=vmem, size = 0x12000, scoped, tag = 'internal scratch']
  #allocation2 [shape = 'f32[304,3]{1,0:T(8,128)}', space=vmem, size = 0x26000, scoped, tag = 'scratch operand']
  #allocation3 [shape = 'f32[96,8]{1,0:T(8,128)}', space=vmem, size = 0xc000, scoped, tag = 'scratch operand']
  #allocation4 [shape = 'f32[96,16]{1,0:T(8,128)}', space=vmem, size = 0xc000, scoped, tag = 'scratch operand']
  #allocation5 [shape = 'f32[304,8]{1,0:T(8,128)}', space=vmem, size = 0x26000, scoped, tag = 'scratch operand']
  %s0 = inlined_call_operand.vmem [shape: f32[2,256,3], index: 0, kind: input, shape index: {}]
  %s1 = inlined_call_operand.vmem [shape: bf16[9,3,8], index: 1, kind: input, shape index: {}]
  %s2 = inlined_call_operand.vmem [shape: f32[1,8], index: 2, kind: input, shape index: {}]
  %s3 = inlined_call_operand.vmem [shape: bf16[4,64,256], index: 3, kind: input, shape index: {}]
  %s4 = inlined_call_operand.vmem [shape: bf16[9,8,16], index: 4, kind: input, shape index: {}]
  %s5 = inlined_call_operand.vmem [shape: f32[1,16], index: 5, kind: input, shape index: {}]
  %s6 = inlined_call_operand.vmem [shape: bf16[4,16,64], index: 6, kind: input, shape index: {}]
  %s7 = inlined_call_operand.vmem [shape: bf16[9,16,8], index: 7, kind: input, shape index: {}]
  %s8 = inlined_call_operand.vmem [shape: f32[1,8], index: 8, kind: input, shape index: {}]
  %s9 = inlined_call_operand.vmem [shape: bf16[64,16], index: 9, kind: input, shape index: {}]
  %s10 = inlined_call_operand.vmem [shape: bf16[9,8,3], index: 10, kind: input, shape index: {}]
  %s11 = inlined_call_operand.vmem [shape: f32[1,3], index: 11, kind: input, shape index: {}]
  %s12 = inlined_call_operand.vmem [shape: bf16[256,64], index: 12, kind: input, shape index: {}]
  %s13 = inlined_call_operand.vmem [shape: f32[2,256,3], index: 13, kind: output, shape index: {}]
  %s14 = sld [smem:[#allocation0]]
  $region85: #{tpu_custom_call.1} parent=0
    _
  %s16 = ssub.s32 1, %s14
  %s17 = scalar_select 0, %s16, %s14
  loop: start=0, step=1, limit=4
  $region2: #{tpu_custom_call.1} parent=0 // loop_pre_header
    _
  $region3: #{tpu_custom_call.1} parent=0 // loop_header
    %s19 = sphi 0, %s23
    %p20 = scmp.ge.s32.totalorder %s19, 4
    %s29 = sphi 0, %s31
    %s32 = sphi 0, %s29
    %s33 = sphi 0, %s32
    %s49 = sphi 0, %s33
    %s53 = sphi 0, %s53
    %s55 = sphi 0, %s53
    %s56 = sphi 0, %s55
    %s70 = sphi 0, %s56
    %s74 = sphi 0, %s74
    %s76 = sphi 0, %s74
    %s77 = sphi 0, %s76
    %s91 = sphi 0, %s77
    %s95 = sphi 0, %s95
    %s97 = sphi 0, %s95
    %s98 = sphi 0, %s97
    %s112 = sphi 0, %s98
    %s116 = sphi 0, %s116
    %s118 = sphi 0, %s116
    %s119 = sphi 0, %s118
    %s133 = sphi 0, %s119
    %s137 = sphi 0, %s137
    %s139 = sphi 0, %s137
    %s140 = sphi 0, %s139
    %s154 = sphi 0, %s140
    %s158 = sphi 0, %s158
    %s160 = sphi 0, %s158
    %s161 = sphi 0, %s160
    %s175 = sphi 0, %s161
    %s179 = sphi 0, %s179
    %s181 = sphi 0, %s179
    %s182 = sphi 0, %s181
    %s196 = sphi 0, %s182
    %s200 = sphi 0, %s200
    %s202 = sphi 0, %s200
    %s203 = sphi 0, %s202
    %s217 = sphi 0, %s203
    %s221 = sphi 0, %s221
    %s223 = sphi 0, %s221
    %s224 = sphi 0, %s223
    %s238 = sphi 0, %s224
    %s242 = sphi 0, %s242
    %s244 = sphi 0, %s242
    %s245 = sphi 0, %s244
    %s259 = sphi 0, %s245
    %s263 = sphi 0, %s263
    %s265 = sphi 0, %s263
    %s266 = sphi 0, %s265
    %s280 = sphi 0, %s266
    %s284 = sphi 0, %s284
    %s286 = sphi 0, %s284
    %s287 = sphi 0, %s286
    %s301 = sphi 0, %s287
    %s307 = sphi 0, %s309
    %s310 = sphi 0, %s307
    %s311 = sphi 0, %s310
    %s327 = sphi 0, %s311
  $region4: #{tpu_custom_call.1} parent=0 // loop_header_branch
    %22 = sbr.rel (%p20) target = $region8
  $region5: #{tpu_custom_call.1} parent=0 // loop_body
    %s24 = ssub.s32 %s19, 1
    %s25 = ssub.s32 %s19, 2
    %s26 = sadd.s32 %s19, 1
    %s27 = ssub.s32 %s19, %s26
    %p28 = scmp.eq.s32.totalorder %s27, 0
    %s30 = sadd.s32 %s29, 1
    %s31 = scalar_select %p28, %s29, %s30
    %p34 = pneg %p28
    %p35 = scmp.eq.s32.totalorder %s19, 1
    %p36 = por %p34, %p35
    %p37 = scmp.ne.s32.totalorder %s29, %s32
    %p38 = scmp.eq.s32.totalorder %s19, 0
    %p39 = por %p37, %p38
    %p40 = scmp.ne.s32.totalorder %s29, %s32
    %p41 = scmp.eq.s32.totalorder %s24, 1
    %p42 = por %p40, %p41
    %p43 = scmp.ne.s32.totalorder %s32, %s33
    %p44 = scmp.eq.s32.totalorder %s24, 0
    %p45 = por %p43, %p44
    %p46 = scmp.ne.s32.totalorder %s32, %s33
    %p47 = scmp.eq.s32.totalorder %s25, 1
    %p48 = por %p46, %p47
    %p50 = scmp.ne.s32.totalorder %s33, %s49
    %p51 = scmp.eq.s32.totalorder %s25, 0
    %p52 = por %p50, %p51
    %s54 = sadd.s32 %s53, 1
    %p57 = scmp.eq.s32.totalorder %s19, 1
    %p58 = scmp.ne.s32.totalorder %s53, %s55
    %p59 = scmp.eq.s32.totalorder %s19, 0
    %p60 = por %p58, %p59
    %p61 = scmp.ne.s32.totalorder %s53, %s55
    %p62 = scmp.eq.s32.totalorder %s24, 1
    %p63 = por %p61, %p62
    %p64 = scmp.ne.s32.totalorder %s55, %s56
    %p65 = scmp.eq.s32.totalorder %s24, 0
    %p66 = por %p64, %p65
    %p67 = scmp.ne.s32.totalorder %s55, %s56
    %p68 = scmp.eq.s32.totalorder %s25, 1
    %p69 = por %p67, %p68
    %p71 = scmp.ne.s32.totalorder %s56, %s70
    %p72 = scmp.eq.s32.totalorder %s25, 0
    %p73 = por %p71, %p72
    %s75 = sadd.s32 %s74, 1
    %p78 = scmp.eq.s32.totalorder %s19, 1
    %p79 = scmp.ne.s32.totalorder %s74, %s76
    %p80 = scmp.eq.s32.totalorder %s19, 0
    %p81 = por %p79, %p80
    %p82 = scmp.ne.s32.totalorder %s74, %s76
    %p83 = scmp.eq.s32.totalorder %s24, 1
    %p84 = por %p82, %p83
    %p85 = scmp.ne.s32.totalorder %s76, %s77
    %p86 = scmp.eq.s32.totalorder %s24, 0
    %p87 = por %p85, %p86
    %p88 = scmp.ne.s32.totalorder %s76, %s77
    %p89 = scmp.eq.s32.totalorder %s25, 1
    %p90 = por %p88, %p89
    %p92 = scmp.ne.s32.totalorder %s77, %s91
    %p93 = scmp.eq.s32.totalorder %s25, 0
    %p94 = por %p92, %p93
    %s96 = sadd.s32 %s95, 1
    %p99 = scmp.eq.s32.totalorder %s19, 1
    %p100 = scmp.ne.s32.totalorder %s95, %s97
    %p101 = scmp.eq.s32.totalorder %s19, 0
    %p102 = por %p100, %p101
    %p103 = scmp.ne.s32.totalorder %s95, %s97
    %p104 = scmp.eq.s32.totalorder %s24, 1
    %p105 = por %p103, %p104
    %p106 = scmp.ne.s32.totalorder %s97, %s98
    %p107 = scmp.eq.s32.totalorder %s24, 0
    %p108 = por %p106, %p107
    %p109 = scmp.ne.s32.totalorder %s97, %s98
    %p110 = scmp.eq.s32.totalorder %s25, 1
    %p111 = por %p109, %p110
    %p113 = scmp.ne.s32.totalorder %s98, %s112
    %p114 = scmp.eq.s32.totalorder %s25, 0
    %p115 = por %p113, %p114
    %s117 = sadd.s32 %s116, 1
    %p120 = scmp.eq.s32.totalorder %s19, 1
    %p121 = scmp.ne.s32.totalorder %s116, %s118
    %p122 = scmp.eq.s32.totalorder %s19, 0
    %p123 = por %p121, %p122
    %p124 = scmp.ne.s32.totalorder %s116, %s118
    %p125 = scmp.eq.s32.totalorder %s24, 1
    %p126 = por %p124, %p125
    %p127 = scmp.ne.s32.totalorder %s118, %s119
    %p128 = scmp.eq.s32.totalorder %s24, 0
    %p129 = por %p127, %p128
    %p130 = scmp.ne.s32.totalorder %s118, %s119
    %p131 = scmp.eq.s32.totalorder %s25, 1
    %p132 = por %p130, %p131
    %p134 = scmp.ne.s32.totalorder %s119, %s133
    %p135 = scmp.eq.s32.totalorder %s25, 0
    %p136 = por %p134, %p135
    %s138 = sadd.s32 %s137, 1
    %p141 = scmp.eq.s32.totalorder %s19, 1
    %p142 = scmp.ne.s32.totalorder %s137, %s139
    %p143 = scmp.eq.s32.totalorder %s19, 0
    %p144 = por %p142, %p143
    %p145 = scmp.ne.s32.totalorder %s137, %s139
    %p146 = scmp.eq.s32.totalorder %s24, 1
    %p147 = por %p145, %p146
    %p148 = scmp.ne.s32.totalorder %s139, %s140
    %p149 = scmp.eq.s32.totalorder %s24, 0
    %p150 = por %p148, %p149
    %p151 = scmp.ne.s32.totalorder %s139, %s140
    %p152 = scmp.eq.s32.totalorder %s25, 1
    %p153 = por %p151, %p152
    %p155 = scmp.ne.s32.totalorder %s140, %s154
    %p156 = scmp.eq.s32.totalorder %s25, 0
    %p157 = por %p155, %p156
    %s159 = sadd.s32 %s158, 1
    %p162 = scmp.eq.s32.totalorder %s19, 1
    %p163 = scmp.ne.s32.totalorder %s158, %s160
    %p164 = scmp.eq.s32.totalorder %s19, 0
    %p165 = por %p163, %p164
    %p166 = scmp.ne.s32.totalorder %s158, %s160
    %p167 = scmp.eq.s32.totalorder %s24, 1
    %p168 = por %p166, %p167
    %p169 = scmp.ne.s32.totalorder %s160, %s161
    %p170 = scmp.eq.s32.totalorder %s24, 0
    %p171 = por %p169, %p170
    %p172 = scmp.ne.s32.totalorder %s160, %s161
    %p173 = scmp.eq.s32.totalorder %s25, 1
    %p174 = por %p172, %p173
    %p176 = scmp.ne.s32.totalorder %s161, %s175
    %p177 = scmp.eq.s32.totalorder %s25, 0
    %p178 = por %p176, %p177
    %s180 = sadd.s32 %s179, 1
    %p183 = scmp.eq.s32.totalorder %s19, 1
    %p184 = scmp.ne.s32.totalorder %s179, %s181
    %p185 = scmp.eq.s32.totalorder %s19, 0
    %p186 = por %p184, %p185
    %p187 = scmp.ne.s32.totalorder %s179, %s181
    %p188 = scmp.eq.s32.totalorder %s24, 1
    %p189 = por %p187, %p188
    %p190 = scmp.ne.s32.totalorder %s181, %s182
    %p191 = scmp.eq.s32.totalorder %s24, 0
    %p192 = por %p190, %p191
    %p193 = scmp.ne.s32.totalorder %s181, %s182
    %p194 = scmp.eq.s32.totalorder %s25, 1
    %p195 = por %p193, %p194
    %p197 = scmp.ne.s32.totalorder %s182, %s196
    %p198 = scmp.eq.s32.totalorder %s25, 0
    %p199 = por %p197, %p198
    %s201 = sadd.s32 %s200, 1
    %p204 = scmp.eq.s32.totalorder %s19, 1
    %p205 = scmp.ne.s32.totalorder %s200, %s202
    %p206 = scmp.eq.s32.totalorder %s19, 0
    %p207 = por %p205, %p206
    %p208 = scmp.ne.s32.totalorder %s200, %s202
    %p209 = scmp.eq.s32.totalorder %s24, 1
    %p210 = por %p208, %p209
    %p211 = scmp.ne.s32.totalorder %s202, %s203
    %p212 = scmp.eq.s32.totalorder %s24, 0
    %p213 = por %p211, %p212
    %p214 = scmp.ne.s32.totalorder %s202, %s203
    %p215 = scmp.eq.s32.totalorder %s25, 1
    %p216 = por %p214, %p215
    %p218 = scmp.ne.s32.totalorder %s203, %s217
    %p219 = scmp.eq.s32.totalorder %s25, 0
    %p220 = por %p218, %p219
    %s222 = sadd.s32 %s221, 1
    %p225 = scmp.eq.s32.totalorder %s19, 1
    %p226 = scmp.ne.s32.totalorder %s221, %s223
    %p227 = scmp.eq.s32.totalorder %s19, 0
    %p228 = por %p226, %p227
    %p229 = scmp.ne.s32.totalorder %s221, %s223
    %p230 = scmp.eq.s32.totalorder %s24, 1
    %p231 = por %p229, %p230
    %p232 = scmp.ne.s32.totalorder %s223, %s224
    %p233 = scmp.eq.s32.totalorder %s24, 0
    %p234 = por %p232, %p233
    %p235 = scmp.ne.s32.totalorder %s223, %s224
    %p236 = scmp.eq.s32.totalorder %s25, 1
    %p237 = por %p235, %p236
    %p239 = scmp.ne.s32.totalorder %s224, %s238
    %p240 = scmp.eq.s32.totalorder %s25, 0
    %p241 = por %p239, %p240
    %s243 = sadd.s32 %s242, 1
    %p246 = scmp.eq.s32.totalorder %s19, 1
    %p247 = scmp.ne.s32.totalorder %s242, %s244
    %p248 = scmp.eq.s32.totalorder %s19, 0
    %p249 = por %p247, %p248
    %p250 = scmp.ne.s32.totalorder %s242, %s244
    %p251 = scmp.eq.s32.totalorder %s24, 1
    %p252 = por %p250, %p251
    %p253 = scmp.ne.s32.totalorder %s244, %s245
    %p254 = scmp.eq.s32.totalorder %s24, 0
    %p255 = por %p253, %p254
    %p256 = scmp.ne.s32.totalorder %s244, %s245
    %p257 = scmp.eq.s32.totalorder %s25, 1
    %p258 = por %p256, %p257
    %p260 = scmp.ne.s32.totalorder %s245, %s259
    %p261 = scmp.eq.s32.totalorder %s25, 0
    %p262 = por %p260, %p261
    %s264 = sadd.s32 %s263, 1
    %p267 = scmp.eq.s32.totalorder %s19, 1
    %p268 = scmp.ne.s32.totalorder %s263, %s265
    %p269 = scmp.eq.s32.totalorder %s19, 0
    %p270 = por %p268, %p269
    %p271 = scmp.ne.s32.totalorder %s263, %s265
    %p272 = scmp.eq.s32.totalorder %s24, 1
    %p273 = por %p271, %p272
    %p274 = scmp.ne.s32.totalorder %s265, %s266
    %p275 = scmp.eq.s32.totalorder %s24, 0
    %p276 = por %p274, %p275
    %p277 = scmp.ne.s32.totalorder %s265, %s266
    %p278 = scmp.eq.s32.totalorder %s25, 1
    %p279 = por %p277, %p278
    %p281 = scmp.ne.s32.totalorder %s266, %s280
    %p282 = scmp.eq.s32.totalorder %s25, 0
    %p283 = por %p281, %p282
    %s285 = sadd.s32 %s284, 1
    %p288 = scmp.eq.s32.totalorder %s19, 1
    %p289 = scmp.ne.s32.totalorder %s284, %s286
    %p290 = scmp.eq.s32.totalorder %s19, 0
    %p291 = por %p289, %p290
    %p292 = scmp.ne.s32.totalorder %s284, %s286
    %p293 = scmp.eq.s32.totalorder %s24, 1
    %p294 = por %p292, %p293
    %p295 = scmp.ne.s32.totalorder %s286, %s287
    %p296 = scmp.eq.s32.totalorder %s24, 0
    %p297 = por %p295, %p296
    %p298 = scmp.ne.s32.totalorder %s286, %s287
    %p299 = scmp.eq.s32.totalorder %s25, 1
    %p300 = por %p298, %p299
    %p302 = scmp.ne.s32.totalorder %s287, %s301
    %p303 = scmp.eq.s32.totalorder %s25, 0
    %p304 = por %p302, %p303
    %s305 = ssub.s32 %s19, %s26
    %p306 = scmp.eq.s32.totalorder %s305, 0
    %s308 = sadd.s32 %s307, 1
    %s309 = scalar_select %p306, %s307, %s308
    %p312 = pneg %p306
    %p313 = scmp.eq.s32.totalorder %s19, 1
    %p314 = por %p312, %p313
    %p315 = scmp.ne.s32.totalorder %s307, %s310
    %p316 = scmp.eq.s32.totalorder %s19, 0
    %p317 = por %p315, %p316
    %p318 = scmp.ne.s32.totalorder %s307, %s310
    %p319 = scmp.eq.s32.totalorder %s24, 1
    %p320 = por %p318, %p319
    %p321 = scmp.ne.s32.totalorder %s310, %s311
    %p322 = scmp.eq.s32.totalorder %s24, 0
    %p323 = por %p321, %p322
    %p324 = scmp.ne.s32.totalorder %s310, %s311
    %p325 = scmp.eq.s32.totalorder %s25, 1
    %p326 = por %p324, %p325
    %p328 = scmp.ne.s32.totalorder %s311, %s327
    %p329 = scmp.eq.s32.totalorder %s25, 0
    %p330 = por %p328, %p329
    %p331 = scmp.le.s32.totalorder 1, %s19
    %p332 = scmp.lt.s32.totalorder %s19, 3
    %p333 = pnand %p331, %p332
    %p334 = pneg %p333
    // Predicated region
    $region9: #{tpu_custom_call.1} parent=5 // pred_check
      _
    $region10: #{tpu_custom_call.1} parent=5 // pred_check_branch
      %336 = sbr.rel (%p333) target = $region12
    $region11: #{tpu_custom_call.1} parent=5 // pred_region
      %s337 = ssub.s32 %s19, 1
      // Predicated region
      $region13: #{tpu_custom_call.1} parent=11 // pred_check
        %p338 = pneg %p66
      $region14: #{tpu_custom_call.1} parent=11 // pred_check_branch
        %340 = sbr.rel (%p338) target = $region16
      $region15: #{tpu_custom_call.1} parent=11 // pred_region
        _
      $region16: #{tpu_custom_call.1} parent=11 // pred_fallthru
        _
      // Predicated region
      $region17: #{tpu_custom_call.1} parent=11 // pred_check
        %p341 = pneg %p87
      $region18: #{tpu_custom_call.1} parent=11 // pred_check_branch
        %343 = sbr.rel (%p341) target = $region20
      $region19: #{tpu_custom_call.1} parent=11 // pred_region
        _
      $region20: #{tpu_custom_call.1} parent=11 // pred_fallthru
        _
      // Predicated region
      $region21: #{tpu_custom_call.1} parent=11 // pred_check
        %p344 = pneg %p108
      $region22: #{tpu_custom_call.1} parent=11 // pred_check_branch
        %346 = sbr.rel (%p344) target = $region24
      $region23: #{tpu_custom_call.1} parent=11 // pred_region
        _
      $region24: #{tpu_custom_call.1} parent=11 // pred_fallthru
        _
      // Predicated region
      $region25: #{tpu_custom_call.1} parent=11 // pred_check
        %p347 = pneg %p129
      $region26: #{tpu_custom_call.1} parent=11 // pred_check_branch
        %349 = sbr.rel (%p347) target = $region28
      $region27: #{tpu_custom_call.1} parent=11 // pred_region
        _
      $region28: #{tpu_custom_call.1} parent=11 // pred_fallthru
        _
      // Predicated region
      $region29: #{tpu_custom_call.1} parent=11 // pred_check
        %p350 = pneg %p150
      $region30: #{tpu_custom_call.1} parent=11 // pred_check_branch
        %352 = sbr.rel (%p350) target = $region32
      $region31: #{tpu_custom_call.1} parent=11 // pred_region
        _
      $region32: #{tpu_custom_call.1} parent=11 // pred_fallthru
        _
      // Predicated region
      $region33: #{tpu_custom_call.1} parent=11 // pred_check
        %p353 = pneg %p171
      $region34: #{tpu_custom_call.1} parent=11 // pred_check_branch
        %355 = sbr.rel (%p353) target = $region36
      $region35: #{tpu_custom_call.1} parent=11 // pred_region
        _
      $region36: #{tpu_custom_call.1} parent=11 // pred_fallthru
        _
      // Predicated region
      $region37: #{tpu_custom_call.1} parent=11 // pred_check
        %p356 = pneg %p192
      $region38: #{tpu_custom_call.1} parent=11 // pred_check_branch
        %358 = sbr.rel (%p356) target = $region40
      $region39: #{tpu_custom_call.1} parent=11 // pred_region
        _
      $region40: #{tpu_custom_call.1} parent=11 // pred_fallthru
        _
      // Predicated region
      $region41: #{tpu_custom_call.1} parent=11 // pred_check
        %p359 = pneg %p213
      $region42: #{tpu_custom_call.1} parent=11 // pred_check_branch
        %361 = sbr.rel (%p359) target = $region44
      $region43: #{tpu_custom_call.1} parent=11 // pred_region
        _
      $region44: #{tpu_custom_call.1} parent=11 // pred_fallthru
        _
      // Predicated region
      $region45: #{tpu_custom_call.1} parent=11 // pred_check
        %p362 = pneg %p234
      $region46: #{tpu_custom_call.1} parent=11 // pred_check_branch
        %364 = sbr.rel (%p362) target = $region48
      $region47: #{tpu_custom_call.1} parent=11 // pred_region
        _
      $region48: #{tpu_custom_call.1} parent=11 // pred_fallthru
        _
      // Predicated region
      $region49: #{tpu_custom_call.1} parent=11 // pred_check
        %p365 = pneg %p255
      $region50: #{tpu_custom_call.1} parent=11 // pred_check_branch
        %367 = sbr.rel (%p365) target = $region52
      $region51: #{tpu_custom_call.1} parent=11 // pred_region
        _
      $region52: #{tpu_custom_call.1} parent=11 // pred_fallthru
        _
      // Predicated region
      $region53: #{tpu_custom_call.1} parent=11 // pred_check
        %p368 = pneg %p276
      $region54: #{tpu_custom_call.1} parent=11 // pred_check_branch
        %370 = sbr.rel (%p368) target = $region56
      $region55: #{tpu_custom_call.1} parent=11 // pred_region
        _
      $region56: #{tpu_custom_call.1} parent=11 // pred_fallthru
        _
      // Predicated region
      $region57: #{tpu_custom_call.1} parent=11 // pred_check
        %p371 = pneg %p297
      $region58: #{tpu_custom_call.1} parent=11 // pred_check_branch
        %373 = sbr.rel (%p371) target = $region60
      $region59: #{tpu_custom_call.1} parent=11 // pred_region
        _
      $region60: #{tpu_custom_call.1} parent=11 // pred_fallthru
        _
    $region12: #{tpu_custom_call.1} parent=5 // pred_fallthru
      _
    %p374 = scmp.lt.s32.totalorder %s19, 2
    // Predicated region
    $region61: #{tpu_custom_call.1} parent=5 // pred_check
      %p375 = pneg %p374
    $region62: #{tpu_custom_call.1} parent=5 // pred_check_branch
      %377 = sbr.rel (%p375) target = $region64
    $region63: #{tpu_custom_call.1} parent=5 // pred_region
      // Predicated region
      $region65: #{tpu_custom_call.1} parent=63 // pred_check
        %p378 = pneg %p39
      $region66: #{tpu_custom_call.1} parent=63 // pred_check_branch
        %380 = sbr.rel (%p378) target = $region68
      $region67: #{tpu_custom_call.1} parent=63 // pred_region
        %p381 = scmp.lt.s32.totalorder %s19, 1
        %s382 = scalar_select %p381, %s19, 1
        %s383 = smul.addr %s382, 32
        %s384 = smul.addr %s383, 8
        %s385 = scalar_lea.vmem %s0, %s384
      $region68: #{tpu_custom_call.1} parent=63 // pred_fallthru
        _
    $region64: #{tpu_custom_call.1} parent=5 // pred_fallthru
      _
    %p386 = scmp.le.s32.totalorder 1, %s19
    %p387 = scmp.lt.s32.totalorder %s19, 3
    %p388 = pnand %p386, %p387
    %p389 = pneg %p388
    // Predicated region
    $region69: #{tpu_custom_call.1} parent=5 // pred_check
      _
    $region70: #{tpu_custom_call.1} parent=5 // pred_check_branch
      %391 = sbr.rel (%p388) target = $region72
    $region71: #{tpu_custom_call.1} parent=5 // pred_region
      %s392 = ssub.s32 %s19, 1
      %p393 = scmp.lt.s32.totalorder %s24, 1
      %s394 = scalar_select %p393, %s24, 1
      %s395 = smul.addr %s394, 32
      %s396 = smul.addr %s395, 8
      %s397 = scalar_lea.vmem %s0, %s396
      %p398 = pneg %p45
      %p399 = pneg %p42
      %p400 = pneg %p66
      %p401 = pneg %p63
      %p402 = pneg %p87
      %p403 = pneg %p84
      %p404 = pneg %p108
      %p405 = pneg %p105
      %p406 = pneg %p129
      %p407 = pneg %p126
      %p408 = pneg %p150
      %p409 = pneg %p147
      %p410 = pneg %p171
      %p411 = pneg %p168
      %p412 = pneg %p192
      %p413 = pneg %p189
      %p414 = pneg %p213
      %p415 = pneg %p210
      %p416 = pneg %p234
      %p417 = pneg %p231
      %p418 = pneg %p255
      %p419 = pneg %p252
      %p420 = pneg %p276
      %p421 = pneg %p273
      %p422 = pneg %p297
      %p423 = pneg %p294
      %p424 = pneg %p323
      %p425 = pneg %p320
      %p426 = scmp.lt.s32.totalorder %s24, 1
      %s427 = scalar_select %p426, %s24, 1
      %s428 = smul.addr %s427, 32
      %s429 = smul.addr %s428, 8
      %s430 = scalar_lea.vmem %s13, %s429
      %p431 = scmp.lt.s32.totalorder %s24, 1
      %s432 = scalar_select %p431, %s24, 1
      %s433 = smul.addr %s432, 32
      %s434 = smul.addr %s433, 8
      %s435 = scalar_lea.vmem %s0, %s434
      %p436 = scmp.lt.s32.totalorder %s24, 1
      %s437 = scalar_select %p436, %s24, 1
      %s438 = smul.addr %s437, 32
      %s439 = smul.addr %s438, 8
      %s440 = scalar_lea.vmem %s13, %s439
      %v442 = vld [vmem:[%s435] sm:$0xff]
      %v443 = vld [vmem:[%s435 + $0x8] sm:$0xff]
      %v444 = vld [vmem:[%s435 + $0x10] sm:$0xff]
      %v445 = vld [vmem:[%s435 + $0x18] sm:$0xff]
      %v446 = vld [vmem:[%s435 + $0x20] sm:$0xff]
      %v447 = vld [vmem:[%s435 + $0x28] sm:$0xff]
      %v448 = vld [vmem:[%s435 + $0x30] sm:$0xff]
      %v449 = vld [vmem:[%s435 + $0x38] sm:$0xff]
      %v450 = vld [vmem:[%s435 + $0x40] sm:$0xff]
      %v451 = vld [vmem:[%s435 + $0x48] sm:$0xff]
      %v452 = vld [vmem:[%s435 + $0x50] sm:$0xff]
      %v453 = vld [vmem:[%s435 + $0x58] sm:$0xff]
      %v454 = vld [vmem:[%s435 + $0x60] sm:$0xff]
      %v455 = vld [vmem:[%s435 + $0x68] sm:$0xff]
      %v456 = vld [vmem:[%s435 + $0x70] sm:$0xff]
      %v457 = vld [vmem:[%s435 + $0x78] sm:$0xff]
      %v458 = vld [vmem:[%s435 + $0x80] sm:$0xff]
      %v459 = vld [vmem:[%s435 + $0x88] sm:$0xff]
      %v460 = vld [vmem:[%s435 + $0x90] sm:$0xff]
      %v461 = vld [vmem:[%s435 + $0x98] sm:$0xff]
      %v462 = vld [vmem:[%s435 + $0xa0] sm:$0xff]
      %v463 = vld [vmem:[%s435 + $0xa8] sm:$0xff]
      %v464 = vld [vmem:[%s435 + $0xb0] sm:$0xff]
      %v465 = vld [vmem:[%s435 + $0xb8] sm:$0xff]
      %v466 = vld [vmem:[%s435 + $0xc0] sm:$0xff]
      %v467 = vld [vmem:[%s435 + $0xc8] sm:$0xff]
      %v468 = vld [vmem:[%s435 + $0xd0] sm:$0xff]
      %v469 = vld [vmem:[%s435 + $0xd8] sm:$0xff]
      %v470 = vld [vmem:[%s435 + $0xe0] sm:$0xff]
      %v471 = vld [vmem:[%s435 + $0xe8] sm:$0xff]
      %v472 = vld [vmem:[%s435 + $0xf0] sm:$0xff]
      %v473 = vld [vmem:[%s435 + $0xf8] sm:$0xff]
      %vm474 = vcmask 23552
      %475 = vst.msk [vmem:[#allocation2] sm:$0xff] %vm474, 0.0
      %476 = vst.msk [vmem:[#allocation2 + $0x8] sm:$0xff] %vm474, 0.0
      %477 = vst.msk [vmem:[#allocation2 + $0x10] sm:$0xff] %vm474, 0.0
      %478 = vst.msk [vmem:[#allocation2 + $0x118] sm:$0xff] %vm474, 0.0
      %479 = vst.msk [vmem:[#allocation2 + $0x120] sm:$0xff] %vm474, 0.0
      %480 = vst.msk [vmem:[#allocation2 + $0x128] sm:$0xff] %vm474, 0.0
      %481 = vst.msk [vmem:[#allocation2 + $0x18] sm:$0xff] %vm474, %v442
      %482 = vst.msk [vmem:[#allocation2 + $0x20] sm:$0xff] %vm474, %v443
      %483 = vst.msk [vmem:[#allocation2 + $0x28] sm:$0xff] %vm474, %v444
      %484 = vst.msk [vmem:[#allocation2 + $0x30] sm:$0xff] %vm474, %v445
      %485 = vst.msk [vmem:[#allocation2 + $0x38] sm:$0xff] %vm474, %v446
      %486 = vst.msk [vmem:[#allocation2 + $0x40] sm:$0xff] %vm474, %v447
      %487 = vst.msk [vmem:[#allocation2 + $0x48] sm:$0xff] %vm474, %v448
      %488 = vst.msk [vmem:[#allocation2 + $0x50] sm:$0xff] %vm474, %v449
      %489 = vst.msk [vmem:[#allocation2 + $0x58] sm:$0xff] %vm474, %v450
      %490 = vst.msk [vmem:[#allocation2 + $0x60] sm:$0xff] %vm474, %v451
      %491 = vst.msk [vmem:[#allocation2 + $0x68] sm:$0xff] %vm474, %v452
      %492 = vst.msk [vmem:[#allocation2 + $0x70] sm:$0xff] %vm474, %v453
      %493 = vst.msk [vmem:[#allocation2 + $0x78] sm:$0xff] %vm474, %v454
      %494 = vst.msk [vmem:[#allocation2 + $0x80] sm:$0xff] %vm474, %v455
      %495 = vst.msk [vmem:[#allocation2 + $0x88] sm:$0xff] %vm474, %v456
      %496 = vst.msk [vmem:[#allocation2 + $0x90] sm:$0xff] %vm474, %v457
      %497 = vst.msk [vmem:[#allocation2 + $0x98] sm:$0xff] %vm474, %v458
      %498 = vst.msk [vmem:[#allocation2 + $0xa0] sm:$0xff] %vm474, %v459
      %499 = vst.msk [vmem:[#allocation2 + $0xa8] sm:$0xff] %vm474, %v460
      %500 = vst.msk [vmem:[#allocation2 + $0xb0] sm:$0xff] %vm474, %v461
      %501 = vst.msk [vmem:[#allocation2 + $0xb8] sm:$0xff] %vm474, %v462
      %502 = vst.msk [vmem:[#allocation2 + $0xc0] sm:$0xff] %vm474, %v463
      %503 = vst.msk [vmem:[#allocation2 + $0xc8] sm:$0xff] %vm474, %v464
      %504 = vst.msk [vmem:[#allocation2 + $0xd0] sm:$0xff] %vm474, %v465
      %505 = vst.msk [vmem:[#allocation2 + $0xd8] sm:$0xff] %vm474, %v466
      %506 = vst.msk [vmem:[#allocation2 + $0xe0] sm:$0xff] %vm474, %v467
      %507 = vst.msk [vmem:[#allocation2 + $0xe8] sm:$0xff] %vm474, %v468
      %508 = vst.msk [vmem:[#allocation2 + $0xf0] sm:$0xff] %vm474, %v469
      %509 = vst.msk [vmem:[#allocation2 + $0xf8] sm:$0xff] %vm474, %v470
      %510 = vst.msk [vmem:[#allocation2 + $0x100] sm:$0xff] %vm474, %v471
      %511 = vst.msk [vmem:[#allocation2 + $0x108] sm:$0xff] %vm474, %v472
      %512 = vst.msk [vmem:[#allocation2 + $0x110] sm:$0xff] %vm474, %v473
      %v513 = vlaneseq
      %v514 = vshrl.u32 %v513, 7
      %v515 = vadd.s32 %v514, 8
      %v516 = vadd.s32 %v514, 16
      %v517 = vadd.s32 %v514, 24
      %v518 = vadd.s32 %v514, 32
      %v519 = vadd.s32 %v514, 40
      %v520 = vadd.s32 %v514, 48
      %v521 = vadd.s32 %v514, 56
      %v522 = vadd.s32 %v514, 64
      %v523 = vadd.s32 %v514, 72
      %v524 = vadd.s32 %v514, 80
      %v525 = vadd.s32 %v514, 88
      %v526 = vadd.s32 %v514, 96
      %v527 = vadd.s32 %v514, 104
      %v528 = vadd.s32 %v514, 112
      %v529 = vadd.s32 %v514, 120
      %v530 = vadd.s32 %v514, 128
      %v531 = vadd.s32 %v514, 136
      %v532 = vadd.s32 %v514, 144
      %v533 = vadd.s32 %v514, 152
      %v534 = vadd.s32 %v514, 160
      %v535 = vadd.s32 %v514, 168
      %v536 = vadd.s32 %v514, 176
      %v537 = vadd.s32 %v514, 184
      %v538 = vadd.s32 %v514, 192
      %v539 = vadd.s32 %v514, 200
      %v540 = vadd.s32 %v514, 208
      %v541 = vadd.s32 %v514, 216
      %v542 = vadd.s32 %v514, 224
      %v543 = vadd.s32 %v514, 232
      %v544 = vadd.s32 %v514, 240
      %v545 = vadd.s32 %v514, 248
      %vm546 = vcmp.lt.s32.totalorder %v514, 0
      %v547 = vsub.s32 0, %v514
      %v548 = vsel %vm546, %v547, %v514
      %v549 = vshrl.u32 %v548, 4
      %v550 = vand.u32 %v548, 15
      %v551 = vsub.s32 0, %v550
      %v552 = vsel %vm546, %v551, %v550
      %vm553 = vcmp.lt.s32.totalorder %v515, 0
      %v554 = vsub.s32 0, %v515
      %v555 = vsel %vm553, %v554, %v515
      %v556 = vshrl.u32 %v555, 4
      %v557 = vand.u32 %v555, 15
      %v558 = vsub.s32 0, %v557
      %v559 = vsel %vm553, %v558, %v557
      %vm560 = vcmp.lt.s32.totalorder %v516, 0
      %v561 = vsub.s32 0, %v516
      %v562 = vsel %vm560, %v561, %v516
      %v563 = vshrl.u32 %v562, 4
      %v564 = vand.u32 %v562, 15
      %v565 = vsub.s32 0, %v564
      %v566 = vsel %vm560, %v565, %v564
      %vm567 = vcmp.lt.s32.totalorder %v517, 0
      %v568 = vsub.s32 0, %v517
      %v569 = vsel %vm567, %v568, %v517
      %v570 = vshrl.u32 %v569, 4
      %v571 = vand.u32 %v569, 15
      %v572 = vsub.s32 0, %v571
      %v573 = vsel %vm567, %v572, %v571
      %vm574 = vcmp.lt.s32.totalorder %v518, 0
      %v575 = vsub.s32 0, %v518
      %v576 = vsel %vm574, %v575, %v518
      %v577 = vshrl.u32 %v576, 4
      %v578 = vand.u32 %v576, 15
      %v579 = vsub.s32 0, %v578
      %v580 = vsel %vm574, %v579, %v578
      %vm581 = vcmp.lt.s32.totalorder %v519, 0
      %v582 = vsub.s32 0, %v519
      %v583 = vsel %vm581, %v582, %v519
      %v584 = vshrl.u32 %v583, 4
      %v585 = vand.u32 %v583, 15
      %v586 = vsub.s32 0, %v585
      %v587 = vsel %vm581, %v586, %v585
      %vm588 = vcmp.lt.s32.totalorder %v520, 0
      %v589 = vsub.s32 0, %v520
      %v590 = vsel %vm588, %v589, %v520
      %v591 = vshrl.u32 %v590, 4
      %v592 = vand.u32 %v590, 15
      %v593 = vsub.s32 0, %v592
      %v594 = vsel %vm588, %v593, %v592
      %vm595 = vcmp.lt.s32.totalorder %v521, 0
      %v596 = vsub.s32 0, %v521
      %v597 = vsel %vm595, %v596, %v521
      %v598 = vshrl.u32 %v597, 4
      %v599 = vand.u32 %v597, 15
      %v600 = vsub.s32 0, %v599
      %v601 = vsel %vm595, %v600, %v599
      %vm602 = vcmp.lt.s32.totalorder %v522, 0
      %v603 = vsub.s32 0, %v522
      %v604 = vsel %vm602, %v603, %v522
      %v605 = vshrl.u32 %v604, 4
      %v606 = vand.u32 %v604, 15
      %v607 = vsub.s32 0, %v606
      %v608 = vsel %vm602, %v607, %v606
      %vm609 = vcmp.lt.s32.totalorder %v523, 0
      %v610 = vsub.s32 0, %v523
      %v611 = vsel %vm609, %v610, %v523
      %v612 = vshrl.u32 %v611, 4
      %v613 = vand.u32 %v611, 15
      %v614 = vsub.s32 0, %v613
      %v615 = vsel %vm609, %v614, %v613
      %vm616 = vcmp.lt.s32.totalorder %v524, 0
      %v617 = vsub.s32 0, %v524
      %v618 = vsel %vm616, %v617, %v524
      %v619 = vshrl.u32 %v618, 4
      %v620 = vand.u32 %v618, 15
      %v621 = vsub.s32 0, %v620
      %v622 = vsel %vm616, %v621, %v620
      %vm623 = vcmp.lt.s32.totalorder %v525, 0
      %v624 = vsub.s32 0, %v525
      %v625 = vsel %vm623, %v624, %v525
      %v626 = vshrl.u32 %v625, 4
      %v627 = vand.u32 %v625, 15
      %v628 = vsub.s32 0, %v627
      %v629 = vsel %vm623, %v628, %v627
      %vm630 = vcmp.lt.s32.totalorder %v526, 0
      %v631 = vsub.s32 0, %v526
      %v632 = vsel %vm630, %v631, %v526
      %v633 = vshrl.u32 %v632, 4
      %v634 = vand.u32 %v632, 15
      %v635 = vsub.s32 0, %v634
      %v636 = vsel %vm630, %v635, %v634
      %vm637 = vcmp.lt.s32.totalorder %v527, 0
      %v638 = vsub.s32 0, %v527
      %v639 = vsel %vm637, %v638, %v527
      %v640 = vshrl.u32 %v639, 4
      %v641 = vand.u32 %v639, 15
      %v642 = vsub.s32 0, %v641
      %v643 = vsel %vm637, %v642, %v641
      %vm644 = vcmp.lt.s32.totalorder %v528, 0
      %v645 = vsub.s32 0, %v528
      %v646 = vsel %vm644, %v645, %v528
      %v647 = vshrl.u32 %v646, 4
      %v648 = vand.u32 %v646, 15
      %v649 = vsub.s32 0, %v648
      %v650 = vsel %vm644, %v649, %v648
      %vm651 = vcmp.lt.s32.totalorder %v529, 0
      %v652 = vsub.s32 0, %v529
      %v653 = vsel %vm651, %v652, %v529
      %v654 = vshrl.u32 %v653, 4
      %v655 = vand.u32 %v653, 15
      %v656 = vsub.s32 0, %v655
      %v657 = vsel %vm651, %v656, %v655
      %vm658 = vcmp.lt.s32.totalorder %v530, 0
      %v659 = vsub.s32 0, %v530
      %v660 = vsel %vm658, %v659, %v530
      %v661 = vshrl.u32 %v660, 4
      %v662 = vand.u32 %v660, 15
      %v663 = vsub.s32 0, %v662
      %v664 = vsel %vm658, %v663, %v662
      %vm665 = vcmp.lt.s32.totalorder %v531, 0
      %v666 = vsub.s32 0, %v531
      %v667 = vsel %vm665, %v666, %v531
      %v668 = vshrl.u32 %v667, 4
      %v669 = vand.u32 %v667, 15
      %v670 = vsub.s32 0, %v669
      %v671 = vsel %vm665, %v670, %v669
      %vm672 = vcmp.lt.s32.totalorder %v532, 0
      %v673 = vsub.s32 0, %v532
      %v674 = vsel %vm672, %v673, %v532
      %v675 = vshrl.u32 %v674, 4
      %v676 = vand.u32 %v674, 15
      %v677 = vsub.s32 0, %v676
      %v678 = vsel %vm672, %v677, %v676
      %vm679 = vcmp.lt.s32.totalorder %v533, 0
      %v680 = vsub.s32 0, %v533
      %v681 = vsel %vm679, %v680, %v533
      %v682 = vshrl.u32 %v681, 4
      %v683 = vand.u32 %v681, 15
      %v684 = vsub.s32 0, %v683
      %v685 = vsel %vm679, %v684, %v683
      %vm686 = vcmp.lt.s32.totalorder %v534, 0
      %v687 = vsub.s32 0, %v534
      %v688 = vsel %vm686, %v687, %v534
      %v689 = vshrl.u32 %v688, 4
      %v690 = vand.u32 %v688, 15
      %v691 = vsub.s32 0, %v690
      %v692 = vsel %vm686, %v691, %v690
      %vm693 = vcmp.lt.s32.totalorder %v535, 0
      %v694 = vsub.s32 0, %v535
      %v695 = vsel %vm693, %v694, %v535
      %v696 = vshrl.u32 %v695, 4
      %v697 = vand.u32 %v695, 15
      %v698 = vsub.s32 0, %v697
      %v699 = vsel %vm693, %v698, %v697
      %vm700 = vcmp.lt.s32.totalorder %v536, 0
      %v701 = vsub.s32 0, %v536
      %v702 = vsel %vm700, %v701, %v536
      %v703 = vshrl.u32 %v702, 4
      %v704 = vand.u32 %v702, 15
      %v705 = vsub.s32 0, %v704
      %v706 = vsel %vm700, %v705, %v704
      %vm707 = vcmp.lt.s32.totalorder %v537, 0
      %v708 = vsub.s32 0, %v537
      %v709 = vsel %vm707, %v708, %v537
      %v710 = vshrl.u32 %v709, 4
      %v711 = vand.u32 %v709, 15
      %v712 = vsub.s32 0, %v711
      %v713 = vsel %vm707, %v712, %v711
      %vm714 = vcmp.lt.s32.totalorder %v538, 0
      %v715 = vsub.s32 0, %v538
      %v716 = vsel %vm714, %v715, %v538
      %v717 = vshrl.u32 %v716, 4
      %v718 = vand.u32 %v716, 15
      %v719 = vsub.s32 0, %v718
      %v720 = vsel %vm714, %v719, %v718
      %vm721 = vcmp.lt.s32.totalorder %v539, 0
      %v722 = vsub.s32 0, %v539
      %v723 = vsel %vm721, %v722, %v539
      %v724 = vshrl.u32 %v723, 4
      %v725 = vand.u32 %v723, 15
      %v726 = vsub.s32 0, %v725
      %v727 = vsel %vm721, %v726, %v725
      %vm728 = vcmp.lt.s32.totalorder %v540, 0
      %v729 = vsub.s32 0, %v540
      %v730 = vsel %vm728, %v729, %v540
      %v731 = vshrl.u32 %v730, 4
      %v732 = vand.u32 %v730, 15
      %v733 = vsub.s32 0, %v732
      %v734 = vsel %vm728, %v733, %v732
      %vm735 = vcmp.lt.s32.totalorder %v541, 0
      %v736 = vsub.s32 0, %v541
      %v737 = vsel %vm735, %v736, %v541
      %v738 = vshrl.u32 %v737, 4
      %v739 = vand.u32 %v737, 15
      %v740 = vsub.s32 0, %v739
      %v741 = vsel %vm735, %v740, %v739
      %vm742 = vcmp.lt.s32.totalorder %v542, 0
      %v743 = vsub.s32 0, %v542
      %v744 = vsel %vm742, %v743, %v542
      %v745 = vshrl.u32 %v744, 4
      %v746 = vand.u32 %v744, 15
      %v747 = vsub.s32 0, %v746
      %v748 = vsel %vm742, %v747, %v746
      %vm749 = vcmp.lt.s32.totalorder %v543, 0
      %v750 = vsub.s32 0, %v543
      %v751 = vsel %vm749, %v750, %v543
      %v752 = vshrl.u32 %v751, 4
      %v753 = vand.u32 %v751, 15
      %v754 = vsub.s32 0, %v753
      %v755 = vsel %vm749, %v754, %v753
      %vm756 = vcmp.lt.s32.totalorder %v544, 0
      %v757 = vsub.s32 0, %v544
      %v758 = vsel %vm756, %v757, %v544
      %v759 = vshrl.u32 %v758, 4
      %v760 = vand.u32 %v758, 15
      %v761 = vsub.s32 0, %v760
      %v762 = vsel %vm756, %v761, %v760
      %vm763 = vcmp.lt.s32.totalorder %v545, 0
      %v764 = vsub.s32 0, %v545
      %v765 = vsel %vm763, %v764, %v545
      %v766 = vshrl.u32 %v765, 4
      %v767 = vand.u32 %v765, 15
      %v768 = vsub.s32 0, %v767
      %v769 = vsel %vm763, %v768, %v767
      %vm770 = vcmp.ne.s32.totalorder %v552, 0
      %vm771 = vcmp.ne.s32.totalorder %v559, 0
      %vm772 = vcmp.ne.s32.totalorder %v566, 0
      %vm773 = vcmp.ne.s32.totalorder %v573, 0
      %vm774 = vcmp.ne.s32.totalorder %v580, 0
      %vm775 = vcmp.ne.s32.totalorder %v587, 0
      %vm776 = vcmp.ne.s32.totalorder %v594, 0
      %vm777 = vcmp.ne.s32.totalorder %v601, 0
      %vm778 = vcmp.ne.s32.totalorder %v608, 0
      %vm779 = vcmp.ne.s32.totalorder %v615, 0
      %vm780 = vcmp.ne.s32.totalorder %v622, 0
      %vm781 = vcmp.ne.s32.totalorder %v629, 0
      %vm782 = vcmp.ne.s32.totalorder %v636, 0
      %vm783 = vcmp.ne.s32.totalorder %v643, 0
      %vm784 = vcmp.ne.s32.totalorder %v650, 0
      %vm785 = vcmp.ne.s32.totalorder %v657, 0
      %vm786 = vcmp.ne.s32.totalorder %v664, 0
      %vm787 = vcmp.ne.s32.totalorder %v671, 0
      %vm788 = vcmp.ne.s32.totalorder %v678, 0
      %vm789 = vcmp.ne.s32.totalorder %v685, 0
      %vm790 = vcmp.ne.s32.totalorder %v692, 0
      %vm791 = vcmp.ne.s32.totalorder %v699, 0
      %vm792 = vcmp.ne.s32.totalorder %v706, 0
      %vm793 = vcmp.ne.s32.totalorder %v713, 0
      %vm794 = vcmp.ne.s32.totalorder %v720, 0
      %vm795 = vcmp.ne.s32.totalorder %v727, 0
      %vm796 = vcmp.ne.s32.totalorder %v734, 0
      %vm797 = vcmp.ne.s32.totalorder %v741, 0
      %vm798 = vcmp.ne.s32.totalorder %v748, 0
      %vm799 = vcmp.ne.s32.totalorder %v755, 0
      %vm800 = vcmp.ne.s32.totalorder %v762, 0
      %vm801 = vcmp.ne.s32.totalorder %v769, 0
      %vm802 = vcmp.lt.s32.totalorder %v552, 0
      %vm803 = vcmp.lt.s32.totalorder %v559, 0
      %vm804 = vcmp.lt.s32.totalorder %v566, 0
      %vm805 = vcmp.lt.s32.totalorder %v573, 0
      %vm806 = vcmp.lt.s32.totalorder %v580, 0
      %vm807 = vcmp.lt.s32.totalorder %v587, 0
      %vm808 = vcmp.lt.s32.totalorder %v594, 0
      %vm809 = vcmp.lt.s32.totalorder %v601, 0
      %vm810 = vcmp.lt.s32.totalorder %v608, 0
      %vm811 = vcmp.lt.s32.totalorder %v615, 0
      %vm812 = vcmp.lt.s32.totalorder %v622, 0
      %vm813 = vcmp.lt.s32.totalorder %v629, 0
      %vm814 = vcmp.lt.s32.totalorder %v636, 0
      %vm815 = vcmp.lt.s32.totalorder %v643, 0
      %vm816 = vcmp.lt.s32.totalorder %v650, 0
      %vm817 = vcmp.lt.s32.totalorder %v657, 0
      %vm818 = vcmp.lt.s32.totalorder %v664, 0
      %vm819 = vcmp.lt.s32.totalorder %v671, 0
      %vm820 = vcmp.lt.s32.totalorder %v678, 0
      %vm821 = vcmp.lt.s32.totalorder %v685, 0
      %vm822 = vcmp.lt.s32.totalorder %v692, 0
      %vm823 = vcmp.lt.s32.totalorder %v699, 0
      %vm824 = vcmp.lt.s32.totalorder %v706, 0
      %vm825 = vcmp.lt.s32.totalorder %v713, 0
      %vm826 = vcmp.lt.s32.totalorder %v720, 0
      %vm827 = vcmp.lt.s32.totalorder %v727, 0
      %vm828 = vcmp.lt.s32.totalorder %v734, 0
      %vm829 = vcmp.lt.s32.totalorder %v741, 0
      %vm830 = vcmp.lt.s32.totalorder %v748, 0
      %vm831 = vcmp.lt.s32.totalorder %v755, 0
      %vm832 = vcmp.lt.s32.totalorder %v762, 0
      %vm833 = vcmp.lt.s32.totalorder %v769, 0
      %vm834 = vmand %vm802, %vm770
      %vm835 = vmand %vm803, %vm771
      %vm836 = vmand %vm804, %vm772
      %vm837 = vmand %vm805, %vm773
      %vm838 = vmand %vm806, %vm774
      %vm839 = vmand %vm807, %vm775
      %vm840 = vmand %vm808, %vm776
      %vm841 = vmand %vm809, %vm777
      %vm842 = vmand %vm810, %vm778
      %vm843 = vmand %vm811, %vm779
      %vm844 = vmand %vm812, %vm780
      %vm845 = vmand %vm813, %vm781
      %vm846 = vmand %vm814, %vm782
      %vm847 = vmand %vm815, %vm783
      %vm848 = vmand %vm816, %vm784
      %vm849 = vmand %vm817, %vm785
      %vm850 = vmand %vm818, %vm786
      %vm851 = vmand %vm819, %vm787
      %vm852 = vmand %vm820, %vm788
      %vm853 = vmand %vm821, %vm789
      %vm854 = vmand %vm822, %vm790
      %vm855 = vmand %vm823, %vm791
      %vm856 = vmand %vm824, %vm792
      %vm857 = vmand %vm825, %vm793
      %vm858 = vmand %vm826, %vm794
      %vm859 = vmand %vm827, %vm795
      %vm860 = vmand %vm828, %vm796
      %vm861 = vmand %vm829, %vm797
      %vm862 = vmand %vm830, %vm798
      %vm863 = vmand %vm831, %vm799
      %vm864 = vmand %vm832, %vm800
      %vm865 = vmand %vm833, %vm801
      %v866 = vadd.s32 %v552, 16
      %v867 = vadd.s32 %v559, 16
      %v868 = vadd.s32 %v566, 16
      %v869 = vadd.s32 %v573, 16
      %v870 = vadd.s32 %v580, 16
      %v871 = vadd.s32 %v587, 16
      %v872 = vadd.s32 %v594, 16
      %v873 = vadd.s32 %v601, 16
      %v874 = vadd.s32 %v608, 16
      %v875 = vadd.s32 %v615, 16
      %v876 = vadd.s32 %v622, 16
      %v877 = vadd.s32 %v629, 16
      %v878 = vadd.s32 %v636, 16
      %v879 = vadd.s32 %v643, 16
      %v880 = vadd.s32 %v650, 16
      %v881 = vadd.s32 %v657, 16
      %v882 = vadd.s32 %v664, 16
      %v883 = vadd.s32 %v671, 16
      %v884 = vadd.s32 %v678, 16
      %v885 = vadd.s32 %v685, 16
      %v886 = vadd.s32 %v692, 16
      %v887 = vadd.s32 %v699, 16
      %v888 = vadd.s32 %v706, 16
      %v889 = vadd.s32 %v713, 16
      %v890 = vadd.s32 %v720, 16
      %v891 = vadd.s32 %v727, 16
      %v892 = vadd.s32 %v734, 16
      %v893 = vadd.s32 %v741, 16
      %v894 = vadd.s32 %v748, 16
      %v895 = vadd.s32 %v755, 16
      %v896 = vadd.s32 %v762, 16
      %v897 = vadd.s32 %v769, 16
      %v898 = vsel %vm834, %v866, %v552
      %v899 = vsel %vm835, %v867, %v559
      %v900 = vsel %vm836, %v868, %v566
      %v901 = vsel %vm837, %v869, %v573
      %v902 = vsel %vm838, %v870, %v580
      %v903 = vsel %vm839, %v871, %v587
      %v904 = vsel %vm840, %v872, %v594
      %v905 = vsel %vm841, %v873, %v601
      %v906 = vsel %vm842, %v874, %v608
      %v907 = vsel %vm843, %v875, %v615
      %v908 = vsel %vm844, %v876, %v622
      %v909 = vsel %vm845, %v877, %v629
      %v910 = vsel %vm846, %v878, %v636
      %v911 = vsel %vm847, %v879, %v643
      %v912 = vsel %vm848, %v880, %v650
      %v913 = vsel %vm849, %v881, %v657
      %v914 = vsel %vm850, %v882, %v664
      %v915 = vsel %vm851, %v883, %v671
      %v916 = vsel %vm852, %v884, %v678
      %v917 = vsel %vm853, %v885, %v685
      %v918 = vsel %vm854, %v886, %v692
      %v919 = vsel %vm855, %v887, %v699
      %v920 = vsel %vm856, %v888, %v706
      %v921 = vsel %vm857, %v889, %v713
      %v922 = vsel %vm858, %v890, %v720
      %v923 = vsel %vm859, %v891, %v727
      %v924 = vsel %vm860, %v892, %v734
      %v925 = vsel %vm861, %v893, %v741
      %v926 = vsel %vm862, %v894, %v748
      %v927 = vsel %vm863, %v895, %v755
      %v928 = vsel %vm864, %v896, %v762
      %v929 = vsel %vm865, %v897, %v769
      %vm930 = vcmp.ne.s32.totalorder %v898, 0
      %vm931 = vcmp.ne.s32.totalorder %v899, 0
      %vm932 = vcmp.ne.s32.totalorder %v900, 0
      %vm933 = vcmp.ne.s32.totalorder %v901, 0
      %vm934 = vcmp.ne.s32.totalorder %v902, 0
      %vm935 = vcmp.ne.s32.totalorder %v903, 0
      %vm936 = vcmp.ne.s32.totalorder %v904, 0
      %vm937 = vcmp.ne.s32.totalorder %v905, 0
      %vm938 = vcmp.ne.s32.totalorder %v906, 0
      %vm939 = vcmp.ne.s32.totalorder %v907, 0
      %vm940 = vcmp.ne.s32.totalorder %v908, 0
      %vm941 = vcmp.ne.s32.totalorder %v909, 0
      %vm942 = vcmp.ne.s32.totalorder %v910, 0
      %vm943 = vcmp.ne.s32.totalorder %v911, 0
      %vm944 = vcmp.ne.s32.totalorder %v912, 0
      %vm945 = vcmp.ne.s32.totalorder %v913, 0
      %vm946 = vcmp.ne.s32.totalorder %v914, 0
      %vm947 = vcmp.ne.s32.totalorder %v915, 0
      %vm948 = vcmp.ne.s32.totalorder %v916, 0
      %vm949 = vcmp.ne.s32.totalorder %v917, 0
      %vm950 = vcmp.ne.s32.totalorder %v918, 0
      %vm951 = vcmp.ne.s32.totalorder %v919, 0
      %vm952 = vcmp.ne.s32.totalorder %v920, 0
      %vm953 = vcmp.ne.s32.totalorder %v921, 0
      %vm954 = vcmp.ne.s32.totalorder %v922, 0
      %vm955 = vcmp.ne.s32.totalorder %v923, 0
      %vm956 = vcmp.ne.s32.totalorder %v924, 0
      %vm957 = vcmp.ne.s32.totalorder %v925, 0
      %vm958 = vcmp.ne.s32.totalorder %v926, 0
      %vm959 = vcmp.ne.s32.totalorder %v927, 0
      %vm960 = vcmp.ne.s32.totalorder %v928, 0
      %vm961 = vcmp.ne.s32.totalorder %v929, 0
      %vm962 = vcmp.ne.s32.totalorder %v898, 15
      %vm963 = vcmp.ne.s32.totalorder %v899, 15
      %vm964 = vcmp.ne.s32.totalorder %v900, 15
      %vm965 = vcmp.ne.s32.totalorder %v901, 15
      %vm966 = vcmp.ne.s32.totalorder %v902, 15
      %vm967 = vcmp.ne.s32.totalorder %v903, 15
      %vm968 = vcmp.ne.s32.totalorder %v904, 15
      %vm969 = vcmp.ne.s32.totalorder %v905, 15
      %vm970 = vcmp.ne.s32.totalorder %v906, 15
      %vm971 = vcmp.ne.s32.totalorder %v907, 15
      %vm972 = vcmp.ne.s32.totalorder %v908, 15
      %vm973 = vcmp.ne.s32.totalorder %v909, 15
      %vm974 = vcmp.ne.s32.totalorder %v910, 15
      %vm975 = vcmp.ne.s32.totalorder %v911, 15
      %vm976 = vcmp.ne.s32.totalorder %v912, 15
      %vm977 = vcmp.ne.s32.totalorder %v913, 15
      %vm978 = vcmp.ne.s32.totalorder %v914, 15
      %vm979 = vcmp.ne.s32.totalorder %v915, 15
      %vm980 = vcmp.ne.s32.totalorder %v916, 15
      %vm981 = vcmp.ne.s32.totalorder %v917, 15
      %vm982 = vcmp.ne.s32.totalorder %v918, 15
      %vm983 = vcmp.ne.s32.totalorder %v919, 15
      %vm984 = vcmp.ne.s32.totalorder %v920, 15
      %vm985 = vcmp.ne.s32.totalorder %v921, 15
      %vm986 = vcmp.ne.s32.totalorder %v922, 15
      %vm987 = vcmp.ne.s32.totalorder %v923, 15
      %vm988 = vcmp.ne.s32.totalorder %v924, 15
      %vm989 = vcmp.ne.s32.totalorder %v925, 15
      %vm990 = vcmp.ne.s32.totalorder %v926, 15
      %vm991 = vcmp.ne.s32.totalorder %v927, 15
      %vm992 = vcmp.ne.s32.totalorder %v928, 15
      %vm993 = vcmp.ne.s32.totalorder %v929, 15
      %v994 = vld [vmem:[#allocation2 + $0x7] sm:$0xff]
      %v995 = vld [vmem:[#allocation2 + $0xf] sm:$0xff]
      %v996 = vld [vmem:[#allocation2 + $0x17] sm:$0xff]
      %v997 = vld [vmem:[#allocation2 + $0x1f] sm:$0xff]
      %v998 = vld [vmem:[#allocation2 + $0x27] sm:$0xff]
      %v999 = vld [vmem:[#allocation2 + $0x2f] sm:$0xff]
      %v1000 = vld [vmem:[#allocation2 + $0x37] sm:$0xff]
      %v1001 = vld [vmem:[#allocation2 + $0x3f] sm:$0xff]
      %v1002 = vld [vmem:[#allocation2 + $0x47] sm:$0xff]
      %v1003 = vld [vmem:[#allocation2 + $0x4f] sm:$0xff]
      %v1004 = vld [vmem:[#allocation2 + $0x57] sm:$0xff]
      %v1005 = vld [vmem:[#allocation2 + $0x5f] sm:$0xff]
      %v1006 = vld [vmem:[#allocation2 + $0x67] sm:$0xff]
      %v1007 = vld [vmem:[#allocation2 + $0x6f] sm:$0xff]
      %v1008 = vld [vmem:[#allocation2 + $0x77] sm:$0xff]
      %v1009 = vld [vmem:[#allocation2 + $0x7f] sm:$0xff]
      %v1010 = vld [vmem:[#allocation2 + $0x87] sm:$0xff]
      %v1011 = vld [vmem:[#allocation2 + $0x8f] sm:$0xff]
      %v1012 = vld [vmem:[#allocation2 + $0x97] sm:$0xff]
      %v1013 = vld [vmem:[#allocation2 + $0x9f] sm:$0xff]
      %v1014 = vld [vmem:[#allocation2 + $0xa7] sm:$0xff]
      %v1015 = vld [vmem:[#allocation2 + $0xaf] sm:$0xff]
      %v1016 = vld [vmem:[#allocation2 + $0xb7] sm:$0xff]
      %v1017 = vld [vmem:[#allocation2 + $0xbf] sm:$0xff]
      %v1018 = vld [vmem:[#allocation2 + $0xc7] sm:$0xff]
      %v1019 = vld [vmem:[#allocation2 + $0xcf] sm:$0xff]
      %v1020 = vld [vmem:[#allocation2 + $0xd7] sm:$0xff]
      %v1021 = vld [vmem:[#allocation2 + $0xdf] sm:$0xff]
      %v1022 = vld [vmem:[#allocation2 + $0xe7] sm:$0xff]
      %v1023 = vld [vmem:[#allocation2 + $0xef] sm:$0xff]
      %v1024 = vld [vmem:[#allocation2 + $0xf7] sm:$0xff]
      %v1025 = vld [vmem:[#allocation2 + $0xff] sm:$0xff]
      %v1026 = vsel %vm930, %v994, 0.0
      %v1027 = vsel %vm931, %v995, 0.0
      %v1028 = vsel %vm932, %v996, 0.0
      %v1029 = vsel %vm933, %v997, 0.0
      %v1030 = vsel %vm934, %v998, 0.0
      %v1031 = vsel %vm935, %v999, 0.0
      %v1032 = vsel %vm936, %v1000, 0.0
      %v1033 = vsel %vm937, %v1001, 0.0
      %v1034 = vsel %vm938, %v1002, 0.0
      %v1035 = vsel %vm939, %v1003, 0.0
      %v1036 = vsel %vm940, %v1004, 0.0
      %v1037 = vsel %vm941, %v1005, 0.0
      %v1038 = vsel %vm942, %v1006, 0.0
      %v1039 = vsel %vm943, %v1007, 0.0
      %v1040 = vsel %vm944, %v1008, 0.0
      %v1041 = vsel %vm945, %v1009, 0.0
      %v1042 = vsel %vm946, %v1010, 0.0
      %v1043 = vsel %vm947, %v1011, 0.0
      %v1044 = vsel %vm948, %v1012, 0.0
      %v1045 = vsel %vm949, %v1013, 0.0
      %v1046 = vsel %vm950, %v1014, 0.0
      %v1047 = vsel %vm951, %v1015, 0.0
      %v1048 = vsel %vm952, %v1016, 0.0
      %v1049 = vsel %vm953, %v1017, 0.0
      %v1050 = vsel %vm954, %v1018, 0.0
      %v1051 = vsel %vm955, %v1019, 0.0
      %v1052 = vsel %vm956, %v1020, 0.0
      %v1053 = vsel %vm957, %v1021, 0.0
      %v1054 = vsel %vm958, %v1022, 0.0
      %v1055 = vsel %vm959, %v1023, 0.0
      %v1056 = vsel %vm960, %v1024, 0.0
      %v1057 = vsel %vm961, %v1025, 0.0
      %v1058 = vpack.c.bf16 %v1027, %v1026
      %v1059 = vpack.c.bf16 %v1029, %v1028
      %v1060 = vpack.c.bf16 %v1031, %v1030
      %v1061 = vpack.c.bf16 %v1033, %v1032
      %v1062 = vpack.c.bf16 %v1035, %v1034
      %v1063 = vpack.c.bf16 %v1037, %v1036
      %v1064 = vpack.c.bf16 %v1039, %v1038
      %v1065 = vpack.c.bf16 %v1041, %v1040
      %v1066 = vpack.c.bf16 %v1043, %v1042
      %v1067 = vpack.c.bf16 %v1045, %v1044
      %v1068 = vpack.c.bf16 %v1047, %v1046
      %v1069 = vpack.c.bf16 %v1049, %v1048
      %v1070 = vpack.c.bf16 %v1051, %v1050
      %v1071 = vpack.c.bf16 %v1053, %v1052
      %v1072 = vpack.c.bf16 %v1055, %v1054
      %v1073 = vpack.c.bf16 %v1057, %v1056
      %v1074 = vld [vmem:[%s1] sm:$0x3]
      %v1075 = vld [vmem:[#allocation2 + $0x8] sm:$0xff]
      %v1076 = vld [vmem:[#allocation2 + $0x10] sm:$0xff]
      %v1077 = vld [vmem:[#allocation2 + $0x18] sm:$0xff]
      %v1078 = vld [vmem:[#allocation2 + $0x20] sm:$0xff]
      %v1079 = vld [vmem:[#allocation2 + $0x28] sm:$0xff]
      %v1080 = vld [vmem:[#allocation2 + $0x30] sm:$0xff]
      %v1081 = vld [vmem:[#allocation2 + $0x38] sm:$0xff]
      %v1082 = vld [vmem:[#allocation2 + $0x40] sm:$0xff]
      %v1083 = vld [vmem:[#allocation2 + $0x48] sm:$0xff]
      %v1084 = vld [vmem:[#allocation2 + $0x50] sm:$0xff]
      %v1085 = vld [vmem:[#allocation2 + $0x58] sm:$0xff]
      %v1086 = vld [vmem:[#allocation2 + $0x60] sm:$0xff]
      %v1087 = vld [vmem:[#allocation2 + $0x68] sm:$0xff]
      %v1088 = vld [vmem:[#allocation2 + $0x70] sm:$0xff]
      %v1089 = vld [vmem:[#allocation2 + $0x78] sm:$0xff]
      %v1090 = vld [vmem:[#allocation2 + $0x80] sm:$0xff]
      %v1091 = vld [vmem:[#allocation2 + $0x88] sm:$0xff]
      %v1092 = vld [vmem:[#allocation2 + $0x90] sm:$0xff]
      %v1093 = vld [vmem:[#allocation2 + $0x98] sm:$0xff]
      %v1094 = vld [vmem:[#allocation2 + $0xa0] sm:$0xff]
      %v1095 = vld [vmem:[#allocation2 + $0xa8] sm:$0xff]
      %v1096 = vld [vmem:[#allocation2 + $0xb0] sm:$0xff]
      %v1097 = vld [vmem:[#allocation2 + $0xb8] sm:$0xff]
      %v1098 = vld [vmem:[#allocation2 + $0xc0] sm:$0xff]
      %v1099 = vld [vmem:[#allocation2 + $0xc8] sm:$0xff]
      %v1100 = vld [vmem:[#allocation2 + $0xd0] sm:$0xff]
      %v1101 = vld [vmem:[#allocation2 + $0xd8] sm:$0xff]
      %v1102 = vld [vmem:[#allocation2 + $0xe0] sm:$0xff]
      %v1103 = vld [vmem:[#allocation2 + $0xe8] sm:$0xff]
      %v1104 = vld [vmem:[#allocation2 + $0xf0] sm:$0xff]
      %v1105 = vld [vmem:[#allocation2 + $0xf8] sm:$0xff]
      %v1106 = vld [vmem:[#allocation2 + $0x100] sm:$0xff]
      %v1107 = vpack.c.bf16 %v1076, %v1075
      %v1108 = vpack.c.bf16 %v1078, %v1077
      %v1109 = vpack.c.bf16 %v1080, %v1079
      %v1110 = vpack.c.bf16 %v1082, %v1081
      %v1111 = vpack.c.bf16 %v1084, %v1083
      %v1112 = vpack.c.bf16 %v1086, %v1085
      %v1113 = vpack.c.bf16 %v1088, %v1087
      %v1114 = vpack.c.bf16 %v1090, %v1089
      %v1115 = vpack.c.bf16 %v1092, %v1091
      %v1116 = vpack.c.bf16 %v1094, %v1093
      %v1117 = vpack.c.bf16 %v1096, %v1095
      %v1118 = vpack.c.bf16 %v1098, %v1097
      %v1119 = vpack.c.bf16 %v1100, %v1099
      %v1120 = vpack.c.bf16 %v1102, %v1101
      %v1121 = vpack.c.bf16 %v1104, %v1103
      %v1122 = vpack.c.bf16 %v1106, %v1105
      %s1123 = scalar_lea.vmem %s1, 2
      %v1124 = vld [vmem:[%s1123] sm:$0x3]
      %v1126 = vsel %vm474, %v1107, 0
      %v1129 = vsel %vm474, %v1108, 0
      %v1132 = vsel %vm474, %v1109, 0
      %v1135 = vsel %vm474, %v1110, 0
      %v1138 = vsel %vm474, %v1111, 0
      %v1141 = vsel %vm474, %v1112, 0
      %v1144 = vsel %vm474, %v1113, 0
      %v1147 = vsel %vm474, %v1114, 0
      %v1150 = vsel %vm474, %v1115, 0
      %v1153 = vsel %vm474, %v1116, 0
      %v1156 = vsel %vm474, %v1117, 0
      %v1159 = vsel %vm474, %v1118, 0
      %v1162 = vsel %vm474, %v1119, 0
      %v1165 = vsel %vm474, %v1120, 0
      %v1168 = vsel %vm474, %v1121, 0
      %v1171 = vsel %vm474, %v1122, 0
      %vm1173 = vcmask 1040384
      %vm1174 = vcmask 1041408
      %v1175 = vsel %vm1173, 4294967295, 65535
      %v1176 = vsel %vm1174, %v1175, 0
      %v1178 = vand.u32 %v1124, %v1176
      %1180 = vmatprep.subr.bf16.mxu0 0
      %1181 = vmatpush1.bf16.msra.mxu0 %v1178
      %1182 = vmatprep.subr.bf16.mxu0 0
      %1183 = vmatpush1.bf16.msra.mxu0 0
      %1184 = vmatprep.subr.bf16.mxu0 0
      %1185 = vmatpush1.bf16.msra.mxu0 0
      %1186 = vmatprep.subr.bf16.mxu0 0
      %1187 = vmatpush1.bf16.msra.mxu0 0
      %1188 = vmatprep.subr.bf16.mxu0 0
      %1189 = vmatpush1.bf16.msra.mxu0 0
      %1190 = vmatprep.subr.bf16.mxu0 0
      %1191 = vmatpush1.bf16.msra.mxu0 0
      %1192 = vmatprep.subr.bf16.mxu0 0
      %1193 = vmatpush1.bf16.msra.mxu0 0
      %1194 = vmatprep.subr.bf16.mxu0 0
      %1195 = vmatpush1.bf16.msra.mxu0 0
      %1196 = vmatprep.subr.bf16.mxu0 0
      %1197 = vmatpush1.bf16.msra.mxu0 0
      %1198 = vmatprep.subr.bf16.mxu0 0
      %1199 = vmatpush1.bf16.msra.mxu0 0
      %1200 = vmatprep.subr.bf16.mxu0 0
      %1201 = vmatpush1.bf16.msra.mxu0 0
      %1202 = vmatprep.subr.bf16.mxu0 0
      %1203 = vmatpush1.bf16.msra.mxu0 0
      %1204 = vmatprep.subr.bf16.mxu0 0
      %1205 = vmatpush1.bf16.msra.mxu0 0
      %1206 = vmatprep.subr.bf16.mxu0 0
      %1207 = vmatpush1.bf16.msra.mxu0 0
      %1208 = vmatprep.subr.bf16.mxu0 0
      %1209 = vmatpush1.bf16.msra.mxu0 0
      %1210 = vmatprep.subr.bf16.mxu0 0
      %1211 = vmatpush1.bf16.msra.mxu0 0
      %1212 = vmatprep.mubr.bf16.mxu0 0
      %1213 = vmatmul.mubr.bf16.gmra.mrb[0].mxu0 %v1126
      %v1214 = vpop.f32.mrb[0].mxu0
      %v1215 = vadd.f32 0.0, %v1214
      %v1216 = vpop.f32.mrb[0].mxu0
      %v1217 = vpop.f32.mrb[0].mxu0
      %v1218 = vadd.f32 0.0, %v1217
      %v1219 = vpop.f32.mrb[0].mxu0
      %1220 = vmatprep.mubr.bf16.mxu0 0
      %1221 = vmatmul.mubr.bf16.gmra.mrb[0].mxu0 %v1129
      %v1222 = vpop.f32.mrb[0].mxu0
      %v1223 = vadd.f32 0.0, %v1222
      %v1224 = vpop.f32.mrb[0].mxu0
      %v1225 = vpop.f32.mrb[0].mxu0
      %v1226 = vadd.f32 0.0, %v1225
      %v1227 = vpop.f32.mrb[0].mxu0
      %1228 = vmatprep.mubr.bf16.mxu0 0
      %1229 = vmatmul.mubr.bf16.gmra.mrb[0].mxu0 %v1132
      %v1230 = vpop.f32.mrb[0].mxu0
      %v1231 = vadd.f32 0.0, %v1230
      %v1232 = vpop.f32.mrb[0].mxu0
      %v1233 = vpop.f32.mrb[0].mxu0
      %v1234 = vadd.f32 0.0, %v1233
      %v1235 = vpop.f32.mrb[0].mxu0
      %1236 = vmatprep.mubr.bf16.mxu0 0
      %1237 = vmatmul.mubr.bf16.gmra.mrb[0].mxu0 %v1135
      %v1238 = vpop.f32.mrb[0].mxu0
      %v1239 = vadd.f32 0.0, %v1238
      %v1240 = vpop.f32.mrb[0].mxu0
      %v1241 = vpop.f32.mrb[0].mxu0
      %v1242 = vadd.f32 0.0, %v1241
      %v1243 = vpop.f32.mrb[0].mxu0
      %1244 = vmatprep.mubr.bf16.mxu0 0
      %1245 = vmatmul.mubr.bf16.gmra.mrb[0].mxu0 %v1138
      %v1246 = vpop.f32.mrb[0].mxu0
      %v1247 = vadd.f32 0.0, %v1246
      %v1248 = vpop.f32.mrb[0].mxu0
      %v1249 = vpop.f32.mrb[0].mxu0
      %v1250 = vadd.f32 0.0, %v1249
      %v1251 = vpop.f32.mrb[0].mxu0
      %1252 = vmatprep.mubr.bf16.mxu0 0
      %1253 = vmatmul.mubr.bf16.gmra.mrb[0].mxu0 %v1141
      %v1254 = vpop.f32.mrb[0].mxu0
      %v1255 = vadd.f32 0.0, %v1254
      %v1256 = vpop.f32.mrb[0].mxu0
      %v1257 = vpop.f32.mrb[0].mxu0
      %v1258 = vadd.f32 0.0, %v1257
      %v1259 = vpop.f32.mrb[0].mxu0
      %1260 = vmatprep.mubr.bf16.mxu0 0
      %1261 = vmatmul.mubr.bf16.gmra.mrb[0].mxu0 %v1144
      %v1262 = vpop.f32.mrb[0].mxu0
      %v1263 = vadd.f32 0.0, %v1262
      %v1264 = vpop.f32.mrb[0].mxu0
      %v1265 = vpop.f32.mrb[0].mxu0
      %v1266 = vadd.f32 0.0, %v1265
      %v1267 = vpop.f32.mrb[0].mxu0
      %1268 = vmatprep.mubr.bf16.mxu0 0
      %1269 = vmatmul.mubr.bf16.gmra.mrb[0].mxu0 %v1147
      %v1270 = vpop.f32.mrb[0].mxu0
      %v1271 = vadd.f32 0.0, %v1270
      %v1272 = vpop.f32.mrb[0].mxu0
      %v1273 = vpop.f32.mrb[0].mxu0
      %v1274 = vadd.f32 0.0, %v1273
      %v1275 = vpop.f32.mrb[0].mxu0
      %1276 = vmatprep.mubr.bf16.mxu0 0
      %1277 = vmatmul.mubr.bf16.gmra.mrb[0].mxu0 %v1150
      %v1278 = vpop.f32.mrb[0].mxu0
      %v1279 = vadd.f32 0.0, %v1278
      %v1280 = vpop.f32.mrb[0].mxu0
      %v1281 = vpop.f32.mrb[0].mxu0
      %v1282 = vadd.f32 0.0, %v1281
      %v1283 = vpop.f32.mrb[0].mxu0
      %1284 = vmatprep.mubr.bf16.mxu0 0
      %1285 = vmatmul.mubr.bf16.gmra.mrb[0].mxu0 %v1153
      %v1286 = vpop.f32.mrb[0].mxu0
      %v1287 = vadd.f32 0.0, %v1286
      %v1288 = vpop.f32.mrb[0].mxu0
      %v1289 = vpop.f32.mrb[0].mxu0
      %v1290 = vadd.f32 0.0, %v1289
      %v1291 = vpop.f32.mrb[0].mxu0
      %1292 = vmatprep.mubr.bf16.mxu0 0
      %1293 = vmatmul.mubr.bf16.gmra.mrb[0].mxu0 %v1156
      %v1294 = vpop.f32.mrb[0].mxu0
      %v1295 = vadd.f32 0.0, %v1294
      %v1296 = vpop.f32.mrb[0].mxu0
      %v1297 = vpop.f32.mrb[0].mxu0
      %v1298 = vadd.f32 0.0, %v1297
      %v1299 = vpop.f32.mrb[0].mxu0
      %1300 = vmatprep.mubr.bf16.mxu0 0
      %1301 = vmatmul.mubr.bf16.gmra.mrb[0].mxu0 %v1159
      %v1302 = vpop.f32.mrb[0].mxu0
      %v1303 = vadd.f32 0.0, %v1302
      %v1304 = vpop.f32.mrb[0].mxu0
      %v1305 = vpop.f32.mrb[0].mxu0
      %v1306 = vadd.f32 0.0, %v1305
      %v1307 = vpop.f32.mrb[0].mxu0
      %1308 = vmatprep.mubr.bf16.mxu0 0
      %1309 = vmatmul.mubr.bf16.gmra.mrb[0].mxu0 %v1162
      %v1310 = vpop.f32.mrb[0].mxu0
      %v1311 = vadd.f32 0.0, %v1310
      %v1312 = vpop.f32.mrb[0].mxu0
      %v1313 = vpop.f32.mrb[0].mxu0
      %v1314 = vadd.f32 0.0, %v1313
      %v1315 = vpop.f32.mrb[0].mxu0
      %1316 = vmatprep.mubr.bf16.mxu0 0
      %1317 = vmatmul.mubr.bf16.gmra.mrb[0].mxu0 %v1165
      %v1318 = vpop.f32.mrb[0].mxu0
      %v1319 = vadd.f32 0.0, %v1318
      %v1320 = vpop.f32.mrb[0].mxu0
      %v1321 = vpop.f32.mrb[0].mxu0
      %v1322 = vadd.f32 0.0, %v1321
      %v1323 = vpop.f32.mrb[0].mxu0
      %1324 = vmatprep.mubr.bf16.mxu0 0
      %1325 = vmatmul.mubr.bf16.gmra.mrb[0].mxu0 %v1168
      %v1326 = vpop.f32.mrb[0].mxu0
      %v1327 = vadd.f32 0.0, %v1326
      %v1328 = vpop.f32.mrb[0].mxu0
      %v1329 = vpop.f32.mrb[0].mxu0
      %v1330 = vadd.f32 0.0, %v1329
      %v1331 = vpop.f32.mrb[0].mxu0
      %1332 = vmatprep.mubr.bf16.mxu0 0
      %1333 = vmatmul.mubr.bf16.gmra.mrb[0].mxu0 %v1171
      %v1334 = vpop.f32.mrb[0].mxu0
      %v1335 = vadd.f32 0.0, %v1334
      %v1336 = vpop.f32.mrb[0].mxu0
      %v1337 = vpop.f32.mrb[0].mxu0
      %v1338 = vadd.f32 0.0, %v1337
      %v1339 = vpop.f32.mrb[0].mxu0
      %1340 = vdwg.mxu0
      %v1342 = vsel %vm474, %v1058, 0
      %v1345 = vsel %vm474, %v1059, 0
      %v1348 = vsel %vm474, %v1060, 0
      %v1351 = vsel %vm474, %v1061, 0
      %v1354 = vsel %vm474, %v1062, 0
      %v1357 = vsel %vm474, %v1063, 0
      %v1360 = vsel %vm474, %v1064, 0
      %v1363 = vsel %vm474, %v1065, 0
      %v1366 = vsel %vm474, %v1066, 0
      %v1369 = vsel %vm474, %v1067, 0
      %v1372 = vsel %vm474, %v1068, 0
      %v1375 = vsel %vm474, %v1069, 0
      %v1378 = vsel %vm474, %v1070, 0
      %v1381 = vsel %vm474, %v1071, 0
      %v1384 = vsel %vm474, %v1072, 0
      %v1387 = vsel %vm474, %v1073, 0
      %v1390 = vand.u32 %v1074, %v1176
      %1392 = vmatprep.subr.bf16.mxu0 0
      %1393 = vmatpush1.bf16.msra.mxu0 %v1390
      %1394 = vmatprep.subr.bf16.mxu0 0
      %1395 = vmatpush1.bf16.msra.mxu0 0
      %1396 = vmatprep.subr.bf16.mxu0 0
      %1397 = vmatpush1.bf16.msra.mxu0 0
      %1398 = vmatprep.subr.bf16.mxu0 0
      %1399 = vmatpush1.bf16.msra.mxu0 0
      %1400 = vmatprep.subr.bf16.mxu0 0
      %1401 = vmatpush1.bf16.msra.mxu0 0
      %1402 = vmatprep.subr.bf16.mxu0 0
      %1403 = vmatpush1.bf16.msra.mxu0 0
      %1404 = vmatprep.subr.bf16.mxu0 0
      %1405 = vmatpush1.bf16.msra.mxu0 0
      %1406 = vmatprep.subr.bf16.mxu0 0
      %1407 = vmatpush1.bf16.msra.mxu0 0
      %1408 = vmatprep.subr.bf16.mxu0 0
      %1409 = vmatpush1.bf16.msra.mxu0 0
      %1410 = vmatprep.subr.bf16.mxu0 0
      %1411 = vmatpush1.bf16.msra.mxu0 0
      %1412 = vmatprep.subr.bf16.mxu0 0
      %1413 = vmatpush1.bf16.msra.mxu0 0
      %1414 = vmatprep.subr.bf16.mxu0 0
      %1415 = vmatpush1.bf16.msra.mxu0 0
      %1416 = vmatprep.subr.bf16.mxu0 0
      %1417 = vmatpush1.bf16.msra.mxu0 0
      %1418 = vmatprep.subr.bf16.mxu0 0
      %1419 = vmatpush1.bf16.msra.mxu0 0
      %1420 = vmatprep.subr.bf16.mxu0 0
      %1421 = vmatpush1.bf16.msra.mxu0 0
      %1422 = vmatprep.subr.bf16.mxu0 0
      %1423 = vmatpush1.bf16.msra.mxu0 0
      %1424 = vmatprep.mubr.bf16.mxu0 0
      %1425 = vmatmul.mubr.bf16.gmra.mrb[0].mxu0 %v1342
      %v1426 = vpop.f32.mrb[0].mxu0
      %v1427 = vadd.f32 %v1215, %v1426
      %v1428 = vpop.f32.mrb[0].mxu0
      %v1429 = vpop.f32.mrb[0].mxu0
      %v1430 = vadd.f32 %v1218, %v1429
      %v1431 = vpop.f32.mrb[0].mxu0
      %1432 = vmatprep.mubr.bf16.mxu0 0
      %1433 = vmatmul.mubr.bf16.gmra.mrb[0].mxu0 %v1345
      %v1434 = vpop.f32.mrb[0].mxu0
      %v1435 = vadd.f32 %v1223, %v1434
      %v1436 = vpop.f32.mrb[0].mxu0
      %v1437 = vpop.f32.mrb[0].mxu0
      %v1438 = vadd.f32 %v1226, %v1437
      %v1439 = vpop.f32.mrb[0].mxu0
      %1440 = vmatprep.mubr.bf16.mxu0 0
      %1441 = vmatmul.mubr.bf16.gmra.mrb[0].mxu0 %v1348
      %v1442 = vpop.f32.mrb[0].mxu0
      %v1443 = vadd.f32 %v1231, %v1442
      %v1444 = vpop.f32.mrb[0].mxu0
      %v1445 = vpop.f32.mrb[0].mxu0
      %v1446 = vadd.f32 %v1234, %v1445
      %v1447 = vpop.f32.mrb[0].mxu0
      %1448 = vmatprep.mubr.bf16.mxu0 0
      %1449 = vmatmul.mubr.bf16.gmra.mrb[0].mxu0 %v1351
      %v1450 = vpop.f32.mrb[0].mxu0
      %v1451 = vadd.f32 %v1239, %v1450
      %v1452 = vpop.f32.mrb[0].mxu0
      %v1453 = vpop.f32.mrb[0].mxu0
      %v1454 = vadd.f32 %v1242, %v1453
      %v1455 = vpop.f32.mrb[0].mxu0
      %1456 = vmatprep.mubr.bf16.mxu0 0
      %1457 = vmatmul.mubr.bf16.gmra.mrb[0].mxu0 %v1354
      %v1458 = vpop.f32.mrb[0].mxu0
      %v1459 = vadd.f32 %v1247, %v1458
      %v1460 = vpop.f32.mrb[0].mxu0
      %v1461 = vpop.f32.mrb[0].mxu0
      %v1462 = vadd.f32 %v1250, %v1461
      %v1463 = vpop.f32.mrb[0].mxu0
      %1464 = vmatprep.mubr.bf16.mxu0 0
      %1465 = vmatmul.mubr.bf16.gmra.mrb[0].mxu0 %v1357
      %v1466 = vpop.f32.mrb[0].mxu0
      %v1467 = vadd.f32 %v1255, %v1466
      %v1468 = vpop.f32.mrb[0].mxu0
      %v1469 = vpop.f32.mrb[0].mxu0
      %v1470 = vadd.f32 %v1258, %v1469
      %v1471 = vpop.f32.mrb[0].mxu0
      %1472 = vmatprep.mubr.bf16.mxu0 0
      %1473 = vmatmul.mubr.bf16.gmra.mrb[0].mxu0 %v1360
      %v1474 = vpop.f32.mrb[0].mxu0
      %v1475 = vadd.f32 %v1263, %v1474
      %v1476 = vpop.f32.mrb[0].mxu0
      %v1477 = vpop.f32.mrb[0].mxu0
      %v1478 = vadd.f32 %v1266, %v1477
      %v1479 = vpop.f32.mrb[0].mxu0
      %1480 = vmatprep.mubr.bf16.mxu0 0
      %1481 = vmatmul.mubr.bf16.gmra.mrb[0].mxu0 %v1363
      %v1482 = vpop.f32.mrb[0].mxu0
      %v1483 = vadd.f32 %v1271, %v1482
      %v1484 = vpop.f32.mrb[0].mxu0
      %v1485 = vpop.f32.mrb[0].mxu0
      %v1486 = vadd.f32 %v1274, %v1485
      %v1487 = vpop.f32.mrb[0].mxu0
      %1488 = vmatprep.mubr.bf16.mxu0 0
      %1489 = vmatmul.mubr.bf16.gmra.mrb[0].mxu0 %v1366
      %v1490 = vpop.f32.mrb[0].mxu0
      %v1491 = vadd.f32 %v1279, %v1490
      %v1492 = vpop.f32.mrb[0].mxu0
      %v1493 = vpop.f32.mrb[0].mxu0
      %v1494 = vadd.f32 %v1282, %v1493
      %v1495 = vpop.f32.mrb[0].mxu0
      %1496 = vmatprep.mubr.bf16.mxu0 0
      %1497 = vmatmul.mubr.bf16.gmra.mrb[0].mxu0 %v1369
      %v1498 = vpop.f32.mrb[0].mxu0
      %v1499 = vadd.f32 %v1287, %v1498
      %v1500 = vpop.f32.mrb[0].mxu0
      %v1501 = vpop.f32.mrb[0].mxu0
      %v1502 = vadd.f32 %v1290, %v1501
      %v1503 = vpop.f32.mrb[0].mxu0
      %1504 = vmatprep.mubr.bf16.mxu0 0
      %1505 = vmatmul.mubr.bf16.gmra.mrb[0].mxu0 %v1372
      %v1506 = vpop.f32.mrb[0].mxu0
      %v1507 = vadd.f32 %v1295, %v1506
      %v1508 = vpop.f32.mrb[0].mxu0
      %v1509 = vpop.f32.mrb[0].mxu0
      %v1510 = vadd.f32 %v1298, %v1509
      %v1511 = vpop.f32.mrb[0].mxu0
      %1512 = vmatprep.mubr.bf16.mxu0 0
      %1513 = vmatmul.mubr.bf16.gmra.mrb[0].mxu0 %v1375
      %v1514 = vpop.f32.mrb[0].mxu0
      %v1515 = vadd.f32 %v1303, %v1514
      %v1516 = vpop.f32.mrb[0].mxu0
      %v1517 = vpop.f32.mrb[0].mxu0
      %v1518 = vadd.f32 %v1306, %v1517
      %v1519 = vpop.f32.mrb[0].mxu0
      %1520 = vmatprep.mubr.bf16.mxu0 0
      %1521 = vmatmul.mubr.bf16.gmra.mrb[0].mxu0 %v1378
      %v1522 = vpop.f32.mrb[0].mxu0
      %v1523 = vadd.f32 %v1311, %v1522
      %v1524 = vpop.f32.mrb[0].mxu0
      %v1525 = vpop.f32.mrb[0].mxu0
      %v1526 = vadd.f32 %v1314, %v1525
      %v1527 = vpop.f32.mrb[0].mxu0
      %1528 = vmatprep.mubr.bf16.mxu0 0
      %1529 = vmatmul.mubr.bf16.gmra.mrb[0].mxu0 %v1381
      %v1530 = vpop.f32.mrb[0].mxu0
      %v1531 = vadd.f32 %v1319, %v1530
      %v1532 = vpop.f32.mrb[0].mxu0
      %v1533 = vpop.f32.mrb[0].mxu0
      %v1534 = vadd.f32 %v1322, %v1533
      %v1535 = vpop.f32.mrb[0].mxu0
      %1536 = vmatprep.mubr.bf16.mxu0 0
      %1537 = vmatmul.mubr.bf16.gmra.mrb[0].mxu0 %v1384
      %v1538 = vpop.f32.mrb[0].mxu0
      %v1539 = vadd.f32 %v1327, %v1538
      %v1540 = vpop.f32.mrb[0].mxu0
      %v1541 = vpop.f32.mrb[0].mxu0
      %v1542 = vadd.f32 %v1330, %v1541
      %v1543 = vpop.f32.mrb[0].mxu0
      %1544 = vmatprep.mubr.bf16.mxu0 0
      %1545 = vmatmul.mubr.bf16.gmra.mrb[0].mxu0 %v1387
      %v1546 = vpop.f32.mrb[0].mxu0
      %v1547 = vadd.f32 %v1335, %v1546
      %v1548 = vpop.f32.mrb[0].mxu0
      %v1549 = vpop.f32.mrb[0].mxu0
      %v1550 = vadd.f32 %v1338, %v1549
      %v1551 = vpop.f32.mrb[0].mxu0
      %1552 = vdwg.mxu0
      %v1553 = vld [vmem:[#allocation2 + $0x9] sm:$0xff]
      %v1554 = vld [vmem:[#allocation2 + $0x11] sm:$0xff]
      %v1555 = vld [vmem:[#allocation2 + $0x19] sm:$0xff]
      %v1556 = vld [vmem:[#allocation2 + $0x21] sm:$0xff]
      %v1557 = vld [vmem:[#allocation2 + $0x29] sm:$0xff]
      %v1558 = vld [vmem:[#allocation2 + $0x31] sm:$0xff]
      %v1559 = vld [vmem:[#allocation2 + $0x39] sm:$0xff]
      %v1560 = vld [vmem:[#allocation2 + $0x41] sm:$0xff]
      %v1561 = vld [vmem:[#allocation2 + $0x49] sm:$0xff]
      %v1562 = vld [vmem:[#allocation2 + $0x51] sm:$0xff]
      %v1563 = vld [vmem:[#allocation2 + $0x59] sm:$0xff]
      %v1564 = vld [vmem:[#allocation2 + $0x61] sm:$0xff]
      %v1565 = vld [vmem:[#allocation2 + $0x69] sm:$0xff]
      %v1566 = vld [vmem:[#allocation2 + $0x71] sm:$0xff]
      %v1567 = vld [vmem:[#allocation2 + $0x79] sm:$0xff]
      %v1568 = vld [vmem:[#allocation2 + $0x81] sm:$0xff]
      %v1569 = vld [vmem:[#allocation2 + $0x89] sm:$0xff]
      %v1570 = vld [vmem:[#allocation2 + $0x91] sm:$0xff]
      %v1571 = vld [vmem:[#allocation2 + $0x99] sm:$0xff]
      %v1572 = vld [vmem:[#allocation2 + $0xa1] sm:$0xff]
      %v1573 = vld [vmem:[#allocation2 + $0xa9] sm:$0xff]
      %v1574 = vld [vmem:[#allocation2 + $0xb1] sm:$0xff]
      %v1575 = vld [vmem:[#allocation2 + $0xb9] sm:$0xff]
      %v1576 = vld [vmem:[#allocation2 + $0xc1] sm:$0xff]
      %v1577 = vld [vmem:[#allocation2 + $0xc9] sm:$0xff]
      %v1578 = vld [vmem:[#allocation2 + $0xd1] sm:$0xff]
      %v1579 = vld [vmem:[#allocation2 + $0xd9] sm:$0xff]
      %v1580 = vld [vmem:[#allocation2 + $0xe1] sm:$0xff]
      %v1581 = vld [vmem:[#allocation2 + $0xe9] sm:$0xff]
      %v1582 = vld [vmem:[#allocation2 + $0xf1] sm:$0xff]
      %v1583 = vld [vmem:[#allocation2 + $0xf9] sm:$0xff]
      %v1584 = vld [vmem:[#allocation2 + $0x101] sm:$0xff]
      %v1585 = vsel %vm962, %v1553, 0.0
      %v1586 = vsel %vm963, %v1554, 0.0
      %v1587 = vsel %vm964, %v1555, 0.0
      %v1588 = vsel %vm965, %v1556, 0.0
      %v1589 = vsel %vm966, %v1557, 0.0
      %v1590 = vsel %vm967, %v1558, 0.0
      %v1591 = vsel %vm968, %v1559, 0.0
      %v1592 = vsel %vm969, %v1560, 0.0
      %v1593 = vsel %vm970, %v1561, 0.0
      %v1594 = vsel %vm971, %v1562, 0.0
      %v1595 = vsel %vm972, %v1563, 0.0
      %v1596 = vsel %vm973, %v1564, 0.0
      %v1597 = vsel %vm974, %v1565, 0.0
      %v1598 = vsel %vm975, %v1566, 0.0
      %v1599 = vsel %vm976, %v1567, 0.0
      %v1600 = vsel %vm977, %v1568, 0.0
      %v1601 = vsel %vm978, %v1569, 0.0
      %v1602 = vsel %vm979, %v1570, 0.0
      %v1603 = vsel %vm980, %v1571, 0.0
      %v1604 = vsel %vm981, %v1572, 0.0
      %v1605 = vsel %vm982, %v1573, 0.0
      %v1606 = vsel %vm983, %v1574, 0.0
      %v1607 = vsel %vm984, %v1575, 0.0
      %v1608 = vsel %vm985, %v1576, 0.0
      %v1609 = vsel %vm986, %v1577, 0.0
      %v1610 = vsel %vm987, %v1578, 0.0
      %v1611 = vsel %vm988, %v1579, 0.0
      %v1612 = vsel %vm989, %v1580, 0.0
      %v1613 = vsel %vm990, %v1581, 0.0
      %v1614 = vsel %vm991, %v1582, 0.0
      %v1615 = vsel %vm992, %v1583, 0.0
      %v1616 = vsel %vm993, %v1584, 0.0
      %v1617 = vpack.c.bf16 %v1586, %v1585
      %v1618 = vpack.c.bf16 %v1588, %v1587
      %v1619 = vpack.c.bf16 %v1590, %v1589
      %v1620 = vpack.c.bf16 %v1592, %v1591
      %v1621 = vpack.c.bf16 %v1594, %v1593
      %v1622 = vpack.c.bf16 %v1596, %v1595
      %v1623 = vpack.c.bf16 %v1598, %v1597
      %v1624 = vpack.c.bf16 %v1600, %v1599
      %v1625 = vpack.c.bf16 %v1602, %v1601
      %v1626 = vpack.c.bf16 %v1604, %v1603
      %v1627 = vpack.c.bf16 %v1606, %v1605
      %v1628 = vpack.c.bf16 %v1608, %v1607
      %v1629 = vpack.c.bf16 %v1610, %v1609
      %v1630 = vpack.c.bf16 %v1612, %v1611
      %v1631 = vpack.c.bf16 %v1614, %v1613
      %v1632 = vpack.c.bf16 %v1616, %v1615
      %s1633 = scalar_lea.vmem %s1, 4
      %v1634 = vld [vmem:[%s1633] sm:$0x3]
      %v1636 = vsel %vm474, %v1617, 0
      %v1639 = vsel %vm474, %v1618, 0
      %v1642 = vsel %vm474, %v1619, 0
      %v1645 = vsel %vm474, %v1620, 0
      %v1648 = vsel %vm474, %v1621, 0
      %v1651 = vsel %vm474, %v1622, 0
      %v1654 = vsel %vm474, %v1623, 0
      %v1657 = vsel %vm474, %v1624, 0
      %v1660 = vsel %vm474, %v1625, 0
      %v1663 = vsel %vm474, %v1626, 0
      %v1666 = vsel %vm474, %v1627, 0
      %v1669 = vsel %vm474, %v1628, 0
      %v1672 = vsel %vm474, %v1629, 0
      %v1675 = vsel %vm474, %v1630, 0
      %v1678 = vsel %vm474, %v1631, 0
      %v1681 = vsel %vm474, %v1632, 0
      %v1684 = vand.u32 %v1634, %v1176
      %1686 = vmatprep.subr.bf16.mxu0 0
      %1687 = vmatpush1.bf16.msra.mxu0 %v1684
      %1688 = vmatprep.subr.bf16.mxu0 0
      %1689 = vmatpush1.bf16.msra.mxu0 0
      %1690 = vmatprep.subr.bf16.mxu0 0
      %1691 = vmatpush1.bf16.msra.mxu0 0
      %1692 = vmatprep.subr.bf16.mxu0 0
      %1693 = vmatpush1.bf16.msra.mxu0 0
      %1694 = vmatprep.subr.bf16.mxu0 0
      %1695 = vmatpush1.bf16.msra.mxu0 0
      %1696 = vmatprep.subr.bf16.mxu0 0
      %1697 = vmatpush1.bf16.msra.mxu0 0
      %1698 = vmatprep.subr.bf16.mxu0 0
      %1699 = vmatpush1.bf16.msra.mxu0 0
      %1700 = vmatprep.subr.bf16.mxu0 0
      %1701 = vmatpush1.bf16.msra.mxu0 0
      %1702 = vmatprep.subr.bf16.mxu0 0
      %1703 = vmatpush1.bf16.msra.mxu0 0
      %1704 = vmatprep.subr.bf16.mxu0 0
      %1705 = vmatpush1.bf16.msra.mxu0 0
      %1706 = vmatprep.subr.bf16.mxu0 0
      %1707 = vmatpush1.bf16.msra.mxu0 0
      %1708 = vmatprep.subr.bf16.mxu0 0
      %1709 = vmatpush1.bf16.msra.mxu0 0
      %1710 = vmatprep.subr.bf16.mxu0 0
      %1711 = vmatpush1.bf16.msra.mxu0 0
      %1712 = vmatprep.subr.bf16.mxu0 0
      %1713 = vmatpush1.bf16.msra.mxu0 0
      %1714 = vmatprep.subr.bf16.mxu0 0
      %1715 = vmatpush1.bf16.msra.mxu0 0
      %1716 = vmatprep.subr.bf16.mxu0 0
      %1717 = vmatpush1.bf16.msra.mxu0 0
      %1718 = vmatprep.mubr.bf16.mxu0 0
      %1719 = vmatmul.mubr.bf16.gmra.mrb[0].mxu0 %v1636
      %v1720 = vpop.f32.mrb[0].mxu0
      %v1721 = vadd.f32 0.0, %v1720
      %v1722 = vpop.f32.mrb[0].mxu0
      %v1723 = vpop.f32.mrb[0].mxu0
      %v1724 = vadd.f32 0.0, %v1723
      %v1725 = vpop.f32.mrb[0].mxu0
      %1726 = vmatprep.mubr.bf16.mxu0 0
      %1727 = vmatmul.mubr.bf16.gmra.mrb[0].mxu0 %v1639
      %v1728 = vpop.f32.mrb[0].mxu0
      %v1729 = vadd.f32 0.0, %v1728
      %v1730 = vpop.f32.mrb[0].mxu0
      %v1731 = vpop.f32.mrb[0].mxu0
      %v1732 = vadd.f32 0.0, %v1731
      %v1733 = vpop.f32.mrb[0].mxu0
      %1734 = vmatprep.mubr.bf16.mxu0 0
      %1735 = vmatmul.mubr.bf16.gmra.mrb[0].mxu0 %v1642
      %v1736 = vpop.f32.mrb[0].mxu0
      %v1737 = vadd.f32 0.0, %v1736
      %v1738 = vpop.f32.mrb[0].mxu0
      %v1739 = vpop.f32.mrb[0].mxu0
      %v1740 = vadd.f32 0.0, %v1739
      %v1741 = vpop.f32.mrb[0].mxu0
      %1742 = vmatprep.mubr.bf16.mxu0 0
      %1743 = vmatmul.mubr.bf16.gmra.mrb[0].mxu0 %v1645
      %v1744 = vpop.f32.mrb[0].mxu0
      %v1745 = vadd.f32 0.0, %v1744
      %v1746 = vpop.f32.mrb[0].mxu0
      %v1747 = vpop.f32.mrb[0].mxu0
      %v1748 = vadd.f32 0.0, %v1747
      %v1749 = vpop.f32.mrb[0].mxu0
      %1750 = vmatprep.mubr.bf16.mxu0 0
      %1751 = vmatmul.mubr.bf16.gmra.mrb[0].mxu0 %v1648
      %v1752 = vpop.f32.mrb[0].mxu0
      %v1753 = vadd.f32 0.0, %v1752
      %v1754 = vpop.f32.mrb[0].mxu0
      %v1755 = vpop.f32.mrb[0].mxu0
      %v1756 = vadd.f32 0.0, %v1755
      %v1757 = vpop.f32.mrb[0].mxu0
      %1758 = vmatprep.mubr.bf16.mxu0 0
      %1759 = vmatmul.mubr.bf16.gmra.mrb[0].mxu0 %v1651
      %v1760 = vpop.f32.mrb[0].mxu0
      %v1761 = vadd.f32 0.0, %v1760
      %v1762 = vpop.f32.mrb[0].mxu0
      %v1763 = vpop.f32.mrb[0].mxu0
      %v1764 = vadd.f32 0.0, %v1763
      %v1765 = vpop.f32.mrb[0].mxu0
      %1766 = vmatprep.mubr.bf16.mxu0 0
      %1767 = vmatmul.mubr.bf16.gmra.mrb[0].mxu0 %v1654
      %v1768 = vpop.f32.mrb[0].mxu0
      %v1769 = vadd.f32 0.0, %v1768
      %v1770 = vpop.f32.mrb[0].mxu0
      %v1771 = vpop.f32.mrb[0].mxu0
      %v1772 = vadd.f32 0.0, %v1771
      %v1773 = vpop.f32.mrb[0].mxu0
      %1774 = vmatprep.mubr.bf16.mxu0 0
      %1775 = vmatmul.mubr.bf16.gmra.mrb[0].mxu0 %v1657
      %v1776 = vpop.f32.mrb[0].mxu0
      %v1777 = vadd.f32 0.0, %v1776
      %v1778 = vpop.f32.mrb[0].mxu0
      %v1779 = vpop.f32.mrb[0].mxu0
      %v1780 = vadd.f32 0.0, %v1779
      %v1781 = vpop.f32.mrb[0].mxu0
      %1782 = vmatprep.mubr.bf16.mxu0 0
      %1783 = vmatmul.mubr.bf16.gmra.mrb[0].mxu0 %v1660
      %v1784 = vpop.f32.mrb[0].mxu0
      %v1785 = vadd.f32 0.0, %v1784
      %v1786 = vpop.f32.mrb[0].mxu0
      %v1787 = vpop.f32.mrb[0].mxu0
      %v1788 = vadd.f32 0.0, %v1787
      %v1789 = vpop.f32.mrb[0].mxu0
      %1790 = vmatprep.mubr.bf16.mxu0 0
      %1791 = vmatmul.mubr.bf16.gmra.mrb[0].mxu0 %v1663
      %v1792 = vpop.f32.mrb[0].mxu0
      %v1793 = vadd.f32 0.0, %v1792
      %v1794 = vpop.f32.mrb[0].mxu0
      %v1795 = vpop.f32.mrb[0].mxu0
      %v1796 = vadd.f32 0.0, %v1795
      %v1797 = vpop.f32.mrb[0].mxu0
      %1798 = vmatprep.mubr.bf16.mxu0 0
      %1799 = vmatmul.mubr.bf16.gmra.mrb[0].mxu0 %v1666
      %v1800 = vpop.f32.mrb[0].mxu0
      %v1801 = vadd.f32 0.0, %v1800
      %v1802 = vpop.f32.mrb[0].mxu0
      %v1803 = vpop.f32.mrb[0].mxu0
      %v1804 = vadd.f32 0.0, %v1803
      %v1805 = vpop.f32.mrb[0].mxu0
      %1806 = vmatprep.mubr.bf16.mxu0 0
      %1807 = vmatmul.mubr.bf16.gmra.mrb[0].mxu0 %v1669
      %v1808 = vpop.f32.mrb[0].mxu0
      %v1809 = vadd.f32 0.0, %v1808
      %v1810 = vpop.f32.mrb[0].mxu0
      %v1811 = vpop.f32.mrb[0].mxu0
      %v1812 = vadd.f32 0.0, %v1811
      %v1813 = vpop.f32.mrb[0].mxu0
      %1814 = vmatprep.mubr.bf16.mxu0 0
      %1815 = vmatmul.mubr.bf16.gmra.mrb[0].mxu0 %v1672
      %v1816 = vpop.f32.mrb[0].mxu0
      %v1817 = vadd.f32 0.0, %v1816
      %v1818 = vpop.f32.mrb[0].mxu0
      %v1819 = vpop.f32.mrb[0].mxu0
      %v1820 = vadd.f32 0.0, %v1819
      %v1821 = vpop.f32.mrb[0].mxu0
      %1822 = vmatprep.mubr.bf16.mxu0 0
      %1823 = vmatmul.mubr.bf16.gmra.mrb[0].mxu0 %v1675
      %v1824 = vpop.f32.mrb[0].mxu0
      %v1825 = vadd.f32 0.0, %v1824
      %v1826 = vpop.f32.mrb[0].mxu0
      %v1827 = vpop.f32.mrb[0].mxu0
      %v1828 = vadd.f32 0.0, %v1827
      %v1829 = vpop.f32.mrb[0].mxu0
      %1830 = vmatprep.mubr.bf16.mxu0 0
      %1831 = vmatmul.mubr.bf16.gmra.mrb[0].mxu0 %v1678
      %v1832 = vpop.f32.mrb[0].mxu0
      %v1833 = vadd.f32 0.0, %v1832
      %v1834 = vpop.f32.mrb[0].mxu0
      %v1835 = vpop.f32.mrb[0].mxu0
      %v1836 = vadd.f32 0.0, %v1835
      %v1837 = vpop.f32.mrb[0].mxu0
      %1838 = vmatprep.mubr.bf16.mxu0 0
      %1839 = vmatmul.mubr.bf16.gmra.mrb[0].mxu0 %v1681
      %v1840 = vpop.f32.mrb[0].mxu0
      %v1841 = vadd.f32 0.0, %v1840
      %v1842 = vpop.f32.mrb[0].mxu0
      %v1843 = vpop.f32.mrb[0].mxu0
      %v1844 = vadd.f32 0.0, %v1843
      %v1845 = vpop.f32.mrb[0].mxu0
      %1846 = vdwg.mxu0
      %v1847 = vadd.f32 %v1427, %v1721
      %v1848 = vadd.f32 %v1430, %v1724
      %v1849 = vadd.f32 %v1435, %v1729
      %v1850 = vadd.f32 %v1438, %v1732
      %v1851 = vadd.f32 %v1443, %v1737
      %v1852 = vadd.f32 %v1446, %v1740
      %v1853 = vadd.f32 %v1451, %v1745
      %v1854 = vadd.f32 %v1454, %v1748
      %v1855 = vadd.f32 %v1459, %v1753
      %v1856 = vadd.f32 %v1462, %v1756
      %v1857 = vadd.f32 %v1467, %v1761
      %v1858 = vadd.f32 %v1470, %v1764
      %v1859 = vadd.f32 %v1475, %v1769
      %v1860 = vadd.f32 %v1478, %v1772
      %v1861 = vadd.f32 %v1483, %v1777
      %v1862 = vadd.f32 %v1486, %v1780
      %v1863 = vadd.f32 %v1491, %v1785
      %v1864 = vadd.f32 %v1494, %v1788
      %v1865 = vadd.f32 %v1499, %v1793
      %v1866 = vadd.f32 %v1502, %v1796
      %v1867 = vadd.f32 %v1507, %v1801
      %v1868 = vadd.f32 %v1510, %v1804
      %v1869 = vadd.f32 %v1515, %v1809
      %v1870 = vadd.f32 %v1518, %v1812
      %v1871 = vadd.f32 %v1523, %v1817
      %v1872 = vadd.f32 %v1526, %v1820
      %v1873 = vadd.f32 %v1531, %v1825
      %v1874 = vadd.f32 %v1534, %v1828
      %v1875 = vadd.f32 %v1539, %v1833
      %v1876 = vadd.f32 %v1542, %v1836
      %v1877 = vadd.f32 %v1547, %v1841
      %v1878 = vadd.f32 %v1550, %v1844
      %v1879 = vld [vmem:[#allocation2 + $0x17] sm:$0xff]
      %v1880 = vld [vmem:[#allocation2 + $0x1f] sm:$0xff]
      %v1881 = vld [vmem:[#allocation2 + $0x27] sm:$0xff]
      %v1882 = vld [vmem:[#allocation2 + $0x2f] sm:$0xff]
      %v1883 = vld [vmem:[#allocation2 + $0x37] sm:$0xff]
      %v1884 = vld [vmem:[#allocation2 + $0x3f] sm:$0xff]
      %v1885 = vld [vmem:[#allocation2 + $0x47] sm:$0xff]
      %v1886 = vld [vmem:[#allocation2 + $0x4f] sm:$0xff]
      %v1887 = vld [vmem:[#allocation2 + $0x57] sm:$0xff]
      %v1888 = vld [vmem:[#allocation2 + $0x5f] sm:$0xff]
      %v1889 = vld [vmem:[#allocation2 + $0x67] sm:$0xff]
      %v1890 = vld [vmem:[#allocation2 + $0x6f] sm:$0xff]
      %v1891 = vld [vmem:[#allocation2 + $0x77] sm:$0xff]
      %v1892 = vld [vmem:[#allocation2 + $0x7f] sm:$0xff]
      %v1893 = vld [vmem:[#allocation2 + $0x87] sm:$0xff]
      %v1894 = vld [vmem:[#allocation2 + $0x8f] sm:$0xff]
      %v1895 = vld [vmem:[#allocation2 + $0x97] sm:$0xff]
      %v1896 = vld [vmem:[#allocation2 + $0x9f] sm:$0xff]
      %v1897 = vld [vmem:[#allocation2 + $0xa7] sm:$0xff]
      %v1898 = vld [vmem:[#allocation2 + $0xaf] sm:$0xff]
      %v1899 = vld [vmem:[#allocation2 + $0xb7] sm:$0xff]
      %v1900 = vld [vmem:[#allocation2 + $0xbf] sm:$0xff]
      %v1901 = vld [vmem:[#allocation2 + $0xc7] sm:$0xff]
      %v1902 = vld [vmem:[#allocation2 + $0xcf] sm:$0xff]
      %v1903 = vld [vmem:[#allocation2 + $0xd7] sm:$0xff]
      %v1904 = vld [vmem:[#allocation2 + $0xdf] sm:$0xff]
      %v1905 = vld [vmem:[#allocation2 + $0xe7] sm:$0xff]
      %v1906 = vld [vmem:[#allocation2 + $0xef] sm:$0xff]
      %v1907 = vld [vmem:[#allocation2 + $0xf7] sm:$0xff]
      %v1908 = vld [vmem:[#allocation2 + $0xff] sm:$0xff]
      %v1909 = vld [vmem:[#allocation2 + $0x107] sm:$0xff]
      %v1910 = vld [vmem:[#allocation2 + $0x10f] sm:$0xff]
      %v1911 = vsel %vm930, %v1879, 0.0
      %v1912 = vsel %vm931, %v1880, 0.0
      %v1913 = vsel %vm932, %v1881, 0.0
      %v1914 = vsel %vm933, %v1882, 0.0
      %v1915 = vsel %vm934, %v1883, 0.0
      %v1916 = vsel %vm935, %v1884, 0.0
      %v1917 = vsel %vm936, %v1885, 0.0
      %v1918 = vsel %vm937, %v1886, 0.0
      %v1919 = vsel %vm938, %v1887, 0.0
      %v1920 = vsel %vm939, %v1888, 0.0
      %v1921 = vsel %vm940, %v1889, 0.0
      %v1922 = vsel %vm941, %v1890, 0.0
      %v1923 = vsel %vm942, %v1891, 0.0
      %v1924 = vsel %vm943, %v1892, 0.0
      %v1925 = vsel %vm944, %v1893, 0.0
      %v1926 = vsel %vm945, %v1894, 0.0
      %v1927 = vsel %vm946, %v1895, 0.0
      %v1928 = vsel %vm947, %v1896, 0.0
      %v1929 = vsel %vm948, %v1897, 0.0
      %v1930 = vsel %vm949, %v1898, 0.0
      %v1931 = vsel %vm950, %v1899, 0.0
      %v1932 = vsel %vm951, %v1900, 0.0
      %v1933 = vsel %vm952, %v1901, 0.0
      %v1934 = vsel %vm953, %v1902, 0.0
      %v1935 = vsel %vm954, %v1903, 0.0
      %v1936 = vsel %vm955, %v1904, 0.0
      %v1937 = vsel %vm956, %v1905, 0.0
      %v1938 = vsel %vm957, %v1906, 0.0
      %v1939 = vsel %vm958, %v1907, 0.0
      %v1940 = vsel %vm959, %v1908, 0.0
      %v1941 = vsel %vm960, %v1909, 0.0
      %v1942 = vsel %vm961, %v1910, 0.0
      %v1943 = vpack.c.bf16 %v1912, %v1911
      %v1944 = vpack.c.bf16 %v1914, %v1913
      %v1945 = vpack.c.bf16 %v1916, %v1915
      %v1946 = vpack.c.bf16 %v1918, %v1917
      %v1947 = vpack.c.bf16 %v1920, %v1919
      %v1948 = vpack.c.bf16 %v1922, %v1921
      %v1949 = vpack.c.bf16 %v1924, %v1923
      %v1950 = vpack.c.bf16 %v1926, %v1925
      %v1951 = vpack.c.bf16 %v1928, %v1927
      %v1952 = vpack.c.bf16 %v1930, %v1929
      %v1953 = vpack.c.bf16 %v1932, %v1931
      %v1954 = vpack.c.bf16 %v1934, %v1933
      %v1955 = vpack.c.bf16 %v1936, %v1935
      %v1956 = vpack.c.bf16 %v1938, %v1937
      %v1957 = vpack.c.bf16 %v1940, %v1939
      %v1958 = vpack.c.bf16 %v1942, %v1941
      %s1959 = scalar_lea.vmem %s1, 6
      %v1960 = vld [vmem:[%s1959] sm:$0x3]
      %v1962 = vsel %vm474, %v1943, 0
      %v1965 = vsel %vm474, %v1944, 0
      %v1968 = vsel %vm474, %v1945, 0
      %v1971 = vsel %vm474, %v1946, 0
      %v1974 = vsel %vm474, %v1947, 0
      %v1977 = vsel %vm474, %v1948, 0
      %v1980 = vsel %vm474, %v1949, 0
      %v1983 = vsel %vm474, %v1950, 0
      %v1986 = vsel %vm474, %v1951, 0
      %v1989 = vsel %vm474, %v1952, 0
      %v1992 = vsel %vm474, %v1953, 0
      %v1995 = vsel %vm474, %v1954, 0
      %v1998 = vsel %vm474, %v1955, 0
      %v2001 = vsel %vm474, %v1956, 0
      %v2004 = vsel %vm474, %v1957, 0
      %v2007 = vsel %vm474, %v1958, 0
      %v2010 = vand.u32 %v1960, %v1176
      %2012 = vmatprep.subr.bf16.mxu0 0
      %2013 = vmatpush1.bf16.msra.mxu0 %v2010
      %2014 = vmatprep.subr.bf16.mxu0 0
      %2015 = vmatpush1.bf16.msra.mxu0 0
      %2016 = vmatprep.subr.bf16.mxu0 0
      %2017 = vmatpush1.bf16.msra.mxu0 0
      %2018 = vmatprep.subr.bf16.mxu0 0
      %2019 = vmatpush1.bf16.msra.mxu0 0
      %2020 = vmatprep.subr.bf16.mxu0 0
      %2021 = vmatpush1.bf16.msra.mxu0 0
      %2022 = vmatprep.subr.bf16.mxu0 0
      %2023 = vmatpush1.bf16.msra.mxu0 0
      %2024 = vmatprep.subr.bf16.mxu0 0
      %2025 = vmatpush1.bf16.msra.mxu0 0
      %2026 = vmatprep.subr.bf16.mxu0 0
      %2027 = vmatpush1.bf16.msra.mxu0 0
      %2028 = vmatprep.subr.bf16.mxu0 0
      %2029 = vmatpush1.bf16.msra.mxu0 0
      %2030 = vmatprep.subr.bf16.mxu0 0
      %2031 = vmatpush1.bf16.msra.mxu0 0
      %2032 = vmatprep.subr.bf16.mxu0 0
      %2033 = vmatpush1.bf16.msra.mxu0 0
      %2034 = vmatprep.subr.bf16.mxu0 0
      %2035 = vmatpush1.bf16.msra.mxu0 0
      %2036 = vmatprep.subr.bf16.mxu0 0
      %2037 = vmatpush1.bf16.msra.mxu0 0
      %2038 = vmatprep.subr.bf16.mxu0 0
      %2039 = vmatpush1.bf16.msra.mxu0 0
      %2040 = vmatprep.subr.bf16.mxu0 0
      %2041 = vmatpush1.bf16.msra.mxu0 0
      %2042 = vmatprep.subr.bf16.mxu0 0
      %2043 = vmatpush1.bf16.msra.mxu0 0
      %2044 = vmatprep.mubr.bf16.mxu0 0
      %2045 = vmatmul.mubr.bf16.gmra.mrb[0].mxu0 %v1962
      %v2046 = vpop.f32.mrb[0].mxu0
      %v2047 = vadd.f32 0.0, %v2046
      %v2048 = vpop.f32.mrb[0].mxu0
      %v2049 = vpop.f32.mrb[0].mxu0
      %v2050 = vadd.f32 0.0, %v2049
      %v2051 = vpop.f32.mrb[0].mxu0
      %2052 = vmatprep.mubr.bf16.mxu0 0
      %2053 = vmatmul.mubr.bf16.gmra.mrb[0].mxu0 %v1965
      %v2054 = vpop.f32.mrb[0].mxu0
      %v2055 = vadd.f32 0.0, %v2054
      %v2056 = vpop.f32.mrb[0].mxu0
      %v2057 = vpop.f32.mrb[0].mxu0
      %v2058 = vadd.f32 0.0, %v2057
      %v2059 = vpop.f32.mrb[0].mxu0
      %2060 = vmatprep.mubr.bf16.mxu0 0
      %2061 = vmatmul.mubr.bf16.gmra.mrb[0].mxu0 %v1968
      %v2062 = vpop.f32.mrb[0].mxu0
      %v2063 = vadd.f32 0.0, %v2062
      %v2064 = vpop.f32.mrb[0].mxu0
      %v2065 = vpop.f32.mrb[0].mxu0
      %v2066 = vadd.f32 0.0, %v2065
      %v2067 = vpop.f32.mrb[0].mxu0
      %2068 = vmatprep.mubr.bf16.mxu0 0
      %2069 = vmatmul.mubr.bf16.gmra.mrb[0].mxu0 %v1971
      %v2070 = vpop.f32.mrb[0].mxu0
      %v2071 = vadd.f32 0.0, %v2070
      %v2072 = vpop.f32.mrb[0].mxu0
      %v2073 = vpop.f32.mrb[0].mxu0
      %v2074 = vadd.f32 0.0, %v2073
      %v2075 = vpop.f32.mrb[0].mxu0
      %2076 = vmatprep.mubr.bf16.mxu0 0
      %2077 = vmatmul.mubr.bf16.gmra.mrb[0].mxu0 %v1974
      %v2078 = vpop.f32.mrb[0].mxu0
      %v2079 = vadd.f32 0.0, %v2078
      %v2080 = vpop.f32.mrb[0].mxu0
      %v2081 = vpop.f32.mrb[0].mxu0
      %v2082 = vadd.f32 0.0, %v2081
      %v2083 = vpop.f32.mrb[0].mxu0
      %2084 = vmatprep.mubr.bf16.mxu0 0
      %2085 = vmatmul.mubr.bf16.gmra.mrb[0].mxu0 %v1977
      %v2086 = vpop.f32.mrb[0].mxu0
      %v2087 = vadd.f32 0.0, %v2086
      %v2088 = vpop.f32.mrb[0].mxu0
      %v2089 = vpop.f32.mrb[0].mxu0
      %v2090 = vadd.f32 0.0, %v2089
      %v2091 = vpop.f32.mrb[0].mxu0
      %2092 = vmatprep.mubr.bf16.mxu0 0
      %2093 = vmatmul.mubr.bf16.gmra.mrb[0].mxu0 %v1980
      %v2094 = vpop.f32.mrb[0].mxu0
      %v2095 = vadd.f32 0.0, %v2094
      %v2096 = vpop.f32.mrb[0].mxu0
      %v2097 = vpop.f32.mrb[0].mxu0
      %v2098 = vadd.f32 0.0, %v2097
      %v2099 = vpop.f32.mrb[0].mxu0
      %2100 = vmatprep.mubr.bf16.mxu0 0
      %2101 = vmatmul.mubr.bf16.gmra.mrb[0].mxu0 %v1983
      %v2102 = vpop.f32.mrb[0].mxu0
      %v2103 = vadd.f32 0.0, %v2102
      %v2104 = vpop.f32.mrb[0].mxu0
      %v2105 = vpop.f32.mrb[0].mxu0
      %v2106 = vadd.f32 0.0, %v2105
      %v2107 = vpop.f32.mrb[0].mxu0
      %2108 = vmatprep.mubr.bf16.mxu0 0
      %2109 = vmatmul.mubr.bf16.gmra.mrb[0].mxu0 %v1986
      %v2110 = vpop.f32.mrb[0].mxu0
      %v2111 = vadd.f32 0.0, %v2110
      %v2112 = vpop.f32.mrb[0].mxu0
      %v2113 = vpop.f32.mrb[0].mxu0
      %v2114 = vadd.f32 0.0, %v2113
      %v2115 = vpop.f32.mrb[0].mxu0
      %2116 = vmatprep.mubr.bf16.mxu0 0
      %2117 = vmatmul.mubr.bf16.gmra.mrb[0].mxu0 %v1989
      %v2118 = vpop.f32.mrb[0].mxu0
      %v2119 = vadd.f32 0.0, %v2118
      %v2120 = vpop.f32.mrb[0].mxu0
      %v2121 = vpop.f32.mrb[0].mxu0
      %v2122 = vadd.f32 0.0, %v2121
      %v2123 = vpop.f32.mrb[0].mxu0
      %2124 = vmatprep.mubr.bf16.mxu0 0
      %2125 = vmatmul.mubr.bf16.gmra.mrb[0].mxu0 %v1992
      %v2126 = vpop.f32.mrb[0].mxu0
      %v2127 = vadd.f32 0.0, %v2126
      %v2128 = vpop.f32.mrb[0].mxu0
      %v2129 = vpop.f32.mrb[0].mxu0
      %v2130 = vadd.f32 0.0, %v2129
      %v2131 = vpop.f32.mrb[0].mxu0
      %2132 = vmatprep.mubr.bf16.mxu0 0
      %2133 = vmatmul.mubr.bf16.gmra.mrb[0].mxu0 %v1995
      %v2134 = vpop.f32.mrb[0].mxu0
      %v2135 = vadd.f32 0.0, %v2134
      %v2136 = vpop.f32.mrb[0].mxu0
      %v2137 = vpop.f32.mrb[0].mxu0
      %v2138 = vadd.f32 0.0, %v2137
      %v2139 = vpop.f32.mrb[0].mxu0
      %2140 = vmatprep.mubr.bf16.mxu0 0
      %2141 = vmatmul.mubr.bf16.gmra.mrb[0].mxu0 %v1998
      %v2142 = vpop.f32.mrb[0].mxu0
      %v2143 = vadd.f32 0.0, %v2142
      %v2144 = vpop.f32.mrb[0].mxu0
      %v2145 = vpop.f32.mrb[0].mxu0
      %v2146 = vadd.f32 0.0, %v2145
      %v2147 = vpop.f32.mrb[0].mxu0
      %2148 = vmatprep.mubr.bf16.mxu0 0
      %2149 = vmatmul.mubr.bf16.gmra.mrb[0].mxu0 %v2001
      %v2150 = vpop.f32.mrb[0].mxu0
      %v2151 = vadd.f32 0.0, %v2150
      %v2152 = vpop.f32.mrb[0].mxu0
      %v2153 = vpop.f32.mrb[0].mxu0
      %v2154 = vadd.f32 0.0, %v2153
      %v2155 = vpop.f32.mrb[0].mxu0
      %2156 = vmatprep.mubr.bf16.mxu0 0
      %2157 = vmatmul.mubr.bf16.gmra.mrb[0].mxu0 %v2004
      %v2158 = vpop.f32.mrb[0].mxu0
      %v2159 = vadd.f32 0.0, %v2158
      %v2160 = vpop.f32.mrb[0].mxu0
      %v2161 = vpop.f32.mrb[0].mxu0
      %v2162 = vadd.f32 0.0, %v2161
      %v2163 = vpop.f32.mrb[0].mxu0
      %2164 = vmatprep.mubr.bf16.mxu0 0
      %2165 = vmatmul.mubr.bf16.gmra.mrb[0].mxu0 %v2007
      %v2166 = vpop.f32.mrb[0].mxu0
      %v2167 = vadd.f32 0.0, %v2166
      %v2168 = vpop.f32.mrb[0].mxu0
      %v2169 = vpop.f32.mrb[0].mxu0
      %v2170 = vadd.f32 0.0, %v2169
      %v2171 = vpop.f32.mrb[0].mxu0
      %2172 = vdwg.mxu0
      %v2173 = vadd.f32 %v1847, %v2047
      %v2174 = vadd.f32 %v1848, %v2050
      %v2175 = vadd.f32 %v1849, %v2055
      %v2176 = vadd.f32 %v1850, %v2058
      %v2177 = vadd.f32 %v1851, %v2063
      %v2178 = vadd.f32 %v1852, %v2066
      %v2179 = vadd.f32 %v1853, %v2071
      %v2180 = vadd.f32 %v1854, %v2074
      %v2181 = vadd.f32 %v1855, %v2079
      %v2182 = vadd.f32 %v1856, %v2082
      %v2183 = vadd.f32 %v1857, %v2087
      %v2184 = vadd.f32 %v1858, %v2090
      %v2185 = vadd.f32 %v1859, %v2095
      %v2186 = vadd.f32 %v1860, %v2098
      %v2187 = vadd.f32 %v1861, %v2103
      %v2188 = vadd.f32 %v1862, %v2106
      %v2189 = vadd.f32 %v1863, %v2111
      %v2190 = vadd.f32 %v1864, %v2114
      %v2191 = vadd.f32 %v1865, %v2119
      %v2192 = vadd.f32 %v1866, %v2122
      %v2193 = vadd.f32 %v1867, %v2127
      %v2194 = vadd.f32 %v1868, %v2130
      %v2195 = vadd.f32 %v1869, %v2135
      %v2196 = vadd.f32 %v1870, %v2138
      %v2197 = vadd.f32 %v1871, %v2143
      %v2198 = vadd.f32 %v1872, %v2146
      %v2199 = vadd.f32 %v1873, %v2151
      %v2200 = vadd.f32 %v1874, %v2154
      %v2201 = vadd.f32 %v1875, %v2159
      %v2202 = vadd.f32 %v1876, %v2162
      %v2203 = vadd.f32 %v1877, %v2167
      %v2204 = vadd.f32 %v1878, %v2170
      %v2205 = vld [vmem:[#allocation2 + $0x18] sm:$0xff]
      %v2206 = vld [vmem:[#allocation2 + $0x20] sm:$0xff]
      %v2207 = vld [vmem:[#allocation2 + $0x28] sm:$0xff]
      %v2208 = vld [vmem:[#allocation2 + $0x30] sm:$0xff]
      %v2209 = vld [vmem:[#allocation2 + $0x38] sm:$0xff]
      %v2210 = vld [vmem:[#allocation2 + $0x40] sm:$0xff]
      %v2211 = vld [vmem:[#allocation2 + $0x48] sm:$0xff]
      %v2212 = vld [vmem:[#allocation2 + $0x50] sm:$0xff]
      %v2213 = vld [vmem:[#allocation2 + $0x58] sm:$0xff]
      %v2214 = vld [vmem:[#allocation2 + $0x60] sm:$0xff]
      %v2215 = vld [vmem:[#allocation2 + $0x68] sm:$0xff]
      %v2216 = vld [vmem:[#allocation2 + $0x70] sm:$0xff]
      %v2217 = vld [vmem:[#allocation2 + $0x78] sm:$0xff]
      %v2218 = vld [vmem:[#allocation2 + $0x80] sm:$0xff]
      %v2219 = vld [vmem:[#allocation2 + $0x88] sm:$0xff]
      %v2220 = vld [vmem:[#allocation2 + $0x90] sm:$0xff]
      %v2221 = vld [vmem:[#allocation2 + $0x98] sm:$0xff]
      %v2222 = vld [vmem:[#allocation2 + $0xa0] sm:$0xff]
      %v2223 = vld [vmem:[#allocation2 + $0xa8] sm:$0xff]
      %v2224 = vld [vmem:[#allocation2 + $0xb0] sm:$0xff]
      %v2225 = vld [vmem:[#allocation2 + $0xb8] sm:$0xff]
      %v2226 = vld [vmem:[#allocation2 + $0xc0] sm:$0xff]
      %v2227 = vld [vmem:[#allocation2 + $0xc8] sm:$0xff]
      %v2228 = vld [vmem:[#allocation2 + $0xd0] sm:$0xff]
      %v2229 = vld [vmem:[#allocation2 + $0xd8] sm:$0xff]
      %v2230 = vld [vmem:[#allocation2 + $0xe0] sm:$0xff]
      %v2231 = vld [vmem:[#allocation2 + $0xe8] sm:$0xff]
      %v2232 = vld [vmem:[#allocation2 + $0xf0] sm:$0xff]
      %v2233 = vld [vmem:[#allocation2 + $0xf8] sm:$0xff]
      %v2234 = vld [vmem:[#allocation2 + $0x100] sm:$0xff]
      %v2235 = vld [vmem:[#allocation2 + $0x108] sm:$0xff]
      %v2236 = vld [vmem:[#allocation2 + $0x110] sm:$0xff]
      %v2237 = vpack.c.bf16 %v2206, %v2205
      %v2238 = vpack.c.bf16 %v2208, %v2207
      %v2239 = vpack.c.bf16 %v2210, %v2209
      %v2240 = vpack.c.bf16 %v2212, %v2211
      %v2241 = vpack.c.bf16 %v2214, %v2213
      %v2242 = vpack.c.bf16 %v2216, %v2215
      %v2243 = vpack.c.bf16 %v2218, %v2217
      %v2244 = vpack.c.bf16 %v2220, %v2219
      %v2245 = vpack.c.bf16 %v2222, %v2221
      %v2246 = vpack.c.bf16 %v2224, %v2223
      %v2247 = vpack.c.bf16 %v2226, %v2225
      %v2248 = vpack.c.bf16 %v2228, %v2227
      %v2249 = vpack.c.bf16 %v2230, %v2229
      %v2250 = vpack.c.bf16 %v2232, %v2231
      %v2251 = vpack.c.bf16 %v2234, %v2233
      %v2252 = vpack.c.bf16 %v2236, %v2235
      %s2253 = scalar_lea.vmem %s1, 8
      %v2254 = vld [vmem:[%s2253] sm:$0x3]
      %v2256 = vsel %vm474, %v2237, 0
      %v2259 = vsel %vm474, %v2238, 0
      %v2262 = vsel %vm474, %v2239, 0
      %v2265 = vsel %vm474, %v2240, 0
      %v2268 = vsel %vm474, %v2241, 0
      %v2271 = vsel %vm474, %v2242, 0
      %v2274 = vsel %vm474, %v2243, 0
      %v2277 = vsel %vm474, %v2244, 0
      %v2280 = vsel %vm474, %v2245, 0
      %v2283 = vsel %vm474, %v2246, 0
      %v2286 = vsel %vm474, %v2247, 0
      %v2289 = vsel %vm474, %v2248, 0
      %v2292 = vsel %vm474, %v2249, 0
      %v2295 = vsel %vm474, %v2250, 0
      %v2298 = vsel %vm474, %v2251, 0
      %v2301 = vsel %vm474, %v2252, 0
      %v2304 = vand.u32 %v2254, %v1176
      %2306 = vmatprep.subr.bf16.mxu0 0
      %2307 = vmatpush1.bf16.msra.mxu0 %v2304
      %2308 = vmatprep.subr.bf16.mxu0 0
      %2309 = vmatpush1.bf16.msra.mxu0 0
      %2310 = vmatprep.subr.bf16.mxu0 0
      %2311 = vmatpush1.bf16.msra.mxu0 0
      %2312 = vmatprep.subr.bf16.mxu0 0
      %2313 = vmatpush1.bf16.msra.mxu0 0
      %2314 = vmatprep.subr.bf16.mxu0 0
      %2315 = vmatpush1.bf16.msra.mxu0 0
      %2316 = vmatprep.subr.bf16.mxu0 0
      %2317 = vmatpush1.bf16.msra.mxu0 0
      %2318 = vmatprep.subr.bf16.mxu0 0
      %2319 = vmatpush1.bf16.msra.mxu0 0
      %2320 = vmatprep.subr.bf16.mxu0 0
      %2321 = vmatpush1.bf16.msra.mxu0 0
      %2322 = vmatprep.subr.bf16.mxu0 0
      %2323 = vmatpush1.bf16.msra.mxu0 0
      %2324 = vmatprep.subr.bf16.mxu0 0
      %2325 = vmatpush1.bf16.msra.mxu0 0
      %2326 = vmatprep.subr.bf16.mxu0 0
      %2327 = vmatpush1.bf16.msra.mxu0 0
      %2328 = vmatprep.subr.bf16.mxu0 0
      %2329 = vmatpush1.bf16.msra.mxu0 0
      %2330 = vmatprep.subr.bf16.mxu0 0
      %2331 = vmatpush1.bf16.msra.mxu0 0
      %2332 = vmatprep.subr.bf16.mxu0 0
      %2333 = vmatpush1.bf16.msra.mxu0 0
      %2334 = vmatprep.subr.bf16.mxu0 0
      %2335 = vmatpush1.bf16.msra.mxu0 0
      %2336 = vmatprep.subr.bf16.mxu0 0
      %2337 = vmatpush1.bf16.msra.mxu0 0
      %2338 = vmatprep.mubr.bf16.mxu0 0
      %2339 = vmatmul.mubr.bf16.gmra.mrb[0].mxu0 %v2256
      %v2340 = vpop.f32.mrb[0].mxu0
      %v2341 = vadd.f32 0.0, %v2340
      %v2342 = vpop.f32.mrb[0].mxu0
      %v2343 = vpop.f32.mrb[0].mxu0
      %v2344 = vadd.f32 0.0, %v2343
      %v2345 = vpop.f32.mrb[0].mxu0
      %2346 = vmatprep.mubr.bf16.mxu0 0
      %2347 = vmatmul.mubr.bf16.gmra.mrb[0].mxu0 %v2259
      %v2348 = vpop.f32.mrb[0].mxu0
      %v2349 = vadd.f32 0.0, %v2348
      %v2350 = vpop.f32.mrb[0].mxu0
      %v2351 = vpop.f32.mrb[0].mxu0
      %v2352 = vadd.f32 0.0, %v2351
      %v2353 = vpop.f32.mrb[0].mxu0
      %2354 = vmatprep.mubr.bf16.mxu0 0
      %2355 = vmatmul.mubr.bf16.gmra.mrb[0].mxu0 %v2262
      %v2356 = vpop.f32.mrb[0].mxu0
      %v2357 = vadd.f32 0.0, %v2356
      %v2358 = vpop.f32.mrb[0].mxu0
      %v2359 = vpop.f32.mrb[0].mxu0
      %v2360 = vadd.f32 0.0, %v2359
      %v2361 = vpop.f32.mrb[0].mxu0
      %2362 = vmatprep.mubr.bf16.mxu0 0
      %2363 = vmatmul.mubr.bf16.gmra.mrb[0].mxu0 %v2265
      %v2364 = vpop.f32.mrb[0].mxu0
      %v2365 = vadd.f32 0.0, %v2364
      %v2366 = vpop.f32.mrb[0].mxu0
      %v2367 = vpop.f32.mrb[0].mxu0
      %v2368 = vadd.f32 0.0, %v2367
      %v2369 = vpop.f32.mrb[0].mxu0
      %2370 = vmatprep.mubr.bf16.mxu0 0
      %2371 = vmatmul.mubr.bf16.gmra.mrb[0].mxu0 %v2268
      %v2372 = vpop.f32.mrb[0].mxu0
      %v2373 = vadd.f32 0.0, %v2372
      %v2374 = vpop.f32.mrb[0].mxu0
      %v2375 = vpop.f32.mrb[0].mxu0
      %v2376 = vadd.f32 0.0, %v2375
      %v2377 = vpop.f32.mrb[0].mxu0
      %2378 = vmatprep.mubr.bf16.mxu0 0
      %2379 = vmatmul.mubr.bf16.gmra.mrb[0].mxu0 %v2271
      %v2380 = vpop.f32.mrb[0].mxu0
      %v2381 = vadd.f32 0.0, %v2380
      %v2382 = vpop.f32.mrb[0].mxu0
      %v2383 = vpop.f32.mrb[0].mxu0
      %v2384 = vadd.f32 0.0, %v2383
      %v2385 = vpop.f32.mrb[0].mxu0
      %2386 = vmatprep.mubr.bf16.mxu0 0
      %2387 = vmatmul.mubr.bf16.gmra.mrb[0].mxu0 %v2274
      %v2388 = vpop.f32.mrb[0].mxu0
      %v2389 = vadd.f32 0.0, %v2388
      %v2390 = vpop.f32.mrb[0].mxu0
      %v2391 = vpop.f32.mrb[0].mxu0
      %v2392 = vadd.f32 0.0, %v2391
      %v2393 = vpop.f32.mrb[0].mxu0
      %2394 = vmatprep.mubr.bf16.mxu0 0
      %2395 = vmatmul.mubr.bf16.gmra.mrb[0].mxu0 %v2277
      %v2396 = vpop.f32.mrb[0].mxu0
      %v2397 = vadd.f32 0.0, %v2396
      %v2398 = vpop.f32.mrb[0].mxu0
      %v2399 = vpop.f32.mrb[0].mxu0
      %v2400 = vadd.f32 0.0, %v2399
      %v2401 = vpop.f32.mrb[0].mxu0
      %2402 = vmatprep.mubr.bf16.mxu0 0
      %2403 = vmatmul.mubr.bf16.gmra.mrb[0].mxu0 %v2280
      %v2404 = vpop.f32.mrb[0].mxu0
      %v2405 = vadd.f32 0.0, %v2404
      %v2406 = vpop.f32.mrb[0].mxu0
      %v2407 = vpop.f32.mrb[0].mxu0
      %v2408 = vadd.f32 0.0, %v2407
      %v2409 = vpop.f32.mrb[0].mxu0
      %2410 = vmatprep.mubr.bf16.mxu0 0
      %2411 = vmatmul.mubr.bf16.gmra.mrb[0].mxu0 %v2283
      %v2412 = vpop.f32.mrb[0].mxu0
      %v2413 = vadd.f32 0.0, %v2412
      %v2414 = vpop.f32.mrb[0].mxu0
      %v2415 = vpop.f32.mrb[0].mxu0
      %v2416 = vadd.f32 0.0, %v2415
      %v2417 = vpop.f32.mrb[0].mxu0
      %2418 = vmatprep.mubr.bf16.mxu0 0
      %2419 = vmatmul.mubr.bf16.gmra.mrb[0].mxu0 %v2286
      %v2420 = vpop.f32.mrb[0].mxu0
      %v2421 = vadd.f32 0.0, %v2420
      %v2422 = vpop.f32.mrb[0].mxu0
      %v2423 = vpop.f32.mrb[0].mxu0
      %v2424 = vadd.f32 0.0, %v2423
      %v2425 = vpop.f32.mrb[0].mxu0
      %2426 = vmatprep.mubr.bf16.mxu0 0
      %2427 = vmatmul.mubr.bf16.gmra.mrb[0].mxu0 %v2289
      %v2428 = vpop.f32.mrb[0].mxu0
      %v2429 = vadd.f32 0.0, %v2428
      %v2430 = vpop.f32.mrb[0].mxu0
      %v2431 = vpop.f32.mrb[0].mxu0
      %v2432 = vadd.f32 0.0, %v2431
      %v2433 = vpop.f32.mrb[0].mxu0
      %2434 = vmatprep.mubr.bf16.mxu0 0
      %2435 = vmatmul.mubr.bf16.gmra.mrb[0].mxu0 %v2292
      %v2436 = vpop.f32.mrb[0].mxu0
      %v2437 = vadd.f32 0.0, %v2436
      %v2438 = vpop.f32.mrb[0].mxu0
      %v2439 = vpop.f32.mrb[0].mxu0
      %v2440 = vadd.f32 0.0, %v2439
      %v2441 = vpop.f32.mrb[0].mxu0
      %2442 = vmatprep.mubr.bf16.mxu0 0
      %2443 = vmatmul.mubr.bf16.gmra.mrb[0].mxu0 %v2295
      %v2444 = vpop.f32.mrb[0].mxu0
      %v2445 = vadd.f32 0.0, %v2444
      %v2446 = vpop.f32.mrb[0].mxu0
      %v2447 = vpop.f32.mrb[0].mxu0
      %v2448 = vadd.f32 0.0, %v2447
      %v2449 = vpop.f32.mrb[0].mxu0
      %2450 = vmatprep.mubr.bf16.mxu0 0
      %2451 = vmatmul.mubr.bf16.gmra.mrb[0].mxu0 %v2298
      %v2452 = vpop.f32.mrb[0].mxu0
      %v2453 = vadd.f32 0.0, %v2452
      %v2454 = vpop.f32.mrb[0].mxu0
      %v2455 = vpop.f32.mrb[0].mxu0
      %v2456 = vadd.f32 0.0, %v2455
      %v2457 = vpop.f32.mrb[0].mxu0
      %2458 = vmatprep.mubr.bf16.mxu0 0
      %2459 = vmatmul.mubr.bf16.gmra.mrb[0].mxu0 %v2301
      %v2460 = vpop.f32.mrb[0].mxu0
      %v2461 = vadd.f32 0.0, %v2460
      %v2462 = vpop.f32.mrb[0].mxu0
      %v2463 = vpop.f32.mrb[0].mxu0
      %v2464 = vadd.f32 0.0, %v2463
      %v2465 = vpop.f32.mrb[0].mxu0
      %2466 = vdwg.mxu0
      %v2467 = vadd.f32 %v2173, %v2341
      %v2468 = vadd.f32 %v2174, %v2344
      %v2469 = vadd.f32 %v2175, %v2349
      %v2470 = vadd.f32 %v2176, %v2352
      %v2471 = vadd.f32 %v2177, %v2357
      %v2472 = vadd.f32 %v2178, %v2360
      %v2473 = vadd.f32 %v2179, %v2365
      %v2474 = vadd.f32 %v2180, %v2368
      %v2475 = vadd.f32 %v2181, %v2373
      %v2476 = vadd.f32 %v2182, %v2376
      %v2477 = vadd.f32 %v2183, %v2381
      %v2478 = vadd.f32 %v2184, %v2384
      %v2479 = vadd.f32 %v2185, %v2389
      %v2480 = vadd.f32 %v2186, %v2392
      %v2481 = vadd.f32 %v2187, %v2397
      %v2482 = vadd.f32 %v2188, %v2400
      %v2483 = vadd.f32 %v2189, %v2405
      %v2484 = vadd.f32 %v2190, %v2408
      %v2485 = vadd.f32 %v2191, %v2413
      %v2486 = vadd.f32 %v2192, %v2416
      %v2487 = vadd.f32 %v2193, %v2421
      %v2488 = vadd.f32 %v2194, %v2424
      %v2489 = vadd.f32 %v2195, %v2429
      %v2490 = vadd.f32 %v2196, %v2432
      %v2491 = vadd.f32 %v2197, %v2437
      %v2492 = vadd.f32 %v2198, %v2440
      %v2493 = vadd.f32 %v2199, %v2445
      %v2494 = vadd.f32 %v2200, %v2448
      %v2495 = vadd.f32 %v2201, %v2453
      %v2496 = vadd.f32 %v2202, %v2456
      %v2497 = vadd.f32 %v2203, %v2461
      %v2498 = vadd.f32 %v2204, %v2464
      %v2499 = vld [vmem:[#allocation2 + $0x19] sm:$0xff]
      %v2500 = vld [vmem:[#allocation2 + $0x21] sm:$0xff]
      %v2501 = vld [vmem:[#allocation2 + $0x29] sm:$0xff]
      %v2502 = vld [vmem:[#allocation2 + $0x31] sm:$0xff]
      %v2503 = vld [vmem:[#allocation2 + $0x39] sm:$0xff]
      %v2504 = vld [vmem:[#allocation2 + $0x41] sm:$0xff]
      %v2505 = vld [vmem:[#allocation2 + $0x49] sm:$0xff]
      %v2506 = vld [vmem:[#allocation2 + $0x51] sm:$0xff]
      %v2507 = vld [vmem:[#allocation2 + $0x59] sm:$0xff]
      %v2508 = vld [vmem:[#allocation2 + $0x61] sm:$0xff]
      %v2509 = vld [vmem:[#allocation2 + $0x69] sm:$0xff]
      %v2510 = vld [vmem:[#allocation2 + $0x71] sm:$0xff]
      %v2511 = vld [vmem:[#allocation2 + $0x79] sm:$0xff]
      %v2512 = vld [vmem:[#allocation2 + $0x81] sm:$0xff]
      %v2513 = vld [vmem:[#allocation2 + $0x89] sm:$0xff]
      %v2514 = vld [vmem:[#allocation2 + $0x91] sm:$0xff]
      %v2515 = vld [vmem:[#allocation2 + $0x99] sm:$0xff]
      %v2516 = vld [vmem:[#allocation2 + $0xa1] sm:$0xff]
      %v2517 = vld [vmem:[#allocation2 + $0xa9] sm:$0xff]
      %v2518 = vld [vmem:[#allocation2 + $0xb1] sm:$0xff]
      %v2519 = vld [vmem:[#allocation2 + $0xb9] sm:$0xff]
      %v2520 = vld [vmem:[#allocation2 + $0xc1] sm:$0xff]
      %v2521 = vld [vmem:[#allocation2 + $0xc9] sm:$0xff]
      %v2522 = vld [vmem:[#allocation2 + $0xd1] sm:$0xff]
      %v2523 = vld [vmem:[#allocation2 + $0xd9] sm:$0xff]
      %v2524 = vld [vmem:[#allocation2 + $0xe1] sm:$0xff]
      %v2525 = vld [vmem:[#allocation2 + $0xe9] sm:$0xff]
      %v2526 = vld [vmem:[#allocation2 + $0xf1] sm:$0xff]
      %v2527 = vld [vmem:[#allocation2 + $0xf9] sm:$0xff]
      %v2528 = vld [vmem:[#allocation2 + $0x101] sm:$0xff]
      %v2529 = vld [vmem:[#allocation2 + $0x109] sm:$0xff]
      %v2530 = vld [vmem:[#allocation2 + $0x111] sm:$0xff]
      %v2531 = vsel %vm962, %v2499, 0.0
      %v2532 = vsel %vm963, %v2500, 0.0
      %v2533 = vsel %vm964, %v2501, 0.0
      %v2534 = vsel %vm965, %v2502, 0.0
      %v2535 = vsel %vm966, %v2503, 0.0
      %v2536 = vsel %vm967, %v2504, 0.0
      %v2537 = vsel %vm968, %v2505, 0.0
      %v2538 = vsel %vm969, %v2506, 0.0
      %v2539 = vsel %vm970, %v2507, 0.0
      %v2540 = vsel %vm971, %v2508, 0.0
      %v2541 = vsel %vm972, %v2509, 0.0
      %v2542 = vsel %vm973, %v2510, 0.0
      %v2543 = vsel %vm974, %v2511, 0.0
      %v2544 = vsel %vm975, %v2512, 0.0
      %v2545 = vsel %vm976, %v2513, 0.0
      %v2546 = vsel %vm977, %v2514, 0.0
      %v2547 = vsel %vm978, %v2515, 0.0
      %v2548 = vsel %vm979, %v2516, 0.0
      %v2549 = vsel %vm980, %v2517, 0.0
      %v2550 = vsel %vm981, %v2518, 0.0
      %v2551 = vsel %vm982, %v2519, 0.0
      %v2552 = vsel %vm983, %v2520, 0.0
      %v2553 = vsel %vm984, %v2521, 0.0
      %v2554 = vsel %vm985, %v2522, 0.0
      %v2555 = vsel %vm986, %v2523, 0.0
      %v2556 = vsel %vm987, %v2524, 0.0
      %v2557 = vsel %vm988, %v2525, 0.0
      %v2558 = vsel %vm989, %v2526, 0.0
      %v2559 = vsel %vm990, %v2527, 0.0
      %v2560 = vsel %vm991, %v2528, 0.0
      %v2561 = vsel %vm992, %v2529, 0.0
      %v2562 = vsel %vm993, %v2530, 0.0
      %v2563 = vpack.c.bf16 %v2532, %v2531
      %v2564 = vpack.c.bf16 %v2534, %v2533
      %v2565 = vpack.c.bf16 %v2536, %v2535
      %v2566 = vpack.c.bf16 %v2538, %v2537
      %v2567 = vpack.c.bf16 %v2540, %v2539
      %v2568 = vpack.c.bf16 %v2542, %v2541
      %v2569 = vpack.c.bf16 %v2544, %v2543
      %v2570 = vpack.c.bf16 %v2546, %v2545
      %v2571 = vpack.c.bf16 %v2548, %v2547
      %v2572 = vpack.c.bf16 %v2550, %v2549
      %v2573 = vpack.c.bf16 %v2552, %v2551
      %v2574 = vpack.c.bf16 %v2554, %v2553
      %v2575 = vpack.c.bf16 %v2556, %v2555
      %v2576 = vpack.c.bf16 %v2558, %v2557
      %v2577 = vpack.c.bf16 %v2560, %v2559
      %v2578 = vpack.c.bf16 %v2562, %v2561
      %s2579 = scalar_lea.vmem %s1, 10
      %v2580 = vld [vmem:[%s2579] sm:$0x3]
      %v2582 = vsel %vm474, %v2563, 0
      %v2585 = vsel %vm474, %v2564, 0
      %v2588 = vsel %vm474, %v2565, 0
      %v2591 = vsel %vm474, %v2566, 0
      %v2594 = vsel %vm474, %v2567, 0
      %v2597 = vsel %vm474, %v2568, 0
      %v2600 = vsel %vm474, %v2569, 0
      %v2603 = vsel %vm474, %v2570, 0
      %v2606 = vsel %vm474, %v2571, 0
      %v2609 = vsel %vm474, %v2572, 0
      %v2612 = vsel %vm474, %v2573, 0
      %v2615 = vsel %vm474, %v2574, 0
      %v2618 = vsel %vm474, %v2575, 0
      %v2621 = vsel %vm474, %v2576, 0
      %v2624 = vsel %vm474, %v2577, 0
      %v2627 = vsel %vm474, %v2578, 0
      %v2630 = vand.u32 %v2580, %v1176
      %2632 = vmatprep.subr.bf16.mxu0 0
      %2633 = vmatpush1.bf16.msra.mxu0 %v2630
      %2634 = vmatprep.subr.bf16.mxu0 0
      %2635 = vmatpush1.bf16.msra.mxu0 0
      %2636 = vmatprep.subr.bf16.mxu0 0
      %2637 = vmatpush1.bf16.msra.mxu0 0
      %2638 = vmatprep.subr.bf16.mxu0 0
      %2639 = vmatpush1.bf16.msra.mxu0 0
      %2640 = vmatprep.subr.bf16.mxu0 0
      %2641 = vmatpush1.bf16.msra.mxu0 0
      %2642 = vmatprep.subr.bf16.mxu0 0
      %2643 = vmatpush1.bf16.msra.mxu0 0
      %2644 = vmatprep.subr.bf16.mxu0 0
      %2645 = vmatpush1.bf16.msra.mxu0 0
      %2646 = vmatprep.subr.bf16.mxu0 0
      %2647 = vmatpush1.bf16.msra.mxu0 0
      %2648 = vmatprep.subr.bf16.mxu0 0
      %2649 = vmatpush1.bf16.msra.mxu0 0
      %2650 = vmatprep.subr.bf16.mxu0 0
      %2651 = vmatpush1.bf16.msra.mxu0 0
      %2652 = vmatprep.subr.bf16.mxu0 0
      %2653 = vmatpush1.bf16.msra.mxu0 0
      %2654 = vmatprep.subr.bf16.mxu0 0
      %2655 = vmatpush1.bf16.msra.mxu0 0
      %2656 = vmatprep.subr.bf16.mxu0 0
      %2657 = vmatpush1.bf16.msra.mxu0 0
      %2658 = vmatprep.subr.bf16.mxu0 0
      %2659 = vmatpush1.bf16.msra.mxu0 0
      %2660 = vmatprep.subr.bf16.mxu0 0
      %2661 = vmatpush1.bf16.msra.mxu0 0
      %2662 = vmatprep.subr.bf16.mxu0 0
      %2663 = vmatpush1.bf16.msra.mxu0 0
      %2664 = vmatprep.mubr.bf16.mxu0 0
      %2665 = vmatmul.mubr.bf16.gmra.mrb[0].mxu0 %v2582
      %v2666 = vpop.f32.mrb[0].mxu0
      %v2667 = vadd.f32 0.0, %v2666
      %v2668 = vpop.f32.mrb[0].mxu0
      %v2669 = vpop.f32.mrb[0].mxu0
      %v2670 = vadd.f32 0.0, %v2669
      %v2671 = vpop.f32.mrb[0].mxu0
      %2672 = vmatprep.mubr.bf16.mxu0 0
      %2673 = vmatmul.mubr.bf16.gmra.mrb[0].mxu0 %v2585
      %v2674 = vpop.f32.mrb[0].mxu0
      %v2675 = vadd.f32 0.0, %v2674
      %v2676 = vpop.f32.mrb[0].mxu0
      %v2677 = vpop.f32.mrb[0].mxu0
      %v2678 = vadd.f32 0.0, %v2677
      %v2679 = vpop.f32.mrb[0].mxu0
      %2680 = vmatprep.mubr.bf16.mxu0 0
      %2681 = vmatmul.mubr.bf16.gmra.mrb[0].mxu0 %v2588
      %v2682 = vpop.f32.mrb[0].mxu0
      %v2683 = vadd.f32 0.0, %v2682
      %v2684 = vpop.f32.mrb[0].mxu0
      %v2685 = vpop.f32.mrb[0].mxu0
      %v2686 = vadd.f32 0.0, %v2685
      %v2687 = vpop.f32.mrb[0].mxu0
      %2688 = vmatprep.mubr.bf16.mxu0 0
      %2689 = vmatmul.mubr.bf16.gmra.mrb[0].mxu0 %v2591
      %v2690 = vpop.f32.mrb[0].mxu0
      %v2691 = vadd.f32 0.0, %v2690
      %v2692 = vpop.f32.mrb[0].mxu0
      %v2693 = vpop.f32.mrb[0].mxu0
      %v2694 = vadd.f32 0.0, %v2693
      %v2695 = vpop.f32.mrb[0].mxu0
      %2696 = vmatprep.mubr.bf16.mxu0 0
      %2697 = vmatmul.mubr.bf16.gmra.mrb[0].mxu0 %v2594
      %v2698 = vpop.f32.mrb[0].mxu0
      %v2699 = vadd.f32 0.0, %v2698
      %v2700 = vpop.f32.mrb[0].mxu0
      %v2701 = vpop.f32.mrb[0].mxu0
      %v2702 = vadd.f32 0.0, %v2701
      %v2703 = vpop.f32.mrb[0].mxu0
      %2704 = vmatprep.mubr.bf16.mxu0 0
      %2705 = vmatmul.mubr.bf16.gmra.mrb[0].mxu0 %v2597
      %v2706 = vpop.f32.mrb[0].mxu0
      %v2707 = vadd.f32 0.0, %v2706
      %v2708 = vpop.f32.mrb[0].mxu0
      %v2709 = vpop.f32.mrb[0].mxu0
      %v2710 = vadd.f32 0.0, %v2709
      %v2711 = vpop.f32.mrb[0].mxu0
      %2712 = vmatprep.mubr.bf16.mxu0 0
      %2713 = vmatmul.mubr.bf16.gmra.mrb[0].mxu0 %v2600
      %v2714 = vpop.f32.mrb[0].mxu0
      %v2715 = vadd.f32 0.0, %v2714
      %v2716 = vpop.f32.mrb[0].mxu0
      %v2717 = vpop.f32.mrb[0].mxu0
      %v2718 = vadd.f32 0.0, %v2717
      %v2719 = vpop.f32.mrb[0].mxu0
      %2720 = vmatprep.mubr.bf16.mxu0 0
      %2721 = vmatmul.mubr.bf16.gmra.mrb[0].mxu0 %v2603
      %v2722 = vpop.f32.mrb[0].mxu0
      %v2723 = vadd.f32 0.0, %v2722
      %v2724 = vpop.f32.mrb[0].mxu0
      %v2725 = vpop.f32.mrb[0].mxu0
      %v2726 = vadd.f32 0.0, %v2725
      %v2727 = vpop.f32.mrb[0].mxu0
      %2728 = vmatprep.mubr.bf16.mxu0 0
      %2729 = vmatmul.mubr.bf16.gmra.mrb[0].mxu0 %v2606
      %v2730 = vpop.f32.mrb[0].mxu0
      %v2731 = vadd.f32 0.0, %v2730
      %v2732 = vpop.f32.mrb[0].mxu0
      %v2733 = vpop.f32.mrb[0].mxu0
      %v2734 = vadd.f32 0.0, %v2733
      %v2735 = vpop.f32.mrb[0].mxu0
      %2736 = vmatprep.mubr.bf16.mxu0 0
      %2737 = vmatmul.mubr.bf16.gmra.mrb[0].mxu0 %v2609
      %v2738 = vpop.f32.mrb[0].mxu0
      %v2739 = vadd.f32 0.0, %v2738
      %v2740 = vpop.f32.mrb[0].mxu0
      %v2741 = vpop.f32.mrb[0].mxu0
      %v2742 = vadd.f32 0.0, %v2741
      %v2743 = vpop.f32.mrb[0].mxu0
      %2744 = vmatprep.mubr.bf16.mxu0 0
      %2745 = vmatmul.mubr.bf16.gmra.mrb[0].mxu0 %v2612
      %v2746 = vpop.f32.mrb[0].mxu0
      %v2747 = vadd.f32 0.0, %v2746
      %v2748 = vpop.f32.mrb[0].mxu0
      %v2749 = vpop.f32.mrb[0].mxu0
      %v2750 = vadd.f32 0.0, %v2749
      %v2751 = vpop.f32.mrb[0].mxu0
      %2752 = vmatprep.mubr.bf16.mxu0 0
      %2753 = vmatmul.mubr.bf16.gmra.mrb[0].mxu0 %v2615
      %v2754 = vpop.f32.mrb[0].mxu0
      %v2755 = vadd.f32 0.0, %v2754
      %v2756 = vpop.f32.mrb[0].mxu0
      %v2757 = vpop.f32.mrb[0].mxu0
      %v2758 = vadd.f32 0.0, %v2757
      %v2759 = vpop.f32.mrb[0].mxu0
      %2760 = vmatprep.mubr.bf16.mxu0 0
      %2761 = vmatmul.mubr.bf16.gmra.mrb[0].mxu0 %v2618
      %v2762 = vpop.f32.mrb[0].mxu0
      %v2763 = vadd.f32 0.0, %v2762
      %v2764 = vpop.f32.mrb[0].mxu0
      %v2765 = vpop.f32.mrb[0].mxu0
      %v2766 = vadd.f32 0.0, %v2765
      %v2767 = vpop.f32.mrb[0].mxu0
      %2768 = vmatprep.mubr.bf16.mxu0 0
      %2769 = vmatmul.mubr.bf16.gmra.mrb[0].mxu0 %v2621
      %v2770 = vpop.f32.mrb[0].mxu0
      %v2771 = vadd.f32 0.0, %v2770
      %v2772 = vpop.f32.mrb[0].mxu0
      %v2773 = vpop.f32.mrb[0].mxu0
      %v2774 = vadd.f32 0.0, %v2773
      %v2775 = vpop.f32.mrb[0].mxu0
      %2776 = vmatprep.mubr.bf16.mxu0 0
      %2777 = vmatmul.mubr.bf16.gmra.mrb[0].mxu0 %v2624
      %v2778 = vpop.f32.mrb[0].mxu0
      %v2779 = vadd.f32 0.0, %v2778
      %v2780 = vpop.f32.mrb[0].mxu0
      %v2781 = vpop.f32.mrb[0].mxu0
      %v2782 = vadd.f32 0.0, %v2781
      %v2783 = vpop.f32.mrb[0].mxu0
      %2784 = vmatprep.mubr.bf16.mxu0 0
      %2785 = vmatmul.mubr.bf16.gmra.mrb[0].mxu0 %v2627
      %v2786 = vpop.f32.mrb[0].mxu0
      %v2787 = vadd.f32 0.0, %v2786
      %v2788 = vpop.f32.mrb[0].mxu0
      %v2789 = vpop.f32.mrb[0].mxu0
      %v2790 = vadd.f32 0.0, %v2789
      %v2791 = vpop.f32.mrb[0].mxu0
      %2792 = vdwg.mxu0
      %v2793 = vadd.f32 %v2467, %v2667
      %v2794 = vadd.f32 %v2468, %v2670
      %v2795 = vadd.f32 %v2469, %v2675
      %v2796 = vadd.f32 %v2470, %v2678
      %v2797 = vadd.f32 %v2471, %v2683
      %v2798 = vadd.f32 %v2472, %v2686
      %v2799 = vadd.f32 %v2473, %v2691
      %v2800 = vadd.f32 %v2474, %v2694
      %v2801 = vadd.f32 %v2475, %v2699
      %v2802 = vadd.f32 %v2476, %v2702
      %v2803 = vadd.f32 %v2477, %v2707
      %v2804 = vadd.f32 %v2478, %v2710
      %v2805 = vadd.f32 %v2479, %v2715
      %v2806 = vadd.f32 %v2480, %v2718
      %v2807 = vadd.f32 %v2481, %v2723
      %v2808 = vadd.f32 %v2482, %v2726
      %v2809 = vadd.f32 %v2483, %v2731
      %v2810 = vadd.f32 %v2484, %v2734
      %v2811 = vadd.f32 %v2485, %v2739
      %v2812 = vadd.f32 %v2486, %v2742
      %v2813 = vadd.f32 %v2487, %v2747
      %v2814 = vadd.f32 %v2488, %v2750
      %v2815 = vadd.f32 %v2489, %v2755
      %v2816 = vadd.f32 %v2490, %v2758
      %v2817 = vadd.f32 %v2491, %v2763
      %v2818 = vadd.f32 %v2492, %v2766
      %v2819 = vadd.f32 %v2493, %v2771
      %v2820 = vadd.f32 %v2494, %v2774
      %v2821 = vadd.f32 %v2495, %v2779
      %v2822 = vadd.f32 %v2496, %v2782
      %v2823 = vadd.f32 %v2497, %v2787
      %v2824 = vadd.f32 %v2498, %v2790
      %v2825 = vld [vmem:[#allocation2 + $0x27] sm:$0xff]
      %v2826 = vld [vmem:[#allocation2 + $0x2f] sm:$0xff]
      %v2827 = vld [vmem:[#allocation2 + $0x37] sm:$0xff]
      %v2828 = vld [vmem:[#allocation2 + $0x3f] sm:$0xff]
      %v2829 = vld [vmem:[#allocation2 + $0x47] sm:$0xff]
      %v2830 = vld [vmem:[#allocation2 + $0x4f] sm:$0xff]
      %v2831 = vld [vmem:[#allocation2 + $0x57] sm:$0xff]
      %v2832 = vld [vmem:[#allocation2 + $0x5f] sm:$0xff]
      %v2833 = vld [vmem:[#allocation2 + $0x67] sm:$0xff]
      %v2834 = vld [vmem:[#allocation2 + $0x6f] sm:$0xff]
      %v2835 = vld [vmem:[#allocation2 + $0x77] sm:$0xff]
      %v2836 = vld [vmem:[#allocation2 + $0x7f] sm:$0xff]
      %v2837 = vld [vmem:[#allocation2 + $0x87] sm:$0xff]
      %v2838 = vld [vmem:[#allocation2 + $0x8f] sm:$0xff]
      %v2839 = vld [vmem:[#allocation2 + $0x97] sm:$0xff]
      %v2840 = vld [vmem:[#allocation2 + $0x9f] sm:$0xff]
      %v2841 = vld [vmem:[#allocation2 + $0xa7] sm:$0xff]
      %v2842 = vld [vmem:[#allocation2 + $0xaf] sm:$0xff]
      %v2843 = vld [vmem:[#allocation2 + $0xb7] sm:$0xff]
      %v2844 = vld [vmem:[#allocation2 + $0xbf] sm:$0xff]
      %v2845 = vld [vmem:[#allocation2 + $0xc7] sm:$0xff]
      %v2846 = vld [vmem:[#allocation2 + $0xcf] sm:$0xff]
      %v2847 = vld [vmem:[#allocation2 + $0xd7] sm:$0xff]
      %v2848 = vld [vmem:[#allocation2 + $0xdf] sm:$0xff]
      %v2849 = vld [vmem:[#allocation2 + $0xe7] sm:$0xff]
      %v2850 = vld [vmem:[#allocation2 + $0xef] sm:$0xff]
      %v2851 = vld [vmem:[#allocation2 + $0xf7] sm:$0xff]
      %v2852 = vld [vmem:[#allocation2 + $0xff] sm:$0xff]
      %v2853 = vld [vmem:[#allocation2 + $0x107] sm:$0xff]
      %v2854 = vld [vmem:[#allocation2 + $0x10f] sm:$0xff]
      %v2855 = vld [vmem:[#allocation2 + $0x117] sm:$0xff]
      %v2856 = vld [vmem:[#allocation2 + $0x11f] sm:$0xff]
      %v2857 = vsel %vm930, %v2825, 0.0
      %v2858 = vsel %vm931, %v2826, 0.0
      %v2859 = vsel %vm932, %v2827, 0.0
      %v2860 = vsel %vm933, %v2828, 0.0
      %v2861 = vsel %vm934, %v2829, 0.0
      %v2862 = vsel %vm935, %v2830, 0.0
      %v2863 = vsel %vm936, %v2831, 0.0
      %v2864 = vsel %vm937, %v2832, 0.0
      %v2865 = vsel %vm938, %v2833, 0.0
      %v2866 = vsel %vm939, %v2834, 0.0
      %v2867 = vsel %vm940, %v2835, 0.0
      %v2868 = vsel %vm941, %v2836, 0.0
      %v2869 = vsel %vm942, %v2837, 0.0
      %v2870 = vsel %vm943, %v2838, 0.0
      %v2871 = vsel %vm944, %v2839, 0.0
      %v2872 = vsel %vm945, %v2840, 0.0
      %v2873 = vsel %vm946, %v2841, 0.0
      %v2874 = vsel %vm947, %v2842, 0.0
      %v2875 = vsel %vm948, %v2843, 0.0
      %v2876 = vsel %vm949, %v2844, 0.0
      %v2877 = vsel %vm950, %v2845, 0.0
      %v2878 = vsel %vm951, %v2846, 0.0
      %v2879 = vsel %vm952, %v2847, 0.0
      %v2880 = vsel %vm953, %v2848, 0.0
      %v2881 = vsel %vm954, %v2849, 0.0
      %v2882 = vsel %vm955, %v2850, 0.0
      %v2883 = vsel %vm956, %v2851, 0.0
      %v2884 = vsel %vm957, %v2852, 0.0
      %v2885 = vsel %vm958, %v2853, 0.0
      %v2886 = vsel %vm959, %v2854, 0.0
      %v2887 = vsel %vm960, %v2855, 0.0
      %v2888 = vsel %vm961, %v2856, 0.0
      %v2889 = vpack.c.bf16 %v2858, %v2857
      %v2890 = vpack.c.bf16 %v2860, %v2859
      %v2891 = vpack.c.bf16 %v2862, %v2861
      %v2892 = vpack.c.bf16 %v2864, %v2863
      %v2893 = vpack.c.bf16 %v2866, %v2865
      %v2894 = vpack.c.bf16 %v2868, %v2867
      %v2895 = vpack.c.bf16 %v2870, %v2869
      %v2896 = vpack.c.bf16 %v2872, %v2871
      %v2897 = vpack.c.bf16 %v2874, %v2873
      %v2898 = vpack.c.bf16 %v2876, %v2875
      %v2899 = vpack.c.bf16 %v2878, %v2877
      %v2900 = vpack.c.bf16 %v2880, %v2879
      %v2901 = vpack.c.bf16 %v2882, %v2881
      %v2902 = vpack.c.bf16 %v2884, %v2883
      %v2903 = vpack.c.bf16 %v2886, %v2885
      %v2904 = vpack.c.bf16 %v2888, %v2887
      %s2905 = scalar_lea.vmem %s1, 12
      %v2906 = vld [vmem:[%s2905] sm:$0x3]
      %v2908 = vsel %vm474, %v2889, 0
      %v2911 = vsel %vm474, %v2890, 0
      %v2914 = vsel %vm474, %v2891, 0
      %v2917 = vsel %vm474, %v2892, 0
      %v2920 = vsel %vm474, %v2893, 0
      %v2923 = vsel %vm474, %v2894, 0
      %v2926 = vsel %vm474, %v2895, 0
      %v2929 = vsel %vm474, %v2896, 0
      %v2932 = vsel %vm474, %v2897, 0
      %v2935 = vsel %vm474, %v2898, 0
      %v2938 = vsel %vm474, %v2899, 0
      %v2941 = vsel %vm474, %v2900, 0
      %v2944 = vsel %vm474, %v2901, 0
      %v2947 = vsel %vm474, %v2902, 0
      %v2950 = vsel %vm474, %v2903, 0
      %v2953 = vsel %vm474, %v2904, 0
      %v2956 = vand.u32 %v2906, %v1176
      %2958 = vmatprep.subr.bf16.mxu0 0
      %2959 = vmatpush1.bf16.msra.mxu0 %v2956
      %2960 = vmatprep.subr.bf16.mxu0 0
      %2961 = vmatpush1.bf16.msra.mxu0 0
      %2962 = vmatprep.subr.bf16.mxu0 0
      %2963 = vmatpush1.bf16.msra.mxu0 0
      %2964 = vmatprep.subr.bf16.mxu0 0
      %2965 = vmatpush1.bf16.msra.mxu0 0
      %2966 = vmatprep.subr.bf16.mxu0 0
      %2967 = vmatpush1.bf16.msra.mxu0 0
      %2968 = vmatprep.subr.bf16.mxu0 0
      %2969 = vmatpush1.bf16.msra.mxu0 0
      %2970 = vmatprep.subr.bf16.mxu0 0
      %2971 = vmatpush1.bf16.msra.mxu0 0
      %2972 = vmatprep.subr.bf16.mxu0 0
      %2973 = vmatpush1.bf16.msra.mxu0 0
      %2974 = vmatprep.subr.bf16.mxu0 0
      %2975 = vmatpush1.bf16.msra.mxu0 0
      %2976 = vmatprep.subr.bf16.mxu0 0
      %2977 = vmatpush1.bf16.msra.mxu0 0
      %2978 = vmatprep.subr.bf16.mxu0 0
      %2979 = vmatpush1.bf16.msra.mxu0 0
      %2980 = vmatprep.subr.bf16.mxu0 0
      %2981 = vmatpush1.bf16.msra.mxu0 0
      %2982 = vmatprep.subr.bf16.mxu0 0
      %2983 = vmatpush1.bf16.msra.mxu0 0
      %2984 = vmatprep.subr.bf16.mxu0 0
      %2985 = vmatpush1.bf16.msra.mxu0 0
      %2986 = vmatprep.subr.bf16.mxu0 0
      %2987 = vmatpush1.bf16.msra.mxu0 0
      %2988 = vmatprep.subr.bf16.mxu0 0
      %2989 = vmatpush1.bf16.msra.mxu0 0
      %2990 = vmatprep.mubr.bf16.mxu0 0
      %2991 = vmatmul.mubr.bf16.gmra.mrb[0].mxu0 %v2908
      %v2992 = vpop.f32.mrb[0].mxu0
      %v2993 = vadd.f32 0.0, %v2992
      %v2994 = vpop.f32.mrb[0].mxu0
      %v2995 = vpop.f32.mrb[0].mxu0
      %v2996 = vadd.f32 0.0, %v2995
      %v2997 = vpop.f32.mrb[0].mxu0
      %2998 = vmatprep.mubr.bf16.mxu0 0
      %2999 = vmatmul.mubr.bf16.gmra.mrb[0].mxu0 %v2911
      %v3000 = vpop.f32.mrb[0].mxu0
      %v3001 = vadd.f32 0.0, %v3000
      %v3002 = vpop.f32.mrb[0].mxu0
      %v3003 = vpop.f32.mrb[0].mxu0
      %v3004 = vadd.f32 0.0, %v3003
      %v3005 = vpop.f32.mrb[0].mxu0
      %3006 = vmatprep.mubr.bf16.mxu0 0
      %3007 = vmatmul.mubr.bf16.gmra.mrb[0].mxu0 %v2914
      %v3008 = vpop.f32.mrb[0].mxu0
      %v3009 = vadd.f32 0.0, %v3008
      %v3010 = vpop.f32.mrb[0].mxu0
      %v3011 = vpop.f32.mrb[0].mxu0
      %v3012 = vadd.f32 0.0, %v3011
      %v3013 = vpop.f32.mrb[0].mxu0
      %3014 = vmatprep.mubr.bf16.mxu0 0
      %3015 = vmatmul.mubr.bf16.gmra.mrb[0].mxu0 %v2917
      %v3016 = vpop.f32.mrb[0].mxu0
      %v3017 = vadd.f32 0.0, %v3016
      %v3018 = vpop.f32.mrb[0].mxu0
      %v3019 = vpop.f32.mrb[0].mxu0
      %v3020 = vadd.f32 0.0, %v3019
      %v3021 = vpop.f32.mrb[0].mxu0
      %3022 = vmatprep.mubr.bf16.mxu0 0
      %3023 = vmatmul.mubr.bf16.gmra.mrb[0].mxu0 %v2920
      %v3024 = vpop.f32.mrb[0].mxu0
      %v3025 = vadd.f32 0.0, %v3024
      %v3026 = vpop.f32.mrb[0].mxu0
      %v3027 = vpop.f32.mrb[0].mxu0
      %v3028 = vadd.f32 0.0, %v3027
      %v3029 = vpop.f32.mrb[0].mxu0
      %3030 = vmatprep.mubr.bf16.mxu0 0
      %3031 = vmatmul.mubr.bf16.gmra.mrb[0].mxu0 %v2923
      %v3032 = vpop.f32.mrb[0].mxu0
      %v3033 = vadd.f32 0.0, %v3032
      %v3034 = vpop.f32.mrb[0].mxu0
      %v3035 = vpop.f32.mrb[0].mxu0
      %v3036 = vadd.f32 0.0, %v3035
      %v3037 = vpop.f32.mrb[0].mxu0
      %3038 = vmatprep.mubr.bf16.mxu0 0
      %3039 = vmatmul.mubr.bf16.gmra.mrb[0].mxu0 %v2926
      %v3040 = vpop.f32.mrb[0].mxu0
      %v3041 = vadd.f32 0.0, %v3040
      %v3042 = vpop.f32.mrb[0].mxu0
      %v3043 = vpop.f32.mrb[0].mxu0
      %v3044 = vadd.f32 0.0, %v3043
      %v3045 = vpop.f32.mrb[0].mxu0
      %3046 = vmatprep.mubr.bf16.mxu0 0
      %3047 = vmatmul.mubr.bf16.gmra.mrb[0].mxu0 %v2929
      %v3048 = vpop.f32.mrb[0].mxu0
      %v3049 = vadd.f32 0.0, %v3048
      %v3050 = vpop.f32.mrb[0].mxu0
      %v3051 = vpop.f32.mrb[0].mxu0
      %v3052 = vadd.f32 0.0, %v3051
      %v3053 = vpop.f32.mrb[0].mxu0
      %3054 = vmatprep.mubr.bf16.mxu0 0
      %3055 = vmatmul.mubr.bf16.gmra.mrb[0].mxu0 %v2932
      %v3056 = vpop.f32.mrb[0].mxu0
      %v3057 = vadd.f32 0.0, %v3056
      %v3058 = vpop.f32.mrb[0].mxu0
      %v3059 = vpop.f32.mrb[0].mxu0
      %v3060 = vadd.f32 0.0, %v3059
      %v3061 = vpop.f32.mrb[0].mxu0
      %3062 = vmatprep.mubr.bf16.mxu0 0
      %3063 = vmatmul.mubr.bf16.gmra.mrb[0].mxu0 %v2935
      %v3064 = vpop.f32.mrb[0].mxu0
      %v3065 = vadd.f32 0.0, %v3064
      %v3066 = vpop.f32.mrb[0].mxu0
      %v3067 = vpop.f32.mrb[0].mxu0
      %v3068 = vadd.f32 0.0, %v3067
      %v3069 = vpop.f32.mrb[0].mxu0
      %3070 = vmatprep.mubr.bf16.mxu0 0
      %3071 = vmatmul.mubr.bf16.gmra.mrb[0].mxu0 %v2938
      %v3072 = vpop.f32.mrb[0].mxu0
      %v3073 = vadd.f32 0.0, %v3072
      %v3074 = vpop.f32.mrb[0].mxu0
      %v3075 = vpop.f32.mrb[0].mxu0
      %v3076 = vadd.f32 0.0, %v3075
      %v3077 = vpop.f32.mrb[0].mxu0
      %3078 = vmatprep.mubr.bf16.mxu0 0
      %3079 = vmatmul.mubr.bf16.gmra.mrb[0].mxu0 %v2941
      %v3080 = vpop.f32.mrb[0].mxu0
      %v3081 = vadd.f32 0.0, %v3080
      %v3082 = vpop.f32.mrb[0].mxu0
      %v3083 = vpop.f32.mrb[0].mxu0
      %v3084 = vadd.f32 0.0, %v3083
      %v3085 = vpop.f32.mrb[0].mxu0
      %3086 = vmatprep.mubr.bf16.mxu0 0
      %3087 = vmatmul.mubr.bf16.gmra.mrb[0].mxu0 %v2944
      %v3088 = vpop.f32.mrb[0].mxu0
      %v3089 = vadd.f32 0.0, %v3088
      %v3090 = vpop.f32.mrb[0].mxu0
      %v3091 = vpop.f32.mrb[0].mxu0
      %v3092 = vadd.f32 0.0, %v3091
      %v3093 = vpop.f32.mrb[0].mxu0
      %3094 = vmatprep.mubr.bf16.mxu0 0
      %3095 = vmatmul.mubr.bf16.gmra.mrb[0].mxu0 %v2947
      %v3096 = vpop.f32.mrb[0].mxu0
      %v3097 = vadd.f32 0.0, %v3096
      %v3098 = vpop.f32.mrb[0].mxu0
      %v3099 = vpop.f32.mrb[0].mxu0
      %v3100 = vadd.f32 0.0, %v3099
      %v3101 = vpop.f32.mrb[0].mxu0
      %3102 = vmatprep.mubr.bf16.mxu0 0
      %3103 = vmatmul.mubr.bf16.gmra.mrb[0].mxu0 %v2950
      %v3104 = vpop.f32.mrb[0].mxu0
      %v3105 = vadd.f32 0.0, %v3104
      %v3106 = vpop.f32.mrb[0].mxu0
      %v3107 = vpop.f32.mrb[0].mxu0
      %v3108 = vadd.f32 0.0, %v3107
      %v3109 = vpop.f32.mrb[0].mxu0
      %3110 = vmatprep.mubr.bf16.mxu0 0
      %3111 = vmatmul.mubr.bf16.gmra.mrb[0].mxu0 %v2953
      %v3112 = vpop.f32.mrb[0].mxu0
      %v3113 = vadd.f32 0.0, %v3112
      %v3114 = vpop.f32.mrb[0].mxu0
      %v3115 = vpop.f32.mrb[0].mxu0
      %v3116 = vadd.f32 0.0, %v3115
      %v3117 = vpop.f32.mrb[0].mxu0
      %3118 = vdwg.mxu0
      %v3119 = vadd.f32 %v2793, %v2993
      %v3120 = vadd.f32 %v2794, %v2996
      %v3121 = vadd.f32 %v2795, %v3001
      %v3122 = vadd.f32 %v2796, %v3004
      %v3123 = vadd.f32 %v2797, %v3009
      %v3124 = vadd.f32 %v2798, %v3012
      %v3125 = vadd.f32 %v2799, %v3017
      %v3126 = vadd.f32 %v2800, %v3020
      %v3127 = vadd.f32 %v2801, %v3025
      %v3128 = vadd.f32 %v2802, %v3028
      %v3129 = vadd.f32 %v2803, %v3033
      %v3130 = vadd.f32 %v2804, %v3036
      %v3131 = vadd.f32 %v2805, %v3041
      %v3132 = vadd.f32 %v2806, %v3044
      %v3133 = vadd.f32 %v2807, %v3049
      %v3134 = vadd.f32 %v2808, %v3052
      %v3135 = vadd.f32 %v2809, %v3057
      %v3136 = vadd.f32 %v2810, %v3060
      %v3137 = vadd.f32 %v2811, %v3065
      %v3138 = vadd.f32 %v2812, %v3068
      %v3139 = vadd.f32 %v2813, %v3073
      %v3140 = vadd.f32 %v2814, %v3076
      %v3141 = vadd.f32 %v2815, %v3081
      %v3142 = vadd.f32 %v2816, %v3084
      %v3143 = vadd.f32 %v2817, %v3089
      %v3144 = vadd.f32 %v2818, %v3092
      %v3145 = vadd.f32 %v2819, %v3097
      %v3146 = vadd.f32 %v2820, %v3100
      %v3147 = vadd.f32 %v2821, %v3105
      %v3148 = vadd.f32 %v2822, %v3108
      %v3149 = vadd.f32 %v2823, %v3113
      %v3150 = vadd.f32 %v2824, %v3116
      %v3151 = vld [vmem:[#allocation2 + $0x28] sm:$0xff]
      %v3152 = vld [vmem:[#allocation2 + $0x30] sm:$0xff]
      %v3153 = vld [vmem:[#allocation2 + $0x38] sm:$0xff]
      %v3154 = vld [vmem:[#allocation2 + $0x40] sm:$0xff]
      %v3155 = vld [vmem:[#allocation2 + $0x48] sm:$0xff]
      %v3156 = vld [vmem:[#allocation2 + $0x50] sm:$0xff]
      %v3157 = vld [vmem:[#allocation2 + $0x58] sm:$0xff]
      %v3158 = vld [vmem:[#allocation2 + $0x60] sm:$0xff]
      %v3159 = vld [vmem:[#allocation2 + $0x68] sm:$0xff]
      %v3160 = vld [vmem:[#allocation2 + $0x70] sm:$0xff]
      %v3161 = vld [vmem:[#allocation2 + $0x78] sm:$0xff]
      %v3162 = vld [vmem:[#allocation2 + $0x80] sm:$0xff]
      %v3163 = vld [vmem:[#allocation2 + $0x88] sm:$0xff]
      %v3164 = vld [vmem:[#allocation2 + $0x90] sm:$0xff]
      %v3165 = vld [vmem:[#allocation2 + $0x98] sm:$0xff]
      %v3166 = vld [vmem:[#allocation2 + $0xa0] sm:$0xff]
      %v3167 = vld [vmem:[#allocation2 + $0xa8] sm:$0xff]
      %v3168 = vld [vmem:[#allocation2 + $0xb0] sm:$0xff]
      %v3169 = vld [vmem:[#allocation2 + $0xb8] sm:$0xff]
      %v3170 = vld [vmem:[#allocation2 + $0xc0] sm:$0xff]
      %v3171 = vld [vmem:[#allocation2 + $0xc8] sm:$0xff]
      %v3172 = vld [vmem:[#allocation2 + $0xd0] sm:$0xff]
      %v3173 = vld [vmem:[#allocation2 + $0xd8] sm:$0xff]
      %v3174 = vld [vmem:[#allocation2 + $0xe0] sm:$0xff]
      %v3175 = vld [vmem:[#allocation2 + $0xe8] sm:$0xff]
      %v3176 = vld [vmem:[#allocation2 + $0xf0] sm:$0xff]
      %v3177 = vld [vmem:[#allocation2 + $0xf8] sm:$0xff]
      %v3178 = vld [vmem:[#allocation2 + $0x100] sm:$0xff]
      %v3179 = vld [vmem:[#allocation2 + $0x108] sm:$0xff]
      %v3180 = vld [vmem:[#allocation2 + $0x110] sm:$0xff]
      %v3181 = vld [vmem:[#allocation2 + $0x118] sm:$0xff]
      %v3182 = vld [vmem:[#allocation2 + $0x120] sm:$0xff]
      %v3183 = vpack.c.bf16 %v3152, %v3151
      %v3184 = vpack.c.bf16 %v3154, %v3153
      %v3185 = vpack.c.bf16 %v3156, %v3155
      %v3186 = vpack.c.bf16 %v3158, %v3157
      %v3187 = vpack.c.bf16 %v3160, %v3159
      %v3188 = vpack.c.bf16 %v3162, %v3161
      %v3189 = vpack.c.bf16 %v3164, %v3163
      %v3190 = vpack.c.bf16 %v3166, %v3165
      %v3191 = vpack.c.bf16 %v3168, %v3167
      %v3192 = vpack.c.bf16 %v3170, %v3169
      %v3193 = vpack.c.bf16 %v3172, %v3171
      %v3194 = vpack.c.bf16 %v3174, %v3173
      %v3195 = vpack.c.bf16 %v3176, %v3175
      %v3196 = vpack.c.bf16 %v3178, %v3177
      %v3197 = vpack.c.bf16 %v3180, %v3179
      %v3198 = vpack.c.bf16 %v3182, %v3181
      %s3199 = scalar_lea.vmem %s1, 14
      %v3200 = vld [vmem:[%s3199] sm:$0x3]
      %v3202 = vsel %vm474, %v3183, 0
      %v3205 = vsel %vm474, %v3184, 0
      %v3208 = vsel %vm474, %v3185, 0
      %v3211 = vsel %vm474, %v3186, 0
      %v3214 = vsel %vm474, %v3187, 0
      %v3217 = vsel %vm474, %v3188, 0
      %v3220 = vsel %vm474, %v3189, 0
      %v3223 = vsel %vm474, %v3190, 0
      %v3226 = vsel %vm474, %v3191, 0
      %v3229 = vsel %vm474, %v3192, 0
      %v3232 = vsel %vm474, %v3193, 0
      %v3235 = vsel %vm474, %v3194, 0
      %v3238 = vsel %vm474, %v3195, 0
      %v3241 = vsel %vm474, %v3196, 0
      %v3244 = vsel %vm474, %v3197, 0
      %v3247 = vsel %vm474, %v3198, 0
      %v3250 = vand.u32 %v3200, %v1176
      %3252 = vmatprep.subr.bf16.mxu0 0
      %3253 = vmatpush1.bf16.msra.mxu0 %v3250
      %3254 = vmatprep.subr.bf16.mxu0 0
      %3255 = vmatpush1.bf16.msra.mxu0 0
      %3256 = vmatprep.subr.bf16.mxu0 0
      %3257 = vmatpush1.bf16.msra.mxu0 0
      %3258 = vmatprep.subr.bf16.mxu0 0
      %3259 = vmatpush1.bf16.msra.mxu0 0
      %3260 = vmatprep.subr.bf16.mxu0 0
      %3261 = vmatpush1.bf16.msra.mxu0 0
      %3262 = vmatprep.subr.bf16.mxu0 0
      %3263 = vmatpush1.bf16.msra.mxu0 0
      %3264 = vmatprep.subr.bf16.mxu0 0
      %3265 = vmatpush1.bf16.msra.mxu0 0
      %3266 = vmatprep.subr.bf16.mxu0 0
      %3267 = vmatpush1.bf16.msra.mxu0 0
      %3268 = vmatprep.subr.bf16.mxu0 0
      %3269 = vmatpush1.bf16.msra.mxu0 0
      %3270 = vmatprep.subr.bf16.mxu0 0
      %3271 = vmatpush1.bf16.msra.mxu0 0
      %3272 = vmatprep.subr.bf16.mxu0 0
      %3273 = vmatpush1.bf16.msra.mxu0 0
      %3274 = vmatprep.subr.bf16.mxu0 0
      %3275 = vmatpush1.bf16.msra.mxu0 0
      %3276 = vmatprep.subr.bf16.mxu0 0
      %3277 = vmatpush1.bf16.msra.mxu0 0
      %3278 = vmatprep.subr.bf16.mxu0 0
      %3279 = vmatpush1.bf16.msra.mxu0 0
      %3280 = vmatprep.subr.bf16.mxu0 0
      %3281 = vmatpush1.bf16.msra.mxu0 0
      %3282 = vmatprep.subr.bf16.mxu0 0
      %3283 = vmatpush1.bf16.msra.mxu0 0
      %3284 = vmatprep.mubr.bf16.mxu0 0
      %3285 = vmatmul.mubr.bf16.gmra.mrb[0].mxu0 %v3202
      %v3286 = vpop.f32.mrb[0].mxu0
      %v3287 = vadd.f32 0.0, %v3286
      %v3288 = vpop.f32.mrb[0].mxu0
      %v3289 = vpop.f32.mrb[0].mxu0
      %v3290 = vadd.f32 0.0, %v3289
      %v3291 = vpop.f32.mrb[0].mxu0
      %3292 = vmatprep.mubr.bf16.mxu0 0
      %3293 = vmatmul.mubr.bf16.gmra.mrb[0].mxu0 %v3205
      %v3294 = vpop.f32.mrb[0].mxu0
      %v3295 = vadd.f32 0.0, %v3294
      %v3296 = vpop.f32.mrb[0].mxu0
      %v3297 = vpop.f32.mrb[0].mxu0
      %v3298 = vadd.f32 0.0, %v3297
      %v3299 = vpop.f32.mrb[0].mxu0
      %3300 = vmatprep.mubr.bf16.mxu0 0
      %3301 = vmatmul.mubr.bf16.gmra.mrb[0].mxu0 %v3208
      %v3302 = vpop.f32.mrb[0].mxu0
      %v3303 = vadd.f32 0.0, %v3302
      %v3304 = vpop.f32.mrb[0].mxu0
      %v3305 = vpop.f32.mrb[0].mxu0
      %v3306 = vadd.f32 0.0, %v3305
      %v3307 = vpop.f32.mrb[0].mxu0
      %3308 = vmatprep.mubr.bf16.mxu0 0
      %3309 = vmatmul.mubr.bf16.gmra.mrb[0].mxu0 %v3211
      %v3310 = vpop.f32.mrb[0].mxu0
      %v3311 = vadd.f32 0.0, %v3310
      %v3312 = vpop.f32.mrb[0].mxu0
      %v3313 = vpop.f32.mrb[0].mxu0
      %v3314 = vadd.f32 0.0, %v3313
      %v3315 = vpop.f32.mrb[0].mxu0
      %3316 = vmatprep.mubr.bf16.mxu0 0
      %3317 = vmatmul.mubr.bf16.gmra.mrb[0].mxu0 %v3214
      %v3318 = vpop.f32.mrb[0].mxu0
      %v3319 = vadd.f32 0.0, %v3318
      %v3320 = vpop.f32.mrb[0].mxu0
      %v3321 = vpop.f32.mrb[0].mxu0
      %v3322 = vadd.f32 0.0, %v3321
      %v3323 = vpop.f32.mrb[0].mxu0
      %3324 = vmatprep.mubr.bf16.mxu0 0
      %3325 = vmatmul.mubr.bf16.gmra.mrb[0].mxu0 %v3217
      %v3326 = vpop.f32.mrb[0].mxu0
      %v3327 = vadd.f32 0.0, %v3326
      %v3328 = vpop.f32.mrb[0].mxu0
      %v3329 = vpop.f32.mrb[0].mxu0
      %v3330 = vadd.f32 0.0, %v3329
      %v3331 = vpop.f32.mrb[0].mxu0
      %3332 = vmatprep.mubr.bf16.mxu0 0
      %3333 = vmatmul.mubr.bf16.gmra.mrb[0].mxu0 %v3220
      %v3334 = vpop.f32.mrb[0].mxu0
      %v3335 = vadd.f32 0.0, %v3334
      %v3336 = vpop.f32.mrb[0].mxu0
      %v3337 = vpop.f32.mrb[0].mxu0
      %v3338 = vadd.f32 0.0, %v3337
      %v3339 = vpop.f32.mrb[0].mxu0
      %3340 = vmatprep.mubr.bf16.mxu0 0
      %3341 = vmatmul.mubr.bf16.gmra.mrb[0].mxu0 %v3223
      %v3342 = vpop.f32.mrb[0].mxu0
      %v3343 = vadd.f32 0.0, %v3342
      %v3344 = vpop.f32.mrb[0].mxu0
      %v3345 = vpop.f32.mrb[0].mxu0
      %v3346 = vadd.f32 0.0, %v3345
      %v3347 = vpop.f32.mrb[0].mxu0
      %3348 = vmatprep.mubr.bf16.mxu0 0
      %3349 = vmatmul.mubr.bf16.gmra.mrb[0].mxu0 %v3226
      %v3350 = vpop.f32.mrb[0].mxu0
      %v3351 = vadd.f32 0.0, %v3350
      %v3352 = vpop.f32.mrb[0].mxu0
      %v3353 = vpop.f32.mrb[0].mxu0
      %v3354 = vadd.f32 0.0, %v3353
      %v3355 = vpop.f32.mrb[0].mxu0
      %3356 = vmatprep.mubr.bf16.mxu0 0
      %3357 = vmatmul.mubr.bf16.gmra.mrb[0].mxu0 %v3229
      %v3358 = vpop.f32.mrb[0].mxu0
      %v3359 = vadd.f32 0.0, %v3358
      %v3360 = vpop.f32.mrb[0].mxu0
      %v3361 = vpop.f32.mrb[0].mxu0
      %v3362 = vadd.f32 0.0, %v3361
      %v3363 = vpop.f32.mrb[0].mxu0
      %3364 = vmatprep.mubr.bf16.mxu0 0
      %3365 = vmatmul.mubr.bf16.gmra.mrb[0].mxu0 %v3232
      %v3366 = vpop.f32.mrb[0].mxu0
      %v3367 = vadd.f32 0.0, %v3366
      %v3368 = vpop.f32.mrb[0].mxu0
      %v3369 = vpop.f32.mrb[0].mxu0
      %v3370 = vadd.f32 0.0, %v3369
      %v3371 = vpop.f32.mrb[0].mxu0
      %3372 = vmatprep.mubr.bf16.mxu0 0
      %3373 = vmatmul.mubr.bf16.gmra.mrb[0].mxu0 %v3235
      %v3374 = vpop.f32.mrb[0].mxu0
      %v3375 = vadd.f32 0.0, %v3374
      %v3376 = vpop.f32.mrb[0].mxu0
      %v3377 = vpop.f32.mrb[0].mxu0
      %v3378 = vadd.f32 0.0, %v3377
      %v3379 = vpop.f32.mrb[0].mxu0
      %3380 = vmatprep.mubr.bf16.mxu0 0
      %3381 = vmatmul.mubr.bf16.gmra.mrb[0].mxu0 %v3238
      %v3382 = vpop.f32.mrb[0].mxu0
      %v3383 = vadd.f32 0.0, %v3382
      %v3384 = vpop.f32.mrb[0].mxu0
      %v3385 = vpop.f32.mrb[0].mxu0
      %v3386 = vadd.f32 0.0, %v3385
      %v3387 = vpop.f32.mrb[0].mxu0
      %3388 = vmatprep.mubr.bf16.mxu0 0
      %3389 = vmatmul.mubr.bf16.gmra.mrb[0].mxu0 %v3241
      %v3390 = vpop.f32.mrb[0].mxu0
      %v3391 = vadd.f32 0.0, %v3390
      %v3392 = vpop.f32.mrb[0].mxu0
      %v3393 = vpop.f32.mrb[0].mxu0
      %v3394 = vadd.f32 0.0, %v3393
      %v3395 = vpop.f32.mrb[0].mxu0
      %3396 = vmatprep.mubr.bf16.mxu0 0
      %3397 = vmatmul.mubr.bf16.gmra.mrb[0].mxu0 %v3244
      %v3398 = vpop.f32.mrb[0].mxu0
      %v3399 = vadd.f32 0.0, %v3398
      %v3400 = vpop.f32.mrb[0].mxu0
      %v3401 = vpop.f32.mrb[0].mxu0
      %v3402 = vadd.f32 0.0, %v3401
      %v3403 = vpop.f32.mrb[0].mxu0
      %3404 = vmatprep.mubr.bf16.mxu0 0
      %3405 = vmatmul.mubr.bf16.gmra.mrb[0].mxu0 %v3247
      %v3406 = vpop.f32.mrb[0].mxu0
      %v3407 = vadd.f32 0.0, %v3406
      %v3408 = vpop.f32.mrb[0].mxu0
      %v3409 = vpop.f32.mrb[0].mxu0
      %v3410 = vadd.f32 0.0, %v3409
      %v3411 = vpop.f32.mrb[0].mxu0
      %3412 = vdwg.mxu0
      %v3413 = vadd.f32 %v3119, %v3287
      %v3414 = vadd.f32 %v3120, %v3290
      %v3415 = vadd.f32 %v3121, %v3295
      %v3416 = vadd.f32 %v3122, %v3298
      %v3417 = vadd.f32 %v3123, %v3303
      %v3418 = vadd.f32 %v3124, %v3306
      %v3419 = vadd.f32 %v3125, %v3311
      %v3420 = vadd.f32 %v3126, %v3314
      %v3421 = vadd.f32 %v3127, %v3319
      %v3422 = vadd.f32 %v3128, %v3322
      %v3423 = vadd.f32 %v3129, %v3327
      %v3424 = vadd.f32 %v3130, %v3330
      %v3425 = vadd.f32 %v3131, %v3335
      %v3426 = vadd.f32 %v3132, %v3338
      %v3427 = vadd.f32 %v3133, %v3343
      %v3428 = vadd.f32 %v3134, %v3346
      %v3429 = vadd.f32 %v3135, %v3351
      %v3430 = vadd.f32 %v3136, %v3354
      %v3431 = vadd.f32 %v3137, %v3359
      %v3432 = vadd.f32 %v3138, %v3362
      %v3433 = vadd.f32 %v3139, %v3367
      %v3434 = vadd.f32 %v3140, %v3370
      %v3435 = vadd.f32 %v3141, %v3375
      %v3436 = vadd.f32 %v3142, %v3378
      %v3437 = vadd.f32 %v3143, %v3383
      %v3438 = vadd.f32 %v3144, %v3386
      %v3439 = vadd.f32 %v3145, %v3391
      %v3440 = vadd.f32 %v3146, %v3394
      %v3441 = vadd.f32 %v3147, %v3399
      %v3442 = vadd.f32 %v3148, %v3402
      %v3443 = vadd.f32 %v3149, %v3407
      %v3444 = vadd.f32 %v3150, %v3410
      %v3445 = vld [vmem:[#allocation2 + $0x29] sm:$0xff]
      %v3446 = vld [vmem:[#allocation2 + $0x31] sm:$0xff]
      %v3447 = vld [vmem:[#allocation2 + $0x39] sm:$0xff]
      %v3448 = vld [vmem:[#allocation2 + $0x41] sm:$0xff]
      %v3449 = vld [vmem:[#allocation2 + $0x49] sm:$0xff]
      %v3450 = vld [vmem:[#allocation2 + $0x51] sm:$0xff]
      %v3451 = vld [vmem:[#allocation2 + $0x59] sm:$0xff]
      %v3452 = vld [vmem:[#allocation2 + $0x61] sm:$0xff]
      %v3453 = vld [vmem:[#allocation2 + $0x69] sm:$0xff]
      %v3454 = vld [vmem:[#allocation2 + $0x71] sm:$0xff]
      %v3455 = vld [vmem:[#allocation2 + $0x79] sm:$0xff]
      %v3456 = vld [vmem:[#allocation2 + $0x81] sm:$0xff]
      %v3457 = vld [vmem:[#allocation2 + $0x89] sm:$0xff]
      %v3458 = vld [vmem:[#allocation2 + $0x91] sm:$0xff]
      %v3459 = vld [vmem:[#allocation2 + $0x99] sm:$0xff]
      %v3460 = vld [vmem:[#allocation2 + $0xa1] sm:$0xff]
      %v3461 = vld [vmem:[#allocation2 + $0xa9] sm:$0xff]
      %v3462 = vld [vmem:[#allocation2 + $0xb1] sm:$0xff]
      %v3463 = vld [vmem:[#allocation2 + $0xb9] sm:$0xff]
      %v3464 = vld [vmem:[#allocation2 + $0xc1] sm:$0xff]
      %v3465 = vld [vmem:[#allocation2 + $0xc9] sm:$0xff]
      %v3466 = vld [vmem:[#allocation2 + $0xd1] sm:$0xff]
      %v3467 = vld [vmem:[#allocation2 + $0xd9] sm:$0xff]
      %v3468 = vld [vmem:[#allocation2 + $0xe1] sm:$0xff]
      %v3469 = vld [vmem:[#allocation2 + $0xe9] sm:$0xff]
      %v3470 = vld [vmem:[#allocation2 + $0xf1] sm:$0xff]
      %v3471 = vld [vmem:[#allocation2 + $0xf9] sm:$0xff]
      %v3472 = vld [vmem:[#allocation2 + $0x101] sm:$0xff]
      %v3473 = vld [vmem:[#allocation2 + $0x109] sm:$0xff]
      %v3474 = vld [vmem:[#allocation2 + $0x111] sm:$0xff]
      %v3475 = vld [vmem:[#allocation2 + $0x119] sm:$0xff]
      %v3476 = vld [vmem:[#allocation2 + $0x121] sm:$0xff]
      %v3477 = vsel %vm962, %v3445, 0.0
      %v3478 = vsel %vm963, %v3446, 0.0
      %v3479 = vsel %vm964, %v3447, 0.0
      %v3480 = vsel %vm965, %v3448, 0.0
      %v3481 = vsel %vm966, %v3449, 0.0
      %v3482 = vsel %vm967, %v3450, 0.0
      %v3483 = vsel %vm968, %v3451, 0.0
      %v3484 = vsel %vm969, %v3452, 0.0
      %v3485 = vsel %vm970, %v3453, 0.0
      %v3486 = vsel %vm971, %v3454, 0.0
      %v3487 = vsel %vm972, %v3455, 0.0
      %v3488 = vsel %vm973, %v3456, 0.0
      %v3489 = vsel %vm974, %v3457, 0.0
      %v3490 = vsel %vm975, %v3458, 0.0
      %v3491 = vsel %vm976, %v3459, 0.0
      %v3492 = vsel %vm977, %v3460, 0.0
      %v3493 = vsel %vm978, %v3461, 0.0
      %v3494 = vsel %vm979, %v3462, 0.0
      %v3495 = vsel %vm980, %v3463, 0.0
      %v3496 = vsel %vm981, %v3464, 0.0
      %v3497 = vsel %vm982, %v3465, 0.0
      %v3498 = vsel %vm983, %v3466, 0.0
      %v3499 = vsel %vm984, %v3467, 0.0
      %v3500 = vsel %vm985, %v3468, 0.0
      %v3501 = vsel %vm986, %v3469, 0.0
      %v3502 = vsel %vm987, %v3470, 0.0
      %v3503 = vsel %vm988, %v3471, 0.0
      %v3504 = vsel %vm989, %v3472, 0.0
      %v3505 = vsel %vm990, %v3473, 0.0
      %v3506 = vsel %vm991, %v3474, 0.0
      %v3507 = vsel %vm992, %v3475, 0.0
      %v3508 = vsel %vm993, %v3476, 0.0
      %v3509 = vpack.c.bf16 %v3478, %v3477
      %v3510 = vpack.c.bf16 %v3480, %v3479
      %v3511 = vpack.c.bf16 %v3482, %v3481
      %v3512 = vpack.c.bf16 %v3484, %v3483
      %v3513 = vpack.c.bf16 %v3486, %v3485
      %v3514 = vpack.c.bf16 %v3488, %v3487
      %v3515 = vpack.c.bf16 %v3490, %v3489
      %v3516 = vpack.c.bf16 %v3492, %v3491
      %v3517 = vpack.c.bf16 %v3494, %v3493
      %v3518 = vpack.c.bf16 %v3496, %v3495
      %v3519 = vpack.c.bf16 %v3498, %v3497
      %v3520 = vpack.c.bf16 %v3500, %v3499
      %v3521 = vpack.c.bf16 %v3502, %v3501
      %v3522 = vpack.c.bf16 %v3504, %v3503
      %v3523 = vpack.c.bf16 %v3506, %v3505
      %v3524 = vpack.c.bf16 %v3508, %v3507
      %s3525 = scalar_lea.vmem %s1, 16
      %v3526 = vld [vmem:[%s3525] sm:$0x3]
      %v3528 = vsel %vm474, %v3509, 0
      %v3531 = vsel %vm474, %v3510, 0
      %v3534 = vsel %vm474, %v3511, 0
      %v3537 = vsel %vm474, %v3512, 0
      %v3540 = vsel %vm474, %v3513, 0
      %v3543 = vsel %vm474, %v3514, 0
      %v3546 = vsel %vm474, %v3515, 0
      %v3549 = vsel %vm474, %v3516, 0
      %v3552 = vsel %vm474, %v3517, 0
      %v3555 = vsel %vm474, %v3518, 0
      %v3558 = vsel %vm474, %v3519, 0
      %v3561 = vsel %vm474, %v3520, 0
      %v3564 = vsel %vm474, %v3521, 0
      %v3567 = vsel %vm474, %v3522, 0
      %v3570 = vsel %vm474, %v3523, 0
      %v3573 = vsel %vm474, %v3524, 0
      %v3576 = vand.u32 %v3526, %v1176
      %3578 = vmatprep.subr.bf16.mxu0 0
      %3579 = vmatpush1.bf16.msra.mxu0 %v3576
      %3580 = vmatprep.subr.bf16.mxu0 0
      %3581 = vmatpush1.bf16.msra.mxu0 0
      %3582 = vmatprep.subr.bf16.mxu0 0
      %3583 = vmatpush1.bf16.msra.mxu0 0
      %3584 = vmatprep.subr.bf16.mxu0 0
      %3585 = vmatpush1.bf16.msra.mxu0 0
      %3586 = vmatprep.subr.bf16.mxu0 0
      %3587 = vmatpush1.bf16.msra.mxu0 0
      %3588 = vmatprep.subr.bf16.mxu0 0
      %3589 = vmatpush1.bf16.msra.mxu0 0
      %3590 = vmatprep.subr.bf16.mxu0 0
      %3591 = vmatpush1.bf16.msra.mxu0 0
      %3592 = vmatprep.subr.bf16.mxu0 0
      %3593 = vmatpush1.bf16.msra.mxu0 0
      %3594 = vmatprep.subr.bf16.mxu0 0
      %3595 = vmatpush1.bf16.msra.mxu0 0
      %3596 = vmatprep.subr.bf16.mxu0 0
      %3597 = vmatpush1.bf16.msra.mxu0 0
      %3598 = vmatprep.subr.bf16.mxu0 0
      %3599 = vmatpush1.bf16.msra.mxu0 0
      %3600 = vmatprep.subr.bf16.mxu0 0
      %3601 = vmatpush1.bf16.msra.mxu0 0
      %3602 = vmatprep.subr.bf16.mxu0 0
      %3603 = vmatpush1.bf16.msra.mxu0 0
      %3604 = vmatprep.subr.bf16.mxu0 0
      %3605 = vmatpush1.bf16.msra.mxu0 0
      %3606 = vmatprep.subr.bf16.mxu0 0
      %3607 = vmatpush1.bf16.msra.mxu0 0
      %3608 = vmatprep.subr.bf16.mxu0 0
      %3609 = vmatpush1.bf16.msra.mxu0 0
      %3610 = vmatprep.mubr.bf16.mxu0 0
      %3611 = vmatmul.mubr.bf16.gmra.mrb[0].mxu0 %v3528
      %v3612 = vpop.f32.mrb[0].mxu0
      %v3613 = vadd.f32 0.0, %v3612
      %v3614 = vpop.f32.mrb[0].mxu0
      %v3615 = vpop.f32.mrb[0].mxu0
      %v3616 = vadd.f32 0.0, %v3615
      %v3617 = vpop.f32.mrb[0].mxu0
      %3618 = vmatprep.mubr.bf16.mxu0 0
      %3619 = vmatmul.mubr.bf16.gmra.mrb[0].mxu0 %v3531
      %v3620 = vpop.f32.mrb[0].mxu0
      %v3621 = vadd.f32 0.0, %v3620
      %v3622 = vpop.f32.mrb[0].mxu0
      %v3623 = vpop.f32.mrb[0].mxu0
      %v3624 = vadd.f32 0.0, %v3623
      %v3625 = vpop.f32.mrb[0].mxu0
      %3626 = vmatprep.mubr.bf16.mxu0 0
      %3627 = vmatmul.mubr.bf16.gmra.mrb[0].mxu0 %v3534
      %v3628 = vpop.f32.mrb[0].mxu0
      %v3629 = vadd.f32 0.0, %v3628
      %v3630 = vpop.f32.mrb[0].mxu0
      %v3631 = vpop.f32.mrb[0].mxu0
      %v3632 = vadd.f32 0.0, %v3631
      %v3633 = vpop.f32.mrb[0].mxu0
      %3634 = vmatprep.mubr.bf16.mxu0 0
      %3635 = vmatmul.mubr.bf16.gmra.mrb[0].mxu0 %v3537
      %v3636 = vpop.f32.mrb[0].mxu0
      %v3637 = vadd.f32 0.0, %v3636
      %v3638 = vpop.f32.mrb[0].mxu0
      %v3639 = vpop.f32.mrb[0].mxu0
      %v3640 = vadd.f32 0.0, %v3639
      %v3641 = vpop.f32.mrb[0].mxu0
      %3642 = vmatprep.mubr.bf16.mxu0 0
      %3643 = vmatmul.mubr.bf16.gmra.mrb[0].mxu0 %v3540
      %v3644 = vpop.f32.mrb[0].mxu0
      %v3645 = vadd.f32 0.0, %v3644
      %v3646 = vpop.f32.mrb[0].mxu0
      %v3647 = vpop.f32.mrb[0].mxu0
      %v3648 = vadd.f32 0.0, %v3647
      %v3649 = vpop.f32.mrb[0].mxu0
      %3650 = vmatprep.mubr.bf16.mxu0 0
      %3651 = vmatmul.mubr.bf16.gmra.mrb[0].mxu0 %v3543
      %v3652 = vpop.f32.mrb[0].mxu0
      %v3653 = vadd.f32 0.0, %v3652
      %v3654 = vpop.f32.mrb[0].mxu0
      %v3655 = vpop.f32.mrb[0].mxu0
      %v3656 = vadd.f32 0.0, %v3655
      %v3657 = vpop.f32.mrb[0].mxu0
      %3658 = vmatprep.mubr.bf16.mxu0 0
      %3659 = vmatmul.mubr.bf16.gmra.mrb[0].mxu0 %v3546
      %v3660 = vpop.f32.mrb[0].mxu0
      %v3661 = vadd.f32 0.0, %v3660
      %v3662 = vpop.f32.mrb[0].mxu0
      %v3663 = vpop.f32.mrb[0].mxu0
      %v3664 = vadd.f32 0.0, %v3663
      %v3665 = vpop.f32.mrb[0].mxu0
      %3666 = vmatprep.mubr.bf16.mxu0 0
      %3667 = vmatmul.mubr.bf16.gmra.mrb[0].mxu0 %v3549
      %v3668 = vpop.f32.mrb[0].mxu0
      %v3669 = vadd.f32 0.0, %v3668
      %v3670 = vpop.f32.mrb[0].mxu0
      %v3671 = vpop.f32.mrb[0].mxu0
      %v3672 = vadd.f32 0.0, %v3671
      %v3673 = vpop.f32.mrb[0].mxu0
      %3674 = vmatprep.mubr.bf16.mxu0 0
      %3675 = vmatmul.mubr.bf16.gmra.mrb[0].mxu0 %v3552
      %v3676 = vpop.f32.mrb[0].mxu0
      %v3677 = vadd.f32 0.0, %v3676
      %v3678 = vpop.f32.mrb[0].mxu0
      %v3679 = vpop.f32.mrb[0].mxu0
      %v3680 = vadd.f32 0.0, %v3679
      %v3681 = vpop.f32.mrb[0].mxu0
      %3682 = vmatprep.mubr.bf16.mxu0 0
      %3683 = vmatmul.mubr.bf16.gmra.mrb[0].mxu0 %v3555
      %v3684 = vpop.f32.mrb[0].mxu0
      %v3685 = vadd.f32 0.0, %v3684
      %v3686 = vpop.f32.mrb[0].mxu0
      %v3687 = vpop.f32.mrb[0].mxu0
      %v3688 = vadd.f32 0.0, %v3687
      %v3689 = vpop.f32.mrb[0].mxu0
      %3690 = vmatprep.mubr.bf16.mxu0 0
      %3691 = vmatmul.mubr.bf16.gmra.mrb[0].mxu0 %v3558
      %v3692 = vpop.f32.mrb[0].mxu0
      %v3693 = vadd.f32 0.0, %v3692
      %v3694 = vpop.f32.mrb[0].mxu0
      %v3695 = vpop.f32.mrb[0].mxu0
      %v3696 = vadd.f32 0.0, %v3695
      %v3697 = vpop.f32.mrb[0].mxu0
      %3698 = vmatprep.mubr.bf16.mxu0 0
      %3699 = vmatmul.mubr.bf16.gmra.mrb[0].mxu0 %v3561
      %v3700 = vpop.f32.mrb[0].mxu0
      %v3701 = vadd.f32 0.0, %v3700
      %v3702 = vpop.f32.mrb[0].mxu0
      %v3703 = vpop.f32.mrb[0].mxu0
      %v3704 = vadd.f32 0.0, %v3703
      %v3705 = vpop.f32.mrb[0].mxu0
      %3706 = vmatprep.mubr.bf16.mxu0 0
      %3707 = vmatmul.mubr.bf16.gmra.mrb[0].mxu0 %v3564
      %v3708 = vpop.f32.mrb[0].mxu0
      %v3709 = vadd.f32 0.0, %v3708
      %v3710 = vpop.f32.mrb[0].mxu0
      %v3711 = vpop.f32.mrb[0].mxu0
      %v3712 = vadd.f32 0.0, %v3711
      %v3713 = vpop.f32.mrb[0].mxu0
      %3714 = vmatprep.mubr.bf16.mxu0 0
      %3715 = vmatmul.mubr.bf16.gmra.mrb[0].mxu0 %v3567
      %v3716 = vpop.f32.mrb[0].mxu0
      %v3717 = vadd.f32 0.0, %v3716
      %v3718 = vpop.f32.mrb[0].mxu0
      %v3719 = vpop.f32.mrb[0].mxu0
      %v3720 = vadd.f32 0.0, %v3719
      %v3721 = vpop.f32.mrb[0].mxu0
      %3722 = vmatprep.mubr.bf16.mxu0 0
      %3723 = vmatmul.mubr.bf16.gmra.mrb[0].mxu0 %v3570
      %v3724 = vpop.f32.mrb[0].mxu0
      %v3725 = vadd.f32 0.0, %v3724
      %v3726 = vpop.f32.mrb[0].mxu0
      %v3727 = vpop.f32.mrb[0].mxu0
      %v3728 = vadd.f32 0.0, %v3727
      %v3729 = vpop.f32.mrb[0].mxu0
      %3730 = vmatprep.mubr.bf16.mxu0 0
      %3731 = vmatmul.mubr.bf16.gmra.mrb[0].mxu0 %v3573
      %v3732 = vpop.f32.mrb[0].mxu0
      %v3733 = vadd.f32 0.0, %v3732
      %v3734 = vpop.f32.mrb[0].mxu0
      %v3735 = vpop.f32.mrb[0].mxu0
      %v3736 = vadd.f32 0.0, %v3735
      %v3737 = vpop.f32.mrb[0].mxu0
      %3738 = vdwg.mxu0
      %v3739 = vadd.f32 %v3413, %v3613
      %v3740 = vadd.f32 %v3414, %v3616
      %v3741 = vadd.f32 %v3415, %v3621
      %v3742 = vadd.f32 %v3416, %v3624
      %v3743 = vadd.f32 %v3417, %v3629
      %v3744 = vadd.f32 %v3418, %v3632
      %v3745 = vadd.f32 %v3419, %v3637
      %v3746 = vadd.f32 %v3420, %v3640
      %v3747 = vadd.f32 %v3421, %v3645
      %v3748 = vadd.f32 %v3422, %v3648
      %v3749 = vadd.f32 %v3423, %v3653
      %v3750 = vadd.f32 %v3424, %v3656
      %v3751 = vadd.f32 %v3425, %v3661
      %v3752 = vadd.f32 %v3426, %v3664
      %v3753 = vadd.f32 %v3427, %v3669
      %v3754 = vadd.f32 %v3428, %v3672
      %v3755 = vadd.f32 %v3429, %v3677
      %v3756 = vadd.f32 %v3430, %v3680
      %v3757 = vadd.f32 %v3431, %v3685
      %v3758 = vadd.f32 %v3432, %v3688
      %v3759 = vadd.f32 %v3433, %v3693
      %v3760 = vadd.f32 %v3434, %v3696
      %v3761 = vadd.f32 %v3435, %v3701
      %v3762 = vadd.f32 %v3436, %v3704
      %v3763 = vadd.f32 %v3437, %v3709
      %v3764 = vadd.f32 %v3438, %v3712
      %v3765 = vadd.f32 %v3439, %v3717
      %v3766 = vadd.f32 %v3440, %v3720
      %v3767 = vadd.f32 %v3441, %v3725
      %v3768 = vadd.f32 %v3442, %v3728
      %v3769 = vadd.f32 %v3443, %v3733
      %v3770 = vadd.f32 %v3444, %v3736
      %v3771 = vld [vmem:[%s2] sm:$0x1]
      %v3773 = vlaneseq
      %v3774 = vshrl.u32 %v3773, 7
      %v3775 = vsub.s32 0, %v3774
      %v3776 = vrot.slane %v3771, %v3775
      %v3778 = vadd.f32 %v3739, %v3776
      %v3779 = vadd.f32 %v3740, %v3776
      %v3780 = vadd.f32 %v3741, %v3776
      %v3781 = vadd.f32 %v3742, %v3776
      %v3782 = vadd.f32 %v3743, %v3776
      %v3783 = vadd.f32 %v3744, %v3776
      %v3784 = vadd.f32 %v3745, %v3776
      %v3785 = vadd.f32 %v3746, %v3776
      %v3786 = vadd.f32 %v3747, %v3776
      %v3787 = vadd.f32 %v3748, %v3776
      %v3788 = vadd.f32 %v3749, %v3776
      %v3789 = vadd.f32 %v3750, %v3776
      %v3790 = vadd.f32 %v3751, %v3776
      %v3791 = vadd.f32 %v3752, %v3776
      %v3792 = vadd.f32 %v3753, %v3776
      %v3793 = vadd.f32 %v3754, %v3776
      %v3794 = vadd.f32 %v3755, %v3776
      %v3795 = vadd.f32 %v3756, %v3776
      %v3796 = vadd.f32 %v3757, %v3776
      %v3797 = vadd.f32 %v3758, %v3776
      %v3798 = vadd.f32 %v3759, %v3776
      %v3799 = vadd.f32 %v3760, %v3776
      %v3800 = vadd.f32 %v3761, %v3776
      %v3801 = vadd.f32 %v3762, %v3776
      %v3802 = vadd.f32 %v3763, %v3776
      %v3803 = vadd.f32 %v3764, %v3776
      %v3804 = vadd.f32 %v3765, %v3776
      %v3805 = vadd.f32 %v3766, %v3776
      %v3806 = vadd.f32 %v3767, %v3776
      %v3807 = vadd.f32 %v3768, %v3776
      %v3808 = vadd.f32 %v3769, %v3776
      %v3809 = vadd.f32 %v3770, %v3776
      %v3810 = vmax.f32 %v3778, 0.0
      %v3811 = vmax.f32 %v3779, 0.0
      %v3812 = vmax.f32 %v3780, 0.0
      %v3813 = vmax.f32 %v3781, 0.0
      %v3814 = vmax.f32 %v3782, 0.0
      %v3815 = vmax.f32 %v3783, 0.0
      %v3816 = vmax.f32 %v3784, 0.0
      %v3817 = vmax.f32 %v3785, 0.0
      %v3818 = vmax.f32 %v3786, 0.0
      %v3819 = vmax.f32 %v3787, 0.0
      %v3820 = vmax.f32 %v3788, 0.0
      %v3821 = vmax.f32 %v3789, 0.0
      %v3822 = vmax.f32 %v3790, 0.0
      %v3823 = vmax.f32 %v3791, 0.0
      %v3824 = vmax.f32 %v3792, 0.0
      %v3825 = vmax.f32 %v3793, 0.0
      %v3826 = vmax.f32 %v3794, 0.0
      %v3827 = vmax.f32 %v3795, 0.0
      %v3828 = vmax.f32 %v3796, 0.0
      %v3829 = vmax.f32 %v3797, 0.0
      %v3830 = vmax.f32 %v3798, 0.0
      %v3831 = vmax.f32 %v3799, 0.0
      %v3832 = vmax.f32 %v3800, 0.0
      %v3833 = vmax.f32 %v3801, 0.0
      %v3834 = vmax.f32 %v3802, 0.0
      %v3835 = vmax.f32 %v3803, 0.0
      %v3836 = vmax.f32 %v3804, 0.0
      %v3837 = vmax.f32 %v3805, 0.0
      %v3838 = vmax.f32 %v3806, 0.0
      %v3839 = vmax.f32 %v3807, 0.0
      %v3840 = vmax.f32 %v3808, 0.0
      %v3841 = vmax.f32 %v3809, 0.0
      %v3842 = vpack.c.bf16 %v3811, %v3810
      %v3843 = vpack.c.bf16 %v3813, %v3812
      %v3844 = vpack.c.bf16 %v3815, %v3814
      %v3845 = vpack.c.bf16 %v3817, %v3816
      %v3846 = vpack.c.bf16 %v3819, %v3818
      %v3847 = vpack.c.bf16 %v3821, %v3820
      %v3848 = vpack.c.bf16 %v3823, %v3822
      %v3849 = vpack.c.bf16 %v3825, %v3824
      %v3850 = vpack.c.bf16 %v3827, %v3826
      %v3851 = vpack.c.bf16 %v3829, %v3828
      %v3852 = vpack.c.bf16 %v3831, %v3830
      %v3853 = vpack.c.bf16 %v3833, %v3832
      %v3854 = vpack.c.bf16 %v3835, %v3834
      %v3855 = vpack.c.bf16 %v3837, %v3836
      %v3856 = vpack.c.bf16 %v3839, %v3838
      %v3857 = vpack.c.bf16 %v3841, %v3840
      %v3858 = vld [vmem:[%s3] sm:$0xff]
      %v3859 = vld [vmem:[%s3 + $0x8] sm:$0xff]
      %v3860 = vld [vmem:[%s3 + $0x10] sm:$0xff]
      %v3861 = vld [vmem:[%s3 + $0x18] sm:$0xff]
      %v3862 = vld [vmem:[%s3 + $0x20] sm:$0xff]
      %v3863 = vld [vmem:[%s3 + $0x28] sm:$0xff]
      %v3864 = vld [vmem:[%s3 + $0x30] sm:$0xff]
      %v3865 = vld [vmem:[%s3 + $0x38] sm:$0xff]
      %v3874 = vunpack.c.l.b16 %v3858
      %v3875 = vunpack.c.h.b16 %v3858
      %v3876 = vunpack.c.l.b16 %v3859
      %v3877 = vunpack.c.h.b16 %v3859
      %v3878 = vunpack.c.l.b16 %v3860
      %v3879 = vunpack.c.h.b16 %v3860
      %v3880 = vunpack.c.l.b16 %v3861
      %v3881 = vunpack.c.h.b16 %v3861
      %v3882 = vunpack.c.l.b16 %v3862
      %v3883 = vunpack.c.h.b16 %v3862
      %v3884 = vunpack.c.l.b16 %v3863
      %v3885 = vunpack.c.h.b16 %v3863
      %v3886 = vunpack.c.l.b16 %v3864
      %v3887 = vunpack.c.h.b16 %v3864
      %v3888 = vunpack.c.l.b16 %v3865
      %v3889 = vunpack.c.h.b16 %v3865
      %v3890 = vpack.c.b16 %v3876, %v3874
      %v3891 = vpack.c.b16 %v3877, %v3875
      %v3892 = vpack.c.b16 %v3880, %v3878
      %v3893 = vpack.c.b16 %v3881, %v3879
      %v3894 = vpack.c.b16 %v3884, %v3882
      %v3895 = vpack.c.b16 %v3885, %v3883
      %v3896 = vpack.c.b16 %v3888, %v3886
      %v3897 = vpack.c.b16 %v3889, %v3887
      %3906 = vmatprep.subr.bf16.mxu0 0
      %3907 = vmatpush1.bf16.msra.mxu0 %v3842
      %3908 = vmatprep.subr.bf16.mxu0 0
      %3909 = vmatpush1.bf16.msra.mxu0 %v3843
      %3910 = vmatprep.subr.bf16.mxu0 0
      %3911 = vmatpush1.bf16.msra.mxu0 %v3844
      %3912 = vmatprep.subr.bf16.mxu0 0
      %3913 = vmatpush1.bf16.msra.mxu0 %v3845
      %3914 = vmatprep.subr.bf16.mxu0 0
      %3915 = vmatpush1.bf16.msra.mxu0 %v3846
      %3916 = vmatprep.subr.bf16.mxu0 0
      %3917 = vmatpush1.bf16.msra.mxu0 %v3847
      %3918 = vmatprep.subr.bf16.mxu0 0
      %3919 = vmatpush1.bf16.msra.mxu0 %v3848
      %3920 = vmatprep.subr.bf16.mxu0 0
      %3921 = vmatpush1.bf16.msra.mxu0 %v3849
      %3922 = vmatprep.subr.bf16.mxu0 0
      %3923 = vmatpush1.bf16.msra.mxu0 %v3850
      %3924 = vmatprep.subr.bf16.mxu0 0
      %3925 = vmatpush1.bf16.msra.mxu0 %v3851
      %3926 = vmatprep.subr.bf16.mxu0 0
      %3927 = vmatpush1.bf16.msra.mxu0 %v3852
      %3928 = vmatprep.subr.bf16.mxu0 0
      %3929 = vmatpush1.bf16.msra.mxu0 %v3853
      %3930 = vmatprep.subr.bf16.mxu0 0
      %3931 = vmatpush1.bf16.msra.mxu0 %v3854
      %3932 = vmatprep.subr.bf16.mxu0 0
      %3933 = vmatpush1.bf16.msra.mxu0 %v3855
      %3934 = vmatprep.subr.bf16.mxu0 0
      %3935 = vmatpush1.bf16.msra.mxu0 %v3856
      %3936 = vmatprep.subr.bf16.mxu0 0
      %3937 = vmatpush1.bf16.msra.mxu0 %v3857
      %3938 = vmatprep.mubr.bf16.mxu0 %v3891
      %3939 = vmatmul.mubr.bf16.gmra.mrb[0].mxu0 %v3890
      %v3940 = vpop.f32.mrb[0].mxu0
      %v3941 = vadd.f32 0.0, %v3940
      %v3942 = vpop.f32.mrb[0].mxu0
      %v3943 = vpop.f32.mrb[0].mxu0
      %v3944 = vadd.f32 0.0, %v3943
      %v3945 = vpop.f32.mrb[0].mxu0
      %3946 = vmatprep.mubr.bf16.mxu0 %v3893
      %3947 = vmatmul.mubr.bf16.gmra.mrb[0].mxu0 %v3892
      %v3948 = vpop.f32.mrb[0].mxu0
      %v3949 = vadd.f32 0.0, %v3948
      %v3950 = vpop.f32.mrb[0].mxu0
      %v3951 = vpop.f32.mrb[0].mxu0
      %v3952 = vadd.f32 0.0, %v3951
      %v3953 = vpop.f32.mrb[0].mxu0
      %3954 = vmatprep.mubr.bf16.mxu0 %v3895
      %3955 = vmatmul.mubr.bf16.gmra.mrb[0].mxu0 %v3894
      %v3956 = vpop.f32.mrb[0].mxu0
      %v3957 = vadd.f32 0.0, %v3956
      %v3958 = vpop.f32.mrb[0].mxu0
      %v3959 = vpop.f32.mrb[0].mxu0
      %v3960 = vadd.f32 0.0, %v3959
      %v3961 = vpop.f32.mrb[0].mxu0
      %3962 = vmatprep.mubr.bf16.mxu0 %v3897
      %3963 = vmatmul.mubr.bf16.gmra.mrb[0].mxu0 %v3896
      %v3964 = vpop.f32.mrb[0].mxu0
      %v3965 = vadd.f32 0.0, %v3964
      %v3966 = vpop.f32.mrb[0].mxu0
      %v3967 = vpop.f32.mrb[0].mxu0
      %v3968 = vadd.f32 0.0, %v3967
      %v3969 = vpop.f32.mrb[0].mxu0
      %3970 = vdwg.mxu0
      %s3971 = scalar_lea.vmem %s3, 64
      %v3972 = vld [vmem:[%s3971] sm:$0xff]
      %v3973 = vld [vmem:[%s3971 + $0x8] sm:$0xff]
      %v3974 = vld [vmem:[%s3971 + $0x10] sm:$0xff]
      %v3975 = vld [vmem:[%s3971 + $0x18] sm:$0xff]
      %v3976 = vld [vmem:[%s3971 + $0x20] sm:$0xff]
      %v3977 = vld [vmem:[%s3971 + $0x28] sm:$0xff]
      %v3978 = vld [vmem:[%s3971 + $0x30] sm:$0xff]
      %v3979 = vld [vmem:[%s3971 + $0x38] sm:$0xff]
      %v3988 = vunpack.c.l.b16 %v3972
      %v3989 = vunpack.c.h.b16 %v3972
      %v3990 = vunpack.c.l.b16 %v3973
      %v3991 = vunpack.c.h.b16 %v3973
      %v3992 = vunpack.c.l.b16 %v3974
      %v3993 = vunpack.c.h.b16 %v3974
      %v3994 = vunpack.c.l.b16 %v3975
      %v3995 = vunpack.c.h.b16 %v3975
      %v3996 = vunpack.c.l.b16 %v3976
      %v3997 = vunpack.c.h.b16 %v3976
      %v3998 = vunpack.c.l.b16 %v3977
      %v3999 = vunpack.c.h.b16 %v3977
      %v4000 = vunpack.c.l.b16 %v3978
      %v4001 = vunpack.c.h.b16 %v3978
      %v4002 = vunpack.c.l.b16 %v3979
      %v4003 = vunpack.c.h.b16 %v3979
      %v4004 = vpack.c.b16 %v3990, %v3988
      %v4005 = vpack.c.b16 %v3991, %v3989
      %v4006 = vpack.c.b16 %v3994, %v3992
      %v4007 = vpack.c.b16 %v3995, %v3993
      %v4008 = vpack.c.b16 %v3998, %v3996
      %v4009 = vpack.c.b16 %v3999, %v3997
      %v4010 = vpack.c.b16 %v4002, %v4000
      %v4011 = vpack.c.b16 %v4003, %v4001
      %4020 = vmatprep.subr.bf16.mxu0 0
      %4021 = vmatpush1.bf16.msra.mxu0 %v3842
      %4022 = vmatprep.subr.bf16.mxu0 0
      %4023 = vmatpush1.bf16.msra.mxu0 %v3843
      %4024 = vmatprep.subr.bf16.mxu0 0
      %4025 = vmatpush1.bf16.msra.mxu0 %v3844
      %4026 = vmatprep.subr.bf16.mxu0 0
      %4027 = vmatpush1.bf16.msra.mxu0 %v3845
      %4028 = vmatprep.subr.bf16.mxu0 0
      %4029 = vmatpush1.bf16.msra.mxu0 %v3846
      %4030 = vmatprep.subr.bf16.mxu0 0
      %4031 = vmatpush1.bf16.msra.mxu0 %v3847
      %4032 = vmatprep.subr.bf16.mxu0 0
      %4033 = vmatpush1.bf16.msra.mxu0 %v3848
      %4034 = vmatprep.subr.bf16.mxu0 0
      %4035 = vmatpush1.bf16.msra.mxu0 %v3849
      %4036 = vmatprep.subr.bf16.mxu0 0
      %4037 = vmatpush1.bf16.msra.mxu0 %v3850
      %4038 = vmatprep.subr.bf16.mxu0 0
      %4039 = vmatpush1.bf16.msra.mxu0 %v3851
      %4040 = vmatprep.subr.bf16.mxu0 0
      %4041 = vmatpush1.bf16.msra.mxu0 %v3852
      %4042 = vmatprep.subr.bf16.mxu0 0
      %4043 = vmatpush1.bf16.msra.mxu0 %v3853
      %4044 = vmatprep.subr.bf16.mxu0 0
      %4045 = vmatpush1.bf16.msra.mxu0 %v3854
      %4046 = vmatprep.subr.bf16.mxu0 0
      %4047 = vmatpush1.bf16.msra.mxu0 %v3855
      %4048 = vmatprep.subr.bf16.mxu0 0
      %4049 = vmatpush1.bf16.msra.mxu0 %v3856
      %4050 = vmatprep.subr.bf16.mxu0 0
      %4051 = vmatpush1.bf16.msra.mxu0 %v3857
      %4052 = vmatprep.mubr.bf16.mxu0 %v4005
      %4053 = vmatmul.mubr.bf16.gmra.mrb[0].mxu0 %v4004
      %v4054 = vpop.f32.mrb[0].mxu0
      %v4055 = vadd.f32 0.0, %v4054
      %v4056 = vpop.f32.mrb[0].mxu0
      %v4057 = vpop.f32.mrb[0].mxu0
      %v4058 = vadd.f32 0.0, %v4057
      %v4059 = vpop.f32.mrb[0].mxu0
      %4060 = vmatprep.mubr.bf16.mxu0 %v4007
      %4061 = vmatmul.mubr.bf16.gmra.mrb[0].mxu0 %v4006
      %v4062 = vpop.f32.mrb[0].mxu0
      %v4063 = vadd.f32 0.0, %v4062
      %v4064 = vpop.f32.mrb[0].mxu0
      %v4065 = vpop.f32.mrb[0].mxu0
      %v4066 = vadd.f32 0.0, %v4065
      %v4067 = vpop.f32.mrb[0].mxu0
      %4068 = vmatprep.mubr.bf16.mxu0 %v4009
      %4069 = vmatmul.mubr.bf16.gmra.mrb[0].mxu0 %v4008
      %v4070 = vpop.f32.mrb[0].mxu0
      %v4071 = vadd.f32 0.0, %v4070
      %v4072 = vpop.f32.mrb[0].mxu0
      %v4073 = vpop.f32.mrb[0].mxu0
      %v4074 = vadd.f32 0.0, %v4073
      %v4075 = vpop.f32.mrb[0].mxu0
      %4076 = vmatprep.mubr.bf16.mxu0 %v4011
      %4077 = vmatmul.mubr.bf16.gmra.mrb[0].mxu0 %v4010
      %v4078 = vpop.f32.mrb[0].mxu0
      %v4079 = vadd.f32 0.0, %v4078
      %v4080 = vpop.f32.mrb[0].mxu0
      %v4081 = vpop.f32.mrb[0].mxu0
      %v4082 = vadd.f32 0.0, %v4081
      %v4083 = vpop.f32.mrb[0].mxu0
      %4084 = vdwg.mxu0
      %v4085 = vmax.f32 %v3941, %v4055
      %v4086 = vmax.f32 %v3944, %v4058
      %v4087 = vmax.f32 %v3949, %v4063
      %v4088 = vmax.f32 %v3952, %v4066
      %v4089 = vmax.f32 %v3957, %v4071
      %v4090 = vmax.f32 %v3960, %v4074
      %v4091 = vmax.f32 %v3965, %v4079
      %v4092 = vmax.f32 %v3968, %v4082
      %s4093 = scalar_lea.vmem %s3, 128
      %v4094 = vld [vmem:[%s4093] sm:$0xff]
      %v4095 = vld [vmem:[%s4093 + $0x8] sm:$0xff]
      %v4096 = vld [vmem:[%s4093 + $0x10] sm:$0xff]
      %v4097 = vld [vmem:[%s4093 + $0x18] sm:$0xff]
      %v4098 = vld [vmem:[%s4093 + $0x20] sm:$0xff]
      %v4099 = vld [vmem:[%s4093 + $0x28] sm:$0xff]
      %v4100 = vld [vmem:[%s4093 + $0x30] sm:$0xff]
      %v4101 = vld [vmem:[%s4093 + $0x38] sm:$0xff]
      %v4110 = vunpack.c.l.b16 %v4094
      %v4111 = vunpack.c.h.b16 %v4094
      %v4112 = vunpack.c.l.b16 %v4095
      %v4113 = vunpack.c.h.b16 %v4095
      %v4114 = vunpack.c.l.b16 %v4096
      %v4115 = vunpack.c.h.b16 %v4096
      %v4116 = vunpack.c.l.b16 %v4097
      %v4117 = vunpack.c.h.b16 %v4097
      %v4118 = vunpack.c.l.b16 %v4098
      %v4119 = vunpack.c.h.b16 %v4098
      %v4120 = vunpack.c.l.b16 %v4099
      %v4121 = vunpack.c.h.b16 %v4099
      %v4122 = vunpack.c.l.b16 %v4100
      %v4123 = vunpack.c.h.b16 %v4100
      %v4124 = vunpack.c.l.b16 %v4101
      %v4125 = vunpack.c.h.b16 %v4101
      %v4126 = vpack.c.b16 %v4112, %v4110
      %v4127 = vpack.c.b16 %v4113, %v4111
      %v4128 = vpack.c.b16 %v4116, %v4114
      %v4129 = vpack.c.b16 %v4117, %v4115
      %v4130 = vpack.c.b16 %v4120, %v4118
      %v4131 = vpack.c.b16 %v4121, %v4119
      %v4132 = vpack.c.b16 %v4124, %v4122
      %v4133 = vpack.c.b16 %v4125, %v4123
      %4142 = vmatprep.subr.bf16.mxu0 0
      %4143 = vmatpush1.bf16.msra.mxu0 %v3842
      %4144 = vmatprep.subr.bf16.mxu0 0
      %4145 = vmatpush1.bf16.msra.mxu0 %v3843
      %4146 = vmatprep.subr.bf16.mxu0 0
      %4147 = vmatpush1.bf16.msra.mxu0 %v3844
      %4148 = vmatprep.subr.bf16.mxu0 0
      %4149 = vmatpush1.bf16.msra.mxu0 %v3845
      %4150 = vmatprep.subr.bf16.mxu0 0
      %4151 = vmatpush1.bf16.msra.mxu0 %v3846
      %4152 = vmatprep.subr.bf16.mxu0 0
      %4153 = vmatpush1.bf16.msra.mxu0 %v3847
      %4154 = vmatprep.subr.bf16.mxu0 0
      %4155 = vmatpush1.bf16.msra.mxu0 %v3848
      %4156 = vmatprep.subr.bf16.mxu0 0
      %4157 = vmatpush1.bf16.msra.mxu0 %v3849
      %4158 = vmatprep.subr.bf16.mxu0 0
      %4159 = vmatpush1.bf16.msra.mxu0 %v3850
      %4160 = vmatprep.subr.bf16.mxu0 0
      %4161 = vmatpush1.bf16.msra.mxu0 %v3851
      %4162 = vmatprep.subr.bf16.mxu0 0
      %4163 = vmatpush1.bf16.msra.mxu0 %v3852
      %4164 = vmatprep.subr.bf16.mxu0 0
      %4165 = vmatpush1.bf16.msra.mxu0 %v3853
      %4166 = vmatprep.subr.bf16.mxu0 0
      %4167 = vmatpush1.bf16.msra.mxu0 %v3854
      %4168 = vmatprep.subr.bf16.mxu0 0
      %4169 = vmatpush1.bf16.msra.mxu0 %v3855
      %4170 = vmatprep.subr.bf16.mxu0 0
      %4171 = vmatpush1.bf16.msra.mxu0 %v3856
      %4172 = vmatprep.subr.bf16.mxu0 0
      %4173 = vmatpush1.bf16.msra.mxu0 %v3857
      %4174 = vmatprep.mubr.bf16.mxu0 %v4127
      %4175 = vmatmul.mubr.bf16.gmra.mrb[0].mxu0 %v4126
      %v4176 = vpop.f32.mrb[0].mxu0
      %v4177 = vadd.f32 0.0, %v4176
      %v4178 = vpop.f32.mrb[0].mxu0
      %v4179 = vpop.f32.mrb[0].mxu0
      %v4180 = vadd.f32 0.0, %v4179
      %v4181 = vpop.f32.mrb[0].mxu0
      %4182 = vmatprep.mubr.bf16.mxu0 %v4129
      %4183 = vmatmul.mubr.bf16.gmra.mrb[0].mxu0 %v4128
      %v4184 = vpop.f32.mrb[0].mxu0
      %v4185 = vadd.f32 0.0, %v4184
      %v4186 = vpop.f32.mrb[0].mxu0
      %v4187 = vpop.f32.mrb[0].mxu0
      %v4188 = vadd.f32 0.0, %v4187
      %v4189 = vpop.f32.mrb[0].mxu0
      %4190 = vmatprep.mubr.bf16.mxu0 %v4131
      %4191 = vmatmul.mubr.bf16.gmra.mrb[0].mxu0 %v4130
      %v4192 = vpop.f32.mrb[0].mxu0
      %v4193 = vadd.f32 0.0, %v4192
      %v4194 = vpop.f32.mrb[0].mxu0
      %v4195 = vpop.f32.mrb[0].mxu0
      %v4196 = vadd.f32 0.0, %v4195
      %v4197 = vpop.f32.mrb[0].mxu0
      %4198 = vmatprep.mubr.bf16.mxu0 %v4133
      %4199 = vmatmul.mubr.bf16.gmra.mrb[0].mxu0 %v4132
      %v4200 = vpop.f32.mrb[0].mxu0
      %v4201 = vadd.f32 0.0, %v4200
      %v4202 = vpop.f32.mrb[0].mxu0
      %v4203 = vpop.f32.mrb[0].mxu0
      %v4204 = vadd.f32 0.0, %v4203
      %v4205 = vpop.f32.mrb[0].mxu0
      %4206 = vdwg.mxu0
      %v4207 = vmax.f32 %v4085, %v4177
      %v4208 = vmax.f32 %v4086, %v4180
      %v4209 = vmax.f32 %v4087, %v4185
      %v4210 = vmax.f32 %v4088, %v4188
      %v4211 = vmax.f32 %v4089, %v4193
      %v4212 = vmax.f32 %v4090, %v4196
      %v4213 = vmax.f32 %v4091, %v4201
      %v4214 = vmax.f32 %v4092, %v4204
      %s4215 = scalar_lea.vmem %s3, 192
      %v4216 = vld [vmem:[%s4215] sm:$0xff]
      %v4217 = vld [vmem:[%s4215 + $0x8] sm:$0xff]
      %v4218 = vld [vmem:[%s4215 + $0x10] sm:$0xff]
      %v4219 = vld [vmem:[%s4215 + $0x18] sm:$0xff]
      %v4220 = vld [vmem:[%s4215 + $0x20] sm:$0xff]
      %v4221 = vld [vmem:[%s4215 + $0x28] sm:$0xff]
      %v4222 = vld [vmem:[%s4215 + $0x30] sm:$0xff]
      %v4223 = vld [vmem:[%s4215 + $0x38] sm:$0xff]
      %v4232 = vunpack.c.l.b16 %v4216
      %v4233 = vunpack.c.h.b16 %v4216
      %v4234 = vunpack.c.l.b16 %v4217
      %v4235 = vunpack.c.h.b16 %v4217
      %v4236 = vunpack.c.l.b16 %v4218
      %v4237 = vunpack.c.h.b16 %v4218
      %v4238 = vunpack.c.l.b16 %v4219
      %v4239 = vunpack.c.h.b16 %v4219
      %v4240 = vunpack.c.l.b16 %v4220
      %v4241 = vunpack.c.h.b16 %v4220
      %v4242 = vunpack.c.l.b16 %v4221
      %v4243 = vunpack.c.h.b16 %v4221
      %v4244 = vunpack.c.l.b16 %v4222
      %v4245 = vunpack.c.h.b16 %v4222
      %v4246 = vunpack.c.l.b16 %v4223
      %v4247 = vunpack.c.h.b16 %v4223
      %v4248 = vpack.c.b16 %v4234, %v4232
      %v4249 = vpack.c.b16 %v4235, %v4233
      %v4250 = vpack.c.b16 %v4238, %v4236
      %v4251 = vpack.c.b16 %v4239, %v4237
      %v4252 = vpack.c.b16 %v4242, %v4240
      %v4253 = vpack.c.b16 %v4243, %v4241
      %v4254 = vpack.c.b16 %v4246, %v4244
      %v4255 = vpack.c.b16 %v4247, %v4245
      %4264 = vmatprep.subr.bf16.mxu0 0
      %4265 = vmatpush1.bf16.msra.mxu0 %v3842
      %4266 = vmatprep.subr.bf16.mxu0 0
      %4267 = vmatpush1.bf16.msra.mxu0 %v3843
      %4268 = vmatprep.subr.bf16.mxu0 0
      %4269 = vmatpush1.bf16.msra.mxu0 %v3844
      %4270 = vmatprep.subr.bf16.mxu0 0
      %4271 = vmatpush1.bf16.msra.mxu0 %v3845
      %4272 = vmatprep.subr.bf16.mxu0 0
      %4273 = vmatpush1.bf16.msra.mxu0 %v3846
      %4274 = vmatprep.subr.bf16.mxu0 0
      %4275 = vmatpush1.bf16.msra.mxu0 %v3847
      %4276 = vmatprep.subr.bf16.mxu0 0
      %4277 = vmatpush1.bf16.msra.mxu0 %v3848
      %4278 = vmatprep.subr.bf16.mxu0 0
      %4279 = vmatpush1.bf16.msra.mxu0 %v3849
      %4280 = vmatprep.subr.bf16.mxu0 0
      %4281 = vmatpush1.bf16.msra.mxu0 %v3850
      %4282 = vmatprep.subr.bf16.mxu0 0
      %4283 = vmatpush1.bf16.msra.mxu0 %v3851
      %4284 = vmatprep.subr.bf16.mxu0 0
      %4285 = vmatpush1.bf16.msra.mxu0 %v3852
      %4286 = vmatprep.subr.bf16.mxu0 0
      %4287 = vmatpush1.bf16.msra.mxu0 %v3853
      %4288 = vmatprep.subr.bf16.mxu0 0
      %4289 = vmatpush1.bf16.msra.mxu0 %v3854
      %4290 = vmatprep.subr.bf16.mxu0 0
      %4291 = vmatpush1.bf16.msra.mxu0 %v3855
      %4292 = vmatprep.subr.bf16.mxu0 0
      %4293 = vmatpush1.bf16.msra.mxu0 %v3856
      %4294 = vmatprep.subr.bf16.mxu0 0
      %4295 = vmatpush1.bf16.msra.mxu0 %v3857
      %4296 = vmatprep.mubr.bf16.mxu0 %v4249
      %4297 = vmatmul.mubr.bf16.gmra.mrb[0].mxu0 %v4248
      %v4298 = vpop.f32.mrb[0].mxu0
      %v4299 = vadd.f32 0.0, %v4298
      %v4300 = vpop.f32.mrb[0].mxu0
      %v4301 = vpop.f32.mrb[0].mxu0
      %v4302 = vadd.f32 0.0, %v4301
      %v4303 = vpop.f32.mrb[0].mxu0
      %4304 = vmatprep.mubr.bf16.mxu0 %v4251
      %4305 = vmatmul.mubr.bf16.gmra.mrb[0].mxu0 %v4250
      %v4306 = vpop.f32.mrb[0].mxu0
      %v4307 = vadd.f32 0.0, %v4306
      %v4308 = vpop.f32.mrb[0].mxu0
      %v4309 = vpop.f32.mrb[0].mxu0
      %v4310 = vadd.f32 0.0, %v4309
      %v4311 = vpop.f32.mrb[0].mxu0
      %4312 = vmatprep.mubr.bf16.mxu0 %v4253
      %4313 = vmatmul.mubr.bf16.gmra.mrb[0].mxu0 %v4252
      %v4314 = vpop.f32.mrb[0].mxu0
      %v4315 = vadd.f32 0.0, %v4314
      %v4316 = vpop.f32.mrb[0].mxu0
      %v4317 = vpop.f32.mrb[0].mxu0
      %v4318 = vadd.f32 0.0, %v4317
      %v4319 = vpop.f32.mrb[0].mxu0
      %4320 = vmatprep.mubr.bf16.mxu0 %v4255
      %4321 = vmatmul.mubr.bf16.gmra.mrb[0].mxu0 %v4254
      %v4322 = vpop.f32.mrb[0].mxu0
      %v4323 = vadd.f32 0.0, %v4322
      %v4324 = vpop.f32.mrb[0].mxu0
      %v4325 = vpop.f32.mrb[0].mxu0
      %v4326 = vadd.f32 0.0, %v4325
      %v4327 = vpop.f32.mrb[0].mxu0
      %4328 = vdwg.mxu0
      %v4329 = vmax.f32 %v4207, %v4299
      %v4330 = vmax.f32 %v4208, %v4302
      %v4331 = vmax.f32 %v4209, %v4307
      %v4332 = vmax.f32 %v4210, %v4310
      %v4333 = vmax.f32 %v4211, %v4315
      %v4334 = vmax.f32 %v4212, %v4318
      %v4335 = vmax.f32 %v4213, %v4323
      %v4336 = vmax.f32 %v4214, %v4326
      %vm4337 = vcmask 64512
      %4338 = vst.msk [vmem:[#allocation3] sm:$0xff] %vm4337, 0.0
      %4339 = vst.msk [vmem:[#allocation3 + $0x8] sm:$0xff] %vm4337, 0.0
      %4340 = vst.msk [vmem:[#allocation3 + $0x50] sm:$0xff] %vm4337, 0.0
      %4341 = vst.msk [vmem:[#allocation3 + $0x58] sm:$0xff] %vm4337, 0.0
      %4342 = vst.msk [vmem:[#allocation3 + $0x10] sm:$0xff] %vm4337, %v4329
      %4343 = vst.msk [vmem:[#allocation3 + $0x18] sm:$0xff] %vm4337, %v4330
      %4344 = vst.msk [vmem:[#allocation3 + $0x20] sm:$0xff] %vm4337, %v4331
      %4345 = vst.msk [vmem:[#allocation3 + $0x28] sm:$0xff] %vm4337, %v4332
      %4346 = vst.msk [vmem:[#allocation3 + $0x30] sm:$0xff] %vm4337, %v4333
      %4347 = vst.msk [vmem:[#allocation3 + $0x38] sm:$0xff] %vm4337, %v4334
      %4348 = vst.msk [vmem:[#allocation3 + $0x40] sm:$0xff] %vm4337, %v4335
      %4349 = vst.msk [vmem:[#allocation3 + $0x48] sm:$0xff] %vm4337, %v4336
      %vm4350 = vcmp.lt.s32.totalorder %v514, 0
      %v4351 = vsub.s32 0, %v514
      %v4352 = vsel %vm4350, %v4351, %v514
      %v4353 = vshrl.u32 %v4352, 3
      %v4354 = vand.u32 %v4352, 7
      %v4355 = vsub.s32 0, %v4354
      %v4356 = vsel %vm4350, %v4355, %v4354
      %vm4357 = vcmp.lt.s32.totalorder %v515, 0
      %v4358 = vsub.s32 0, %v515
      %v4359 = vsel %vm4357, %v4358, %v515
      %v4360 = vshrl.u32 %v4359, 3
      %v4361 = vand.u32 %v4359, 7
      %v4362 = vsub.s32 0, %v4361
      %v4363 = vsel %vm4357, %v4362, %v4361
      %vm4364 = vcmp.lt.s32.totalorder %v516, 0
      %v4365 = vsub.s32 0, %v516
      %v4366 = vsel %vm4364, %v4365, %v516
      %v4367 = vshrl.u32 %v4366, 3
      %v4368 = vand.u32 %v4366, 7
      %v4369 = vsub.s32 0, %v4368
      %v4370 = vsel %vm4364, %v4369, %v4368
      %vm4371 = vcmp.lt.s32.totalorder %v517, 0
      %v4372 = vsub.s32 0, %v517
      %v4373 = vsel %vm4371, %v4372, %v517
      %v4374 = vshrl.u32 %v4373, 3
      %v4375 = vand.u32 %v4373, 7
      %v4376 = vsub.s32 0, %v4375
      %v4377 = vsel %vm4371, %v4376, %v4375
      %vm4378 = vcmp.lt.s32.totalorder %v518, 0
      %v4379 = vsub.s32 0, %v518
      %v4380 = vsel %vm4378, %v4379, %v518
      %v4381 = vshrl.u32 %v4380, 3
      %v4382 = vand.u32 %v4380, 7
      %v4383 = vsub.s32 0, %v4382
      %v4384 = vsel %vm4378, %v4383, %v4382
      %vm4385 = vcmp.lt.s32.totalorder %v519, 0
      %v4386 = vsub.s32 0, %v519
      %v4387 = vsel %vm4385, %v4386, %v519
      %v4388 = vshrl.u32 %v4387, 3
      %v4389 = vand.u32 %v4387, 7
      %v4390 = vsub.s32 0, %v4389
      %v4391 = vsel %vm4385, %v4390, %v4389
      %vm4392 = vcmp.lt.s32.totalorder %v520, 0
      %v4393 = vsub.s32 0, %v520
      %v4394 = vsel %vm4392, %v4393, %v520
      %v4395 = vshrl.u32 %v4394, 3
      %v4396 = vand.u32 %v4394, 7
      %v4397 = vsub.s32 0, %v4396
      %v4398 = vsel %vm4392, %v4397, %v4396
      %vm4399 = vcmp.lt.s32.totalorder %v521, 0
      %v4400 = vsub.s32 0, %v521
      %v4401 = vsel %vm4399, %v4400, %v521
      %v4402 = vshrl.u32 %v4401, 3
      %v4403 = vand.u32 %v4401, 7
      %v4404 = vsub.s32 0, %v4403
      %v4405 = vsel %vm4399, %v4404, %v4403
      %vm4406 = vcmp.ne.s32.totalorder %v4356, 0
      %vm4407 = vcmp.ne.s32.totalorder %v4363, 0
      %vm4408 = vcmp.ne.s32.totalorder %v4370, 0
      %vm4409 = vcmp.ne.s32.totalorder %v4377, 0
      %vm4410 = vcmp.ne.s32.totalorder %v4384, 0
      %vm4411 = vcmp.ne.s32.totalorder %v4391, 0
      %vm4412 = vcmp.ne.s32.totalorder %v4398, 0
      %vm4413 = vcmp.ne.s32.totalorder %v4405, 0
      %vm4414 = vcmp.lt.s32.totalorder %v4356, 0
      %vm4415 = vcmp.lt.s32.totalorder %v4363, 0
      %vm4416 = vcmp.lt.s32.totalorder %v4370, 0
      %vm4417 = vcmp.lt.s32.totalorder %v4377, 0
      %vm4418 = vcmp.lt.s32.totalorder %v4384, 0
      %vm4419 = vcmp.lt.s32.totalorder %v4391, 0
      %vm4420 = vcmp.lt.s32.totalorder %v4398, 0
      %vm4421 = vcmp.lt.s32.totalorder %v4405, 0
      %vm4422 = vmand %vm4414, %vm4406
      %vm4423 = vmand %vm4415, %vm4407
      %vm4424 = vmand %vm4416, %vm4408
      %vm4425 = vmand %vm4417, %vm4409
      %vm4426 = vmand %vm4418, %vm4410
      %vm4427 = vmand %vm4419, %vm4411
      %vm4428 = vmand %vm4420, %vm4412
      %vm4429 = vmand %vm4421, %vm4413
      %v4430 = vadd.s32 %v4356, 8
      %v4431 = vadd.s32 %v4363, 8
      %v4432 = vadd.s32 %v4370, 8
      %v4433 = vadd.s32 %v4377, 8
      %v4434 = vadd.s32 %v4384, 8
      %v4435 = vadd.s32 %v4391, 8
      %v4436 = vadd.s32 %v4398, 8
      %v4437 = vadd.s32 %v4405, 8
      %v4438 = vsel %vm4422, %v4430, %v4356
      %v4439 = vsel %vm4423, %v4431, %v4363
      %v4440 = vsel %vm4424, %v4432, %v4370
      %v4441 = vsel %vm4425, %v4433, %v4377
      %v4442 = vsel %vm4426, %v4434, %v4384
      %v4443 = vsel %vm4427, %v4435, %v4391
      %v4444 = vsel %vm4428, %v4436, %v4398
      %v4445 = vsel %vm4429, %v4437, %v4405
      %vm4446 = vcmp.ne.s32.totalorder %v4438, 0
      %vm4447 = vcmp.ne.s32.totalorder %v4439, 0
      %vm4448 = vcmp.ne.s32.totalorder %v4440, 0
      %vm4449 = vcmp.ne.s32.totalorder %v4441, 0
      %vm4450 = vcmp.ne.s32.totalorder %v4442, 0
      %vm4451 = vcmp.ne.s32.totalorder %v4443, 0
      %vm4452 = vcmp.ne.s32.totalorder %v4444, 0
      %vm4453 = vcmp.ne.s32.totalorder %v4445, 0
      %vm4454 = vcmp.ne.s32.totalorder %v4438, 7
      %vm4455 = vcmp.ne.s32.totalorder %v4439, 7
      %vm4456 = vcmp.ne.s32.totalorder %v4440, 7
      %vm4457 = vcmp.ne.s32.totalorder %v4441, 7
      %vm4458 = vcmp.ne.s32.totalorder %v4442, 7
      %vm4459 = vcmp.ne.s32.totalorder %v4443, 7
      %vm4460 = vcmp.ne.s32.totalorder %v4444, 7
      %vm4461 = vcmp.ne.s32.totalorder %v4445, 7
      %v4462 = vld [vmem:[#allocation3 + $0x7] sm:$0xff]
      %v4463 = vld [vmem:[#allocation3 + $0xf] sm:$0xff]
      %v4464 = vld [vmem:[#allocation3 + $0x17] sm:$0xff]
      %v4465 = vld [vmem:[#allocation3 + $0x1f] sm:$0xff]
      %v4466 = vld [vmem:[#allocation3 + $0x27] sm:$0xff]
      %v4467 = vld [vmem:[#allocation3 + $0x2f] sm:$0xff]
      %v4468 = vld [vmem:[#allocation3 + $0x37] sm:$0xff]
      %v4469 = vld [vmem:[#allocation3 + $0x3f] sm:$0xff]
      %v4470 = vsel %vm4446, %v4462, 0.0
      %v4471 = vsel %vm4447, %v4463, 0.0
      %v4472 = vsel %vm4448, %v4464, 0.0
      %v4473 = vsel %vm4449, %v4465, 0.0
      %v4474 = vsel %vm4450, %v4466, 0.0
      %v4475 = vsel %vm4451, %v4467, 0.0
      %v4476 = vsel %vm4452, %v4468, 0.0
      %v4477 = vsel %vm4453, %v4469, 0.0
      %v4478 = vpack.c.bf16 %v4471, %v4470
      %v4479 = vpack.c.bf16 %v4473, %v4472
      %v4480 = vpack.c.bf16 %v4475, %v4474
      %v4481 = vpack.c.bf16 %v4477, %v4476
      %v4482 = vld [vmem:[%s4] sm:$0xf]
      %v4483 = vld [vmem:[#allocation3 + $0x8] sm:$0xff]
      %v4484 = vld [vmem:[#allocation3 + $0x10] sm:$0xff]
      %v4485 = vld [vmem:[#allocation3 + $0x18] sm:$0xff]
      %v4486 = vld [vmem:[#allocation3 + $0x20] sm:$0xff]
      %v4487 = vld [vmem:[#allocation3 + $0x28] sm:$0xff]
      %v4488 = vld [vmem:[#allocation3 + $0x30] sm:$0xff]
      %v4489 = vld [vmem:[#allocation3 + $0x38] sm:$0xff]
      %v4490 = vld [vmem:[#allocation3 + $0x40] sm:$0xff]
      %v4491 = vpack.c.bf16 %v4484, %v4483
      %v4492 = vpack.c.bf16 %v4486, %v4485
      %v4493 = vpack.c.bf16 %v4488, %v4487
      %v4494 = vpack.c.bf16 %v4490, %v4489
      %s4495 = scalar_lea.vmem %s4, 4
      %v4496 = vld [vmem:[%s4495] sm:$0xf]
      %v4498 = vsel %vm4337, %v4491, 0
      %v4501 = vsel %vm4337, %v4492, 0
      %v4504 = vsel %vm4337, %v4493, 0
      %v4507 = vsel %vm4337, %v4494, 0
      %vm4509 = vcmask 1043456
      %v4511 = vsel %vm4509, %v4496, 0
      %4513 = vmatprep.subr.bf16.mxu0 0
      %4514 = vmatpush1.bf16.msra.mxu0 %v4511
      %4515 = vmatprep.subr.bf16.mxu0 0
      %4516 = vmatpush1.bf16.msra.mxu0 0
      %4517 = vmatprep.subr.bf16.mxu0 0
      %4518 = vmatpush1.bf16.msra.mxu0 0
      %4519 = vmatprep.subr.bf16.mxu0 0
      %4520 = vmatpush1.bf16.msra.mxu0 0
      %4521 = vmatprep.subr.bf16.mxu0 0
      %4522 = vmatpush1.bf16.msra.mxu0 0
      %4523 = vmatprep.subr.bf16.mxu0 0
      %4524 = vmatpush1.bf16.msra.mxu0 0
      %4525 = vmatprep.subr.bf16.mxu0 0
      %4526 = vmatpush1.bf16.msra.mxu0 0
      %4527 = vmatprep.subr.bf16.mxu0 0
      %4528 = vmatpush1.bf16.msra.mxu0 0
      %4529 = vmatprep.subr.bf16.mxu0 0
      %4530 = vmatpush1.bf16.msra.mxu0 0
      %4531 = vmatprep.subr.bf16.mxu0 0
      %4532 = vmatpush1.bf16.msra.mxu0 0
      %4533 = vmatprep.subr.bf16.mxu0 0
      %4534 = vmatpush1.bf16.msra.mxu0 0
      %4535 = vmatprep.subr.bf16.mxu0 0
      %4536 = vmatpush1.bf16.msra.mxu0 0
      %4537 = vmatprep.subr.bf16.mxu0 0
      %4538 = vmatpush1.bf16.msra.mxu0 0
      %4539 = vmatprep.subr.bf16.mxu0 0
      %4540 = vmatpush1.bf16.msra.mxu0 0
      %4541 = vmatprep.subr.bf16.mxu0 0
      %4542 = vmatpush1.bf16.msra.mxu0 0
      %4543 = vmatprep.subr.bf16.mxu0 0
      %4544 = vmatpush1.bf16.msra.mxu0 0
      %4545 = vmatprep.mubr.bf16.mxu0 0
      %4546 = vmatmul.mubr.bf16.gmra.mrb[0].mxu0 %v4498
      %v4547 = vpop.f32.mrb[0].mxu0
      %v4548 = vadd.f32 0.0, %v4547
      %v4549 = vpop.f32.mrb[0].mxu0
      %v4550 = vpop.f32.mrb[0].mxu0
      %v4551 = vadd.f32 0.0, %v4550
      %v4552 = vpop.f32.mrb[0].mxu0
      %4553 = vmatprep.mubr.bf16.mxu0 0
      %4554 = vmatmul.mubr.bf16.gmra.mrb[0].mxu0 %v4501
      %v4555 = vpop.f32.mrb[0].mxu0
      %v4556 = vadd.f32 0.0, %v4555
      %v4557 = vpop.f32.mrb[0].mxu0
      %v4558 = vpop.f32.mrb[0].mxu0
      %v4559 = vadd.f32 0.0, %v4558
      %v4560 = vpop.f32.mrb[0].mxu0
      %4561 = vmatprep.mubr.bf16.mxu0 0
      %4562 = vmatmul.mubr.bf16.gmra.mrb[0].mxu0 %v4504
      %v4563 = vpop.f32.mrb[0].mxu0
      %v4564 = vadd.f32 0.0, %v4563
      %v4565 = vpop.f32.mrb[0].mxu0
      %v4566 = vpop.f32.mrb[0].mxu0
      %v4567 = vadd.f32 0.0, %v4566
      %v4568 = vpop.f32.mrb[0].mxu0
      %4569 = vmatprep.mubr.bf16.mxu0 0
      %4570 = vmatmul.mubr.bf16.gmra.mrb[0].mxu0 %v4507
      %v4571 = vpop.f32.mrb[0].mxu0
      %v4572 = vadd.f32 0.0, %v4571
      %v4573 = vpop.f32.mrb[0].mxu0
      %v4574 = vpop.f32.mrb[0].mxu0
      %v4575 = vadd.f32 0.0, %v4574
      %v4576 = vpop.f32.mrb[0].mxu0
      %4577 = vdwg.mxu0
      %v4579 = vsel %vm4337, %v4478, 0
      %v4582 = vsel %vm4337, %v4479, 0
      %v4585 = vsel %vm4337, %v4480, 0
      %v4588 = vsel %vm4337, %v4481, 0
      %v4591 = vsel %vm4509, %v4482, 0
      %4593 = vmatprep.subr.bf16.mxu0 0
      %4594 = vmatpush1.bf16.msra.mxu0 %v4591
      %4595 = vmatprep.subr.bf16.mxu0 0
      %4596 = vmatpush1.bf16.msra.mxu0 0
      %4597 = vmatprep.subr.bf16.mxu0 0
      %4598 = vmatpush1.bf16.msra.mxu0 0
      %4599 = vmatprep.subr.bf16.mxu0 0
      %4600 = vmatpush1.bf16.msra.mxu0 0
      %4601 = vmatprep.subr.bf16.mxu0 0
      %4602 = vmatpush1.bf16.msra.mxu0 0
      %4603 = vmatprep.subr.bf16.mxu0 0
      %4604 = vmatpush1.bf16.msra.mxu0 0
      %4605 = vmatprep.subr.bf16.mxu0 0
      %4606 = vmatpush1.bf16.msra.mxu0 0
      %4607 = vmatprep.subr.bf16.mxu0 0
      %4608 = vmatpush1.bf16.msra.mxu0 0
      %4609 = vmatprep.subr.bf16.mxu0 0
      %4610 = vmatpush1.bf16.msra.mxu0 0
      %4611 = vmatprep.subr.bf16.mxu0 0
      %4612 = vmatpush1.bf16.msra.mxu0 0
      %4613 = vmatprep.subr.bf16.mxu0 0
      %4614 = vmatpush1.bf16.msra.mxu0 0
      %4615 = vmatprep.subr.bf16.mxu0 0
      %4616 = vmatpush1.bf16.msra.mxu0 0
      %4617 = vmatprep.subr.bf16.mxu0 0
      %4618 = vmatpush1.bf16.msra.mxu0 0
      %4619 = vmatprep.subr.bf16.mxu0 0
      %4620 = vmatpush1.bf16.msra.mxu0 0
      %4621 = vmatprep.subr.bf16.mxu0 0
      %4622 = vmatpush1.bf16.msra.mxu0 0
      %4623 = vmatprep.subr.bf16.mxu0 0
      %4624 = vmatpush1.bf16.msra.mxu0 0
      %4625 = vmatprep.mubr.bf16.mxu0 0
      %4626 = vmatmul.mubr.bf16.gmra.mrb[0].mxu0 %v4579
      %v4627 = vpop.f32.mrb[0].mxu0
      %v4628 = vadd.f32 %v4548, %v4627
      %v4629 = vpop.f32.mrb[0].mxu0
      %v4630 = vpop.f32.mrb[0].mxu0
      %v4631 = vadd.f32 %v4551, %v4630
      %v4632 = vpop.f32.mrb[0].mxu0
      %4633 = vmatprep.mubr.bf16.mxu0 0
      %4634 = vmatmul.mubr.bf16.gmra.mrb[0].mxu0 %v4582
      %v4635 = vpop.f32.mrb[0].mxu0
      %v4636 = vadd.f32 %v4556, %v4635
      %v4637 = vpop.f32.mrb[0].mxu0
      %v4638 = vpop.f32.mrb[0].mxu0
      %v4639 = vadd.f32 %v4559, %v4638
      %v4640 = vpop.f32.mrb[0].mxu0
      %4641 = vmatprep.mubr.bf16.mxu0 0
      %4642 = vmatmul.mubr.bf16.gmra.mrb[0].mxu0 %v4585
      %v4643 = vpop.f32.mrb[0].mxu0
      %v4644 = vadd.f32 %v4564, %v4643
      %v4645 = vpop.f32.mrb[0].mxu0
      %v4646 = vpop.f32.mrb[0].mxu0
      %v4647 = vadd.f32 %v4567, %v4646
      %v4648 = vpop.f32.mrb[0].mxu0
      %4649 = vmatprep.mubr.bf16.mxu0 0
      %4650 = vmatmul.mubr.bf16.gmra.mrb[0].mxu0 %v4588
      %v4651 = vpop.f32.mrb[0].mxu0
      %v4652 = vadd.f32 %v4572, %v4651
      %v4653 = vpop.f32.mrb[0].mxu0
      %v4654 = vpop.f32.mrb[0].mxu0
      %v4655 = vadd.f32 %v4575, %v4654
      %v4656 = vpop.f32.mrb[0].mxu0
      %4657 = vdwg.mxu0
      %v4658 = vld [vmem:[#allocation3 + $0x9] sm:$0xff]
      %v4659 = vld [vmem:[#allocation3 + $0x11] sm:$0xff]
      %v4660 = vld [vmem:[#allocation3 + $0x19] sm:$0xff]
      %v4661 = vld [vmem:[#allocation3 + $0x21] sm:$0xff]
      %v4662 = vld [vmem:[#allocation3 + $0x29] sm:$0xff]
      %v4663 = vld [vmem:[#allocation3 + $0x31] sm:$0xff]
      %v4664 = vld [vmem:[#allocation3 + $0x39] sm:$0xff]
      %v4665 = vld [vmem:[#allocation3 + $0x41] sm:$0xff]
      %v4666 = vsel %vm4454, %v4658, 0.0
      %v4667 = vsel %vm4455, %v4659, 0.0
      %v4668 = vsel %vm4456, %v4660, 0.0
      %v4669 = vsel %vm4457, %v4661, 0.0
      %v4670 = vsel %vm4458, %v4662, 0.0
      %v4671 = vsel %vm4459, %v4663, 0.0
      %v4672 = vsel %vm4460, %v4664, 0.0
      %v4673 = vsel %vm4461, %v4665, 0.0
      %v4674 = vpack.c.bf16 %v4667, %v4666
      %v4675 = vpack.c.bf16 %v4669, %v4668
      %v4676 = vpack.c.bf16 %v4671, %v4670
      %v4677 = vpack.c.bf16 %v4673, %v4672
      %s4678 = scalar_lea.vmem %s4, 8
      %v4679 = vld [vmem:[%s4678] sm:$0xf]
      %v4681 = vsel %vm4337, %v4674, 0
      %v4684 = vsel %vm4337, %v4675, 0
      %v4687 = vsel %vm4337, %v4676, 0
      %v4690 = vsel %vm4337, %v4677, 0
      %v4693 = vsel %vm4509, %v4679, 0
      %4695 = vmatprep.subr.bf16.mxu0 0
      %4696 = vmatpush1.bf16.msra.mxu0 %v4693
      %4697 = vmatprep.subr.bf16.mxu0 0
      %4698 = vmatpush1.bf16.msra.mxu0 0
      %4699 = vmatprep.subr.bf16.mxu0 0
      %4700 = vmatpush1.bf16.msra.mxu0 0
      %4701 = vmatprep.subr.bf16.mxu0 0
      %4702 = vmatpush1.bf16.msra.mxu0 0
      %4703 = vmatprep.subr.bf16.mxu0 0
      %4704 = vmatpush1.bf16.msra.mxu0 0
      %4705 = vmatprep.subr.bf16.mxu0 0
      %4706 = vmatpush1.bf16.msra.mxu0 0
      %4707 = vmatprep.subr.bf16.mxu0 0
      %4708 = vmatpush1.bf16.msra.mxu0 0
      %4709 = vmatprep.subr.bf16.mxu0 0
      %4710 = vmatpush1.bf16.msra.mxu0 0
      %4711 = vmatprep.subr.bf16.mxu0 0
      %4712 = vmatpush1.bf16.msra.mxu0 0
      %4713 = vmatprep.subr.bf16.mxu0 0
      %4714 = vmatpush1.bf16.msra.mxu0 0
      %4715 = vmatprep.subr.bf16.mxu0 0
      %4716 = vmatpush1.bf16.msra.mxu0 0
      %4717 = vmatprep.subr.bf16.mxu0 0
      %4718 = vmatpush1.bf16.msra.mxu0 0
      %4719 = vmatprep.subr.bf16.mxu0 0
      %4720 = vmatpush1.bf16.msra.mxu0 0
      %4721 = vmatprep.subr.bf16.mxu0 0
      %4722 = vmatpush1.bf16.msra.mxu0 0
      %4723 = vmatprep.subr.bf16.mxu0 0
      %4724 = vmatpush1.bf16.msra.mxu0 0
      %4725 = vmatprep.subr.bf16.mxu0 0
      %4726 = vmatpush1.bf16.msra.mxu0 0
      %4727 = vmatprep.mubr.bf16.mxu0 0
      %4728 = vmatmul.mubr.bf16.gmra.mrb[0].mxu0 %v4681
      %v4729 = vpop.f32.mrb[0].mxu0
      %v4730 = vadd.f32 0.0, %v4729
      %v4731 = vpop.f32.mrb[0].mxu0
      %v4732 = vpop.f32.mrb[0].mxu0
      %v4733 = vadd.f32 0.0, %v4732
      %v4734 = vpop.f32.mrb[0].mxu0
      %4735 = vmatprep.mubr.bf16.mxu0 0
      %4736 = vmatmul.mubr.bf16.gmra.mrb[0].mxu0 %v4684
      %v4737 = vpop.f32.mrb[0].mxu0
      %v4738 = vadd.f32 0.0, %v4737
      %v4739 = vpop.f32.mrb[0].mxu0
      %v4740 = vpop.f32.mrb[0].mxu0
      %v4741 = vadd.f32 0.0, %v4740
      %v4742 = vpop.f32.mrb[0].mxu0
      %4743 = vmatprep.mubr.bf16.mxu0 0
      %4744 = vmatmul.mubr.bf16.gmra.mrb[0].mxu0 %v4687
      %v4745 = vpop.f32.mrb[0].mxu0
      %v4746 = vadd.f32 0.0, %v4745
      %v4747 = vpop.f32.mrb[0].mxu0
      %v4748 = vpop.f32.mrb[0].mxu0
      %v4749 = vadd.f32 0.0, %v4748
      %v4750 = vpop.f32.mrb[0].mxu0
      %4751 = vmatprep.mubr.bf16.mxu0 0
      %4752 = vmatmul.mubr.bf16.gmra.mrb[0].mxu0 %v4690
      %v4753 = vpop.f32.mrb[0].mxu0
      %v4754 = vadd.f32 0.0, %v4753
      %v4755 = vpop.f32.mrb[0].mxu0
      %v4756 = vpop.f32.mrb[0].mxu0
      %v4757 = vadd.f32 0.0, %v4756
      %v4758 = vpop.f32.mrb[0].mxu0
      %4759 = vdwg.mxu0
      %v4760 = vadd.f32 %v4628, %v4730
      %v4761 = vadd.f32 %v4631, %v4733
      %v4762 = vadd.f32 %v4636, %v4738
      %v4763 = vadd.f32 %v4639, %v4741
      %v4764 = vadd.f32 %v4644, %v4746
      %v4765 = vadd.f32 %v4647, %v4749
      %v4766 = vadd.f32 %v4652, %v4754
      %v4767 = vadd.f32 %v4655, %v4757
      %v4768 = vld [vmem:[#allocation3 + $0xf] sm:$0xff]
      %v4769 = vld [vmem:[#allocation3 + $0x17] sm:$0xff]
      %v4770 = vld [vmem:[#allocation3 + $0x1f] sm:$0xff]
      %v4771 = vld [vmem:[#allocation3 + $0x27] sm:$0xff]
      %v4772 = vld [vmem:[#allocation3 + $0x2f] sm:$0xff]
      %v4773 = vld [vmem:[#allocation3 + $0x37] sm:$0xff]
      %v4774 = vld [vmem:[#allocation3 + $0x3f] sm:$0xff]
      %v4775 = vld [vmem:[#allocation3 + $0x47] sm:$0xff]
      %v4776 = vsel %vm4446, %v4768, 0.0
      %v4777 = vsel %vm4447, %v4769, 0.0
      %v4778 = vsel %vm4448, %v4770, 0.0
      %v4779 = vsel %vm4449, %v4771, 0.0
      %v4780 = vsel %vm4450, %v4772, 0.0
      %v4781 = vsel %vm4451, %v4773, 0.0
      %v4782 = vsel %vm4452, %v4774, 0.0
      %v4783 = vsel %vm4453, %v4775, 0.0
      %v4784 = vpack.c.bf16 %v4777, %v4776
      %v4785 = vpack.c.bf16 %v4779, %v4778
      %v4786 = vpack.c.bf16 %v4781, %v4780
      %v4787 = vpack.c.bf16 %v4783, %v4782
      %s4788 = scalar_lea.vmem %s4, 12
      %v4789 = vld [vmem:[%s4788] sm:$0xf]
      %v4791 = vsel %vm4337, %v4784, 0
      %v4794 = vsel %vm4337, %v4785, 0
      %v4797 = vsel %vm4337, %v4786, 0
      %v4800 = vsel %vm4337, %v4787, 0
      %v4803 = vsel %vm4509, %v4789, 0
      %4805 = vmatprep.subr.bf16.mxu0 0
      %4806 = vmatpush1.bf16.msra.mxu0 %v4803
      %4807 = vmatprep.subr.bf16.mxu0 0
      %4808 = vmatpush1.bf16.msra.mxu0 0
      %4809 = vmatprep.subr.bf16.mxu0 0
      %4810 = vmatpush1.bf16.msra.mxu0 0
      %4811 = vmatprep.subr.bf16.mxu0 0
      %4812 = vmatpush1.bf16.msra.mxu0 0
      %4813 = vmatprep.subr.bf16.mxu0 0
      %4814 = vmatpush1.bf16.msra.mxu0 0
      %4815 = vmatprep.subr.bf16.mxu0 0
      %4816 = vmatpush1.bf16.msra.mxu0 0
      %4817 = vmatprep.subr.bf16.mxu0 0
      %4818 = vmatpush1.bf16.msra.mxu0 0
      %4819 = vmatprep.subr.bf16.mxu0 0
      %4820 = vmatpush1.bf16.msra.mxu0 0
      %4821 = vmatprep.subr.bf16.mxu0 0
      %4822 = vmatpush1.bf16.msra.mxu0 0
      %4823 = vmatprep.subr.bf16.mxu0 0
      %4824 = vmatpush1.bf16.msra.mxu0 0
      %4825 = vmatprep.subr.bf16.mxu0 0
      %4826 = vmatpush1.bf16.msra.mxu0 0
      %4827 = vmatprep.subr.bf16.mxu0 0
      %4828 = vmatpush1.bf16.msra.mxu0 0
      %4829 = vmatprep.subr.bf16.mxu0 0
      %4830 = vmatpush1.bf16.msra.mxu0 0
      %4831 = vmatprep.subr.bf16.mxu0 0
      %4832 = vmatpush1.bf16.msra.mxu0 0
      %4833 = vmatprep.subr.bf16.mxu0 0
      %4834 = vmatpush1.bf16.msra.mxu0 0
      %4835 = vmatprep.subr.bf16.mxu0 0
      %4836 = vmatpush1.bf16.msra.mxu0 0
      %4837 = vmatprep.mubr.bf16.mxu0 0
      %4838 = vmatmul.mubr.bf16.gmra.mrb[0].mxu0 %v4791
      %v4839 = vpop.f32.mrb[0].mxu0
      %v4840 = vadd.f32 0.0, %v4839
      %v4841 = vpop.f32.mrb[0].mxu0
      %v4842 = vpop.f32.mrb[0].mxu0
      %v4843 = vadd.f32 0.0, %v4842
      %v4844 = vpop.f32.mrb[0].mxu0
      %4845 = vmatprep.mubr.bf16.mxu0 0
      %4846 = vmatmul.mubr.bf16.gmra.mrb[0].mxu0 %v4794
      %v4847 = vpop.f32.mrb[0].mxu0
      %v4848 = vadd.f32 0.0, %v4847
      %v4849 = vpop.f32.mrb[0].mxu0
      %v4850 = vpop.f32.mrb[0].mxu0
      %v4851 = vadd.f32 0.0, %v4850
      %v4852 = vpop.f32.mrb[0].mxu0
      %4853 = vmatprep.mubr.bf16.mxu0 0
      %4854 = vmatmul.mubr.bf16.gmra.mrb[0].mxu0 %v4797
      %v4855 = vpop.f32.mrb[0].mxu0
      %v4856 = vadd.f32 0.0, %v4855
      %v4857 = vpop.f32.mrb[0].mxu0
      %v4858 = vpop.f32.mrb[0].mxu0
      %v4859 = vadd.f32 0.0, %v4858
      %v4860 = vpop.f32.mrb[0].mxu0
      %4861 = vmatprep.mubr.bf16.mxu0 0
      %4862 = vmatmul.mubr.bf16.gmra.mrb[0].mxu0 %v4800
      %v4863 = vpop.f32.mrb[0].mxu0
      %v4864 = vadd.f32 0.0, %v4863
      %v4865 = vpop.f32.mrb[0].mxu0
      %v4866 = vpop.f32.mrb[0].mxu0
      %v4867 = vadd.f32 0.0, %v4866
      %v4868 = vpop.f32.mrb[0].mxu0
      %4869 = vdwg.mxu0
      %v4870 = vadd.f32 %v4760, %v4840
      %v4871 = vadd.f32 %v4761, %v4843
      %v4872 = vadd.f32 %v4762, %v4848
      %v4873 = vadd.f32 %v4763, %v4851
      %v4874 = vadd.f32 %v4764, %v4856
      %v4875 = vadd.f32 %v4765, %v4859
      %v4876 = vadd.f32 %v4766, %v4864
      %v4877 = vadd.f32 %v4767, %v4867
      %v4878 = vld [vmem:[#allocation3 + $0x10] sm:$0xff]
      %v4879 = vld [vmem:[#allocation3 + $0x18] sm:$0xff]
      %v4880 = vld [vmem:[#allocation3 + $0x20] sm:$0xff]
      %v4881 = vld [vmem:[#allocation3 + $0x28] sm:$0xff]
      %v4882 = vld [vmem:[#allocation3 + $0x30] sm:$0xff]
      %v4883 = vld [vmem:[#allocation3 + $0x38] sm:$0xff]
      %v4884 = vld [vmem:[#allocation3 + $0x40] sm:$0xff]
      %v4885 = vld [vmem:[#allocation3 + $0x48] sm:$0xff]
      %v4886 = vpack.c.bf16 %v4879, %v4878
      %v4887 = vpack.c.bf16 %v4881, %v4880
      %v4888 = vpack.c.bf16 %v4883, %v4882
      %v4889 = vpack.c.bf16 %v4885, %v4884
      %s4890 = scalar_lea.vmem %s4, 16
      %v4891 = vld [vmem:[%s4890] sm:$0xf]
      %v4893 = vsel %vm4337, %v4886, 0
      %v4896 = vsel %vm4337, %v4887, 0
      %v4899 = vsel %vm4337, %v4888, 0
      %v4902 = vsel %vm4337, %v4889, 0
      %v4905 = vsel %vm4509, %v4891, 0
      %4907 = vmatprep.subr.bf16.mxu0 0
      %4908 = vmatpush1.bf16.msra.mxu0 %v4905
      %4909 = vmatprep.subr.bf16.mxu0 0
      %4910 = vmatpush1.bf16.msra.mxu0 0
      %4911 = vmatprep.subr.bf16.mxu0 0
      %4912 = vmatpush1.bf16.msra.mxu0 0
      %4913 = vmatprep.subr.bf16.mxu0 0
      %4914 = vmatpush1.bf16.msra.mxu0 0
      %4915 = vmatprep.subr.bf16.mxu0 0
      %4916 = vmatpush1.bf16.msra.mxu0 0
      %4917 = vmatprep.subr.bf16.mxu0 0
      %4918 = vmatpush1.bf16.msra.mxu0 0
      %4919 = vmatprep.subr.bf16.mxu0 0
      %4920 = vmatpush1.bf16.msra.mxu0 0
      %4921 = vmatprep.subr.bf16.mxu0 0
      %4922 = vmatpush1.bf16.msra.mxu0 0
      %4923 = vmatprep.subr.bf16.mxu0 0
      %4924 = vmatpush1.bf16.msra.mxu0 0
      %4925 = vmatprep.subr.bf16.mxu0 0
      %4926 = vmatpush1.bf16.msra.mxu0 0
      %4927 = vmatprep.subr.bf16.mxu0 0
      %4928 = vmatpush1.bf16.msra.mxu0 0
      %4929 = vmatprep.subr.bf16.mxu0 0
      %4930 = vmatpush1.bf16.msra.mxu0 0
      %4931 = vmatprep.subr.bf16.mxu0 0
      %4932 = vmatpush1.bf16.msra.mxu0 0
      %4933 = vmatprep.subr.bf16.mxu0 0
      %4934 = vmatpush1.bf16.msra.mxu0 0
      %4935 = vmatprep.subr.bf16.mxu0 0
      %4936 = vmatpush1.bf16.msra.mxu0 0
      %4937 = vmatprep.subr.bf16.mxu0 0
      %4938 = vmatpush1.bf16.msra.mxu0 0
      %4939 = vmatprep.mubr.bf16.mxu0 0
      %4940 = vmatmul.mubr.bf16.gmra.mrb[0].mxu0 %v4893
      %v4941 = vpop.f32.mrb[0].mxu0
      %v4942 = vadd.f32 0.0, %v4941
      %v4943 = vpop.f32.mrb[0].mxu0
      %v4944 = vpop.f32.mrb[0].mxu0
      %v4945 = vadd.f32 0.0, %v4944
      %v4946 = vpop.f32.mrb[0].mxu0
      %4947 = vmatprep.mubr.bf16.mxu0 0
      %4948 = vmatmul.mubr.bf16.gmra.mrb[0].mxu0 %v4896
      %v4949 = vpop.f32.mrb[0].mxu0
      %v4950 = vadd.f32 0.0, %v4949
      %v4951 = vpop.f32.mrb[0].mxu0
      %v4952 = vpop.f32.mrb[0].mxu0
      %v4953 = vadd.f32 0.0, %v4952
      %v4954 = vpop.f32.mrb[0].mxu0
      %4955 = vmatprep.mubr.bf16.mxu0 0
      %4956 = vmatmul.mubr.bf16.gmra.mrb[0].mxu0 %v4899
      %v4957 = vpop.f32.mrb[0].mxu0
      %v4958 = vadd.f32 0.0, %v4957
      %v4959 = vpop.f32.mrb[0].mxu0
      %v4960 = vpop.f32.mrb[0].mxu0
      %v4961 = vadd.f32 0.0, %v4960
      %v4962 = vpop.f32.mrb[0].mxu0
      %4963 = vmatprep.mubr.bf16.mxu0 0
      %4964 = vmatmul.mubr.bf16.gmra.mrb[0].mxu0 %v4902
      %v4965 = vpop.f32.mrb[0].mxu0
      %v4966 = vadd.f32 0.0, %v4965
      %v4967 = vpop.f32.mrb[0].mxu0
      %v4968 = vpop.f32.mrb[0].mxu0
      %v4969 = vadd.f32 0.0, %v4968
      %v4970 = vpop.f32.mrb[0].mxu0
      %4971 = vdwg.mxu0
      %v4972 = vadd.f32 %v4870, %v4942
      %v4973 = vadd.f32 %v4871, %v4945
      %v4974 = vadd.f32 %v4872, %v4950
      %v4975 = vadd.f32 %v4873, %v4953
      %v4976 = vadd.f32 %v4874, %v4958
      %v4977 = vadd.f32 %v4875, %v4961
      %v4978 = vadd.f32 %v4876, %v4966
      %v4979 = vadd.f32 %v4877, %v4969
      %v4980 = vld [vmem:[#allocation3 + $0x11] sm:$0xff]
      %v4981 = vld [vmem:[#allocation3 + $0x19] sm:$0xff]
      %v4982 = vld [vmem:[#allocation3 + $0x21] sm:$0xff]
      %v4983 = vld [vmem:[#allocation3 + $0x29] sm:$0xff]
      %v4984 = vld [vmem:[#allocation3 + $0x31] sm:$0xff]
      %v4985 = vld [vmem:[#allocation3 + $0x39] sm:$0xff]
      %v4986 = vld [vmem:[#allocation3 + $0x41] sm:$0xff]
      %v4987 = vld [vmem:[#allocation3 + $0x49] sm:$0xff]
      %v4988 = vsel %vm4454, %v4980, 0.0
      %v4989 = vsel %vm4455, %v4981, 0.0
      %v4990 = vsel %vm4456, %v4982, 0.0
      %v4991 = vsel %vm4457, %v4983, 0.0
      %v4992 = vsel %vm4458, %v4984, 0.0
      %v4993 = vsel %vm4459, %v4985, 0.0
      %v4994 = vsel %vm4460, %v4986, 0.0
      %v4995 = vsel %vm4461, %v4987, 0.0
      %v4996 = vpack.c.bf16 %v4989, %v4988
      %v4997 = vpack.c.bf16 %v4991, %v4990
      %v4998 = vpack.c.bf16 %v4993, %v4992
      %v4999 = vpack.c.bf16 %v4995, %v4994
      %s5000 = scalar_lea.vmem %s4, 20
      %v5001 = vld [vmem:[%s5000] sm:$0xf]
      %v5003 = vsel %vm4337, %v4996, 0
      %v5006 = vsel %vm4337, %v4997, 0
      %v5009 = vsel %vm4337, %v4998, 0
      %v5012 = vsel %vm4337, %v4999, 0
      %v5015 = vsel %vm4509, %v5001, 0
      %5017 = vmatprep.subr.bf16.mxu0 0
      %5018 = vmatpush1.bf16.msra.mxu0 %v5015
      %5019 = vmatprep.subr.bf16.mxu0 0
      %5020 = vmatpush1.bf16.msra.mxu0 0
      %5021 = vmatprep.subr.bf16.mxu0 0
      %5022 = vmatpush1.bf16.msra.mxu0 0
      %5023 = vmatprep.subr.bf16.mxu0 0
      %5024 = vmatpush1.bf16.msra.mxu0 0
      %5025 = vmatprep.subr.bf16.mxu0 0
      %5026 = vmatpush1.bf16.msra.mxu0 0
      %5027 = vmatprep.subr.bf16.mxu0 0
      %5028 = vmatpush1.bf16.msra.mxu0 0
      %5029 = vmatprep.subr.bf16.mxu0 0
      %5030 = vmatpush1.bf16.msra.mxu0 0
      %5031 = vmatprep.subr.bf16.mxu0 0
      %5032 = vmatpush1.bf16.msra.mxu0 0
      %5033 = vmatprep.subr.bf16.mxu0 0
      %5034 = vmatpush1.bf16.msra.mxu0 0
      %5035 = vmatprep.subr.bf16.mxu0 0
      %5036 = vmatpush1.bf16.msra.mxu0 0
      %5037 = vmatprep.subr.bf16.mxu0 0
      %5038 = vmatpush1.bf16.msra.mxu0 0
      %5039 = vmatprep.subr.bf16.mxu0 0
      %5040 = vmatpush1.bf16.msra.mxu0 0
      %5041 = vmatprep.subr.bf16.mxu0 0
      %5042 = vmatpush1.bf16.msra.mxu0 0
      %5043 = vmatprep.subr.bf16.mxu0 0
      %5044 = vmatpush1.bf16.msra.mxu0 0
      %5045 = vmatprep.subr.bf16.mxu0 0
      %5046 = vmatpush1.bf16.msra.mxu0 0
      %5047 = vmatprep.subr.bf16.mxu0 0
      %5048 = vmatpush1.bf16.msra.mxu0 0
      %5049 = vmatprep.mubr.bf16.mxu0 0
      %5050 = vmatmul.mubr.bf16.gmra.mrb[0].mxu0 %v5003
      %v5051 = vpop.f32.mrb[0].mxu0
      %v5052 = vadd.f32 0.0, %v5051
      %v5053 = vpop.f32.mrb[0].mxu0
      %v5054 = vpop.f32.mrb[0].mxu0
      %v5055 = vadd.f32 0.0, %v5054
      %v5056 = vpop.f32.mrb[0].mxu0
      %5057 = vmatprep.mubr.bf16.mxu0 0
      %5058 = vmatmul.mubr.bf16.gmra.mrb[0].mxu0 %v5006
      %v5059 = vpop.f32.mrb[0].mxu0
      %v5060 = vadd.f32 0.0, %v5059
      %v5061 = vpop.f32.mrb[0].mxu0
      %v5062 = vpop.f32.mrb[0].mxu0
      %v5063 = vadd.f32 0.0, %v5062
      %v5064 = vpop.f32.mrb[0].mxu0
      %5065 = vmatprep.mubr.bf16.mxu0 0
      %5066 = vmatmul.mubr.bf16.gmra.mrb[0].mxu0 %v5009
      %v5067 = vpop.f32.mrb[0].mxu0
      %v5068 = vadd.f32 0.0, %v5067
      %v5069 = vpop.f32.mrb[0].mxu0
      %v5070 = vpop.f32.mrb[0].mxu0
      %v5071 = vadd.f32 0.0, %v5070
      %v5072 = vpop.f32.mrb[0].mxu0
      %5073 = vmatprep.mubr.bf16.mxu0 0
      %5074 = vmatmul.mubr.bf16.gmra.mrb[0].mxu0 %v5012
      %v5075 = vpop.f32.mrb[0].mxu0
      %v5076 = vadd.f32 0.0, %v5075
      %v5077 = vpop.f32.mrb[0].mxu0
      %v5078 = vpop.f32.mrb[0].mxu0
      %v5079 = vadd.f32 0.0, %v5078
      %v5080 = vpop.f32.mrb[0].mxu0
      %5081 = vdwg.mxu0
      %v5082 = vadd.f32 %v4972, %v5052
      %v5083 = vadd.f32 %v4973, %v5055
      %v5084 = vadd.f32 %v4974, %v5060
      %v5085 = vadd.f32 %v4975, %v5063
      %v5086 = vadd.f32 %v4976, %v5068
      %v5087 = vadd.f32 %v4977, %v5071
      %v5088 = vadd.f32 %v4978, %v5076
      %v5089 = vadd.f32 %v4979, %v5079
      %v5090 = vld [vmem:[#allocation3 + $0x17] sm:$0xff]
      %v5091 = vld [vmem:[#allocation3 + $0x1f] sm:$0xff]
      %v5092 = vld [vmem:[#allocation3 + $0x27] sm:$0xff]
      %v5093 = vld [vmem:[#allocation3 + $0x2f] sm:$0xff]
      %v5094 = vld [vmem:[#allocation3 + $0x37] sm:$0xff]
      %v5095 = vld [vmem:[#allocation3 + $0x3f] sm:$0xff]
      %v5096 = vld [vmem:[#allocation3 + $0x47] sm:$0xff]
      %v5097 = vld [vmem:[#allocation3 + $0x4f] sm:$0xff]
      %v5098 = vsel %vm4446, %v5090, 0.0
      %v5099 = vsel %vm4447, %v5091, 0.0
      %v5100 = vsel %vm4448, %v5092, 0.0
      %v5101 = vsel %vm4449, %v5093, 0.0
      %v5102 = vsel %vm4450, %v5094, 0.0
      %v5103 = vsel %vm4451, %v5095, 0.0
      %v5104 = vsel %vm4452, %v5096, 0.0
      %v5105 = vsel %vm4453, %v5097, 0.0
      %v5106 = vpack.c.bf16 %v5099, %v5098
      %v5107 = vpack.c.bf16 %v5101, %v5100
      %v5108 = vpack.c.bf16 %v5103, %v5102
      %v5109 = vpack.c.bf16 %v5105, %v5104
      %s5110 = scalar_lea.vmem %s4, 24
      %v5111 = vld [vmem:[%s5110] sm:$0xf]
      %v5113 = vsel %vm4337, %v5106, 0
      %v5116 = vsel %vm4337, %v5107, 0
      %v5119 = vsel %vm4337, %v5108, 0
      %v5122 = vsel %vm4337, %v5109, 0
      %v5125 = vsel %vm4509, %v5111, 0
      %5127 = vmatprep.subr.bf16.mxu0 0
      %5128 = vmatpush1.bf16.msra.mxu0 %v5125
      %5129 = vmatprep.subr.bf16.mxu0 0
      %5130 = vmatpush1.bf16.msra.mxu0 0
      %5131 = vmatprep.subr.bf16.mxu0 0
      %5132 = vmatpush1.bf16.msra.mxu0 0
      %5133 = vmatprep.subr.bf16.mxu0 0
      %5134 = vmatpush1.bf16.msra.mxu0 0
      %5135 = vmatprep.subr.bf16.mxu0 0
      %5136 = vmatpush1.bf16.msra.mxu0 0
      %5137 = vmatprep.subr.bf16.mxu0 0
      %5138 = vmatpush1.bf16.msra.mxu0 0
      %5139 = vmatprep.subr.bf16.mxu0 0
      %5140 = vmatpush1.bf16.msra.mxu0 0
      %5141 = vmatprep.subr.bf16.mxu0 0
      %5142 = vmatpush1.bf16.msra.mxu0 0
      %5143 = vmatprep.subr.bf16.mxu0 0
      %5144 = vmatpush1.bf16.msra.mxu0 0
      %5145 = vmatprep.subr.bf16.mxu0 0
      %5146 = vmatpush1.bf16.msra.mxu0 0
      %5147 = vmatprep.subr.bf16.mxu0 0
      %5148 = vmatpush1.bf16.msra.mxu0 0
      %5149 = vmatprep.subr.bf16.mxu0 0
      %5150 = vmatpush1.bf16.msra.mxu0 0
      %5151 = vmatprep.subr.bf16.mxu0 0
      %5152 = vmatpush1.bf16.msra.mxu0 0
      %5153 = vmatprep.subr.bf16.mxu0 0
      %5154 = vmatpush1.bf16.msra.mxu0 0
      %5155 = vmatprep.subr.bf16.mxu0 0
      %5156 = vmatpush1.bf16.msra.mxu0 0
      %5157 = vmatprep.subr.bf16.mxu0 0
      %5158 = vmatpush1.bf16.msra.mxu0 0
      %5159 = vmatprep.mubr.bf16.mxu0 0
      %5160 = vmatmul.mubr.bf16.gmra.mrb[0].mxu0 %v5113
      %v5161 = vpop.f32.mrb[0].mxu0
      %v5162 = vadd.f32 0.0, %v5161
      %v5163 = vpop.f32.mrb[0].mxu0
      %v5164 = vpop.f32.mrb[0].mxu0
      %v5165 = vadd.f32 0.0, %v5164
      %v5166 = vpop.f32.mrb[0].mxu0
      %5167 = vmatprep.mubr.bf16.mxu0 0
      %5168 = vmatmul.mubr.bf16.gmra.mrb[0].mxu0 %v5116
      %v5169 = vpop.f32.mrb[0].mxu0
      %v5170 = vadd.f32 0.0, %v5169
      %v5171 = vpop.f32.mrb[0].mxu0
      %v5172 = vpop.f32.mrb[0].mxu0
      %v5173 = vadd.f32 0.0, %v5172
      %v5174 = vpop.f32.mrb[0].mxu0
      %5175 = vmatprep.mubr.bf16.mxu0 0
      %5176 = vmatmul.mubr.bf16.gmra.mrb[0].mxu0 %v5119
      %v5177 = vpop.f32.mrb[0].mxu0
      %v5178 = vadd.f32 0.0, %v5177
      %v5179 = vpop.f32.mrb[0].mxu0
      %v5180 = vpop.f32.mrb[0].mxu0
      %v5181 = vadd.f32 0.0, %v5180
      %v5182 = vpop.f32.mrb[0].mxu0
      %5183 = vmatprep.mubr.bf16.mxu0 0
      %5184 = vmatmul.mubr.bf16.gmra.mrb[0].mxu0 %v5122
      %v5185 = vpop.f32.mrb[0].mxu0
      %v5186 = vadd.f32 0.0, %v5185
      %v5187 = vpop.f32.mrb[0].mxu0
      %v5188 = vpop.f32.mrb[0].mxu0
      %v5189 = vadd.f32 0.0, %v5188
      %v5190 = vpop.f32.mrb[0].mxu0
      %5191 = vdwg.mxu0
      %v5192 = vadd.f32 %v5082, %v5162
      %v5193 = vadd.f32 %v5083, %v5165
      %v5194 = vadd.f32 %v5084, %v5170
      %v5195 = vadd.f32 %v5085, %v5173
      %v5196 = vadd.f32 %v5086, %v5178
      %v5197 = vadd.f32 %v5087, %v5181
      %v5198 = vadd.f32 %v5088, %v5186
      %v5199 = vadd.f32 %v5089, %v5189
      %v5200 = vld [vmem:[#allocation3 + $0x18] sm:$0xff]
      %v5201 = vld [vmem:[#allocation3 + $0x20] sm:$0xff]
      %v5202 = vld [vmem:[#allocation3 + $0x28] sm:$0xff]
      %v5203 = vld [vmem:[#allocation3 + $0x30] sm:$0xff]
      %v5204 = vld [vmem:[#allocation3 + $0x38] sm:$0xff]
      %v5205 = vld [vmem:[#allocation3 + $0x40] sm:$0xff]
      %v5206 = vld [vmem:[#allocation3 + $0x48] sm:$0xff]
      %v5207 = vld [vmem:[#allocation3 + $0x50] sm:$0xff]
      %v5208 = vpack.c.bf16 %v5201, %v5200
      %v5209 = vpack.c.bf16 %v5203, %v5202
      %v5210 = vpack.c.bf16 %v5205, %v5204
      %v5211 = vpack.c.bf16 %v5207, %v5206
      %s5212 = scalar_lea.vmem %s4, 28
      %v5213 = vld [vmem:[%s5212] sm:$0xf]
      %v5215 = vsel %vm4337, %v5208, 0
      %v5218 = vsel %vm4337, %v5209, 0
      %v5221 = vsel %vm4337, %v5210, 0
      %v5224 = vsel %vm4337, %v5211, 0
      %v5227 = vsel %vm4509, %v5213, 0
      %5229 = vmatprep.subr.bf16.mxu0 0
      %5230 = vmatpush1.bf16.msra.mxu0 %v5227
      %5231 = vmatprep.subr.bf16.mxu0 0
      %5232 = vmatpush1.bf16.msra.mxu0 0
      %5233 = vmatprep.subr.bf16.mxu0 0
      %5234 = vmatpush1.bf16.msra.mxu0 0
      %5235 = vmatprep.subr.bf16.mxu0 0
      %5236 = vmatpush1.bf16.msra.mxu0 0
      %5237 = vmatprep.subr.bf16.mxu0 0
      %5238 = vmatpush1.bf16.msra.mxu0 0
      %5239 = vmatprep.subr.bf16.mxu0 0
      %5240 = vmatpush1.bf16.msra.mxu0 0
      %5241 = vmatprep.subr.bf16.mxu0 0
      %5242 = vmatpush1.bf16.msra.mxu0 0
      %5243 = vmatprep.subr.bf16.mxu0 0
      %5244 = vmatpush1.bf16.msra.mxu0 0
      %5245 = vmatprep.subr.bf16.mxu0 0
      %5246 = vmatpush1.bf16.msra.mxu0 0
      %5247 = vmatprep.subr.bf16.mxu0 0
      %5248 = vmatpush1.bf16.msra.mxu0 0
      %5249 = vmatprep.subr.bf16.mxu0 0
      %5250 = vmatpush1.bf16.msra.mxu0 0
      %5251 = vmatprep.subr.bf16.mxu0 0
      %5252 = vmatpush1.bf16.msra.mxu0 0
      %5253 = vmatprep.subr.bf16.mxu0 0
      %5254 = vmatpush1.bf16.msra.mxu0 0
      %5255 = vmatprep.subr.bf16.mxu0 0
      %5256 = vmatpush1.bf16.msra.mxu0 0
      %5257 = vmatprep.subr.bf16.mxu0 0
      %5258 = vmatpush1.bf16.msra.mxu0 0
      %5259 = vmatprep.subr.bf16.mxu0 0
      %5260 = vmatpush1.bf16.msra.mxu0 0
      %5261 = vmatprep.mubr.bf16.mxu0 0
      %5262 = vmatmul.mubr.bf16.gmra.mrb[0].mxu0 %v5215
      %v5263 = vpop.f32.mrb[0].mxu0
      %v5264 = vadd.f32 0.0, %v5263
      %v5265 = vpop.f32.mrb[0].mxu0
      %v5266 = vpop.f32.mrb[0].mxu0
      %v5267 = vadd.f32 0.0, %v5266
      %v5268 = vpop.f32.mrb[0].mxu0
      %5269 = vmatprep.mubr.bf16.mxu0 0
      %5270 = vmatmul.mubr.bf16.gmra.mrb[0].mxu0 %v5218
      %v5271 = vpop.f32.mrb[0].mxu0
      %v5272 = vadd.f32 0.0, %v5271
      %v5273 = vpop.f32.mrb[0].mxu0
      %v5274 = vpop.f32.mrb[0].mxu0
      %v5275 = vadd.f32 0.0, %v5274
      %v5276 = vpop.f32.mrb[0].mxu0
      %5277 = vmatprep.mubr.bf16.mxu0 0
      %5278 = vmatmul.mubr.bf16.gmra.mrb[0].mxu0 %v5221
      %v5279 = vpop.f32.mrb[0].mxu0
      %v5280 = vadd.f32 0.0, %v5279
      %v5281 = vpop.f32.mrb[0].mxu0
      %v5282 = vpop.f32.mrb[0].mxu0
      %v5283 = vadd.f32 0.0, %v5282
      %v5284 = vpop.f32.mrb[0].mxu0
      %5285 = vmatprep.mubr.bf16.mxu0 0
      %5286 = vmatmul.mubr.bf16.gmra.mrb[0].mxu0 %v5224
      %v5287 = vpop.f32.mrb[0].mxu0
      %v5288 = vadd.f32 0.0, %v5287
      %v5289 = vpop.f32.mrb[0].mxu0
      %v5290 = vpop.f32.mrb[0].mxu0
      %v5291 = vadd.f32 0.0, %v5290
      %v5292 = vpop.f32.mrb[0].mxu0
      %5293 = vdwg.mxu0
      %v5294 = vadd.f32 %v5192, %v5264
      %v5295 = vadd.f32 %v5193, %v5267
      %v5296 = vadd.f32 %v5194, %v5272
      %v5297 = vadd.f32 %v5195, %v5275
      %v5298 = vadd.f32 %v5196, %v5280
      %v5299 = vadd.f32 %v5197, %v5283
      %v5300 = vadd.f32 %v5198, %v5288
      %v5301 = vadd.f32 %v5199, %v5291
      %v5302 = vld [vmem:[#allocation3 + $0x19] sm:$0xff]
      %v5303 = vld [vmem:[#allocation3 + $0x21] sm:$0xff]
      %v5304 = vld [vmem:[#allocation3 + $0x29] sm:$0xff]
      %v5305 = vld [vmem:[#allocation3 + $0x31] sm:$0xff]
      %v5306 = vld [vmem:[#allocation3 + $0x39] sm:$0xff]
      %v5307 = vld [vmem:[#allocation3 + $0x41] sm:$0xff]
      %v5308 = vld [vmem:[#allocation3 + $0x49] sm:$0xff]
      %v5309 = vld [vmem:[#allocation3 + $0x51] sm:$0xff]
      %v5310 = vsel %vm4454, %v5302, 0.0
      %v5311 = vsel %vm4455, %v5303, 0.0
      %v5312 = vsel %vm4456, %v5304, 0.0
      %v5313 = vsel %vm4457, %v5305, 0.0
      %v5314 = vsel %vm4458, %v5306, 0.0
      %v5315 = vsel %vm4459, %v5307, 0.0
      %v5316 = vsel %vm4460, %v5308, 0.0
      %v5317 = vsel %vm4461, %v5309, 0.0
      %v5318 = vpack.c.bf16 %v5311, %v5310
      %v5319 = vpack.c.bf16 %v5313, %v5312
      %v5320 = vpack.c.bf16 %v5315, %v5314
      %v5321 = vpack.c.bf16 %v5317, %v5316
      %s5322 = scalar_lea.vmem %s4, 32
      %v5323 = vld [vmem:[%s5322] sm:$0xf]
      %v5325 = vsel %vm4337, %v5318, 0
      %v5328 = vsel %vm4337, %v5319, 0
      %v5331 = vsel %vm4337, %v5320, 0
      %v5334 = vsel %vm4337, %v5321, 0
      %v5337 = vsel %vm4509, %v5323, 0
      %5339 = vmatprep.subr.bf16.mxu0 0
      %5340 = vmatpush1.bf16.msra.mxu0 %v5337
      %5341 = vmatprep.subr.bf16.mxu0 0
      %5342 = vmatpush1.bf16.msra.mxu0 0
      %5343 = vmatprep.subr.bf16.mxu0 0
      %5344 = vmatpush1.bf16.msra.mxu0 0
      %5345 = vmatprep.subr.bf16.mxu0 0
      %5346 = vmatpush1.bf16.msra.mxu0 0
      %5347 = vmatprep.subr.bf16.mxu0 0
      %5348 = vmatpush1.bf16.msra.mxu0 0
      %5349 = vmatprep.subr.bf16.mxu0 0
      %5350 = vmatpush1.bf16.msra.mxu0 0
      %5351 = vmatprep.subr.bf16.mxu0 0
      %5352 = vmatpush1.bf16.msra.mxu0 0
      %5353 = vmatprep.subr.bf16.mxu0 0
      %5354 = vmatpush1.bf16.msra.mxu0 0
      %5355 = vmatprep.subr.bf16.mxu0 0
      %5356 = vmatpush1.bf16.msra.mxu0 0
      %5357 = vmatprep.subr.bf16.mxu0 0
      %5358 = vmatpush1.bf16.msra.mxu0 0
      %5359 = vmatprep.subr.bf16.mxu0 0
      %5360 = vmatpush1.bf16.msra.mxu0 0
      %5361 = vmatprep.subr.bf16.mxu0 0
      %5362 = vmatpush1.bf16.msra.mxu0 0
      %5363 = vmatprep.subr.bf16.mxu0 0
      %5364 = vmatpush1.bf16.msra.mxu0 0
      %5365 = vmatprep.subr.bf16.mxu0 0
      %5366 = vmatpush1.bf16.msra.mxu0 0
      %5367 = vmatprep.subr.bf16.mxu0 0
      %5368 = vmatpush1.bf16.msra.mxu0 0
      %5369 = vmatprep.subr.bf16.mxu0 0
      %5370 = vmatpush1.bf16.msra.mxu0 0
      %5371 = vmatprep.mubr.bf16.mxu0 0
      %5372 = vmatmul.mubr.bf16.gmra.mrb[0].mxu0 %v5325
      %v5373 = vpop.f32.mrb[0].mxu0
      %v5374 = vadd.f32 0.0, %v5373
      %v5375 = vpop.f32.mrb[0].mxu0
      %v5376 = vpop.f32.mrb[0].mxu0
      %v5377 = vadd.f32 0.0, %v5376
      %v5378 = vpop.f32.mrb[0].mxu0
      %5379 = vmatprep.mubr.bf16.mxu0 0
      %5380 = vmatmul.mubr.bf16.gmra.mrb[0].mxu0 %v5328
      %v5381 = vpop.f32.mrb[0].mxu0
      %v5382 = vadd.f32 0.0, %v5381
      %v5383 = vpop.f32.mrb[0].mxu0
      %v5384 = vpop.f32.mrb[0].mxu0
      %v5385 = vadd.f32 0.0, %v5384
      %v5386 = vpop.f32.mrb[0].mxu0
      %5387 = vmatprep.mubr.bf16.mxu0 0
      %5388 = vmatmul.mubr.bf16.gmra.mrb[0].mxu0 %v5331
      %v5389 = vpop.f32.mrb[0].mxu0
      %v5390 = vadd.f32 0.0, %v5389
      %v5391 = vpop.f32.mrb[0].mxu0
      %v5392 = vpop.f32.mrb[0].mxu0
      %v5393 = vadd.f32 0.0, %v5392
      %v5394 = vpop.f32.mrb[0].mxu0
      %5395 = vmatprep.mubr.bf16.mxu0 0
      %5396 = vmatmul.mubr.bf16.gmra.mrb[0].mxu0 %v5334
      %v5397 = vpop.f32.mrb[0].mxu0
      %v5398 = vadd.f32 0.0, %v5397
      %v5399 = vpop.f32.mrb[0].mxu0
      %v5400 = vpop.f32.mrb[0].mxu0
      %v5401 = vadd.f32 0.0, %v5400
      %v5402 = vpop.f32.mrb[0].mxu0
      %5403 = vdwg.mxu0
      %v5404 = vadd.f32 %v5294, %v5374
      %v5405 = vadd.f32 %v5295, %v5377
      %v5406 = vadd.f32 %v5296, %v5382
      %v5407 = vadd.f32 %v5297, %v5385
      %v5408 = vadd.f32 %v5298, %v5390
      %v5409 = vadd.f32 %v5299, %v5393
      %v5410 = vadd.f32 %v5300, %v5398
      %v5411 = vadd.f32 %v5301, %v5401
      %v5412 = vld [vmem:[%s5] sm:$0x1]
      %v5414 = vlaneseq
      %v5415 = vshrl.u32 %v5414, 7
      %v5416 = vsub.s32 0, %v5415
      %v5417 = vrot.slane %v5412, %v5416
      %v5419 = vadd.f32 %v5404, %v5417
      %v5420 = vadd.f32 %v5405, %v5417
      %v5421 = vadd.f32 %v5406, %v5417
      %v5422 = vadd.f32 %v5407, %v5417
      %v5423 = vadd.f32 %v5408, %v5417
      %v5424 = vadd.f32 %v5409, %v5417
      %v5425 = vadd.f32 %v5410, %v5417
      %v5426 = vadd.f32 %v5411, %v5417
      %v5427 = vmax.f32 %v5419, 0.0
      %v5428 = vmax.f32 %v5420, 0.0
      %v5429 = vmax.f32 %v5421, 0.0
      %v5430 = vmax.f32 %v5422, 0.0
      %v5431 = vmax.f32 %v5423, 0.0
      %v5432 = vmax.f32 %v5424, 0.0
      %v5433 = vmax.f32 %v5425, 0.0
      %v5434 = vmax.f32 %v5426, 0.0
      %v5435 = vpack.c.bf16 %v5428, %v5427
      %v5436 = vpack.c.bf16 %v5430, %v5429
      %v5437 = vpack.c.bf16 %v5432, %v5431
      %v5438 = vpack.c.bf16 %v5434, %v5433
      %v5439 = vld [vmem:[%s6] sm:$0xf]
      %v5440 = vld [vmem:[%s6 + $0x4] sm:$0xf]
      %v5443 = vunpack.c.l.b16 %v5439
      %v5444 = vunpack.c.l.b16 %v5440
      %v5445 = vpack.c.b16 %v5444, %v5443
      %vm5446 = vcmask 523264
      %v5448 = vsel %vm5446, %v5445, 0
      %5450 = vmatprep.subr.bf16.mxu0 0
      %5451 = vmatpush1.bf16.msra.mxu0 %v5435
      %5452 = vmatprep.subr.bf16.mxu0 0
      %5453 = vmatpush1.bf16.msra.mxu0 %v5436
      %5454 = vmatprep.subr.bf16.mxu0 0
      %5455 = vmatpush1.bf16.msra.mxu0 %v5437
      %5456 = vmatprep.subr.bf16.mxu0 0
      %5457 = vmatpush1.bf16.msra.mxu0 %v5438
      %5458 = vmatprep.subr.bf16.mxu0 0
      %5459 = vmatpush1.bf16.msra.mxu0 0
      %5460 = vmatprep.subr.bf16.mxu0 0
      %5461 = vmatpush1.bf16.msra.mxu0 0
      %5462 = vmatprep.subr.bf16.mxu0 0
      %5463 = vmatpush1.bf16.msra.mxu0 0
      %5464 = vmatprep.subr.bf16.mxu0 0
      %5465 = vmatpush1.bf16.msra.mxu0 0
      %5466 = vmatprep.subr.bf16.mxu0 0
      %5467 = vmatpush1.bf16.msra.mxu0 0
      %5468 = vmatprep.subr.bf16.mxu0 0
      %5469 = vmatpush1.bf16.msra.mxu0 0
      %5470 = vmatprep.subr.bf16.mxu0 0
      %5471 = vmatpush1.bf16.msra.mxu0 0
      %5472 = vmatprep.subr.bf16.mxu0 0
      %5473 = vmatpush1.bf16.msra.mxu0 0
      %5474 = vmatprep.subr.bf16.mxu0 0
      %5475 = vmatpush1.bf16.msra.mxu0 0
      %5476 = vmatprep.subr.bf16.mxu0 0
      %5477 = vmatpush1.bf16.msra.mxu0 0
      %5478 = vmatprep.subr.bf16.mxu0 0
      %5479 = vmatpush1.bf16.msra.mxu0 0
      %5480 = vmatprep.subr.bf16.mxu0 0
      %5481 = vmatpush1.bf16.msra.mxu0 0
      %5482 = vmatprep.mubr.bf16.mxu0 0
      %5483 = vmatmul.mubr.bf16.gmra.mrb[0].mxu0 %v5448
      %v5484 = vpop.f32.mrb[0].mxu0
      %v5485 = vadd.f32 0.0, %v5484
      %v5486 = vpop.f32.mrb[0].mxu0
      %v5487 = vpop.f32.mrb[0].mxu0
      %v5488 = vadd.f32 0.0, %v5487
      %v5489 = vpop.f32.mrb[0].mxu0
      %5490 = vdwg.mxu0
      %s5491 = scalar_lea.vmem %s6, 8
      %v5492 = vld [vmem:[%s5491] sm:$0xf]
      %v5493 = vld [vmem:[%s5491 + $0x4] sm:$0xf]
      %v5496 = vunpack.c.l.b16 %v5492
      %v5497 = vunpack.c.l.b16 %v5493
      %v5498 = vpack.c.b16 %v5497, %v5496
      %v5500 = vsel %vm5446, %v5498, 0
      %5502 = vmatprep.subr.bf16.mxu0 0
      %5503 = vmatpush1.bf16.msra.mxu0 %v5435
      %5504 = vmatprep.subr.bf16.mxu0 0
      %5505 = vmatpush1.bf16.msra.mxu0 %v5436
      %5506 = vmatprep.subr.bf16.mxu0 0
      %5507 = vmatpush1.bf16.msra.mxu0 %v5437
      %5508 = vmatprep.subr.bf16.mxu0 0
      %5509 = vmatpush1.bf16.msra.mxu0 %v5438
      %5510 = vmatprep.subr.bf16.mxu0 0
      %5511 = vmatpush1.bf16.msra.mxu0 0
      %5512 = vmatprep.subr.bf16.mxu0 0
      %5513 = vmatpush1.bf16.msra.mxu0 0
      %5514 = vmatprep.subr.bf16.mxu0 0
      %5515 = vmatpush1.bf16.msra.mxu0 0
      %5516 = vmatprep.subr.bf16.mxu0 0
      %5517 = vmatpush1.bf16.msra.mxu0 0
      %5518 = vmatprep.subr.bf16.mxu0 0
      %5519 = vmatpush1.bf16.msra.mxu0 0
      %5520 = vmatprep.subr.bf16.mxu0 0
      %5521 = vmatpush1.bf16.msra.mxu0 0
      %5522 = vmatprep.subr.bf16.mxu0 0
      %5523 = vmatpush1.bf16.msra.mxu0 0
      %5524 = vmatprep.subr.bf16.mxu0 0
      %5525 = vmatpush1.bf16.msra.mxu0 0
      %5526 = vmatprep.subr.bf16.mxu0 0
      %5527 = vmatpush1.bf16.msra.mxu0 0
      %5528 = vmatprep.subr.bf16.mxu0 0
      %5529 = vmatpush1.bf16.msra.mxu0 0
      %5530 = vmatprep.subr.bf16.mxu0 0
      %5531 = vmatpush1.bf16.msra.mxu0 0
      %5532 = vmatprep.subr.bf16.mxu0 0
      %5533 = vmatpush1.bf16.msra.mxu0 0
      %5534 = vmatprep.mubr.bf16.mxu0 0
      %5535 = vmatmul.mubr.bf16.gmra.mrb[0].mxu0 %v5500
      %v5536 = vpop.f32.mrb[0].mxu0
      %v5537 = vadd.f32 0.0, %v5536
      %v5538 = vpop.f32.mrb[0].mxu0
      %v5539 = vpop.f32.mrb[0].mxu0
      %v5540 = vadd.f32 0.0, %v5539
      %v5541 = vpop.f32.mrb[0].mxu0
      %5542 = vdwg.mxu0
      %v5543 = vmax.f32 %v5485, %v5537
      %v5544 = vmax.f32 %v5488, %v5540
      %s5545 = scalar_lea.vmem %s6, 16
      %v5546 = vld [vmem:[%s5545] sm:$0xf]
      %v5547 = vld [vmem:[%s5545 + $0x4] sm:$0xf]
      %v5550 = vunpack.c.l.b16 %v5546
      %v5551 = vunpack.c.l.b16 %v5547
      %v5552 = vpack.c.b16 %v5551, %v5550
      %v5554 = vsel %vm5446, %v5552, 0
      %5556 = vmatprep.subr.bf16.mxu0 0
      %5557 = vmatpush1.bf16.msra.mxu0 %v5435
      %5558 = vmatprep.subr.bf16.mxu0 0
      %5559 = vmatpush1.bf16.msra.mxu0 %v5436
      %5560 = vmatprep.subr.bf16.mxu0 0
      %5561 = vmatpush1.bf16.msra.mxu0 %v5437
      %5562 = vmatprep.subr.bf16.mxu0 0
      %5563 = vmatpush1.bf16.msra.mxu0 %v5438
      %5564 = vmatprep.subr.bf16.mxu0 0
      %5565 = vmatpush1.bf16.msra.mxu0 0
      %5566 = vmatprep.subr.bf16.mxu0 0
      %5567 = vmatpush1.bf16.msra.mxu0 0
      %5568 = vmatprep.subr.bf16.mxu0 0
      %5569 = vmatpush1.bf16.msra.mxu0 0
      %5570 = vmatprep.subr.bf16.mxu0 0
      %5571 = vmatpush1.bf16.msra.mxu0 0
      %5572 = vmatprep.subr.bf16.mxu0 0
      %5573 = vmatpush1.bf16.msra.mxu0 0
      %5574 = vmatprep.subr.bf16.mxu0 0
      %5575 = vmatpush1.bf16.msra.mxu0 0
      %5576 = vmatprep.subr.bf16.mxu0 0
      %5577 = vmatpush1.bf16.msra.mxu0 0
      %5578 = vmatprep.subr.bf16.mxu0 0
      %5579 = vmatpush1.bf16.msra.mxu0 0
      %5580 = vmatprep.subr.bf16.mxu0 0
      %5581 = vmatpush1.bf16.msra.mxu0 0
      %5582 = vmatprep.subr.bf16.mxu0 0
      %5583 = vmatpush1.bf16.msra.mxu0 0
      %5584 = vmatprep.subr.bf16.mxu0 0
      %5585 = vmatpush1.bf16.msra.mxu0 0
      %5586 = vmatprep.subr.bf16.mxu0 0
      %5587 = vmatpush1.bf16.msra.mxu0 0
      %5588 = vmatprep.mubr.bf16.mxu0 0
      %5589 = vmatmul.mubr.bf16.gmra.mrb[0].mxu0 %v5554
      %v5590 = vpop.f32.mrb[0].mxu0
      %v5591 = vadd.f32 0.0, %v5590
      %v5592 = vpop.f32.mrb[0].mxu0
      %v5593 = vpop.f32.mrb[0].mxu0
      %v5594 = vadd.f32 0.0, %v5593
      %v5595 = vpop.f32.mrb[0].mxu0
      %5596 = vdwg.mxu0
      %v5597 = vmax.f32 %v5543, %v5591
      %v5598 = vmax.f32 %v5544, %v5594
      %s5599 = scalar_lea.vmem %s6, 24
      %v5600 = vld [vmem:[%s5599] sm:$0xf]
      %v5601 = vld [vmem:[%s5599 + $0x4] sm:$0xf]
      %v5604 = vunpack.c.l.b16 %v5600
      %v5605 = vunpack.c.l.b16 %v5601
      %v5606 = vpack.c.b16 %v5605, %v5604
      %v5608 = vsel %vm5446, %v5606, 0
      %5610 = vmatprep.subr.bf16.mxu0 0
      %5611 = vmatpush1.bf16.msra.mxu0 %v5435
      %5612 = vmatprep.subr.bf16.mxu0 0
      %5613 = vmatpush1.bf16.msra.mxu0 %v5436
      %5614 = vmatprep.subr.bf16.mxu0 0
      %5615 = vmatpush1.bf16.msra.mxu0 %v5437
      %5616 = vmatprep.subr.bf16.mxu0 0
      %5617 = vmatpush1.bf16.msra.mxu0 %v5438
      %5618 = vmatprep.subr.bf16.mxu0 0
      %5619 = vmatpush1.bf16.msra.mxu0 0
      %5620 = vmatprep.subr.bf16.mxu0 0
      %5621 = vmatpush1.bf16.msra.mxu0 0
      %5622 = vmatprep.subr.bf16.mxu0 0
      %5623 = vmatpush1.bf16.msra.mxu0 0
      %5624 = vmatprep.subr.bf16.mxu0 0
      %5625 = vmatpush1.bf16.msra.mxu0 0
      %5626 = vmatprep.subr.bf16.mxu0 0
      %5627 = vmatpush1.bf16.msra.mxu0 0
      %5628 = vmatprep.subr.bf16.mxu0 0
      %5629 = vmatpush1.bf16.msra.mxu0 0
      %5630 = vmatprep.subr.bf16.mxu0 0
      %5631 = vmatpush1.bf16.msra.mxu0 0
      %5632 = vmatprep.subr.bf16.mxu0 0
      %5633 = vmatpush1.bf16.msra.mxu0 0
      %5634 = vmatprep.subr.bf16.mxu0 0
      %5635 = vmatpush1.bf16.msra.mxu0 0
      %5636 = vmatprep.subr.bf16.mxu0 0
      %5637 = vmatpush1.bf16.msra.mxu0 0
      %5638 = vmatprep.subr.bf16.mxu0 0
      %5639 = vmatpush1.bf16.msra.mxu0 0
      %5640 = vmatprep.subr.bf16.mxu0 0
      %5641 = vmatpush1.bf16.msra.mxu0 0
      %5642 = vmatprep.mubr.bf16.mxu0 0
      %5643 = vmatmul.mubr.bf16.gmra.mrb[0].mxu0 %v5608
      %v5644 = vpop.f32.mrb[0].mxu0
      %v5645 = vadd.f32 0.0, %v5644
      %v5646 = vpop.f32.mrb[0].mxu0
      %v5647 = vpop.f32.mrb[0].mxu0
      %v5648 = vadd.f32 0.0, %v5647
      %v5649 = vpop.f32.mrb[0].mxu0
      %5650 = vdwg.mxu0
      %v5651 = vmax.f32 %v5597, %v5645
      %v5652 = vmax.f32 %v5598, %v5648
      %v5653 = vld [vmem:[%s9] sm:$0xf]
      %v5654 = vld [vmem:[%s9 + $0x4] sm:$0xf]
      %v5655 = vld [vmem:[%s9 + $0x8] sm:$0xf]
      %v5656 = vld [vmem:[%s9 + $0xc] sm:$0xf]
      %v5657 = vld [vmem:[%s9 + $0x10] sm:$0xf]
      %v5658 = vld [vmem:[%s9 + $0x14] sm:$0xf]
      %v5659 = vld [vmem:[%s9 + $0x18] sm:$0xf]
      %v5660 = vld [vmem:[%s9 + $0x1c] sm:$0xf]
      %v5661 = vpack.c.bf16 %v5652, %v5651
      %v5670 = vunpack.c.l.b16 %v5653
      %v5671 = vunpack.c.l.b16 %v5654
      %v5672 = vunpack.c.l.b16 %v5655
      %v5673 = vunpack.c.l.b16 %v5656
      %v5674 = vunpack.c.l.b16 %v5657
      %v5675 = vunpack.c.l.b16 %v5658
      %v5676 = vunpack.c.l.b16 %v5659
      %v5677 = vunpack.c.l.b16 %v5660
      %v5678 = vpack.c.b16 %v5671, %v5670
      %v5679 = vpack.c.b16 %v5673, %v5672
      %v5680 = vpack.c.b16 %v5675, %v5674
      %v5681 = vpack.c.b16 %v5677, %v5676
      %vm5682 = vcmask 130048
      %v5684 = vsel %vm5682, %v5678, 0
      %v5687 = vsel %vm5682, %v5679, 0
      %v5690 = vsel %vm5682, %v5680, 0
      %v5693 = vsel %vm5682, %v5681, 0
      %5695 = vmatprep.subr.bf16.mxu0 0
      %5696 = vmatpush1.bf16.msra.mxu0 %v5661
      %5697 = vmatprep.subr.bf16.mxu0 0
      %5698 = vmatpush1.bf16.msra.mxu0 0
      %5699 = vmatprep.subr.bf16.mxu0 0
      %5700 = vmatpush1.bf16.msra.mxu0 0
      %5701 = vmatprep.subr.bf16.mxu0 0
      %5702 = vmatpush1.bf16.msra.mxu0 0
      %5703 = vmatprep.subr.bf16.mxu0 0
      %5704 = vmatpush1.bf16.msra.mxu0 0
      %5705 = vmatprep.subr.bf16.mxu0 0
      %5706 = vmatpush1.bf16.msra.mxu0 0
      %5707 = vmatprep.subr.bf16.mxu0 0
      %5708 = vmatpush1.bf16.msra.mxu0 0
      %5709 = vmatprep.subr.bf16.mxu0 0
      %5710 = vmatpush1.bf16.msra.mxu0 0
      %5711 = vmatprep.subr.bf16.mxu0 0
      %5712 = vmatpush1.bf16.msra.mxu0 0
      %5713 = vmatprep.subr.bf16.mxu0 0
      %5714 = vmatpush1.bf16.msra.mxu0 0
      %5715 = vmatprep.subr.bf16.mxu0 0
      %5716 = vmatpush1.bf16.msra.mxu0 0
      %5717 = vmatprep.subr.bf16.mxu0 0
      %5718 = vmatpush1.bf16.msra.mxu0 0
      %5719 = vmatprep.subr.bf16.mxu0 0
      %5720 = vmatpush1.bf16.msra.mxu0 0
      %5721 = vmatprep.subr.bf16.mxu0 0
      %5722 = vmatpush1.bf16.msra.mxu0 0
      %5723 = vmatprep.subr.bf16.mxu0 0
      %5724 = vmatpush1.bf16.msra.mxu0 0
      %5725 = vmatprep.subr.bf16.mxu0 0
      %5726 = vmatpush1.bf16.msra.mxu0 0
      %5727 = vmatprep.mubr.bf16.mxu0 0
      %5728 = vmatmul.mubr.bf16.gmra.mrb[0].mxu0 %v5684
      %v5729 = vpop.f32.mrb[0].mxu0
      %v5730 = vadd.f32 0.0, %v5729
      %v5731 = vpop.f32.mrb[0].mxu0
      %v5732 = vpop.f32.mrb[0].mxu0
      %v5733 = vadd.f32 0.0, %v5732
      %v5734 = vpop.f32.mrb[0].mxu0
      %5735 = vmatprep.mubr.bf16.mxu0 0
      %5736 = vmatmul.mubr.bf16.gmra.mrb[0].mxu0 %v5687
      %v5737 = vpop.f32.mrb[0].mxu0
      %v5738 = vadd.f32 0.0, %v5737
      %v5739 = vpop.f32.mrb[0].mxu0
      %v5740 = vpop.f32.mrb[0].mxu0
      %v5741 = vadd.f32 0.0, %v5740
      %v5742 = vpop.f32.mrb[0].mxu0
      %5743 = vmatprep.mubr.bf16.mxu0 0
      %5744 = vmatmul.mubr.bf16.gmra.mrb[0].mxu0 %v5690
      %v5745 = vpop.f32.mrb[0].mxu0
      %v5746 = vadd.f32 0.0, %v5745
      %v5747 = vpop.f32.mrb[0].mxu0
      %v5748 = vpop.f32.mrb[0].mxu0
      %v5749 = vadd.f32 0.0, %v5748
      %v5750 = vpop.f32.mrb[0].mxu0
      %5751 = vmatprep.mubr.bf16.mxu0 0
      %5752 = vmatmul.mubr.bf16.gmra.mrb[0].mxu0 %v5693
      %v5753 = vpop.f32.mrb[0].mxu0
      %v5754 = vadd.f32 0.0, %v5753
      %v5755 = vpop.f32.mrb[0].mxu0
      %v5756 = vpop.f32.mrb[0].mxu0
      %v5757 = vadd.f32 0.0, %v5756
      %v5758 = vpop.f32.mrb[0].mxu0
      %5759 = vdwg.mxu0
      %5760 = vst.msk [vmem:[#allocation4] sm:$0xff] %vm5682, 0.0
      %5761 = vst.msk [vmem:[#allocation4 + $0x8] sm:$0xff] %vm5682, 0.0
      %5762 = vst.msk [vmem:[#allocation4 + $0x50] sm:$0xff] %vm5682, 0.0
      %5763 = vst.msk [vmem:[#allocation4 + $0x58] sm:$0xff] %vm5682, 0.0
      %5764 = vst.msk [vmem:[#allocation4 + $0x10] sm:$0xff] %vm5682, %v5730
      %5765 = vst.msk [vmem:[#allocation4 + $0x18] sm:$0xff] %vm5682, %v5733
      %5766 = vst.msk [vmem:[#allocation4 + $0x20] sm:$0xff] %vm5682, %v5738
      %5767 = vst.msk [vmem:[#allocation4 + $0x28] sm:$0xff] %vm5682, %v5741
      %5768 = vst.msk [vmem:[#allocation4 + $0x30] sm:$0xff] %vm5682, %v5746
      %5769 = vst.msk [vmem:[#allocation4 + $0x38] sm:$0xff] %vm5682, %v5749
      %5770 = vst.msk [vmem:[#allocation4 + $0x40] sm:$0xff] %vm5682, %v5754
      %5771 = vst.msk [vmem:[#allocation4 + $0x48] sm:$0xff] %vm5682, %v5757
      %v5772 = vld [vmem:[#allocation4 + $0x7] sm:$0xff]
      %v5773 = vld [vmem:[#allocation4 + $0xf] sm:$0xff]
      %v5774 = vld [vmem:[#allocation4 + $0x17] sm:$0xff]
      %v5775 = vld [vmem:[#allocation4 + $0x1f] sm:$0xff]
      %v5776 = vld [vmem:[#allocation4 + $0x27] sm:$0xff]
      %v5777 = vld [vmem:[#allocation4 + $0x2f] sm:$0xff]
      %v5778 = vld [vmem:[#allocation4 + $0x37] sm:$0xff]
      %v5779 = vld [vmem:[#allocation4 + $0x3f] sm:$0xff]
      %v5780 = vsel %vm4446, %v5772, 0.0
      %v5781 = vsel %vm4447, %v5773, 0.0
      %v5782 = vsel %vm4448, %v5774, 0.0
      %v5783 = vsel %vm4449, %v5775, 0.0
      %v5784 = vsel %vm4450, %v5776, 0.0
      %v5785 = vsel %vm4451, %v5777, 0.0
      %v5786 = vsel %vm4452, %v5778, 0.0
      %v5787 = vsel %vm4453, %v5779, 0.0
      %v5788 = vpack.c.bf16 %v5781, %v5780
      %v5789 = vpack.c.bf16 %v5783, %v5782
      %v5790 = vpack.c.bf16 %v5785, %v5784
      %v5791 = vpack.c.bf16 %v5787, %v5786
      %v5792 = vld [vmem:[%s7] sm:$0xf]
      %v5793 = vld [vmem:[%s7 + $0x4] sm:$0xf]
      %v5794 = vld [vmem:[#allocation4 + $0x8] sm:$0xff]
      %v5795 = vld [vmem:[#allocation4 + $0x10] sm:$0xff]
      %v5796 = vld [vmem:[#allocation4 + $0x18] sm:$0xff]
      %v5797 = vld [vmem:[#allocation4 + $0x20] sm:$0xff]
      %v5798 = vld [vmem:[#allocation4 + $0x28] sm:$0xff]
      %v5799 = vld [vmem:[#allocation4 + $0x30] sm:$0xff]
      %v5800 = vld [vmem:[#allocation4 + $0x38] sm:$0xff]
      %v5801 = vld [vmem:[#allocation4 + $0x40] sm:$0xff]
      %v5802 = vpack.c.bf16 %v5795, %v5794
      %v5803 = vpack.c.bf16 %v5797, %v5796
      %v5804 = vpack.c.bf16 %v5799, %v5798
      %v5805 = vpack.c.bf16 %v5801, %v5800
      %s5806 = scalar_lea.vmem %s7, 8
      %v5807 = vld [vmem:[%s5806] sm:$0xf]
      %v5808 = vld [vmem:[%s5806 + $0x4] sm:$0xf]
      %v5811 = vunpack.c.l.b16 %v5807
      %v5812 = vunpack.c.l.b16 %v5808
      %v5813 = vpack.c.b16 %v5812, %v5811
      %v5816 = vsel %vm5682, %v5802, 0
      %v5819 = vsel %vm5682, %v5803, 0
      %v5822 = vsel %vm5682, %v5804, 0
      %v5825 = vsel %vm5682, %v5805, 0
      %5827 = vmatprep.subr.bf16.mxu0 0
      %5828 = vmatpush1.bf16.msra.mxu0 %v5813
      %5829 = vmatprep.subr.bf16.mxu0 0
      %5830 = vmatpush1.bf16.msra.mxu0 0
      %5831 = vmatprep.subr.bf16.mxu0 0
      %5832 = vmatpush1.bf16.msra.mxu0 0
      %5833 = vmatprep.subr.bf16.mxu0 0
      %5834 = vmatpush1.bf16.msra.mxu0 0
      %5835 = vmatprep.subr.bf16.mxu0 0
      %5836 = vmatpush1.bf16.msra.mxu0 0
      %5837 = vmatprep.subr.bf16.mxu0 0
      %5838 = vmatpush1.bf16.msra.mxu0 0
      %5839 = vmatprep.subr.bf16.mxu0 0
      %5840 = vmatpush1.bf16.msra.mxu0 0
      %5841 = vmatprep.subr.bf16.mxu0 0
      %5842 = vmatpush1.bf16.msra.mxu0 0
      %5843 = vmatprep.subr.bf16.mxu0 0
      %5844 = vmatpush1.bf16.msra.mxu0 0
      %5845 = vmatprep.subr.bf16.mxu0 0
      %5846 = vmatpush1.bf16.msra.mxu0 0
      %5847 = vmatprep.subr.bf16.mxu0 0
      %5848 = vmatpush1.bf16.msra.mxu0 0
      %5849 = vmatprep.subr.bf16.mxu0 0
      %5850 = vmatpush1.bf16.msra.mxu0 0
      %5851 = vmatprep.subr.bf16.mxu0 0
      %5852 = vmatpush1.bf16.msra.mxu0 0
      %5853 = vmatprep.subr.bf16.mxu0 0
      %5854 = vmatpush1.bf16.msra.mxu0 0
      %5855 = vmatprep.subr.bf16.mxu0 0
      %5856 = vmatpush1.bf16.msra.mxu0 0
      %5857 = vmatprep.subr.bf16.mxu0 0
      %5858 = vmatpush1.bf16.msra.mxu0 0
      %5859 = vmatprep.mubr.bf16.mxu0 0
      %5860 = vmatmul.mubr.bf16.gmra.mrb[0].mxu0 %v5816
      %v5861 = vpop.f32.mrb[0].mxu0
      %v5862 = vadd.f32 0.0, %v5861
      %v5863 = vpop.f32.mrb[0].mxu0
      %v5864 = vpop.f32.mrb[0].mxu0
      %v5865 = vadd.f32 0.0, %v5864
      %v5866 = vpop.f32.mrb[0].mxu0
      %5867 = vmatprep.mubr.bf16.mxu0 0
      %5868 = vmatmul.mubr.bf16.gmra.mrb[0].mxu0 %v5819
      %v5869 = vpop.f32.mrb[0].mxu0
      %v5870 = vadd.f32 0.0, %v5869
      %v5871 = vpop.f32.mrb[0].mxu0
      %v5872 = vpop.f32.mrb[0].mxu0
      %v5873 = vadd.f32 0.0, %v5872
      %v5874 = vpop.f32.mrb[0].mxu0
      %5875 = vmatprep.mubr.bf16.mxu0 0
      %5876 = vmatmul.mubr.bf16.gmra.mrb[0].mxu0 %v5822
      %v5877 = vpop.f32.mrb[0].mxu0
      %v5878 = vadd.f32 0.0, %v5877
      %v5879 = vpop.f32.mrb[0].mxu0
      %v5880 = vpop.f32.mrb[0].mxu0
      %v5881 = vadd.f32 0.0, %v5880
      %v5882 = vpop.f32.mrb[0].mxu0
      %5883 = vmatprep.mubr.bf16.mxu0 0
      %5884 = vmatmul.mubr.bf16.gmra.mrb[0].mxu0 %v5825
      %v5885 = vpop.f32.mrb[0].mxu0
      %v5886 = vadd.f32 0.0, %v5885
      %v5887 = vpop.f32.mrb[0].mxu0
      %v5888 = vpop.f32.mrb[0].mxu0
      %v5889 = vadd.f32 0.0, %v5888
      %v5890 = vpop.f32.mrb[0].mxu0
      %5891 = vdwg.mxu0
      %v5894 = vunpack.c.l.b16 %v5792
      %v5895 = vunpack.c.l.b16 %v5793
      %v5896 = vpack.c.b16 %v5895, %v5894
      %v5899 = vsel %vm5682, %v5788, 0
      %v5902 = vsel %vm5682, %v5789, 0
      %v5905 = vsel %vm5682, %v5790, 0
      %v5908 = vsel %vm5682, %v5791, 0
      %5910 = vmatprep.subr.bf16.mxu0 0
      %5911 = vmatpush1.bf16.msra.mxu0 %v5896
      %5912 = vmatprep.subr.bf16.mxu0 0
      %5913 = vmatpush1.bf16.msra.mxu0 0
      %5914 = vmatprep.subr.bf16.mxu0 0
      %5915 = vmatpush1.bf16.msra.mxu0 0
      %5916 = vmatprep.subr.bf16.mxu0 0
      %5917 = vmatpush1.bf16.msra.mxu0 0
      %5918 = vmatprep.subr.bf16.mxu0 0
      %5919 = vmatpush1.bf16.msra.mxu0 0
      %5920 = vmatprep.subr.bf16.mxu0 0
      %5921 = vmatpush1.bf16.msra.mxu0 0
      %5922 = vmatprep.subr.bf16.mxu0 0
      %5923 = vmatpush1.bf16.msra.mxu0 0
      %5924 = vmatprep.subr.bf16.mxu0 0
      %5925 = vmatpush1.bf16.msra.mxu0 0
      %5926 = vmatprep.subr.bf16.mxu0 0
      %5927 = vmatpush1.bf16.msra.mxu0 0
      %5928 = vmatprep.subr.bf16.mxu0 0
      %5929 = vmatpush1.bf16.msra.mxu0 0
      %5930 = vmatprep.subr.bf16.mxu0 0
      %5931 = vmatpush1.bf16.msra.mxu0 0
      %5932 = vmatprep.subr.bf16.mxu0 0
      %5933 = vmatpush1.bf16.msra.mxu0 0
      %5934 = vmatprep.subr.bf16.mxu0 0
      %5935 = vmatpush1.bf16.msra.mxu0 0
      %5936 = vmatprep.subr.bf16.mxu0 0
      %5937 = vmatpush1.bf16.msra.mxu0 0
      %5938 = vmatprep.subr.bf16.mxu0 0
      %5939 = vmatpush1.bf16.msra.mxu0 0
      %5940 = vmatprep.subr.bf16.mxu0 0
      %5941 = vmatpush1.bf16.msra.mxu0 0
      %5942 = vmatprep.mubr.bf16.mxu0 0
      %5943 = vmatmul.mubr.bf16.gmra.mrb[0].mxu0 %v5899
      %v5944 = vpop.f32.mrb[0].mxu0
      %v5945 = vadd.f32 %v5862, %v5944
      %v5946 = vpop.f32.mrb[0].mxu0
      %v5947 = vpop.f32.mrb[0].mxu0
      %v5948 = vadd.f32 %v5865, %v5947
      %v5949 = vpop.f32.mrb[0].mxu0
      %5950 = vmatprep.mubr.bf16.mxu0 0
      %5951 = vmatmul.mubr.bf16.gmra.mrb[0].mxu0 %v5902
      %v5952 = vpop.f32.mrb[0].mxu0
      %v5953 = vadd.f32 %v5870, %v5952
      %v5954 = vpop.f32.mrb[0].mxu0
      %v5955 = vpop.f32.mrb[0].mxu0
      %v5956 = vadd.f32 %v5873, %v5955
      %v5957 = vpop.f32.mrb[0].mxu0
      %5958 = vmatprep.mubr.bf16.mxu0 0
      %5959 = vmatmul.mubr.bf16.gmra.mrb[0].mxu0 %v5905
      %v5960 = vpop.f32.mrb[0].mxu0
      %v5961 = vadd.f32 %v5878, %v5960
      %v5962 = vpop.f32.mrb[0].mxu0
      %v5963 = vpop.f32.mrb[0].mxu0
      %v5964 = vadd.f32 %v5881, %v5963
      %v5965 = vpop.f32.mrb[0].mxu0
      %5966 = vmatprep.mubr.bf16.mxu0 0
      %5967 = vmatmul.mubr.bf16.gmra.mrb[0].mxu0 %v5908
      %v5968 = vpop.f32.mrb[0].mxu0
      %v5969 = vadd.f32 %v5886, %v5968
      %v5970 = vpop.f32.mrb[0].mxu0
      %v5971 = vpop.f32.mrb[0].mxu0
      %v5972 = vadd.f32 %v5889, %v5971
      %v5973 = vpop.f32.mrb[0].mxu0
      %5974 = vdwg.mxu0
      %v5975 = vld [vmem:[#allocation4 + $0x9] sm:$0xff]
      %v5976 = vld [vmem:[#allocation4 + $0x11] sm:$0xff]
      %v5977 = vld [vmem:[#allocation4 + $0x19] sm:$0xff]
      %v5978 = vld [vmem:[#allocation4 + $0x21] sm:$0xff]
      %v5979 = vld [vmem:[#allocation4 + $0x29] sm:$0xff]
      %v5980 = vld [vmem:[#allocation4 + $0x31] sm:$0xff]
      %v5981 = vld [vmem:[#allocation4 + $0x39] sm:$0xff]
      %v5982 = vld [vmem:[#allocation4 + $0x41] sm:$0xff]
      %v5983 = vsel %vm4454, %v5975, 0.0
      %v5984 = vsel %vm4455, %v5976, 0.0
      %v5985 = vsel %vm4456, %v5977, 0.0
      %v5986 = vsel %vm4457, %v5978, 0.0
      %v5987 = vsel %vm4458, %v5979, 0.0
      %v5988 = vsel %vm4459, %v5980, 0.0
      %v5989 = vsel %vm4460, %v5981, 0.0
      %v5990 = vsel %vm4461, %v5982, 0.0
      %v5991 = vpack.c.bf16 %v5984, %v5983
      %v5992 = vpack.c.bf16 %v5986, %v5985
      %v5993 = vpack.c.bf16 %v5988, %v5987
      %v5994 = vpack.c.bf16 %v5990, %v5989
      %s5995 = scalar_lea.vmem %s7, 16
      %v5996 = vld [vmem:[%s5995] sm:$0xf]
      %v5997 = vld [vmem:[%s5995 + $0x4] sm:$0xf]
      %v6000 = vunpack.c.l.b16 %v5996
      %v6001 = vunpack.c.l.b16 %v5997
      %v6002 = vpack.c.b16 %v6001, %v6000
      %v6005 = vsel %vm5682, %v5991, 0
      %v6008 = vsel %vm5682, %v5992, 0
      %v6011 = vsel %vm5682, %v5993, 0
      %v6014 = vsel %vm5682, %v5994, 0
      %6016 = vmatprep.subr.bf16.mxu0 0
      %6017 = vmatpush1.bf16.msra.mxu0 %v6002
      %6018 = vmatprep.subr.bf16.mxu0 0
      %6019 = vmatpush1.bf16.msra.mxu0 0
      %6020 = vmatprep.subr.bf16.mxu0 0
      %6021 = vmatpush1.bf16.msra.mxu0 0
      %6022 = vmatprep.subr.bf16.mxu0 0
      %6023 = vmatpush1.bf16.msra.mxu0 0
      %6024 = vmatprep.subr.bf16.mxu0 0
      %6025 = vmatpush1.bf16.msra.mxu0 0
      %6026 = vmatprep.subr.bf16.mxu0 0
      %6027 = vmatpush1.bf16.msra.mxu0 0
      %6028 = vmatprep.subr.bf16.mxu0 0
      %6029 = vmatpush1.bf16.msra.mxu0 0
      %6030 = vmatprep.subr.bf16.mxu0 0
      %6031 = vmatpush1.bf16.msra.mxu0 0
      %6032 = vmatprep.subr.bf16.mxu0 0
      %6033 = vmatpush1.bf16.msra.mxu0 0
      %6034 = vmatprep.subr.bf16.mxu0 0
      %6035 = vmatpush1.bf16.msra.mxu0 0
      %6036 = vmatprep.subr.bf16.mxu0 0
      %6037 = vmatpush1.bf16.msra.mxu0 0
      %6038 = vmatprep.subr.bf16.mxu0 0
      %6039 = vmatpush1.bf16.msra.mxu0 0
      %6040 = vmatprep.subr.bf16.mxu0 0
      %6041 = vmatpush1.bf16.msra.mxu0 0
      %6042 = vmatprep.subr.bf16.mxu0 0
      %6043 = vmatpush1.bf16.msra.mxu0 0
      %6044 = vmatprep.subr.bf16.mxu0 0
      %6045 = vmatpush1.bf16.msra.mxu0 0
      %6046 = vmatprep.subr.bf16.mxu0 0
      %6047 = vmatpush1.bf16.msra.mxu0 0
      %6048 = vmatprep.mubr.bf16.mxu0 0
      %6049 = vmatmul.mubr.bf16.gmra.mrb[0].mxu0 %v6005
      %v6050 = vpop.f32.mrb[0].mxu0
      %v6051 = vadd.f32 0.0, %v6050
      %v6052 = vpop.f32.mrb[0].mxu0
      %v6053 = vpop.f32.mrb[0].mxu0
      %v6054 = vadd.f32 0.0, %v6053
      %v6055 = vpop.f32.mrb[0].mxu0
      %6056 = vmatprep.mubr.bf16.mxu0 0
      %6057 = vmatmul.mubr.bf16.gmra.mrb[0].mxu0 %v6008
      %v6058 = vpop.f32.mrb[0].mxu0
      %v6059 = vadd.f32 0.0, %v6058
      %v6060 = vpop.f32.mrb[0].mxu0
      %v6061 = vpop.f32.mrb[0].mxu0
      %v6062 = vadd.f32 0.0, %v6061
      %v6063 = vpop.f32.mrb[0].mxu0
      %6064 = vmatprep.mubr.bf16.mxu0 0
      %6065 = vmatmul.mubr.bf16.gmra.mrb[0].mxu0 %v6011
      %v6066 = vpop.f32.mrb[0].mxu0
      %v6067 = vadd.f32 0.0, %v6066
      %v6068 = vpop.f32.mrb[0].mxu0
      %v6069 = vpop.f32.mrb[0].mxu0
      %v6070 = vadd.f32 0.0, %v6069
      %v6071 = vpop.f32.mrb[0].mxu0
      %6072 = vmatprep.mubr.bf16.mxu0 0
      %6073 = vmatmul.mubr.bf16.gmra.mrb[0].mxu0 %v6014
      %v6074 = vpop.f32.mrb[0].mxu0
      %v6075 = vadd.f32 0.0, %v6074
      %v6076 = vpop.f32.mrb[0].mxu0
      %v6077 = vpop.f32.mrb[0].mxu0
      %v6078 = vadd.f32 0.0, %v6077
      %v6079 = vpop.f32.mrb[0].mxu0
      %6080 = vdwg.mxu0
      %v6081 = vadd.f32 %v5945, %v6051
      %v6082 = vadd.f32 %v5948, %v6054
      %v6083 = vadd.f32 %v5953, %v6059
      %v6084 = vadd.f32 %v5956, %v6062
      %v6085 = vadd.f32 %v5961, %v6067
      %v6086 = vadd.f32 %v5964, %v6070
      %v6087 = vadd.f32 %v5969, %v6075
      %v6088 = vadd.f32 %v5972, %v6078
      %v6089 = vld [vmem:[#allocation4 + $0xf] sm:$0xff]
      %v6090 = vld [vmem:[#allocation4 + $0x17] sm:$0xff]
      %v6091 = vld [vmem:[#allocation4 + $0x1f] sm:$0xff]
      %v6092 = vld [vmem:[#allocation4 + $0x27] sm:$0xff]
      %v6093 = vld [vmem:[#allocation4 + $0x2f] sm:$0xff]
      %v6094 = vld [vmem:[#allocation4 + $0x37] sm:$0xff]
      %v6095 = vld [vmem:[#allocation4 + $0x3f] sm:$0xff]
      %v6096 = vld [vmem:[#allocation4 + $0x47] sm:$0xff]
      %v6097 = vsel %vm4446, %v6089, 0.0
      %v6098 = vsel %vm4447, %v6090, 0.0
      %v6099 = vsel %vm4448, %v6091, 0.0
      %v6100 = vsel %vm4449, %v6092, 0.0
      %v6101 = vsel %vm4450, %v6093, 0.0
      %v6102 = vsel %vm4451, %v6094, 0.0
      %v6103 = vsel %vm4452, %v6095, 0.0
      %v6104 = vsel %vm4453, %v6096, 0.0
      %v6105 = vpack.c.bf16 %v6098, %v6097
      %v6106 = vpack.c.bf16 %v6100, %v6099
      %v6107 = vpack.c.bf16 %v6102, %v6101
      %v6108 = vpack.c.bf16 %v6104, %v6103
      %s6109 = scalar_lea.vmem %s7, 24
      %v6110 = vld [vmem:[%s6109] sm:$0xf]
      %v6111 = vld [vmem:[%s6109 + $0x4] sm:$0xf]
      %v6114 = vunpack.c.l.b16 %v6110
      %v6115 = vunpack.c.l.b16 %v6111
      %v6116 = vpack.c.b16 %v6115, %v6114
      %v6119 = vsel %vm5682, %v6105, 0
      %v6122 = vsel %vm5682, %v6106, 0
      %v6125 = vsel %vm5682, %v6107, 0
      %v6128 = vsel %vm5682, %v6108, 0
      %6130 = vmatprep.subr.bf16.mxu0 0
      %6131 = vmatpush1.bf16.msra.mxu0 %v6116
      %6132 = vmatprep.subr.bf16.mxu0 0
      %6133 = vmatpush1.bf16.msra.mxu0 0
      %6134 = vmatprep.subr.bf16.mxu0 0
      %6135 = vmatpush1.bf16.msra.mxu0 0
      %6136 = vmatprep.subr.bf16.mxu0 0
      %6137 = vmatpush1.bf16.msra.mxu0 0
      %6138 = vmatprep.subr.bf16.mxu0 0
      %6139 = vmatpush1.bf16.msra.mxu0 0
      %6140 = vmatprep.subr.bf16.mxu0 0
      %6141 = vmatpush1.bf16.msra.mxu0 0
      %6142 = vmatprep.subr.bf16.mxu0 0
      %6143 = vmatpush1.bf16.msra.mxu0 0
      %6144 = vmatprep.subr.bf16.mxu0 0
      %6145 = vmatpush1.bf16.msra.mxu0 0
      %6146 = vmatprep.subr.bf16.mxu0 0
      %6147 = vmatpush1.bf16.msra.mxu0 0
      %6148 = vmatprep.subr.bf16.mxu0 0
      %6149 = vmatpush1.bf16.msra.mxu0 0
      %6150 = vmatprep.subr.bf16.mxu0 0
      %6151 = vmatpush1.bf16.msra.mxu0 0
      %6152 = vmatprep.subr.bf16.mxu0 0
      %6153 = vmatpush1.bf16.msra.mxu0 0
      %6154 = vmatprep.subr.bf16.mxu0 0
      %6155 = vmatpush1.bf16.msra.mxu0 0
      %6156 = vmatprep.subr.bf16.mxu0 0
      %6157 = vmatpush1.bf16.msra.mxu0 0
      %6158 = vmatprep.subr.bf16.mxu0 0
      %6159 = vmatpush1.bf16.msra.mxu0 0
      %6160 = vmatprep.subr.bf16.mxu0 0
      %6161 = vmatpush1.bf16.msra.mxu0 0
      %6162 = vmatprep.mubr.bf16.mxu0 0
      %6163 = vmatmul.mubr.bf16.gmra.mrb[0].mxu0 %v6119
      %v6164 = vpop.f32.mrb[0].mxu0
      %v6165 = vadd.f32 0.0, %v6164
      %v6166 = vpop.f32.mrb[0].mxu0
      %v6167 = vpop.f32.mrb[0].mxu0
      %v6168 = vadd.f32 0.0, %v6167
      %v6169 = vpop.f32.mrb[0].mxu0
      %6170 = vmatprep.mubr.bf16.mxu0 0
      %6171 = vmatmul.mubr.bf16.gmra.mrb[0].mxu0 %v6122
      %v6172 = vpop.f32.mrb[0].mxu0
      %v6173 = vadd.f32 0.0, %v6172
      %v6174 = vpop.f32.mrb[0].mxu0
      %v6175 = vpop.f32.mrb[0].mxu0
      %v6176 = vadd.f32 0.0, %v6175
      %v6177 = vpop.f32.mrb[0].mxu0
      %6178 = vmatprep.mubr.bf16.mxu0 0
      %6179 = vmatmul.mubr.bf16.gmra.mrb[0].mxu0 %v6125
      %v6180 = vpop.f32.mrb[0].mxu0
      %v6181 = vadd.f32 0.0, %v6180
      %v6182 = vpop.f32.mrb[0].mxu0
      %v6183 = vpop.f32.mrb[0].mxu0
      %v6184 = vadd.f32 0.0, %v6183
      %v6185 = vpop.f32.mrb[0].mxu0
      %6186 = vmatprep.mubr.bf16.mxu0 0
      %6187 = vmatmul.mubr.bf16.gmra.mrb[0].mxu0 %v6128
      %v6188 = vpop.f32.mrb[0].mxu0
      %v6189 = vadd.f32 0.0, %v6188
      %v6190 = vpop.f32.mrb[0].mxu0
      %v6191 = vpop.f32.mrb[0].mxu0
      %v6192 = vadd.f32 0.0, %v6191
      %v6193 = vpop.f32.mrb[0].mxu0
      %6194 = vdwg.mxu0
      %v6195 = vadd.f32 %v6081, %v6165
      %v6196 = vadd.f32 %v6082, %v6168
      %v6197 = vadd.f32 %v6083, %v6173
      %v6198 = vadd.f32 %v6084, %v6176
      %v6199 = vadd.f32 %v6085, %v6181
      %v6200 = vadd.f32 %v6086, %v6184
      %v6201 = vadd.f32 %v6087, %v6189
      %v6202 = vadd.f32 %v6088, %v6192
      %v6203 = vld [vmem:[#allocation4 + $0x10] sm:$0xff]
      %v6204 = vld [vmem:[#allocation4 + $0x18] sm:$0xff]
      %v6205 = vld [vmem:[#allocation4 + $0x20] sm:$0xff]
      %v6206 = vld [vmem:[#allocation4 + $0x28] sm:$0xff]
      %v6207 = vld [vmem:[#allocation4 + $0x30] sm:$0xff]
      %v6208 = vld [vmem:[#allocation4 + $0x38] sm:$0xff]
      %v6209 = vld [vmem:[#allocation4 + $0x40] sm:$0xff]
      %v6210 = vld [vmem:[#allocation4 + $0x48] sm:$0xff]
      %v6211 = vpack.c.bf16 %v6204, %v6203
      %v6212 = vpack.c.bf16 %v6206, %v6205
      %v6213 = vpack.c.bf16 %v6208, %v6207
      %v6214 = vpack.c.bf16 %v6210, %v6209
      %s6215 = scalar_lea.vmem %s7, 32
      %v6216 = vld [vmem:[%s6215] sm:$0xf]
      %v6217 = vld [vmem:[%s6215 + $0x4] sm:$0xf]
      %v6220 = vunpack.c.l.b16 %v6216
      %v6221 = vunpack.c.l.b16 %v6217
      %v6222 = vpack.c.b16 %v6221, %v6220
      %v6225 = vsel %vm5682, %v6211, 0
      %v6228 = vsel %vm5682, %v6212, 0
      %v6231 = vsel %vm5682, %v6213, 0
      %v6234 = vsel %vm5682, %v6214, 0
      %6236 = vmatprep.subr.bf16.mxu0 0
      %6237 = vmatpush1.bf16.msra.mxu0 %v6222
      %6238 = vmatprep.subr.bf16.mxu0 0
      %6239 = vmatpush1.bf16.msra.mxu0 0
      %6240 = vmatprep.subr.bf16.mxu0 0
      %6241 = vmatpush1.bf16.msra.mxu0 0
      %6242 = vmatprep.subr.bf16.mxu0 0
      %6243 = vmatpush1.bf16.msra.mxu0 0
      %6244 = vmatprep.subr.bf16.mxu0 0
      %6245 = vmatpush1.bf16.msra.mxu0 0
      %6246 = vmatprep.subr.bf16.mxu0 0
      %6247 = vmatpush1.bf16.msra.mxu0 0
      %6248 = vmatprep.subr.bf16.mxu0 0
      %6249 = vmatpush1.bf16.msra.mxu0 0
      %6250 = vmatprep.subr.bf16.mxu0 0
      %6251 = vmatpush1.bf16.msra.mxu0 0
      %6252 = vmatprep.subr.bf16.mxu0 0
      %6253 = vmatpush1.bf16.msra.mxu0 0
      %6254 = vmatprep.subr.bf16.mxu0 0
      %6255 = vmatpush1.bf16.msra.mxu0 0
      %6256 = vmatprep.subr.bf16.mxu0 0
      %6257 = vmatpush1.bf16.msra.mxu0 0
      %6258 = vmatprep.subr.bf16.mxu0 0
      %6259 = vmatpush1.bf16.msra.mxu0 0
      %6260 = vmatprep.subr.bf16.mxu0 0
      %6261 = vmatpush1.bf16.msra.mxu0 0
      %6262 = vmatprep.subr.bf16.mxu0 0
      %6263 = vmatpush1.bf16.msra.mxu0 0
      %6264 = vmatprep.subr.bf16.mxu0 0
      %6265 = vmatpush1.bf16.msra.mxu0 0
      %6266 = vmatprep.subr.bf16.mxu0 0
      %6267 = vmatpush1.bf16.msra.mxu0 0
      %6268 = vmatprep.mubr.bf16.mxu0 0
      %6269 = vmatmul.mubr.bf16.gmra.mrb[0].mxu0 %v6225
      %v6270 = vpop.f32.mrb[0].mxu0
      %v6271 = vadd.f32 0.0, %v6270
      %v6272 = vpop.f32.mrb[0].mxu0
      %v6273 = vpop.f32.mrb[0].mxu0
      %v6274 = vadd.f32 0.0, %v6273
      %v6275 = vpop.f32.mrb[0].mxu0
      %6276 = vmatprep.mubr.bf16.mxu0 0
      %6277 = vmatmul.mubr.bf16.gmra.mrb[0].mxu0 %v6228
      %v6278 = vpop.f32.mrb[0].mxu0
      %v6279 = vadd.f32 0.0, %v6278
      %v6280 = vpop.f32.mrb[0].mxu0
      %v6281 = vpop.f32.mrb[0].mxu0
      %v6282 = vadd.f32 0.0, %v6281
      %v6283 = vpop.f32.mrb[0].mxu0
      %6284 = vmatprep.mubr.bf16.mxu0 0
      %6285 = vmatmul.mubr.bf16.gmra.mrb[0].mxu0 %v6231
      %v6286 = vpop.f32.mrb[0].mxu0
      %v6287 = vadd.f32 0.0, %v6286
      %v6288 = vpop.f32.mrb[0].mxu0
      %v6289 = vpop.f32.mrb[0].mxu0
      %v6290 = vadd.f32 0.0, %v6289
      %v6291 = vpop.f32.mrb[0].mxu0
      %6292 = vmatprep.mubr.bf16.mxu0 0
      %6293 = vmatmul.mubr.bf16.gmra.mrb[0].mxu0 %v6234
      %v6294 = vpop.f32.mrb[0].mxu0
      %v6295 = vadd.f32 0.0, %v6294
      %v6296 = vpop.f32.mrb[0].mxu0
      %v6297 = vpop.f32.mrb[0].mxu0
      %v6298 = vadd.f32 0.0, %v6297
      %v6299 = vpop.f32.mrb[0].mxu0
      %6300 = vdwg.mxu0
      %v6301 = vadd.f32 %v6195, %v6271
      %v6302 = vadd.f32 %v6196, %v6274
      %v6303 = vadd.f32 %v6197, %v6279
      %v6304 = vadd.f32 %v6198, %v6282
      %v6305 = vadd.f32 %v6199, %v6287
      %v6306 = vadd.f32 %v6200, %v6290
      %v6307 = vadd.f32 %v6201, %v6295
      %v6308 = vadd.f32 %v6202, %v6298
      %v6309 = vld [vmem:[#allocation4 + $0x11] sm:$0xff]
      %v6310 = vld [vmem:[#allocation4 + $0x19] sm:$0xff]
      %v6311 = vld [vmem:[#allocation4 + $0x21] sm:$0xff]
      %v6312 = vld [vmem:[#allocation4 + $0x29] sm:$0xff]
      %v6313 = vld [vmem:[#allocation4 + $0x31] sm:$0xff]
      %v6314 = vld [vmem:[#allocation4 + $0x39] sm:$0xff]
      %v6315 = vld [vmem:[#allocation4 + $0x41] sm:$0xff]
      %v6316 = vld [vmem:[#allocation4 + $0x49] sm:$0xff]
      %v6317 = vsel %vm4454, %v6309, 0.0
      %v6318 = vsel %vm4455, %v6310, 0.0
      %v6319 = vsel %vm4456, %v6311, 0.0
      %v6320 = vsel %vm4457, %v6312, 0.0
      %v6321 = vsel %vm4458, %v6313, 0.0
      %v6322 = vsel %vm4459, %v6314, 0.0
      %v6323 = vsel %vm4460, %v6315, 0.0
      %v6324 = vsel %vm4461, %v6316, 0.0
      %v6325 = vpack.c.bf16 %v6318, %v6317
      %v6326 = vpack.c.bf16 %v6320, %v6319
      %v6327 = vpack.c.bf16 %v6322, %v6321
      %v6328 = vpack.c.bf16 %v6324, %v6323
      %s6329 = scalar_lea.vmem %s7, 40
      %v6330 = vld [vmem:[%s6329] sm:$0xf]
      %v6331 = vld [vmem:[%s6329 + $0x4] sm:$0xf]
      %v6334 = vunpack.c.l.b16 %v6330
      %v6335 = vunpack.c.l.b16 %v6331
      %v6336 = vpack.c.b16 %v6335, %v6334
      %v6339 = vsel %vm5682, %v6325, 0
      %v6342 = vsel %vm5682, %v6326, 0
      %v6345 = vsel %vm5682, %v6327, 0
      %v6348 = vsel %vm5682, %v6328, 0
      %6350 = vmatprep.subr.bf16.mxu0 0
      %6351 = vmatpush1.bf16.msra.mxu0 %v6336
      %6352 = vmatprep.subr.bf16.mxu0 0
      %6353 = vmatpush1.bf16.msra.mxu0 0
      %6354 = vmatprep.subr.bf16.mxu0 0
      %6355 = vmatpush1.bf16.msra.mxu0 0
      %6356 = vmatprep.subr.bf16.mxu0 0
      %6357 = vmatpush1.bf16.msra.mxu0 0
      %6358 = vmatprep.subr.bf16.mxu0 0
      %6359 = vmatpush1.bf16.msra.mxu0 0
      %6360 = vmatprep.subr.bf16.mxu0 0
      %6361 = vmatpush1.bf16.msra.mxu0 0
      %6362 = vmatprep.subr.bf16.mxu0 0
      %6363 = vmatpush1.bf16.msra.mxu0 0
      %6364 = vmatprep.subr.bf16.mxu0 0
      %6365 = vmatpush1.bf16.msra.mxu0 0
      %6366 = vmatprep.subr.bf16.mxu0 0
      %6367 = vmatpush1.bf16.msra.mxu0 0
      %6368 = vmatprep.subr.bf16.mxu0 0
      %6369 = vmatpush1.bf16.msra.mxu0 0
      %6370 = vmatprep.subr.bf16.mxu0 0
      %6371 = vmatpush1.bf16.msra.mxu0 0
      %6372 = vmatprep.subr.bf16.mxu0 0
      %6373 = vmatpush1.bf16.msra.mxu0 0
      %6374 = vmatprep.subr.bf16.mxu0 0
      %6375 = vmatpush1.bf16.msra.mxu0 0
      %6376 = vmatprep.subr.bf16.mxu0 0
      %6377 = vmatpush1.bf16.msra.mxu0 0
      %6378 = vmatprep.subr.bf16.mxu0 0
      %6379 = vmatpush1.bf16.msra.mxu0 0
      %6380 = vmatprep.subr.bf16.mxu0 0
      %6381 = vmatpush1.bf16.msra.mxu0 0
      %6382 = vmatprep.mubr.bf16.mxu0 0
      %6383 = vmatmul.mubr.bf16.gmra.mrb[0].mxu0 %v6339
      %v6384 = vpop.f32.mrb[0].mxu0
      %v6385 = vadd.f32 0.0, %v6384
      %v6386 = vpop.f32.mrb[0].mxu0
      %v6387 = vpop.f32.mrb[0].mxu0
      %v6388 = vadd.f32 0.0, %v6387
      %v6389 = vpop.f32.mrb[0].mxu0
      %6390 = vmatprep.mubr.bf16.mxu0 0
      %6391 = vmatmul.mubr.bf16.gmra.mrb[0].mxu0 %v6342
      %v6392 = vpop.f32.mrb[0].mxu0
      %v6393 = vadd.f32 0.0, %v6392
      %v6394 = vpop.f32.mrb[0].mxu0
      %v6395 = vpop.f32.mrb[0].mxu0
      %v6396 = vadd.f32 0.0, %v6395
      %v6397 = vpop.f32.mrb[0].mxu0
      %6398 = vmatprep.mubr.bf16.mxu0 0
      %6399 = vmatmul.mubr.bf16.gmra.mrb[0].mxu0 %v6345
      %v6400 = vpop.f32.mrb[0].mxu0
      %v6401 = vadd.f32 0.0, %v6400
      %v6402 = vpop.f32.mrb[0].mxu0
      %v6403 = vpop.f32.mrb[0].mxu0
      %v6404 = vadd.f32 0.0, %v6403
      %v6405 = vpop.f32.mrb[0].mxu0
      %6406 = vmatprep.mubr.bf16.mxu0 0
      %6407 = vmatmul.mubr.bf16.gmra.mrb[0].mxu0 %v6348
      %v6408 = vpop.f32.mrb[0].mxu0
      %v6409 = vadd.f32 0.0, %v6408
      %v6410 = vpop.f32.mrb[0].mxu0
      %v6411 = vpop.f32.mrb[0].mxu0
      %v6412 = vadd.f32 0.0, %v6411
      %v6413 = vpop.f32.mrb[0].mxu0
      %6414 = vdwg.mxu0
      %v6415 = vadd.f32 %v6301, %v6385
      %v6416 = vadd.f32 %v6302, %v6388
      %v6417 = vadd.f32 %v6303, %v6393
      %v6418 = vadd.f32 %v6304, %v6396
      %v6419 = vadd.f32 %v6305, %v6401
      %v6420 = vadd.f32 %v6306, %v6404
      %v6421 = vadd.f32 %v6307, %v6409
      %v6422 = vadd.f32 %v6308, %v6412
      %v6423 = vld [vmem:[#allocation4 + $0x17] sm:$0xff]
      %v6424 = vld [vmem:[#allocation4 + $0x1f] sm:$0xff]
      %v6425 = vld [vmem:[#allocation4 + $0x27] sm:$0xff]
      %v6426 = vld [vmem:[#allocation4 + $0x2f] sm:$0xff]
      %v6427 = vld [vmem:[#allocation4 + $0x37] sm:$0xff]
      %v6428 = vld [vmem:[#allocation4 + $0x3f] sm:$0xff]
      %v6429 = vld [vmem:[#allocation4 + $0x47] sm:$0xff]
      %v6430 = vld [vmem:[#allocation4 + $0x4f] sm:$0xff]
      %v6431 = vsel %vm4446, %v6423, 0.0
      %v6432 = vsel %vm4447, %v6424, 0.0
      %v6433 = vsel %vm4448, %v6425, 0.0
      %v6434 = vsel %vm4449, %v6426, 0.0
      %v6435 = vsel %vm4450, %v6427, 0.0
      %v6436 = vsel %vm4451, %v6428, 0.0
      %v6437 = vsel %vm4452, %v6429, 0.0
      %v6438 = vsel %vm4453, %v6430, 0.0
      %v6439 = vpack.c.bf16 %v6432, %v6431
      %v6440 = vpack.c.bf16 %v6434, %v6433
      %v6441 = vpack.c.bf16 %v6436, %v6435
      %v6442 = vpack.c.bf16 %v6438, %v6437
      %s6443 = scalar_lea.vmem %s7, 48
      %v6444 = vld [vmem:[%s6443] sm:$0xf]
      %v6445 = vld [vmem:[%s6443 + $0x4] sm:$0xf]
      %v6448 = vunpack.c.l.b16 %v6444
      %v6449 = vunpack.c.l.b16 %v6445
      %v6450 = vpack.c.b16 %v6449, %v6448
      %v6453 = vsel %vm5682, %v6439, 0
      %v6456 = vsel %vm5682, %v6440, 0
      %v6459 = vsel %vm5682, %v6441, 0
      %v6462 = vsel %vm5682, %v6442, 0
      %6464 = vmatprep.subr.bf16.mxu0 0
      %6465 = vmatpush1.bf16.msra.mxu0 %v6450
      %6466 = vmatprep.subr.bf16.mxu0 0
      %6467 = vmatpush1.bf16.msra.mxu0 0
      %6468 = vmatprep.subr.bf16.mxu0 0
      %6469 = vmatpush1.bf16.msra.mxu0 0
      %6470 = vmatprep.subr.bf16.mxu0 0
      %6471 = vmatpush1.bf16.msra.mxu0 0
      %6472 = vmatprep.subr.bf16.mxu0 0
      %6473 = vmatpush1.bf16.msra.mxu0 0
      %6474 = vmatprep.subr.bf16.mxu0 0
      %6475 = vmatpush1.bf16.msra.mxu0 0
      %6476 = vmatprep.subr.bf16.mxu0 0
      %6477 = vmatpush1.bf16.msra.mxu0 0
      %6478 = vmatprep.subr.bf16.mxu0 0
      %6479 = vmatpush1.bf16.msra.mxu0 0
      %6480 = vmatprep.subr.bf16.mxu0 0
      %6481 = vmatpush1.bf16.msra.mxu0 0
      %6482 = vmatprep.subr.bf16.mxu0 0
      %6483 = vmatpush1.bf16.msra.mxu0 0
      %6484 = vmatprep.subr.bf16.mxu0 0
      %6485 = vmatpush1.bf16.msra.mxu0 0
      %6486 = vmatprep.subr.bf16.mxu0 0
      %6487 = vmatpush1.bf16.msra.mxu0 0
      %6488 = vmatprep.subr.bf16.mxu0 0
      %6489 = vmatpush1.bf16.msra.mxu0 0
      %6490 = vmatprep.subr.bf16.mxu0 0
      %6491 = vmatpush1.bf16.msra.mxu0 0
      %6492 = vmatprep.subr.bf16.mxu0 0
      %6493 = vmatpush1.bf16.msra.mxu0 0
      %6494 = vmatprep.subr.bf16.mxu0 0
      %6495 = vmatpush1.bf16.msra.mxu0 0
      %6496 = vmatprep.mubr.bf16.mxu0 0
      %6497 = vmatmul.mubr.bf16.gmra.mrb[0].mxu0 %v6453
      %v6498 = vpop.f32.mrb[0].mxu0
      %v6499 = vadd.f32 0.0, %v6498
      %v6500 = vpop.f32.mrb[0].mxu0
      %v6501 = vpop.f32.mrb[0].mxu0
      %v6502 = vadd.f32 0.0, %v6501
      %v6503 = vpop.f32.mrb[0].mxu0
      %6504 = vmatprep.mubr.bf16.mxu0 0
      %6505 = vmatmul.mubr.bf16.gmra.mrb[0].mxu0 %v6456
      %v6506 = vpop.f32.mrb[0].mxu0
      %v6507 = vadd.f32 0.0, %v6506
      %v6508 = vpop.f32.mrb[0].mxu0
      %v6509 = vpop.f32.mrb[0].mxu0
      %v6510 = vadd.f32 0.0, %v6509
      %v6511 = vpop.f32.mrb[0].mxu0
      %6512 = vmatprep.mubr.bf16.mxu0 0
      %6513 = vmatmul.mubr.bf16.gmra.mrb[0].mxu0 %v6459
      %v6514 = vpop.f32.mrb[0].mxu0
      %v6515 = vadd.f32 0.0, %v6514
      %v6516 = vpop.f32.mrb[0].mxu0
      %v6517 = vpop.f32.mrb[0].mxu0
      %v6518 = vadd.f32 0.0, %v6517
      %v6519 = vpop.f32.mrb[0].mxu0
      %6520 = vmatprep.mubr.bf16.mxu0 0
      %6521 = vmatmul.mubr.bf16.gmra.mrb[0].mxu0 %v6462
      %v6522 = vpop.f32.mrb[0].mxu0
      %v6523 = vadd.f32 0.0, %v6522
      %v6524 = vpop.f32.mrb[0].mxu0
      %v6525 = vpop.f32.mrb[0].mxu0
      %v6526 = vadd.f32 0.0, %v6525
      %v6527 = vpop.f32.mrb[0].mxu0
      %6528 = vdwg.mxu0
      %v6529 = vadd.f32 %v6415, %v6499
      %v6530 = vadd.f32 %v6416, %v6502
      %v6531 = vadd.f32 %v6417, %v6507
      %v6532 = vadd.f32 %v6418, %v6510
      %v6533 = vadd.f32 %v6419, %v6515
      %v6534 = vadd.f32 %v6420, %v6518
      %v6535 = vadd.f32 %v6421, %v6523
      %v6536 = vadd.f32 %v6422, %v6526
      %v6537 = vld [vmem:[#allocation4 + $0x18] sm:$0xff]
      %v6538 = vld [vmem:[#allocation4 + $0x20] sm:$0xff]
      %v6539 = vld [vmem:[#allocation4 + $0x28] sm:$0xff]
      %v6540 = vld [vmem:[#allocation4 + $0x30] sm:$0xff]
      %v6541 = vld [vmem:[#allocation4 + $0x38] sm:$0xff]
      %v6542 = vld [vmem:[#allocation4 + $0x40] sm:$0xff]
      %v6543 = vld [vmem:[#allocation4 + $0x48] sm:$0xff]
      %v6544 = vld [vmem:[#allocation4 + $0x50] sm:$0xff]
      %v6545 = vpack.c.bf16 %v6538, %v6537
      %v6546 = vpack.c.bf16 %v6540, %v6539
      %v6547 = vpack.c.bf16 %v6542, %v6541
      %v6548 = vpack.c.bf16 %v6544, %v6543
      %s6549 = scalar_lea.vmem %s7, 56
      %v6550 = vld [vmem:[%s6549] sm:$0xf]
      %v6551 = vld [vmem:[%s6549 + $0x4] sm:$0xf]
      %v6554 = vunpack.c.l.b16 %v6550
      %v6555 = vunpack.c.l.b16 %v6551
      %v6556 = vpack.c.b16 %v6555, %v6554
      %v6559 = vsel %vm5682, %v6545, 0
      %v6562 = vsel %vm5682, %v6546, 0
      %v6565 = vsel %vm5682, %v6547, 0
      %v6568 = vsel %vm5682, %v6548, 0
      %6570 = vmatprep.subr.bf16.mxu0 0
      %6571 = vmatpush1.bf16.msra.mxu0 %v6556
      %6572 = vmatprep.subr.bf16.mxu0 0
      %6573 = vmatpush1.bf16.msra.mxu0 0
      %6574 = vmatprep.subr.bf16.mxu0 0
      %6575 = vmatpush1.bf16.msra.mxu0 0
      %6576 = vmatprep.subr.bf16.mxu0 0
      %6577 = vmatpush1.bf16.msra.mxu0 0
      %6578 = vmatprep.subr.bf16.mxu0 0
      %6579 = vmatpush1.bf16.msra.mxu0 0
      %6580 = vmatprep.subr.bf16.mxu0 0
      %6581 = vmatpush1.bf16.msra.mxu0 0
      %6582 = vmatprep.subr.bf16.mxu0 0
      %6583 = vmatpush1.bf16.msra.mxu0 0
      %6584 = vmatprep.subr.bf16.mxu0 0
      %6585 = vmatpush1.bf16.msra.mxu0 0
      %6586 = vmatprep.subr.bf16.mxu0 0
      %6587 = vmatpush1.bf16.msra.mxu0 0
      %6588 = vmatprep.subr.bf16.mxu0 0
      %6589 = vmatpush1.bf16.msra.mxu0 0
      %6590 = vmatprep.subr.bf16.mxu0 0
      %6591 = vmatpush1.bf16.msra.mxu0 0
      %6592 = vmatprep.subr.bf16.mxu0 0
      %6593 = vmatpush1.bf16.msra.mxu0 0
      %6594 = vmatprep.subr.bf16.mxu0 0
      %6595 = vmatpush1.bf16.msra.mxu0 0
      %6596 = vmatprep.subr.bf16.mxu0 0
      %6597 = vmatpush1.bf16.msra.mxu0 0
      %6598 = vmatprep.subr.bf16.mxu0 0
      %6599 = vmatpush1.bf16.msra.mxu0 0
      %6600 = vmatprep.subr.bf16.mxu0 0
      %6601 = vmatpush1.bf16.msra.mxu0 0
      %6602 = vmatprep.mubr.bf16.mxu0 0
      %6603 = vmatmul.mubr.bf16.gmra.mrb[0].mxu0 %v6559
      %v6604 = vpop.f32.mrb[0].mxu0
      %v6605 = vadd.f32 0.0, %v6604
      %v6606 = vpop.f32.mrb[0].mxu0
      %v6607 = vpop.f32.mrb[0].mxu0
      %v6608 = vadd.f32 0.0, %v6607
      %v6609 = vpop.f32.mrb[0].mxu0
      %6610 = vmatprep.mubr.bf16.mxu0 0
      %6611 = vmatmul.mubr.bf16.gmra.mrb[0].mxu0 %v6562
      %v6612 = vpop.f32.mrb[0].mxu0
      %v6613 = vadd.f32 0.0, %v6612
      %v6614 = vpop.f32.mrb[0].mxu0
      %v6615 = vpop.f32.mrb[0].mxu0
      %v6616 = vadd.f32 0.0, %v6615
      %v6617 = vpop.f32.mrb[0].mxu0
      %6618 = vmatprep.mubr.bf16.mxu0 0
      %6619 = vmatmul.mubr.bf16.gmra.mrb[0].mxu0 %v6565
      %v6620 = vpop.f32.mrb[0].mxu0
      %v6621 = vadd.f32 0.0, %v6620
      %v6622 = vpop.f32.mrb[0].mxu0
      %v6623 = vpop.f32.mrb[0].mxu0
      %v6624 = vadd.f32 0.0, %v6623
      %v6625 = vpop.f32.mrb[0].mxu0
      %6626 = vmatprep.mubr.bf16.mxu0 0
      %6627 = vmatmul.mubr.bf16.gmra.mrb[0].mxu0 %v6568
      %v6628 = vpop.f32.mrb[0].mxu0
      %v6629 = vadd.f32 0.0, %v6628
      %v6630 = vpop.f32.mrb[0].mxu0
      %v6631 = vpop.f32.mrb[0].mxu0
      %v6632 = vadd.f32 0.0, %v6631
      %v6633 = vpop.f32.mrb[0].mxu0
      %6634 = vdwg.mxu0
      %v6635 = vadd.f32 %v6529, %v6605
      %v6636 = vadd.f32 %v6530, %v6608
      %v6637 = vadd.f32 %v6531, %v6613
      %v6638 = vadd.f32 %v6532, %v6616
      %v6639 = vadd.f32 %v6533, %v6621
      %v6640 = vadd.f32 %v6534, %v6624
      %v6641 = vadd.f32 %v6535, %v6629
      %v6642 = vadd.f32 %v6536, %v6632
      %v6643 = vld [vmem:[#allocation4 + $0x19] sm:$0xff]
      %v6644 = vld [vmem:[#allocation4 + $0x21] sm:$0xff]
      %v6645 = vld [vmem:[#allocation4 + $0x29] sm:$0xff]
      %v6646 = vld [vmem:[#allocation4 + $0x31] sm:$0xff]
      %v6647 = vld [vmem:[#allocation4 + $0x39] sm:$0xff]
      %v6648 = vld [vmem:[#allocation4 + $0x41] sm:$0xff]
      %v6649 = vld [vmem:[#allocation4 + $0x49] sm:$0xff]
      %v6650 = vld [vmem:[#allocation4 + $0x51] sm:$0xff]
      %v6651 = vsel %vm4454, %v6643, 0.0
      %v6652 = vsel %vm4455, %v6644, 0.0
      %v6653 = vsel %vm4456, %v6645, 0.0
      %v6654 = vsel %vm4457, %v6646, 0.0
      %v6655 = vsel %vm4458, %v6647, 0.0
      %v6656 = vsel %vm4459, %v6648, 0.0
      %v6657 = vsel %vm4460, %v6649, 0.0
      %v6658 = vsel %vm4461, %v6650, 0.0
      %v6659 = vpack.c.bf16 %v6652, %v6651
      %v6660 = vpack.c.bf16 %v6654, %v6653
      %v6661 = vpack.c.bf16 %v6656, %v6655
      %v6662 = vpack.c.bf16 %v6658, %v6657
      %s6663 = scalar_lea.vmem %s7, 64
      %v6664 = vld [vmem:[%s6663] sm:$0xf]
      %v6665 = vld [vmem:[%s6663 + $0x4] sm:$0xf]
      %v6668 = vunpack.c.l.b16 %v6664
      %v6669 = vunpack.c.l.b16 %v6665
      %v6670 = vpack.c.b16 %v6669, %v6668
      %v6673 = vsel %vm5682, %v6659, 0
      %v6676 = vsel %vm5682, %v6660, 0
      %v6679 = vsel %vm5682, %v6661, 0
      %v6682 = vsel %vm5682, %v6662, 0
      %6684 = vmatprep.subr.bf16.mxu0 0
      %6685 = vmatpush1.bf16.msra.mxu0 %v6670
      %6686 = vmatprep.subr.bf16.mxu0 0
      %6687 = vmatpush1.bf16.msra.mxu0 0
      %6688 = vmatprep.subr.bf16.mxu0 0
      %6689 = vmatpush1.bf16.msra.mxu0 0
      %6690 = vmatprep.subr.bf16.mxu0 0
      %6691 = vmatpush1.bf16.msra.mxu0 0
      %6692 = vmatprep.subr.bf16.mxu0 0
      %6693 = vmatpush1.bf16.msra.mxu0 0
      %6694 = vmatprep.subr.bf16.mxu0 0
      %6695 = vmatpush1.bf16.msra.mxu0 0
      %6696 = vmatprep.subr.bf16.mxu0 0
      %6697 = vmatpush1.bf16.msra.mxu0 0
      %6698 = vmatprep.subr.bf16.mxu0 0
      %6699 = vmatpush1.bf16.msra.mxu0 0
      %6700 = vmatprep.subr.bf16.mxu0 0
      %6701 = vmatpush1.bf16.msra.mxu0 0
      %6702 = vmatprep.subr.bf16.mxu0 0
      %6703 = vmatpush1.bf16.msra.mxu0 0
      %6704 = vmatprep.subr.bf16.mxu0 0
      %6705 = vmatpush1.bf16.msra.mxu0 0
      %6706 = vmatprep.subr.bf16.mxu0 0
      %6707 = vmatpush1.bf16.msra.mxu0 0
      %6708 = vmatprep.subr.bf16.mxu0 0
      %6709 = vmatpush1.bf16.msra.mxu0 0
      %6710 = vmatprep.subr.bf16.mxu0 0
      %6711 = vmatpush1.bf16.msra.mxu0 0
      %6712 = vmatprep.subr.bf16.mxu0 0
      %6713 = vmatpush1.bf16.msra.mxu0 0
      %6714 = vmatprep.subr.bf16.mxu0 0
      %6715 = vmatpush1.bf16.msra.mxu0 0
      %6716 = vmatprep.mubr.bf16.mxu0 0
      %6717 = vmatmul.mubr.bf16.gmra.mrb[0].mxu0 %v6673
      %v6718 = vpop.f32.mrb[0].mxu0
      %v6719 = vadd.f32 0.0, %v6718
      %v6720 = vpop.f32.mrb[0].mxu0
      %v6721 = vpop.f32.mrb[0].mxu0
      %v6722 = vadd.f32 0.0, %v6721
      %v6723 = vpop.f32.mrb[0].mxu0
      %6724 = vmatprep.mubr.bf16.mxu0 0
      %6725 = vmatmul.mubr.bf16.gmra.mrb[0].mxu0 %v6676
      %v6726 = vpop.f32.mrb[0].mxu0
      %v6727 = vadd.f32 0.0, %v6726
      %v6728 = vpop.f32.mrb[0].mxu0
      %v6729 = vpop.f32.mrb[0].mxu0
      %v6730 = vadd.f32 0.0, %v6729
      %v6731 = vpop.f32.mrb[0].mxu0
      %6732 = vmatprep.mubr.bf16.mxu0 0
      %6733 = vmatmul.mubr.bf16.gmra.mrb[0].mxu0 %v6679
      %v6734 = vpop.f32.mrb[0].mxu0
      %v6735 = vadd.f32 0.0, %v6734
      %v6736 = vpop.f32.mrb[0].mxu0
      %v6737 = vpop.f32.mrb[0].mxu0
      %v6738 = vadd.f32 0.0, %v6737
      %v6739 = vpop.f32.mrb[0].mxu0
      %6740 = vmatprep.mubr.bf16.mxu0 0
      %6741 = vmatmul.mubr.bf16.gmra.mrb[0].mxu0 %v6682
      %v6742 = vpop.f32.mrb[0].mxu0
      %v6743 = vadd.f32 0.0, %v6742
      %v6744 = vpop.f32.mrb[0].mxu0
      %v6745 = vpop.f32.mrb[0].mxu0
      %v6746 = vadd.f32 0.0, %v6745
      %v6747 = vpop.f32.mrb[0].mxu0
      %6748 = vdwg.mxu0
      %v6749 = vadd.f32 %v6635, %v6719
      %v6750 = vadd.f32 %v6636, %v6722
      %v6751 = vadd.f32 %v6637, %v6727
      %v6752 = vadd.f32 %v6638, %v6730
      %v6753 = vadd.f32 %v6639, %v6735
      %v6754 = vadd.f32 %v6640, %v6738
      %v6755 = vadd.f32 %v6641, %v6743
      %v6756 = vadd.f32 %v6642, %v6746
      %v6757 = vld [vmem:[%s8] sm:$0x1]
      %v6759 = vlaneseq
      %v6760 = vshrl.u32 %v6759, 7
      %v6761 = vsub.s32 0, %v6760
      %v6762 = vrot.slane %v6757, %v6761
      %v6764 = vadd.f32 %v6749, %v6762
      %v6765 = vadd.f32 %v6750, %v6762
      %v6766 = vadd.f32 %v6751, %v6762
      %v6767 = vadd.f32 %v6752, %v6762
      %v6768 = vadd.f32 %v6753, %v6762
      %v6769 = vadd.f32 %v6754, %v6762
      %v6770 = vadd.f32 %v6755, %v6762
      %v6771 = vadd.f32 %v6756, %v6762
      %v6772 = vmax.f32 %v6764, 0.0
      %v6773 = vmax.f32 %v6765, 0.0
      %v6774 = vmax.f32 %v6766, 0.0
      %v6775 = vmax.f32 %v6767, 0.0
      %v6776 = vmax.f32 %v6768, 0.0
      %v6777 = vmax.f32 %v6769, 0.0
      %v6778 = vmax.f32 %v6770, 0.0
      %v6779 = vmax.f32 %v6771, 0.0
      %v6780 = vld [vmem:[%s12] sm:$0xf]
      %v6781 = vld [vmem:[%s12 + $0x4] sm:$0xf]
      %v6782 = vld [vmem:[%s12 + $0x8] sm:$0xf]
      %v6783 = vld [vmem:[%s12 + $0xc] sm:$0xf]
      %v6784 = vld [vmem:[%s12 + $0x10] sm:$0xf]
      %v6785 = vld [vmem:[%s12 + $0x14] sm:$0xf]
      %v6786 = vld [vmem:[%s12 + $0x18] sm:$0xf]
      %v6787 = vld [vmem:[%s12 + $0x1c] sm:$0xf]
      %v6788 = vld [vmem:[%s12 + $0x20] sm:$0xf]
      %v6789 = vld [vmem:[%s12 + $0x24] sm:$0xf]
      %v6790 = vld [vmem:[%s12 + $0x28] sm:$0xf]
      %v6791 = vld [vmem:[%s12 + $0x2c] sm:$0xf]
      %v6792 = vld [vmem:[%s12 + $0x30] sm:$0xf]
      %v6793 = vld [vmem:[%s12 + $0x34] sm:$0xf]
      %v6794 = vld [vmem:[%s12 + $0x38] sm:$0xf]
      %v6795 = vld [vmem:[%s12 + $0x3c] sm:$0xf]
      %v6796 = vld [vmem:[%s12 + $0x40] sm:$0xf]
      %v6797 = vld [vmem:[%s12 + $0x44] sm:$0xf]
      %v6798 = vld [vmem:[%s12 + $0x48] sm:$0xf]
      %v6799 = vld [vmem:[%s12 + $0x4c] sm:$0xf]
      %v6800 = vld [vmem:[%s12 + $0x50] sm:$0xf]
      %v6801 = vld [vmem:[%s12 + $0x54] sm:$0xf]
      %v6802 = vld [vmem:[%s12 + $0x58] sm:$0xf]
      %v6803 = vld [vmem:[%s12 + $0x5c] sm:$0xf]
      %v6804 = vld [vmem:[%s12 + $0x60] sm:$0xf]
      %v6805 = vld [vmem:[%s12 + $0x64] sm:$0xf]
      %v6806 = vld [vmem:[%s12 + $0x68] sm:$0xf]
      %v6807 = vld [vmem:[%s12 + $0x6c] sm:$0xf]
      %v6808 = vld [vmem:[%s12 + $0x70] sm:$0xf]
      %v6809 = vld [vmem:[%s12 + $0x74] sm:$0xf]
      %v6810 = vld [vmem:[%s12 + $0x78] sm:$0xf]
      %v6811 = vld [vmem:[%s12 + $0x7c] sm:$0xf]
      %v6812 = vpack.c.bf16 %v6773, %v6772
      %v6813 = vpack.c.bf16 %v6775, %v6774
      %v6814 = vpack.c.bf16 %v6777, %v6776
      %v6815 = vpack.c.bf16 %v6779, %v6778
      %v6848 = vunpack.c.l.b16 %v6780
      %v6849 = vunpack.c.l.b16 %v6781
      %v6850 = vunpack.c.l.b16 %v6782
      %v6851 = vunpack.c.l.b16 %v6783
      %v6852 = vunpack.c.l.b16 %v6784
      %v6853 = vunpack.c.l.b16 %v6785
      %v6854 = vunpack.c.l.b16 %v6786
      %v6855 = vunpack.c.l.b16 %v6787
      %v6856 = vunpack.c.l.b16 %v6788
      %v6857 = vunpack.c.l.b16 %v6789
      %v6858 = vunpack.c.l.b16 %v6790
      %v6859 = vunpack.c.l.b16 %v6791
      %v6860 = vunpack.c.l.b16 %v6792
      %v6861 = vunpack.c.l.b16 %v6793
      %v6862 = vunpack.c.l.b16 %v6794
      %v6863 = vunpack.c.l.b16 %v6795
      %v6864 = vunpack.c.l.b16 %v6796
      %v6865 = vunpack.c.l.b16 %v6797
      %v6866 = vunpack.c.l.b16 %v6798
      %v6867 = vunpack.c.l.b16 %v6799
      %v6868 = vunpack.c.l.b16 %v6800
      %v6869 = vunpack.c.l.b16 %v6801
      %v6870 = vunpack.c.l.b16 %v6802
      %v6871 = vunpack.c.l.b16 %v6803
      %v6872 = vunpack.c.l.b16 %v6804
      %v6873 = vunpack.c.l.b16 %v6805
      %v6874 = vunpack.c.l.b16 %v6806
      %v6875 = vunpack.c.l.b16 %v6807
      %v6876 = vunpack.c.l.b16 %v6808
      %v6877 = vunpack.c.l.b16 %v6809
      %v6878 = vunpack.c.l.b16 %v6810
      %v6879 = vunpack.c.l.b16 %v6811
      %v6880 = vpack.c.b16 %v6849, %v6848
      %v6881 = vpack.c.b16 %v6851, %v6850
      %v6882 = vpack.c.b16 %v6853, %v6852
      %v6883 = vpack.c.b16 %v6855, %v6854
      %v6884 = vpack.c.b16 %v6857, %v6856
      %v6885 = vpack.c.b16 %v6859, %v6858
      %v6886 = vpack.c.b16 %v6861, %v6860
      %v6887 = vpack.c.b16 %v6863, %v6862
      %v6888 = vpack.c.b16 %v6865, %v6864
      %v6889 = vpack.c.b16 %v6867, %v6866
      %v6890 = vpack.c.b16 %v6869, %v6868
      %v6891 = vpack.c.b16 %v6871, %v6870
      %v6892 = vpack.c.b16 %v6873, %v6872
      %v6893 = vpack.c.b16 %v6875, %v6874
      %v6894 = vpack.c.b16 %v6877, %v6876
      %v6895 = vpack.c.b16 %v6879, %v6878
      %v6897 = vsel %vm5446, %v6880, 0
      %v6900 = vsel %vm5446, %v6881, 0
      %v6903 = vsel %vm5446, %v6882, 0
      %v6906 = vsel %vm5446, %v6883, 0
      %v6909 = vsel %vm5446, %v6884, 0
      %v6912 = vsel %vm5446, %v6885, 0
      %v6915 = vsel %vm5446, %v6886, 0
      %v6918 = vsel %vm5446, %v6887, 0
      %v6921 = vsel %vm5446, %v6888, 0
      %v6924 = vsel %vm5446, %v6889, 0
      %v6927 = vsel %vm5446, %v6890, 0
      %v6930 = vsel %vm5446, %v6891, 0
      %v6933 = vsel %vm5446, %v6892, 0
      %v6936 = vsel %vm5446, %v6893, 0
      %v6939 = vsel %vm5446, %v6894, 0
      %v6942 = vsel %vm5446, %v6895, 0
      %6944 = vmatprep.subr.bf16.mxu0 0
      %6945 = vmatpush1.bf16.msra.mxu0 %v6812
      %6946 = vmatprep.subr.bf16.mxu0 0
      %6947 = vmatpush1.bf16.msra.mxu0 %v6813
      %6948 = vmatprep.subr.bf16.mxu0 0
      %6949 = vmatpush1.bf16.msra.mxu0 %v6814
      %6950 = vmatprep.subr.bf16.mxu0 0
      %6951 = vmatpush1.bf16.msra.mxu0 %v6815
      %6952 = vmatprep.subr.bf16.mxu0 0
      %6953 = vmatpush1.bf16.msra.mxu0 0
      %6954 = vmatprep.subr.bf16.mxu0 0
      %6955 = vmatpush1.bf16.msra.mxu0 0
      %6956 = vmatprep.subr.bf16.mxu0 0
      %6957 = vmatpush1.bf16.msra.mxu0 0
      %6958 = vmatprep.subr.bf16.mxu0 0
      %6959 = vmatpush1.bf16.msra.mxu0 0
      %6960 = vmatprep.subr.bf16.mxu0 0
      %6961 = vmatpush1.bf16.msra.mxu0 0
      %6962 = vmatprep.subr.bf16.mxu0 0
      %6963 = vmatpush1.bf16.msra.mxu0 0
      %6964 = vmatprep.subr.bf16.mxu0 0
      %6965 = vmatpush1.bf16.msra.mxu0 0
      %6966 = vmatprep.subr.bf16.mxu0 0
      %6967 = vmatpush1.bf16.msra.mxu0 0
      %6968 = vmatprep.subr.bf16.mxu0 0
      %6969 = vmatpush1.bf16.msra.mxu0 0
      %6970 = vmatprep.subr.bf16.mxu0 0
      %6971 = vmatpush1.bf16.msra.mxu0 0
      %6972 = vmatprep.subr.bf16.mxu0 0
      %6973 = vmatpush1.bf16.msra.mxu0 0
      %6974 = vmatprep.subr.bf16.mxu0 0
      %6975 = vmatpush1.bf16.msra.mxu0 0
      %6976 = vmatprep.mubr.bf16.mxu0 0
      %6977 = vmatmul.mubr.bf16.gmra.mrb[0].mxu0 %v6897
      %v6978 = vpop.f32.mrb[0].mxu0
      %v6979 = vadd.f32 0.0, %v6978
      %v6980 = vpop.f32.mrb[0].mxu0
      %v6981 = vpop.f32.mrb[0].mxu0
      %v6982 = vadd.f32 0.0, %v6981
      %v6983 = vpop.f32.mrb[0].mxu0
      %6984 = vmatprep.mubr.bf16.mxu0 0
      %6985 = vmatmul.mubr.bf16.gmra.mrb[0].mxu0 %v6900
      %v6986 = vpop.f32.mrb[0].mxu0
      %v6987 = vadd.f32 0.0, %v6986
      %v6988 = vpop.f32.mrb[0].mxu0
      %v6989 = vpop.f32.mrb[0].mxu0
      %v6990 = vadd.f32 0.0, %v6989
      %v6991 = vpop.f32.mrb[0].mxu0
      %6992 = vmatprep.mubr.bf16.mxu0 0
      %6993 = vmatmul.mubr.bf16.gmra.mrb[0].mxu0 %v6903
      %v6994 = vpop.f32.mrb[0].mxu0
      %v6995 = vadd.f32 0.0, %v6994
      %v6996 = vpop.f32.mrb[0].mxu0
      %v6997 = vpop.f32.mrb[0].mxu0
      %v6998 = vadd.f32 0.0, %v6997
      %v6999 = vpop.f32.mrb[0].mxu0
      %7000 = vmatprep.mubr.bf16.mxu0 0
      %7001 = vmatmul.mubr.bf16.gmra.mrb[0].mxu0 %v6906
      %v7002 = vpop.f32.mrb[0].mxu0
      %v7003 = vadd.f32 0.0, %v7002
      %v7004 = vpop.f32.mrb[0].mxu0
      %v7005 = vpop.f32.mrb[0].mxu0
      %v7006 = vadd.f32 0.0, %v7005
      %v7007 = vpop.f32.mrb[0].mxu0
      %7008 = vmatprep.mubr.bf16.mxu0 0
      %7009 = vmatmul.mubr.bf16.gmra.mrb[0].mxu0 %v6909
      %v7010 = vpop.f32.mrb[0].mxu0
      %v7011 = vadd.f32 0.0, %v7010
      %v7012 = vpop.f32.mrb[0].mxu0
      %v7013 = vpop.f32.mrb[0].mxu0
      %v7014 = vadd.f32 0.0, %v7013
      %v7015 = vpop.f32.mrb[0].mxu0
      %7016 = vmatprep.mubr.bf16.mxu0 0
      %7017 = vmatmul.mubr.bf16.gmra.mrb[0].mxu0 %v6912
      %v7018 = vpop.f32.mrb[0].mxu0
      %v7019 = vadd.f32 0.0, %v7018
      %v7020 = vpop.f32.mrb[0].mxu0
      %v7021 = vpop.f32.mrb[0].mxu0
      %v7022 = vadd.f32 0.0, %v7021
      %v7023 = vpop.f32.mrb[0].mxu0
      %7024 = vmatprep.mubr.bf16.mxu0 0
      %7025 = vmatmul.mubr.bf16.gmra.mrb[0].mxu0 %v6915
      %v7026 = vpop.f32.mrb[0].mxu0
      %v7027 = vadd.f32 0.0, %v7026
      %v7028 = vpop.f32.mrb[0].mxu0
      %v7029 = vpop.f32.mrb[0].mxu0
      %v7030 = vadd.f32 0.0, %v7029
      %v7031 = vpop.f32.mrb[0].mxu0
      %7032 = vmatprep.mubr.bf16.mxu0 0
      %7033 = vmatmul.mubr.bf16.gmra.mrb[0].mxu0 %v6918
      %v7034 = vpop.f32.mrb[0].mxu0
      %v7035 = vadd.f32 0.0, %v7034
      %v7036 = vpop.f32.mrb[0].mxu0
      %v7037 = vpop.f32.mrb[0].mxu0
      %v7038 = vadd.f32 0.0, %v7037
      %v7039 = vpop.f32.mrb[0].mxu0
      %7040 = vmatprep.mubr.bf16.mxu0 0
      %7041 = vmatmul.mubr.bf16.gmra.mrb[0].mxu0 %v6921
      %v7042 = vpop.f32.mrb[0].mxu0
      %v7043 = vadd.f32 0.0, %v7042
      %v7044 = vpop.f32.mrb[0].mxu0
      %v7045 = vpop.f32.mrb[0].mxu0
      %v7046 = vadd.f32 0.0, %v7045
      %v7047 = vpop.f32.mrb[0].mxu0
      %7048 = vmatprep.mubr.bf16.mxu0 0
      %7049 = vmatmul.mubr.bf16.gmra.mrb[0].mxu0 %v6924
      %v7050 = vpop.f32.mrb[0].mxu0
      %v7051 = vadd.f32 0.0, %v7050
      %v7052 = vpop.f32.mrb[0].mxu0
      %v7053 = vpop.f32.mrb[0].mxu0
      %v7054 = vadd.f32 0.0, %v7053
      %v7055 = vpop.f32.mrb[0].mxu0
      %7056 = vmatprep.mubr.bf16.mxu0 0
      %7057 = vmatmul.mubr.bf16.gmra.mrb[0].mxu0 %v6927
      %v7058 = vpop.f32.mrb[0].mxu0
      %v7059 = vadd.f32 0.0, %v7058
      %v7060 = vpop.f32.mrb[0].mxu0
      %v7061 = vpop.f32.mrb[0].mxu0
      %v7062 = vadd.f32 0.0, %v7061
      %v7063 = vpop.f32.mrb[0].mxu0
      %7064 = vmatprep.mubr.bf16.mxu0 0
      %7065 = vmatmul.mubr.bf16.gmra.mrb[0].mxu0 %v6930
      %v7066 = vpop.f32.mrb[0].mxu0
      %v7067 = vadd.f32 0.0, %v7066
      %v7068 = vpop.f32.mrb[0].mxu0
      %v7069 = vpop.f32.mrb[0].mxu0
      %v7070 = vadd.f32 0.0, %v7069
      %v7071 = vpop.f32.mrb[0].mxu0
      %7072 = vmatprep.mubr.bf16.mxu0 0
      %7073 = vmatmul.mubr.bf16.gmra.mrb[0].mxu0 %v6933
      %v7074 = vpop.f32.mrb[0].mxu0
      %v7075 = vadd.f32 0.0, %v7074
      %v7076 = vpop.f32.mrb[0].mxu0
      %v7077 = vpop.f32.mrb[0].mxu0
      %v7078 = vadd.f32 0.0, %v7077
      %v7079 = vpop.f32.mrb[0].mxu0
      %7080 = vmatprep.mubr.bf16.mxu0 0
      %7081 = vmatmul.mubr.bf16.gmra.mrb[0].mxu0 %v6936
      %v7082 = vpop.f32.mrb[0].mxu0
      %v7083 = vadd.f32 0.0, %v7082
      %v7084 = vpop.f32.mrb[0].mxu0
      %v7085 = vpop.f32.mrb[0].mxu0
      %v7086 = vadd.f32 0.0, %v7085
      %v7087 = vpop.f32.mrb[0].mxu0
      %7088 = vmatprep.mubr.bf16.mxu0 0
      %7089 = vmatmul.mubr.bf16.gmra.mrb[0].mxu0 %v6939
      %v7090 = vpop.f32.mrb[0].mxu0
      %v7091 = vadd.f32 0.0, %v7090
      %v7092 = vpop.f32.mrb[0].mxu0
      %v7093 = vpop.f32.mrb[0].mxu0
      %v7094 = vadd.f32 0.0, %v7093
      %v7095 = vpop.f32.mrb[0].mxu0
      %7096 = vmatprep.mubr.bf16.mxu0 0
      %7097 = vmatmul.mubr.bf16.gmra.mrb[0].mxu0 %v6942
      %v7098 = vpop.f32.mrb[0].mxu0
      %v7099 = vadd.f32 0.0, %v7098
      %v7100 = vpop.f32.mrb[0].mxu0
      %v7101 = vpop.f32.mrb[0].mxu0
      %v7102 = vadd.f32 0.0, %v7101
      %v7103 = vpop.f32.mrb[0].mxu0
      %7104 = vdwg.mxu0
      %7105 = vst.msk [vmem:[#allocation5] sm:$0xff] %vm4337, 0.0
      %7106 = vst.msk [vmem:[#allocation5 + $0x8] sm:$0xff] %vm4337, 0.0
      %7107 = vst.msk [vmem:[#allocation5 + $0x10] sm:$0xff] %vm4337, 0.0
      %7108 = vst.msk [vmem:[#allocation5 + $0x118] sm:$0xff] %vm4337, 0.0
      %7109 = vst.msk [vmem:[#allocation5 + $0x120] sm:$0xff] %vm4337, 0.0
      %7110 = vst.msk [vmem:[#allocation5 + $0x128] sm:$0xff] %vm4337, 0.0
      %7111 = vst.msk [vmem:[#allocation5 + $0x18] sm:$0xff] %vm4337, %v6979
      %7112 = vst.msk [vmem:[#allocation5 + $0x20] sm:$0xff] %vm4337, %v6982
      %7113 = vst.msk [vmem:[#allocation5 + $0x28] sm:$0xff] %vm4337, %v6987
      %7114 = vst.msk [vmem:[#allocation5 + $0x30] sm:$0xff] %vm4337, %v6990
      %7115 = vst.msk [vmem:[#allocation5 + $0x38] sm:$0xff] %vm4337, %v6995
      %7116 = vst.msk [vmem:[#allocation5 + $0x40] sm:$0xff] %vm4337, %v6998
      %7117 = vst.msk [vmem:[#allocation5 + $0x48] sm:$0xff] %vm4337, %v7003
      %7118 = vst.msk [vmem:[#allocation5 + $0x50] sm:$0xff] %vm4337, %v7006
      %7119 = vst.msk [vmem:[#allocation5 + $0x58] sm:$0xff] %vm4337, %v7011
      %7120 = vst.msk [vmem:[#allocation5 + $0x60] sm:$0xff] %vm4337, %v7014
      %7121 = vst.msk [vmem:[#allocation5 + $0x68] sm:$0xff] %vm4337, %v7019
      %7122 = vst.msk [vmem:[#allocation5 + $0x70] sm:$0xff] %vm4337, %v7022
      %7123 = vst.msk [vmem:[#allocation5 + $0x78] sm:$0xff] %vm4337, %v7027
      %7124 = vst.msk [vmem:[#allocation5 + $0x80] sm:$0xff] %vm4337, %v7030
      %7125 = vst.msk [vmem:[#allocation5 + $0x88] sm:$0xff] %vm4337, %v7035
      %7126 = vst.msk [vmem:[#allocation5 + $0x90] sm:$0xff] %vm4337, %v7038
      %7127 = vst.msk [vmem:[#allocation5 + $0x98] sm:$0xff] %vm4337, %v7043
      %7128 = vst.msk [vmem:[#allocation5 + $0xa0] sm:$0xff] %vm4337, %v7046
      %7129 = vst.msk [vmem:[#allocation5 + $0xa8] sm:$0xff] %vm4337, %v7051
      %7130 = vst.msk [vmem:[#allocation5 + $0xb0] sm:$0xff] %vm4337, %v7054
      %7131 = vst.msk [vmem:[#allocation5 + $0xb8] sm:$0xff] %vm4337, %v7059
      %7132 = vst.msk [vmem:[#allocation5 + $0xc0] sm:$0xff] %vm4337, %v7062
      %7133 = vst.msk [vmem:[#allocation5 + $0xc8] sm:$0xff] %vm4337, %v7067
      %7134 = vst.msk [vmem:[#allocation5 + $0xd0] sm:$0xff] %vm4337, %v7070
      %7135 = vst.msk [vmem:[#allocation5 + $0xd8] sm:$0xff] %vm4337, %v7075
      %7136 = vst.msk [vmem:[#allocation5 + $0xe0] sm:$0xff] %vm4337, %v7078
      %7137 = vst.msk [vmem:[#allocation5 + $0xe8] sm:$0xff] %vm4337, %v7083
      %7138 = vst.msk [vmem:[#allocation5 + $0xf0] sm:$0xff] %vm4337, %v7086
      %7139 = vst.msk [vmem:[#allocation5 + $0xf8] sm:$0xff] %vm4337, %v7091
      %7140 = vst.msk [vmem:[#allocation5 + $0x100] sm:$0xff] %vm4337, %v7094
      %7141 = vst.msk [vmem:[#allocation5 + $0x108] sm:$0xff] %vm4337, %v7099
      %7142 = vst.msk [vmem:[#allocation5 + $0x110] sm:$0xff] %vm4337, %v7102
      %v7143 = vld [vmem:[#allocation5 + $0x7] sm:$0xff]
      %v7144 = vld [vmem:[#allocation5 + $0xf] sm:$0xff]
      %v7145 = vld [vmem:[#allocation5 + $0x17] sm:$0xff]
      %v7146 = vld [vmem:[#allocation5 + $0x1f] sm:$0xff]
      %v7147 = vld [vmem:[#allocation5 + $0x27] sm:$0xff]
      %v7148 = vld [vmem:[#allocation5 + $0x2f] sm:$0xff]
      %v7149 = vld [vmem:[#allocation5 + $0x37] sm:$0xff]
      %v7150 = vld [vmem:[#allocation5 + $0x3f] sm:$0xff]
      %v7151 = vld [vmem:[#allocation5 + $0x47] sm:$0xff]
      %v7152 = vld [vmem:[#allocation5 + $0x4f] sm:$0xff]
      %v7153 = vld [vmem:[#allocation5 + $0x57] sm:$0xff]
      %v7154 = vld [vmem:[#allocation5 + $0x5f] sm:$0xff]
      %v7155 = vld [vmem:[#allocation5 + $0x67] sm:$0xff]
      %v7156 = vld [vmem:[#allocation5 + $0x6f] sm:$0xff]
      %v7157 = vld [vmem:[#allocation5 + $0x77] sm:$0xff]
      %v7158 = vld [vmem:[#allocation5 + $0x7f] sm:$0xff]
      %v7159 = vld [vmem:[#allocation5 + $0x87] sm:$0xff]
      %v7160 = vld [vmem:[#allocation5 + $0x8f] sm:$0xff]
      %v7161 = vld [vmem:[#allocation5 + $0x97] sm:$0xff]
      %v7162 = vld [vmem:[#allocation5 + $0x9f] sm:$0xff]
      %v7163 = vld [vmem:[#allocation5 + $0xa7] sm:$0xff]
      %v7164 = vld [vmem:[#allocation5 + $0xaf] sm:$0xff]
      %v7165 = vld [vmem:[#allocation5 + $0xb7] sm:$0xff]
      %v7166 = vld [vmem:[#allocation5 + $0xbf] sm:$0xff]
      %v7167 = vld [vmem:[#allocation5 + $0xc7] sm:$0xff]
      %v7168 = vld [vmem:[#allocation5 + $0xcf] sm:$0xff]
      %v7169 = vld [vmem:[#allocation5 + $0xd7] sm:$0xff]
      %v7170 = vld [vmem:[#allocation5 + $0xdf] sm:$0xff]
      %v7171 = vld [vmem:[#allocation5 + $0xe7] sm:$0xff]
      %v7172 = vld [vmem:[#allocation5 + $0xef] sm:$0xff]
      %v7173 = vld [vmem:[#allocation5 + $0xf7] sm:$0xff]
      %v7174 = vld [vmem:[#allocation5 + $0xff] sm:$0xff]
      %v7175 = vsel %vm930, %v7143, 0.0
      %v7176 = vsel %vm931, %v7144, 0.0
      %v7177 = vsel %vm932, %v7145, 0.0
      %v7178 = vsel %vm933, %v7146, 0.0
      %v7179 = vsel %vm934, %v7147, 0.0
      %v7180 = vsel %vm935, %v7148, 0.0
      %v7181 = vsel %vm936, %v7149, 0.0
      %v7182 = vsel %vm937, %v7150, 0.0
      %v7183 = vsel %vm938, %v7151, 0.0
      %v7184 = vsel %vm939, %v7152, 0.0
      %v7185 = vsel %vm940, %v7153, 0.0
      %v7186 = vsel %vm941, %v7154, 0.0
      %v7187 = vsel %vm942, %v7155, 0.0
      %v7188 = vsel %vm943, %v7156, 0.0
      %v7189 = vsel %vm944, %v7157, 0.0
      %v7190 = vsel %vm945, %v7158, 0.0
      %v7191 = vsel %vm946, %v7159, 0.0
      %v7192 = vsel %vm947, %v7160, 0.0
      %v7193 = vsel %vm948, %v7161, 0.0
      %v7194 = vsel %vm949, %v7162, 0.0
      %v7195 = vsel %vm950, %v7163, 0.0
      %v7196 = vsel %vm951, %v7164, 0.0
      %v7197 = vsel %vm952, %v7165, 0.0
      %v7198 = vsel %vm953, %v7166, 0.0
      %v7199 = vsel %vm954, %v7167, 0.0
      %v7200 = vsel %vm955, %v7168, 0.0
      %v7201 = vsel %vm956, %v7169, 0.0
      %v7202 = vsel %vm957, %v7170, 0.0
      %v7203 = vsel %vm958, %v7171, 0.0
      %v7204 = vsel %vm959, %v7172, 0.0
      %v7205 = vsel %vm960, %v7173, 0.0
      %v7206 = vsel %vm961, %v7174, 0.0
      %v7207 = vpack.c.bf16 %v7176, %v7175
      %v7208 = vpack.c.bf16 %v7178, %v7177
      %v7209 = vpack.c.bf16 %v7180, %v7179
      %v7210 = vpack.c.bf16 %v7182, %v7181
      %v7211 = vpack.c.bf16 %v7184, %v7183
      %v7212 = vpack.c.bf16 %v7186, %v7185
      %v7213 = vpack.c.bf16 %v7188, %v7187
      %v7214 = vpack.c.bf16 %v7190, %v7189
      %v7215 = vpack.c.bf16 %v7192, %v7191
      %v7216 = vpack.c.bf16 %v7194, %v7193
      %v7217 = vpack.c.bf16 %v7196, %v7195
      %v7218 = vpack.c.bf16 %v7198, %v7197
      %v7219 = vpack.c.bf16 %v7200, %v7199
      %v7220 = vpack.c.bf16 %v7202, %v7201
      %v7221 = vpack.c.bf16 %v7204, %v7203
      %v7222 = vpack.c.bf16 %v7206, %v7205
      %v7223 = vld [vmem:[%s10] sm:$0xf]
      %v7224 = vld [vmem:[#allocation5 + $0x8] sm:$0xff]
      %v7225 = vld [vmem:[#allocation5 + $0x10] sm:$0xff]
      %v7226 = vld [vmem:[#allocation5 + $0x18] sm:$0xff]
      %v7227 = vld [vmem:[#allocation5 + $0x20] sm:$0xff]
      %v7228 = vld [vmem:[#allocation5 + $0x28] sm:$0xff]
      %v7229 = vld [vmem:[#allocation5 + $0x30] sm:$0xff]
      %v7230 = vld [vmem:[#allocation5 + $0x38] sm:$0xff]
      %v7231 = vld [vmem:[#allocation5 + $0x40] sm:$0xff]
      %v7232 = vld [vmem:[#allocation5 + $0x48] sm:$0xff]
      %v7233 = vld [vmem:[#allocation5 + $0x50] sm:$0xff]
      %v7234 = vld [vmem:[#allocation5 + $0x58] sm:$0xff]
      %v7235 = vld [vmem:[#allocation5 + $0x60] sm:$0xff]
      %v7236 = vld [vmem:[#allocation5 + $0x68] sm:$0xff]
      %v7237 = vld [vmem:[#allocation5 + $0x70] sm:$0xff]
      %v7238 = vld [vmem:[#allocation5 + $0x78] sm:$0xff]
      %v7239 = vld [vmem:[#allocation5 + $0x80] sm:$0xff]
      %v7240 = vld [vmem:[#allocation5 + $0x88] sm:$0xff]
      %v7241 = vld [vmem:[#allocation5 + $0x90] sm:$0xff]
      %v7242 = vld [vmem:[#allocation5 + $0x98] sm:$0xff]
      %v7243 = vld [vmem:[#allocation5 + $0xa0] sm:$0xff]
      %v7244 = vld [vmem:[#allocation5 + $0xa8] sm:$0xff]
      %v7245 = vld [vmem:[#allocation5 + $0xb0] sm:$0xff]
      %v7246 = vld [vmem:[#allocation5 + $0xb8] sm:$0xff]
      %v7247 = vld [vmem:[#allocation5 + $0xc0] sm:$0xff]
      %v7248 = vld [vmem:[#allocation5 + $0xc8] sm:$0xff]
      %v7249 = vld [vmem:[#allocation5 + $0xd0] sm:$0xff]
      %v7250 = vld [vmem:[#allocation5 + $0xd8] sm:$0xff]
      %v7251 = vld [vmem:[#allocation5 + $0xe0] sm:$0xff]
      %v7252 = vld [vmem:[#allocation5 + $0xe8] sm:$0xff]
      %v7253 = vld [vmem:[#allocation5 + $0xf0] sm:$0xff]
      %v7254 = vld [vmem:[#allocation5 + $0xf8] sm:$0xff]
      %v7255 = vld [vmem:[#allocation5 + $0x100] sm:$0xff]
      %v7256 = vpack.c.bf16 %v7225, %v7224
      %v7257 = vpack.c.bf16 %v7227, %v7226
      %v7258 = vpack.c.bf16 %v7229, %v7228
      %v7259 = vpack.c.bf16 %v7231, %v7230
      %v7260 = vpack.c.bf16 %v7233, %v7232
      %v7261 = vpack.c.bf16 %v7235, %v7234
      %v7262 = vpack.c.bf16 %v7237, %v7236
      %v7263 = vpack.c.bf16 %v7239, %v7238
      %v7264 = vpack.c.bf16 %v7241, %v7240
      %v7265 = vpack.c.bf16 %v7243, %v7242
      %v7266 = vpack.c.bf16 %v7245, %v7244
      %v7267 = vpack.c.bf16 %v7247, %v7246
      %v7268 = vpack.c.bf16 %v7249, %v7248
      %v7269 = vpack.c.bf16 %v7251, %v7250
      %v7270 = vpack.c.bf16 %v7253, %v7252
      %v7271 = vpack.c.bf16 %v7255, %v7254
      %s7272 = scalar_lea.vmem %s10, 4
      %v7273 = vld [vmem:[%s7272] sm:$0xf]
      %v7275 = vsel %vm4337, %v7256, 0
      %v7278 = vsel %vm4337, %v7257, 0
      %v7281 = vsel %vm4337, %v7258, 0
      %v7284 = vsel %vm4337, %v7259, 0
      %v7287 = vsel %vm4337, %v7260, 0
      %v7290 = vsel %vm4337, %v7261, 0
      %v7293 = vsel %vm4337, %v7262, 0
      %v7296 = vsel %vm4337, %v7263, 0
      %v7299 = vsel %vm4337, %v7264, 0
      %v7302 = vsel %vm4337, %v7265, 0
      %v7305 = vsel %vm4337, %v7266, 0
      %v7308 = vsel %vm4337, %v7267, 0
      %v7311 = vsel %vm4337, %v7268, 0
      %v7314 = vsel %vm4337, %v7269, 0
      %v7317 = vsel %vm4337, %v7270, 0
      %v7320 = vsel %vm4337, %v7271, 0
      %v7323 = vsel %vm4509, %v7273, 0
      %7325 = vmatprep.subr.bf16.mxu0 0
      %7326 = vmatpush1.bf16.msra.mxu0 %v7323
      %7327 = vmatprep.subr.bf16.mxu0 0
      %7328 = vmatpush1.bf16.msra.mxu0 0
      %7329 = vmatprep.subr.bf16.mxu0 0
      %7330 = vmatpush1.bf16.msra.mxu0 0
      %7331 = vmatprep.subr.bf16.mxu0 0
      %7332 = vmatpush1.bf16.msra.mxu0 0
      %7333 = vmatprep.subr.bf16.mxu0 0
      %7334 = vmatpush1.bf16.msra.mxu0 0
      %7335 = vmatprep.subr.bf16.mxu0 0
      %7336 = vmatpush1.bf16.msra.mxu0 0
      %7337 = vmatprep.subr.bf16.mxu0 0
      %7338 = vmatpush1.bf16.msra.mxu0 0
      %7339 = vmatprep.subr.bf16.mxu0 0
      %7340 = vmatpush1.bf16.msra.mxu0 0
      %7341 = vmatprep.subr.bf16.mxu0 0
      %7342 = vmatpush1.bf16.msra.mxu0 0
      %7343 = vmatprep.subr.bf16.mxu0 0
      %7344 = vmatpush1.bf16.msra.mxu0 0
      %7345 = vmatprep.subr.bf16.mxu0 0
      %7346 = vmatpush1.bf16.msra.mxu0 0
      %7347 = vmatprep.subr.bf16.mxu0 0
      %7348 = vmatpush1.bf16.msra.mxu0 0
      %7349 = vmatprep.subr.bf16.mxu0 0
      %7350 = vmatpush1.bf16.msra.mxu0 0
      %7351 = vmatprep.subr.bf16.mxu0 0
      %7352 = vmatpush1.bf16.msra.mxu0 0
      %7353 = vmatprep.subr.bf16.mxu0 0
      %7354 = vmatpush1.bf16.msra.mxu0 0
      %7355 = vmatprep.subr.bf16.mxu0 0
      %7356 = vmatpush1.bf16.msra.mxu0 0
      %7357 = vmatprep.mubr.bf16.mxu0 0
      %7358 = vmatmul.mubr.bf16.gmra.mrb[0].mxu0 %v7275
      %v7359 = vpop.f32.mrb[0].mxu0
      %v7360 = vadd.f32 0.0, %v7359
      %v7361 = vpop.f32.mrb[0].mxu0
      %v7362 = vpop.f32.mrb[0].mxu0
      %v7363 = vadd.f32 0.0, %v7362
      %v7364 = vpop.f32.mrb[0].mxu0
      %7365 = vmatprep.mubr.bf16.mxu0 0
      %7366 = vmatmul.mubr.bf16.gmra.mrb[0].mxu0 %v7278
      %v7367 = vpop.f32.mrb[0].mxu0
      %v7368 = vadd.f32 0.0, %v7367
      %v7369 = vpop.f32.mrb[0].mxu0
      %v7370 = vpop.f32.mrb[0].mxu0
      %v7371 = vadd.f32 0.0, %v7370
      %v7372 = vpop.f32.mrb[0].mxu0
      %7373 = vmatprep.mubr.bf16.mxu0 0
      %7374 = vmatmul.mubr.bf16.gmra.mrb[0].mxu0 %v7281
      %v7375 = vpop.f32.mrb[0].mxu0
      %v7376 = vadd.f32 0.0, %v7375
      %v7377 = vpop.f32.mrb[0].mxu0
      %v7378 = vpop.f32.mrb[0].mxu0
      %v7379 = vadd.f32 0.0, %v7378
      %v7380 = vpop.f32.mrb[0].mxu0
      %7381 = vmatprep.mubr.bf16.mxu0 0
      %7382 = vmatmul.mubr.bf16.gmra.mrb[0].mxu0 %v7284
      %v7383 = vpop.f32.mrb[0].mxu0
      %v7384 = vadd.f32 0.0, %v7383
      %v7385 = vpop.f32.mrb[0].mxu0
      %v7386 = vpop.f32.mrb[0].mxu0
      %v7387 = vadd.f32 0.0, %v7386
      %v7388 = vpop.f32.mrb[0].mxu0
      %7389 = vmatprep.mubr.bf16.mxu0 0
      %7390 = vmatmul.mubr.bf16.gmra.mrb[0].mxu0 %v7287
      %v7391 = vpop.f32.mrb[0].mxu0
      %v7392 = vadd.f32 0.0, %v7391
      %v7393 = vpop.f32.mrb[0].mxu0
      %v7394 = vpop.f32.mrb[0].mxu0
      %v7395 = vadd.f32 0.0, %v7394
      %v7396 = vpop.f32.mrb[0].mxu0
      %7397 = vmatprep.mubr.bf16.mxu0 0
      %7398 = vmatmul.mubr.bf16.gmra.mrb[0].mxu0 %v7290
      %v7399 = vpop.f32.mrb[0].mxu0
      %v7400 = vadd.f32 0.0, %v7399
      %v7401 = vpop.f32.mrb[0].mxu0
      %v7402 = vpop.f32.mrb[0].mxu0
      %v7403 = vadd.f32 0.0, %v7402
      %v7404 = vpop.f32.mrb[0].mxu0
      %7405 = vmatprep.mubr.bf16.mxu0 0
      %7406 = vmatmul.mubr.bf16.gmra.mrb[0].mxu0 %v7293
      %v7407 = vpop.f32.mrb[0].mxu0
      %v7408 = vadd.f32 0.0, %v7407
      %v7409 = vpop.f32.mrb[0].mxu0
      %v7410 = vpop.f32.mrb[0].mxu0
      %v7411 = vadd.f32 0.0, %v7410
      %v7412 = vpop.f32.mrb[0].mxu0
      %7413 = vmatprep.mubr.bf16.mxu0 0
      %7414 = vmatmul.mubr.bf16.gmra.mrb[0].mxu0 %v7296
      %v7415 = vpop.f32.mrb[0].mxu0
      %v7416 = vadd.f32 0.0, %v7415
      %v7417 = vpop.f32.mrb[0].mxu0
      %v7418 = vpop.f32.mrb[0].mxu0
      %v7419 = vadd.f32 0.0, %v7418
      %v7420 = vpop.f32.mrb[0].mxu0
      %7421 = vmatprep.mubr.bf16.mxu0 0
      %7422 = vmatmul.mubr.bf16.gmra.mrb[0].mxu0 %v7299
      %v7423 = vpop.f32.mrb[0].mxu0
      %v7424 = vadd.f32 0.0, %v7423
      %v7425 = vpop.f32.mrb[0].mxu0
      %v7426 = vpop.f32.mrb[0].mxu0
      %v7427 = vadd.f32 0.0, %v7426
      %v7428 = vpop.f32.mrb[0].mxu0
      %7429 = vmatprep.mubr.bf16.mxu0 0
      %7430 = vmatmul.mubr.bf16.gmra.mrb[0].mxu0 %v7302
      %v7431 = vpop.f32.mrb[0].mxu0
      %v7432 = vadd.f32 0.0, %v7431
      %v7433 = vpop.f32.mrb[0].mxu0
      %v7434 = vpop.f32.mrb[0].mxu0
      %v7435 = vadd.f32 0.0, %v7434
      %v7436 = vpop.f32.mrb[0].mxu0
      %7437 = vmatprep.mubr.bf16.mxu0 0
      %7438 = vmatmul.mubr.bf16.gmra.mrb[0].mxu0 %v7305
      %v7439 = vpop.f32.mrb[0].mxu0
      %v7440 = vadd.f32 0.0, %v7439
      %v7441 = vpop.f32.mrb[0].mxu0
      %v7442 = vpop.f32.mrb[0].mxu0
      %v7443 = vadd.f32 0.0, %v7442
      %v7444 = vpop.f32.mrb[0].mxu0
      %7445 = vmatprep.mubr.bf16.mxu0 0
      %7446 = vmatmul.mubr.bf16.gmra.mrb[0].mxu0 %v7308
      %v7447 = vpop.f32.mrb[0].mxu0
      %v7448 = vadd.f32 0.0, %v7447
      %v7449 = vpop.f32.mrb[0].mxu0
      %v7450 = vpop.f32.mrb[0].mxu0
      %v7451 = vadd.f32 0.0, %v7450
      %v7452 = vpop.f32.mrb[0].mxu0
      %7453 = vmatprep.mubr.bf16.mxu0 0
      %7454 = vmatmul.mubr.bf16.gmra.mrb[0].mxu0 %v7311
      %v7455 = vpop.f32.mrb[0].mxu0
      %v7456 = vadd.f32 0.0, %v7455
      %v7457 = vpop.f32.mrb[0].mxu0
      %v7458 = vpop.f32.mrb[0].mxu0
      %v7459 = vadd.f32 0.0, %v7458
      %v7460 = vpop.f32.mrb[0].mxu0
      %7461 = vmatprep.mubr.bf16.mxu0 0
      %7462 = vmatmul.mubr.bf16.gmra.mrb[0].mxu0 %v7314
      %v7463 = vpop.f32.mrb[0].mxu0
      %v7464 = vadd.f32 0.0, %v7463
      %v7465 = vpop.f32.mrb[0].mxu0
      %v7466 = vpop.f32.mrb[0].mxu0
      %v7467 = vadd.f32 0.0, %v7466
      %v7468 = vpop.f32.mrb[0].mxu0
      %7469 = vmatprep.mubr.bf16.mxu0 0
      %7470 = vmatmul.mubr.bf16.gmra.mrb[0].mxu0 %v7317
      %v7471 = vpop.f32.mrb[0].mxu0
      %v7472 = vadd.f32 0.0, %v7471
      %v7473 = vpop.f32.mrb[0].mxu0
      %v7474 = vpop.f32.mrb[0].mxu0
      %v7475 = vadd.f32 0.0, %v7474
      %v7476 = vpop.f32.mrb[0].mxu0
      %7477 = vmatprep.mubr.bf16.mxu0 0
      %7478 = vmatmul.mubr.bf16.gmra.mrb[0].mxu0 %v7320
      %v7479 = vpop.f32.mrb[0].mxu0
      %v7480 = vadd.f32 0.0, %v7479
      %v7481 = vpop.f32.mrb[0].mxu0
      %v7482 = vpop.f32.mrb[0].mxu0
      %v7483 = vadd.f32 0.0, %v7482
      %v7484 = vpop.f32.mrb[0].mxu0
      %7485 = vdwg.mxu0
      %v7487 = vsel %vm4337, %v7207, 0
      %v7490 = vsel %vm4337, %v7208, 0
      %v7493 = vsel %vm4337, %v7209, 0
      %v7496 = vsel %vm4337, %v7210, 0
      %v7499 = vsel %vm4337, %v7211, 0
      %v7502 = vsel %vm4337, %v7212, 0
      %v7505 = vsel %vm4337, %v7213, 0
      %v7508 = vsel %vm4337, %v7214, 0
      %v7511 = vsel %vm4337, %v7215, 0
      %v7514 = vsel %vm4337, %v7216, 0
      %v7517 = vsel %vm4337, %v7217, 0
      %v7520 = vsel %vm4337, %v7218, 0
      %v7523 = vsel %vm4337, %v7219, 0
      %v7526 = vsel %vm4337, %v7220, 0
      %v7529 = vsel %vm4337, %v7221, 0
      %v7532 = vsel %vm4337, %v7222, 0
      %v7535 = vsel %vm4509, %v7223, 0
      %7537 = vmatprep.subr.bf16.mxu0 0
      %7538 = vmatpush1.bf16.msra.mxu0 %v7535
      %7539 = vmatprep.subr.bf16.mxu0 0
      %7540 = vmatpush1.bf16.msra.mxu0 0
      %7541 = vmatprep.subr.bf16.mxu0 0
      %7542 = vmatpush1.bf16.msra.mxu0 0
      %7543 = vmatprep.subr.bf16.mxu0 0
      %7544 = vmatpush1.bf16.msra.mxu0 0
      %7545 = vmatprep.subr.bf16.mxu0 0
      %7546 = vmatpush1.bf16.msra.mxu0 0
      %7547 = vmatprep.subr.bf16.mxu0 0
      %7548 = vmatpush1.bf16.msra.mxu0 0
      %7549 = vmatprep.subr.bf16.mxu0 0
      %7550 = vmatpush1.bf16.msra.mxu0 0
      %7551 = vmatprep.subr.bf16.mxu0 0
      %7552 = vmatpush1.bf16.msra.mxu0 0
      %7553 = vmatprep.subr.bf16.mxu0 0
      %7554 = vmatpush1.bf16.msra.mxu0 0
      %7555 = vmatprep.subr.bf16.mxu0 0
      %7556 = vmatpush1.bf16.msra.mxu0 0
      %7557 = vmatprep.subr.bf16.mxu0 0
      %7558 = vmatpush1.bf16.msra.mxu0 0
      %7559 = vmatprep.subr.bf16.mxu0 0
      %7560 = vmatpush1.bf16.msra.mxu0 0
      %7561 = vmatprep.subr.bf16.mxu0 0
      %7562 = vmatpush1.bf16.msra.mxu0 0
      %7563 = vmatprep.subr.bf16.mxu0 0
      %7564 = vmatpush1.bf16.msra.mxu0 0
      %7565 = vmatprep.subr.bf16.mxu0 0
      %7566 = vmatpush1.bf16.msra.mxu0 0
      %7567 = vmatprep.subr.bf16.mxu0 0
      %7568 = vmatpush1.bf16.msra.mxu0 0
      %7569 = vmatprep.mubr.bf16.mxu0 0
      %7570 = vmatmul.mubr.bf16.gmra.mrb[0].mxu0 %v7487
      %v7571 = vpop.f32.mrb[0].mxu0
      %v7572 = vadd.f32 %v7360, %v7571
      %v7573 = vpop.f32.mrb[0].mxu0
      %v7574 = vpop.f32.mrb[0].mxu0
      %v7575 = vadd.f32 %v7363, %v7574
      %v7576 = vpop.f32.mrb[0].mxu0
      %7577 = vmatprep.mubr.bf16.mxu0 0
      %7578 = vmatmul.mubr.bf16.gmra.mrb[0].mxu0 %v7490
      %v7579 = vpop.f32.mrb[0].mxu0
      %v7580 = vadd.f32 %v7368, %v7579
      %v7581 = vpop.f32.mrb[0].mxu0
      %v7582 = vpop.f32.mrb[0].mxu0
      %v7583 = vadd.f32 %v7371, %v7582
      %v7584 = vpop.f32.mrb[0].mxu0
      %7585 = vmatprep.mubr.bf16.mxu0 0
      %7586 = vmatmul.mubr.bf16.gmra.mrb[0].mxu0 %v7493
      %v7587 = vpop.f32.mrb[0].mxu0
      %v7588 = vadd.f32 %v7376, %v7587
      %v7589 = vpop.f32.mrb[0].mxu0
      %v7590 = vpop.f32.mrb[0].mxu0
      %v7591 = vadd.f32 %v7379, %v7590
      %v7592 = vpop.f32.mrb[0].mxu0
      %7593 = vmatprep.mubr.bf16.mxu0 0
      %7594 = vmatmul.mubr.bf16.gmra.mrb[0].mxu0 %v7496
      %v7595 = vpop.f32.mrb[0].mxu0
      %v7596 = vadd.f32 %v7384, %v7595
      %v7597 = vpop.f32.mrb[0].mxu0
      %v7598 = vpop.f32.mrb[0].mxu0
      %v7599 = vadd.f32 %v7387, %v7598
      %v7600 = vpop.f32.mrb[0].mxu0
      %7601 = vmatprep.mubr.bf16.mxu0 0
      %7602 = vmatmul.mubr.bf16.gmra.mrb[0].mxu0 %v7499
      %v7603 = vpop.f32.mrb[0].mxu0
      %v7604 = vadd.f32 %v7392, %v7603
      %v7605 = vpop.f32.mrb[0].mxu0
      %v7606 = vpop.f32.mrb[0].mxu0
      %v7607 = vadd.f32 %v7395, %v7606
      %v7608 = vpop.f32.mrb[0].mxu0
      %7609 = vmatprep.mubr.bf16.mxu0 0
      %7610 = vmatmul.mubr.bf16.gmra.mrb[0].mxu0 %v7502
      %v7611 = vpop.f32.mrb[0].mxu0
      %v7612 = vadd.f32 %v7400, %v7611
      %v7613 = vpop.f32.mrb[0].mxu0
      %v7614 = vpop.f32.mrb[0].mxu0
      %v7615 = vadd.f32 %v7403, %v7614
      %v7616 = vpop.f32.mrb[0].mxu0
      %7617 = vmatprep.mubr.bf16.mxu0 0
      %7618 = vmatmul.mubr.bf16.gmra.mrb[0].mxu0 %v7505
      %v7619 = vpop.f32.mrb[0].mxu0
      %v7620 = vadd.f32 %v7408, %v7619
      %v7621 = vpop.f32.mrb[0].mxu0
      %v7622 = vpop.f32.mrb[0].mxu0
      %v7623 = vadd.f32 %v7411, %v7622
      %v7624 = vpop.f32.mrb[0].mxu0
      %7625 = vmatprep.mubr.bf16.mxu0 0
      %7626 = vmatmul.mubr.bf16.gmra.mrb[0].mxu0 %v7508
      %v7627 = vpop.f32.mrb[0].mxu0
      %v7628 = vadd.f32 %v7416, %v7627
      %v7629 = vpop.f32.mrb[0].mxu0
      %v7630 = vpop.f32.mrb[0].mxu0
      %v7631 = vadd.f32 %v7419, %v7630
      %v7632 = vpop.f32.mrb[0].mxu0
      %7633 = vmatprep.mubr.bf16.mxu0 0
      %7634 = vmatmul.mubr.bf16.gmra.mrb[0].mxu0 %v7511
      %v7635 = vpop.f32.mrb[0].mxu0
      %v7636 = vadd.f32 %v7424, %v7635
      %v7637 = vpop.f32.mrb[0].mxu0
      %v7638 = vpop.f32.mrb[0].mxu0
      %v7639 = vadd.f32 %v7427, %v7638
      %v7640 = vpop.f32.mrb[0].mxu0
      %7641 = vmatprep.mubr.bf16.mxu0 0
      %7642 = vmatmul.mubr.bf16.gmra.mrb[0].mxu0 %v7514
      %v7643 = vpop.f32.mrb[0].mxu0
      %v7644 = vadd.f32 %v7432, %v7643
      %v7645 = vpop.f32.mrb[0].mxu0
      %v7646 = vpop.f32.mrb[0].mxu0
      %v7647 = vadd.f32 %v7435, %v7646
      %v7648 = vpop.f32.mrb[0].mxu0
      %7649 = vmatprep.mubr.bf16.mxu0 0
      %7650 = vmatmul.mubr.bf16.gmra.mrb[0].mxu0 %v7517
      %v7651 = vpop.f32.mrb[0].mxu0
      %v7652 = vadd.f32 %v7440, %v7651
      %v7653 = vpop.f32.mrb[0].mxu0
      %v7654 = vpop.f32.mrb[0].mxu0
      %v7655 = vadd.f32 %v7443, %v7654
      %v7656 = vpop.f32.mrb[0].mxu0
      %7657 = vmatprep.mubr.bf16.mxu0 0
      %7658 = vmatmul.mubr.bf16.gmra.mrb[0].mxu0 %v7520
      %v7659 = vpop.f32.mrb[0].mxu0
      %v7660 = vadd.f32 %v7448, %v7659
      %v7661 = vpop.f32.mrb[0].mxu0
      %v7662 = vpop.f32.mrb[0].mxu0
      %v7663 = vadd.f32 %v7451, %v7662
      %v7664 = vpop.f32.mrb[0].mxu0
      %7665 = vmatprep.mubr.bf16.mxu0 0
      %7666 = vmatmul.mubr.bf16.gmra.mrb[0].mxu0 %v7523
      %v7667 = vpop.f32.mrb[0].mxu0
      %v7668 = vadd.f32 %v7456, %v7667
      %v7669 = vpop.f32.mrb[0].mxu0
      %v7670 = vpop.f32.mrb[0].mxu0
      %v7671 = vadd.f32 %v7459, %v7670
      %v7672 = vpop.f32.mrb[0].mxu0
      %7673 = vmatprep.mubr.bf16.mxu0 0
      %7674 = vmatmul.mubr.bf16.gmra.mrb[0].mxu0 %v7526
      %v7675 = vpop.f32.mrb[0].mxu0
      %v7676 = vadd.f32 %v7464, %v7675
      %v7677 = vpop.f32.mrb[0].mxu0
      %v7678 = vpop.f32.mrb[0].mxu0
      %v7679 = vadd.f32 %v7467, %v7678
      %v7680 = vpop.f32.mrb[0].mxu0
      %7681 = vmatprep.mubr.bf16.mxu0 0
      %7682 = vmatmul.mubr.bf16.gmra.mrb[0].mxu0 %v7529
      %v7683 = vpop.f32.mrb[0].mxu0
      %v7684 = vadd.f32 %v7472, %v7683
      %v7685 = vpop.f32.mrb[0].mxu0
      %v7686 = vpop.f32.mrb[0].mxu0
      %v7687 = vadd.f32 %v7475, %v7686
      %v7688 = vpop.f32.mrb[0].mxu0
      %7689 = vmatprep.mubr.bf16.mxu0 0
      %7690 = vmatmul.mubr.bf16.gmra.mrb[0].mxu0 %v7532
      %v7691 = vpop.f32.mrb[0].mxu0
      %v7692 = vadd.f32 %v7480, %v7691
      %v7693 = vpop.f32.mrb[0].mxu0
      %v7694 = vpop.f32.mrb[0].mxu0
      %v7695 = vadd.f32 %v7483, %v7694
      %v7696 = vpop.f32.mrb[0].mxu0
      %7697 = vdwg.mxu0
      %v7698 = vld [vmem:[#allocation5 + $0x9] sm:$0xff]
      %v7699 = vld [vmem:[#allocation5 + $0x11] sm:$0xff]
      %v7700 = vld [vmem:[#allocation5 + $0x19] sm:$0xff]
      %v7701 = vld [vmem:[#allocation5 + $0x21] sm:$0xff]
      %v7702 = vld [vmem:[#allocation5 + $0x29] sm:$0xff]
      %v7703 = vld [vmem:[#allocation5 + $0x31] sm:$0xff]
      %v7704 = vld [vmem:[#allocation5 + $0x39] sm:$0xff]
      %v7705 = vld [vmem:[#allocation5 + $0x41] sm:$0xff]
      %v7706 = vld [vmem:[#allocation5 + $0x49] sm:$0xff]
      %v7707 = vld [vmem:[#allocation5 + $0x51] sm:$0xff]
      %v7708 = vld [vmem:[#allocation5 + $0x59] sm:$0xff]
      %v7709 = vld [vmem:[#allocation5 + $0x61] sm:$0xff]
      %v7710 = vld [vmem:[#allocation5 + $0x69] sm:$0xff]
      %v7711 = vld [vmem:[#allocation5 + $0x71] sm:$0xff]
      %v7712 = vld [vmem:[#allocation5 + $0x79] sm:$0xff]
      %v7713 = vld [vmem:[#allocation5 + $0x81] sm:$0xff]
      %v7714 = vld [vmem:[#allocation5 + $0x89] sm:$0xff]
      %v7715 = vld [vmem:[#allocation5 + $0x91] sm:$0xff]
      %v7716 = vld [vmem:[#allocation5 + $0x99] sm:$0xff]
      %v7717 = vld [vmem:[#allocation5 + $0xa1] sm:$0xff]
      %v7718 = vld [vmem:[#allocation5 + $0xa9] sm:$0xff]
      %v7719 = vld [vmem:[#allocation5 + $0xb1] sm:$0xff]
      %v7720 = vld [vmem:[#allocation5 + $0xb9] sm:$0xff]
      %v7721 = vld [vmem:[#allocation5 + $0xc1] sm:$0xff]
      %v7722 = vld [vmem:[#allocation5 + $0xc9] sm:$0xff]
      %v7723 = vld [vmem:[#allocation5 + $0xd1] sm:$0xff]
      %v7724 = vld [vmem:[#allocation5 + $0xd9] sm:$0xff]
      %v7725 = vld [vmem:[#allocation5 + $0xe1] sm:$0xff]
      %v7726 = vld [vmem:[#allocation5 + $0xe9] sm:$0xff]
      %v7727 = vld [vmem:[#allocation5 + $0xf1] sm:$0xff]
      %v7728 = vld [vmem:[#allocation5 + $0xf9] sm:$0xff]
      %v7729 = vld [vmem:[#allocation5 + $0x101] sm:$0xff]
      %v7730 = vsel %vm962, %v7698, 0.0
      %v7731 = vsel %vm963, %v7699, 0.0
      %v7732 = vsel %vm964, %v7700, 0.0
      %v7733 = vsel %vm965, %v7701, 0.0
      %v7734 = vsel %vm966, %v7702, 0.0
      %v7735 = vsel %vm967, %v7703, 0.0
      %v7736 = vsel %vm968, %v7704, 0.0
      %v7737 = vsel %vm969, %v7705, 0.0
      %v7738 = vsel %vm970, %v7706, 0.0
      %v7739 = vsel %vm971, %v7707, 0.0
      %v7740 = vsel %vm972, %v7708, 0.0
      %v7741 = vsel %vm973, %v7709, 0.0
      %v7742 = vsel %vm974, %v7710, 0.0
      %v7743 = vsel %vm975, %v7711, 0.0
      %v7744 = vsel %vm976, %v7712, 0.0
      %v7745 = vsel %vm977, %v7713, 0.0
      %v7746 = vsel %vm978, %v7714, 0.0
      %v7747 = vsel %vm979, %v7715, 0.0
      %v7748 = vsel %vm980, %v7716, 0.0
      %v7749 = vsel %vm981, %v7717, 0.0
      %v7750 = vsel %vm982, %v7718, 0.0
      %v7751 = vsel %vm983, %v7719, 0.0
      %v7752 = vsel %vm984, %v7720, 0.0
      %v7753 = vsel %vm985, %v7721, 0.0
      %v7754 = vsel %vm986, %v7722, 0.0
      %v7755 = vsel %vm987, %v7723, 0.0
      %v7756 = vsel %vm988, %v7724, 0.0
      %v7757 = vsel %vm989, %v7725, 0.0
      %v7758 = vsel %vm990, %v7726, 0.0
      %v7759 = vsel %vm991, %v7727, 0.0
      %v7760 = vsel %vm992, %v7728, 0.0
      %v7761 = vsel %vm993, %v7729, 0.0
      %v7762 = vpack.c.bf16 %v7731, %v7730
      %v7763 = vpack.c.bf16 %v7733, %v7732
      %v7764 = vpack.c.bf16 %v7735, %v7734
      %v7765 = vpack.c.bf16 %v7737, %v7736
      %v7766 = vpack.c.bf16 %v7739, %v7738
      %v7767 = vpack.c.bf16 %v7741, %v7740
      %v7768 = vpack.c.bf16 %v7743, %v7742
      %v7769 = vpack.c.bf16 %v7745, %v7744
      %v7770 = vpack.c.bf16 %v7747, %v7746
      %v7771 = vpack.c.bf16 %v7749, %v7748
      %v7772 = vpack.c.bf16 %v7751, %v7750
      %v7773 = vpack.c.bf16 %v7753, %v7752
      %v7774 = vpack.c.bf16 %v7755, %v7754
      %v7775 = vpack.c.bf16 %v7757, %v7756
      %v7776 = vpack.c.bf16 %v7759, %v7758
      %v7777 = vpack.c.bf16 %v7761, %v7760
      %s7778 = scalar_lea.vmem %s10, 8
      %v7779 = vld [vmem:[%s7778] sm:$0xf]
      %v7781 = vsel %vm4337, %v7762, 0
      %v7784 = vsel %vm4337, %v7763, 0
      %v7787 = vsel %vm4337, %v7764, 0
      %v7790 = vsel %vm4337, %v7765, 0
      %v7793 = vsel %vm4337, %v7766, 0
      %v7796 = vsel %vm4337, %v7767, 0
      %v7799 = vsel %vm4337, %v7768, 0
      %v7802 = vsel %vm4337, %v7769, 0
      %v7805 = vsel %vm4337, %v7770, 0
      %v7808 = vsel %vm4337, %v7771, 0
      %v7811 = vsel %vm4337, %v7772, 0
      %v7814 = vsel %vm4337, %v7773, 0
      %v7817 = vsel %vm4337, %v7774, 0
      %v7820 = vsel %vm4337, %v7775, 0
      %v7823 = vsel %vm4337, %v7776, 0
      %v7826 = vsel %vm4337, %v7777, 0
      %v7829 = vsel %vm4509, %v7779, 0
      %7831 = vmatprep.subr.bf16.mxu0 0
      %7832 = vmatpush1.bf16.msra.mxu0 %v7829
      %7833 = vmatprep.subr.bf16.mxu0 0
      %7834 = vmatpush1.bf16.msra.mxu0 0
      %7835 = vmatprep.subr.bf16.mxu0 0
      %7836 = vmatpush1.bf16.msra.mxu0 0
      %7837 = vmatprep.subr.bf16.mxu0 0
      %7838 = vmatpush1.bf16.msra.mxu0 0
      %7839 = vmatprep.subr.bf16.mxu0 0
      %7840 = vmatpush1.bf16.msra.mxu0 0
      %7841 = vmatprep.subr.bf16.mxu0 0
      %7842 = vmatpush1.bf16.msra.mxu0 0
      %7843 = vmatprep.subr.bf16.mxu0 0
      %7844 = vmatpush1.bf16.msra.mxu0 0
      %7845 = vmatprep.subr.bf16.mxu0 0
      %7846 = vmatpush1.bf16.msra.mxu0 0
      %7847 = vmatprep.subr.bf16.mxu0 0
      %7848 = vmatpush1.bf16.msra.mxu0 0
      %7849 = vmatprep.subr.bf16.mxu0 0
      %7850 = vmatpush1.bf16.msra.mxu0 0
      %7851 = vmatprep.subr.bf16.mxu0 0
      %7852 = vmatpush1.bf16.msra.mxu0 0
      %7853 = vmatprep.subr.bf16.mxu0 0
      %7854 = vmatpush1.bf16.msra.mxu0 0
      %7855 = vmatprep.subr.bf16.mxu0 0
      %7856 = vmatpush1.bf16.msra.mxu0 0
      %7857 = vmatprep.subr.bf16.mxu0 0
      %7858 = vmatpush1.bf16.msra.mxu0 0
      %7859 = vmatprep.subr.bf16.mxu0 0
      %7860 = vmatpush1.bf16.msra.mxu0 0
      %7861 = vmatprep.subr.bf16.mxu0 0
      %7862 = vmatpush1.bf16.msra.mxu0 0
      %7863 = vmatprep.mubr.bf16.mxu0 0
      %7864 = vmatmul.mubr.bf16.gmra.mrb[0].mxu0 %v7781
      %v7865 = vpop.f32.mrb[0].mxu0
      %v7866 = vadd.f32 0.0, %v7865
      %v7867 = vpop.f32.mrb[0].mxu0
      %v7868 = vpop.f32.mrb[0].mxu0
      %v7869 = vadd.f32 0.0, %v7868
      %v7870 = vpop.f32.mrb[0].mxu0
      %7871 = vmatprep.mubr.bf16.mxu0 0
      %7872 = vmatmul.mubr.bf16.gmra.mrb[0].mxu0 %v7784
      %v7873 = vpop.f32.mrb[0].mxu0
      %v7874 = vadd.f32 0.0, %v7873
      %v7875 = vpop.f32.mrb[0].mxu0
      %v7876 = vpop.f32.mrb[0].mxu0
      %v7877 = vadd.f32 0.0, %v7876
      %v7878 = vpop.f32.mrb[0].mxu0
      %7879 = vmatprep.mubr.bf16.mxu0 0
      %7880 = vmatmul.mubr.bf16.gmra.mrb[0].mxu0 %v7787
      %v7881 = vpop.f32.mrb[0].mxu0
      %v7882 = vadd.f32 0.0, %v7881
      %v7883 = vpop.f32.mrb[0].mxu0
      %v7884 = vpop.f32.mrb[0].mxu0
      %v7885 = vadd.f32 0.0, %v7884
      %v7886 = vpop.f32.mrb[0].mxu0
      %7887 = vmatprep.mubr.bf16.mxu0 0
      %7888 = vmatmul.mubr.bf16.gmra.mrb[0].mxu0 %v7790
      %v7889 = vpop.f32.mrb[0].mxu0
      %v7890 = vadd.f32 0.0, %v7889
      %v7891 = vpop.f32.mrb[0].mxu0
      %v7892 = vpop.f32.mrb[0].mxu0
      %v7893 = vadd.f32 0.0, %v7892
      %v7894 = vpop.f32.mrb[0].mxu0
      %7895 = vmatprep.mubr.bf16.mxu0 0
      %7896 = vmatmul.mubr.bf16.gmra.mrb[0].mxu0 %v7793
      %v7897 = vpop.f32.mrb[0].mxu0
      %v7898 = vadd.f32 0.0, %v7897
      %v7899 = vpop.f32.mrb[0].mxu0
      %v7900 = vpop.f32.mrb[0].mxu0
      %v7901 = vadd.f32 0.0, %v7900
      %v7902 = vpop.f32.mrb[0].mxu0
      %7903 = vmatprep.mubr.bf16.mxu0 0
      %7904 = vmatmul.mubr.bf16.gmra.mrb[0].mxu0 %v7796
      %v7905 = vpop.f32.mrb[0].mxu0
      %v7906 = vadd.f32 0.0, %v7905
      %v7907 = vpop.f32.mrb[0].mxu0
      %v7908 = vpop.f32.mrb[0].mxu0
      %v7909 = vadd.f32 0.0, %v7908
      %v7910 = vpop.f32.mrb[0].mxu0
      %7911 = vmatprep.mubr.bf16.mxu0 0
      %7912 = vmatmul.mubr.bf16.gmra.mrb[0].mxu0 %v7799
      %v7913 = vpop.f32.mrb[0].mxu0
      %v7914 = vadd.f32 0.0, %v7913
      %v7915 = vpop.f32.mrb[0].mxu0
      %v7916 = vpop.f32.mrb[0].mxu0
      %v7917 = vadd.f32 0.0, %v7916
      %v7918 = vpop.f32.mrb[0].mxu0
      %7919 = vmatprep.mubr.bf16.mxu0 0
      %7920 = vmatmul.mubr.bf16.gmra.mrb[0].mxu0 %v7802
      %v7921 = vpop.f32.mrb[0].mxu0
      %v7922 = vadd.f32 0.0, %v7921
      %v7923 = vpop.f32.mrb[0].mxu0
      %v7924 = vpop.f32.mrb[0].mxu0
      %v7925 = vadd.f32 0.0, %v7924
      %v7926 = vpop.f32.mrb[0].mxu0
      %7927 = vmatprep.mubr.bf16.mxu0 0
      %7928 = vmatmul.mubr.bf16.gmra.mrb[0].mxu0 %v7805
      %v7929 = vpop.f32.mrb[0].mxu0
      %v7930 = vadd.f32 0.0, %v7929
      %v7931 = vpop.f32.mrb[0].mxu0
      %v7932 = vpop.f32.mrb[0].mxu0
      %v7933 = vadd.f32 0.0, %v7932
      %v7934 = vpop.f32.mrb[0].mxu0
      %7935 = vmatprep.mubr.bf16.mxu0 0
      %7936 = vmatmul.mubr.bf16.gmra.mrb[0].mxu0 %v7808
      %v7937 = vpop.f32.mrb[0].mxu0
      %v7938 = vadd.f32 0.0, %v7937
      %v7939 = vpop.f32.mrb[0].mxu0
      %v7940 = vpop.f32.mrb[0].mxu0
      %v7941 = vadd.f32 0.0, %v7940
      %v7942 = vpop.f32.mrb[0].mxu0
      %7943 = vmatprep.mubr.bf16.mxu0 0
      %7944 = vmatmul.mubr.bf16.gmra.mrb[0].mxu0 %v7811
      %v7945 = vpop.f32.mrb[0].mxu0
      %v7946 = vadd.f32 0.0, %v7945
      %v7947 = vpop.f32.mrb[0].mxu0
      %v7948 = vpop.f32.mrb[0].mxu0
      %v7949 = vadd.f32 0.0, %v7948
      %v7950 = vpop.f32.mrb[0].mxu0
      %7951 = vmatprep.mubr.bf16.mxu0 0
      %7952 = vmatmul.mubr.bf16.gmra.mrb[0].mxu0 %v7814
      %v7953 = vpop.f32.mrb[0].mxu0
      %v7954 = vadd.f32 0.0, %v7953
      %v7955 = vpop.f32.mrb[0].mxu0
      %v7956 = vpop.f32.mrb[0].mxu0
      %v7957 = vadd.f32 0.0, %v7956
      %v7958 = vpop.f32.mrb[0].mxu0
      %7959 = vmatprep.mubr.bf16.mxu0 0
      %7960 = vmatmul.mubr.bf16.gmra.mrb[0].mxu0 %v7817
      %v7961 = vpop.f32.mrb[0].mxu0
      %v7962 = vadd.f32 0.0, %v7961
      %v7963 = vpop.f32.mrb[0].mxu0
      %v7964 = vpop.f32.mrb[0].mxu0
      %v7965 = vadd.f32 0.0, %v7964
      %v7966 = vpop.f32.mrb[0].mxu0
      %7967 = vmatprep.mubr.bf16.mxu0 0
      %7968 = vmatmul.mubr.bf16.gmra.mrb[0].mxu0 %v7820
      %v7969 = vpop.f32.mrb[0].mxu0
      %v7970 = vadd.f32 0.0, %v7969
      %v7971 = vpop.f32.mrb[0].mxu0
      %v7972 = vpop.f32.mrb[0].mxu0
      %v7973 = vadd.f32 0.0, %v7972
      %v7974 = vpop.f32.mrb[0].mxu0
      %7975 = vmatprep.mubr.bf16.mxu0 0
      %7976 = vmatmul.mubr.bf16.gmra.mrb[0].mxu0 %v7823
      %v7977 = vpop.f32.mrb[0].mxu0
      %v7978 = vadd.f32 0.0, %v7977
      %v7979 = vpop.f32.mrb[0].mxu0
      %v7980 = vpop.f32.mrb[0].mxu0
      %v7981 = vadd.f32 0.0, %v7980
      %v7982 = vpop.f32.mrb[0].mxu0
      %7983 = vmatprep.mubr.bf16.mxu0 0
      %7984 = vmatmul.mubr.bf16.gmra.mrb[0].mxu0 %v7826
      %v7985 = vpop.f32.mrb[0].mxu0
      %v7986 = vadd.f32 0.0, %v7985
      %v7987 = vpop.f32.mrb[0].mxu0
      %v7988 = vpop.f32.mrb[0].mxu0
      %v7989 = vadd.f32 0.0, %v7988
      %v7990 = vpop.f32.mrb[0].mxu0
      %7991 = vdwg.mxu0
      %v7992 = vadd.f32 %v7572, %v7866
      %v7993 = vadd.f32 %v7575, %v7869
      %v7994 = vadd.f32 %v7580, %v7874
      %v7995 = vadd.f32 %v7583, %v7877
      %v7996 = vadd.f32 %v7588, %v7882
      %v7997 = vadd.f32 %v7591, %v7885
      %v7998 = vadd.f32 %v7596, %v7890
      %v7999 = vadd.f32 %v7599, %v7893
      %v8000 = vadd.f32 %v7604, %v7898
      %v8001 = vadd.f32 %v7607, %v7901
      %v8002 = vadd.f32 %v7612, %v7906
      %v8003 = vadd.f32 %v7615, %v7909
      %v8004 = vadd.f32 %v7620, %v7914
      %v8005 = vadd.f32 %v7623, %v7917
      %v8006 = vadd.f32 %v7628, %v7922
      %v8007 = vadd.f32 %v7631, %v7925
      %v8008 = vadd.f32 %v7636, %v7930
      %v8009 = vadd.f32 %v7639, %v7933
      %v8010 = vadd.f32 %v7644, %v7938
      %v8011 = vadd.f32 %v7647, %v7941
      %v8012 = vadd.f32 %v7652, %v7946
      %v8013 = vadd.f32 %v7655, %v7949
      %v8014 = vadd.f32 %v7660, %v7954
      %v8015 = vadd.f32 %v7663, %v7957
      %v8016 = vadd.f32 %v7668, %v7962
      %v8017 = vadd.f32 %v7671, %v7965
      %v8018 = vadd.f32 %v7676, %v7970
      %v8019 = vadd.f32 %v7679, %v7973
      %v8020 = vadd.f32 %v7684, %v7978
      %v8021 = vadd.f32 %v7687, %v7981
      %v8022 = vadd.f32 %v7692, %v7986
      %v8023 = vadd.f32 %v7695, %v7989
      %v8024 = vld [vmem:[#allocation5 + $0x17] sm:$0xff]
      %v8025 = vld [vmem:[#allocation5 + $0x1f] sm:$0xff]
      %v8026 = vld [vmem:[#allocation5 + $0x27] sm:$0xff]
      %v8027 = vld [vmem:[#allocation5 + $0x2f] sm:$0xff]
      %v8028 = vld [vmem:[#allocation5 + $0x37] sm:$0xff]
      %v8029 = vld [vmem:[#allocation5 + $0x3f] sm:$0xff]
      %v8030 = vld [vmem:[#allocation5 + $0x47] sm:$0xff]
      %v8031 = vld [vmem:[#allocation5 + $0x4f] sm:$0xff]
      %v8032 = vld [vmem:[#allocation5 + $0x57] sm:$0xff]
      %v8033 = vld [vmem:[#allocation5 + $0x5f] sm:$0xff]
      %v8034 = vld [vmem:[#allocation5 + $0x67] sm:$0xff]
      %v8035 = vld [vmem:[#allocation5 + $0x6f] sm:$0xff]
      %v8036 = vld [vmem:[#allocation5 + $0x77] sm:$0xff]
      %v8037 = vld [vmem:[#allocation5 + $0x7f] sm:$0xff]
      %v8038 = vld [vmem:[#allocation5 + $0x87] sm:$0xff]
      %v8039 = vld [vmem:[#allocation5 + $0x8f] sm:$0xff]
      %v8040 = vld [vmem:[#allocation5 + $0x97] sm:$0xff]
      %v8041 = vld [vmem:[#allocation5 + $0x9f] sm:$0xff]
      %v8042 = vld [vmem:[#allocation5 + $0xa7] sm:$0xff]
      %v8043 = vld [vmem:[#allocation5 + $0xaf] sm:$0xff]
      %v8044 = vld [vmem:[#allocation5 + $0xb7] sm:$0xff]
      %v8045 = vld [vmem:[#allocation5 + $0xbf] sm:$0xff]
      %v8046 = vld [vmem:[#allocation5 + $0xc7] sm:$0xff]
      %v8047 = vld [vmem:[#allocation5 + $0xcf] sm:$0xff]
      %v8048 = vld [vmem:[#allocation5 + $0xd7] sm:$0xff]
      %v8049 = vld [vmem:[#allocation5 + $0xdf] sm:$0xff]
      %v8050 = vld [vmem:[#allocation5 + $0xe7] sm:$0xff]
      %v8051 = vld [vmem:[#allocation5 + $0xef] sm:$0xff]
      %v8052 = vld [vmem:[#allocation5 + $0xf7] sm:$0xff]
      %v8053 = vld [vmem:[#allocation5 + $0xff] sm:$0xff]
      %v8054 = vld [vmem:[#allocation5 + $0x107] sm:$0xff]
      %v8055 = vld [vmem:[#allocation5 + $0x10f] sm:$0xff]
      %v8056 = vsel %vm930, %v8024, 0.0
      %v8057 = vsel %vm931, %v8025, 0.0
      %v8058 = vsel %vm932, %v8026, 0.0
      %v8059 = vsel %vm933, %v8027, 0.0
      %v8060 = vsel %vm934, %v8028, 0.0
      %v8061 = vsel %vm935, %v8029, 0.0
      %v8062 = vsel %vm936, %v8030, 0.0
      %v8063 = vsel %vm937, %v8031, 0.0
      %v8064 = vsel %vm938, %v8032, 0.0
      %v8065 = vsel %vm939, %v8033, 0.0
      %v8066 = vsel %vm940, %v8034, 0.0
      %v8067 = vsel %vm941, %v8035, 0.0
      %v8068 = vsel %vm942, %v8036, 0.0
      %v8069 = vsel %vm943, %v8037, 0.0
      %v8070 = vsel %vm944, %v8038, 0.0
      %v8071 = vsel %vm945, %v8039, 0.0
      %v8072 = vsel %vm946, %v8040, 0.0
      %v8073 = vsel %vm947, %v8041, 0.0
      %v8074 = vsel %vm948, %v8042, 0.0
      %v8075 = vsel %vm949, %v8043, 0.0
      %v8076 = vsel %vm950, %v8044, 0.0
      %v8077 = vsel %vm951, %v8045, 0.0
      %v8078 = vsel %vm952, %v8046, 0.0
      %v8079 = vsel %vm953, %v8047, 0.0
      %v8080 = vsel %vm954, %v8048, 0.0
      %v8081 = vsel %vm955, %v8049, 0.0
      %v8082 = vsel %vm956, %v8050, 0.0
      %v8083 = vsel %vm957, %v8051, 0.0
      %v8084 = vsel %vm958, %v8052, 0.0
      %v8085 = vsel %vm959, %v8053, 0.0
      %v8086 = vsel %vm960, %v8054, 0.0
      %v8087 = vsel %vm961, %v8055, 0.0
      %v8088 = vpack.c.bf16 %v8057, %v8056
      %v8089 = vpack.c.bf16 %v8059, %v8058
      %v8090 = vpack.c.bf16 %v8061, %v8060
      %v8091 = vpack.c.bf16 %v8063, %v8062
      %v8092 = vpack.c.bf16 %v8065, %v8064
      %v8093 = vpack.c.bf16 %v8067, %v8066
      %v8094 = vpack.c.bf16 %v8069, %v8068
      %v8095 = vpack.c.bf16 %v8071, %v8070
      %v8096 = vpack.c.bf16 %v8073, %v8072
      %v8097 = vpack.c.bf16 %v8075, %v8074
      %v8098 = vpack.c.bf16 %v8077, %v8076
      %v8099 = vpack.c.bf16 %v8079, %v8078
      %v8100 = vpack.c.bf16 %v8081, %v8080
      %v8101 = vpack.c.bf16 %v8083, %v8082
      %v8102 = vpack.c.bf16 %v8085, %v8084
      %v8103 = vpack.c.bf16 %v8087, %v8086
      %s8104 = scalar_lea.vmem %s10, 12
      %v8105 = vld [vmem:[%s8104] sm:$0xf]
      %v8107 = vsel %vm4337, %v8088, 0
      %v8110 = vsel %vm4337, %v8089, 0
      %v8113 = vsel %vm4337, %v8090, 0
      %v8116 = vsel %vm4337, %v8091, 0
      %v8119 = vsel %vm4337, %v8092, 0
      %v8122 = vsel %vm4337, %v8093, 0
      %v8125 = vsel %vm4337, %v8094, 0
      %v8128 = vsel %vm4337, %v8095, 0
      %v8131 = vsel %vm4337, %v8096, 0
      %v8134 = vsel %vm4337, %v8097, 0
      %v8137 = vsel %vm4337, %v8098, 0
      %v8140 = vsel %vm4337, %v8099, 0
      %v8143 = vsel %vm4337, %v8100, 0
      %v8146 = vsel %vm4337, %v8101, 0
      %v8149 = vsel %vm4337, %v8102, 0
      %v8152 = vsel %vm4337, %v8103, 0
      %v8155 = vsel %vm4509, %v8105, 0
      %8157 = vmatprep.subr.bf16.mxu0 0
      %8158 = vmatpush1.bf16.msra.mxu0 %v8155
      %8159 = vmatprep.subr.bf16.mxu0 0
      %8160 = vmatpush1.bf16.msra.mxu0 0
      %8161 = vmatprep.subr.bf16.mxu0 0
      %8162 = vmatpush1.bf16.msra.mxu0 0
      %8163 = vmatprep.subr.bf16.mxu0 0
      %8164 = vmatpush1.bf16.msra.mxu0 0
      %8165 = vmatprep.subr.bf16.mxu0 0
      %8166 = vmatpush1.bf16.msra.mxu0 0
      %8167 = vmatprep.subr.bf16.mxu0 0
      %8168 = vmatpush1.bf16.msra.mxu0 0
      %8169 = vmatprep.subr.bf16.mxu0 0
      %8170 = vmatpush1.bf16.msra.mxu0 0
      %8171 = vmatprep.subr.bf16.mxu0 0
      %8172 = vmatpush1.bf16.msra.mxu0 0
      %8173 = vmatprep.subr.bf16.mxu0 0
      %8174 = vmatpush1.bf16.msra.mxu0 0
      %8175 = vmatprep.subr.bf16.mxu0 0
      %8176 = vmatpush1.bf16.msra.mxu0 0
      %8177 = vmatprep.subr.bf16.mxu0 0
      %8178 = vmatpush1.bf16.msra.mxu0 0
      %8179 = vmatprep.subr.bf16.mxu0 0
      %8180 = vmatpush1.bf16.msra.mxu0 0
      %8181 = vmatprep.subr.bf16.mxu0 0
      %8182 = vmatpush1.bf16.msra.mxu0 0
      %8183 = vmatprep.subr.bf16.mxu0 0
      %8184 = vmatpush1.bf16.msra.mxu0 0
      %8185 = vmatprep.subr.bf16.mxu0 0
      %8186 = vmatpush1.bf16.msra.mxu0 0
      %8187 = vmatprep.subr.bf16.mxu0 0
      %8188 = vmatpush1.bf16.msra.mxu0 0
      %8189 = vmatprep.mubr.bf16.mxu0 0
      %8190 = vmatmul.mubr.bf16.gmra.mrb[0].mxu0 %v8107
      %v8191 = vpop.f32.mrb[0].mxu0
      %v8192 = vadd.f32 0.0, %v8191
      %v8193 = vpop.f32.mrb[0].mxu0
      %v8194 = vpop.f32.mrb[0].mxu0
      %v8195 = vadd.f32 0.0, %v8194
      %v8196 = vpop.f32.mrb[0].mxu0
      %8197 = vmatprep.mubr.bf16.mxu0 0
      %8198 = vmatmul.mubr.bf16.gmra.mrb[0].mxu0 %v8110
      %v8199 = vpop.f32.mrb[0].mxu0
      %v8200 = vadd.f32 0.0, %v8199
      %v8201 = vpop.f32.mrb[0].mxu0
      %v8202 = vpop.f32.mrb[0].mxu0
      %v8203 = vadd.f32 0.0, %v8202
      %v8204 = vpop.f32.mrb[0].mxu0
      %8205 = vmatprep.mubr.bf16.mxu0 0
      %8206 = vmatmul.mubr.bf16.gmra.mrb[0].mxu0 %v8113
      %v8207 = vpop.f32.mrb[0].mxu0
      %v8208 = vadd.f32 0.0, %v8207
      %v8209 = vpop.f32.mrb[0].mxu0
      %v8210 = vpop.f32.mrb[0].mxu0
      %v8211 = vadd.f32 0.0, %v8210
      %v8212 = vpop.f32.mrb[0].mxu0
      %8213 = vmatprep.mubr.bf16.mxu0 0
      %8214 = vmatmul.mubr.bf16.gmra.mrb[0].mxu0 %v8116
      %v8215 = vpop.f32.mrb[0].mxu0
      %v8216 = vadd.f32 0.0, %v8215
      %v8217 = vpop.f32.mrb[0].mxu0
      %v8218 = vpop.f32.mrb[0].mxu0
      %v8219 = vadd.f32 0.0, %v8218
      %v8220 = vpop.f32.mrb[0].mxu0
      %8221 = vmatprep.mubr.bf16.mxu0 0
      %8222 = vmatmul.mubr.bf16.gmra.mrb[0].mxu0 %v8119
      %v8223 = vpop.f32.mrb[0].mxu0
      %v8224 = vadd.f32 0.0, %v8223
      %v8225 = vpop.f32.mrb[0].mxu0
      %v8226 = vpop.f32.mrb[0].mxu0
      %v8227 = vadd.f32 0.0, %v8226
      %v8228 = vpop.f32.mrb[0].mxu0
      %8229 = vmatprep.mubr.bf16.mxu0 0
      %8230 = vmatmul.mubr.bf16.gmra.mrb[0].mxu0 %v8122
      %v8231 = vpop.f32.mrb[0].mxu0
      %v8232 = vadd.f32 0.0, %v8231
      %v8233 = vpop.f32.mrb[0].mxu0
      %v8234 = vpop.f32.mrb[0].mxu0
      %v8235 = vadd.f32 0.0, %v8234
      %v8236 = vpop.f32.mrb[0].mxu0
      %8237 = vmatprep.mubr.bf16.mxu0 0
      %8238 = vmatmul.mubr.bf16.gmra.mrb[0].mxu0 %v8125
      %v8239 = vpop.f32.mrb[0].mxu0
      %v8240 = vadd.f32 0.0, %v8239
      %v8241 = vpop.f32.mrb[0].mxu0
      %v8242 = vpop.f32.mrb[0].mxu0
      %v8243 = vadd.f32 0.0, %v8242
      %v8244 = vpop.f32.mrb[0].mxu0
      %8245 = vmatprep.mubr.bf16.mxu0 0
      %8246 = vmatmul.mubr.bf16.gmra.mrb[0].mxu0 %v8128
      %v8247 = vpop.f32.mrb[0].mxu0
      %v8248 = vadd.f32 0.0, %v8247
      %v8249 = vpop.f32.mrb[0].mxu0
      %v8250 = vpop.f32.mrb[0].mxu0
      %v8251 = vadd.f32 0.0, %v8250
      %v8252 = vpop.f32.mrb[0].mxu0
      %8253 = vmatprep.mubr.bf16.mxu0 0
      %8254 = vmatmul.mubr.bf16.gmra.mrb[0].mxu0 %v8131
      %v8255 = vpop.f32.mrb[0].mxu0
      %v8256 = vadd.f32 0.0, %v8255
      %v8257 = vpop.f32.mrb[0].mxu0
      %v8258 = vpop.f32.mrb[0].mxu0
      %v8259 = vadd.f32 0.0, %v8258
      %v8260 = vpop.f32.mrb[0].mxu0
      %8261 = vmatprep.mubr.bf16.mxu0 0
      %8262 = vmatmul.mubr.bf16.gmra.mrb[0].mxu0 %v8134
      %v8263 = vpop.f32.mrb[0].mxu0
      %v8264 = vadd.f32 0.0, %v8263
      %v8265 = vpop.f32.mrb[0].mxu0
      %v8266 = vpop.f32.mrb[0].mxu0
      %v8267 = vadd.f32 0.0, %v8266
      %v8268 = vpop.f32.mrb[0].mxu0
      %8269 = vmatprep.mubr.bf16.mxu0 0
      %8270 = vmatmul.mubr.bf16.gmra.mrb[0].mxu0 %v8137
      %v8271 = vpop.f32.mrb[0].mxu0
      %v8272 = vadd.f32 0.0, %v8271
      %v8273 = vpop.f32.mrb[0].mxu0
      %v8274 = vpop.f32.mrb[0].mxu0
      %v8275 = vadd.f32 0.0, %v8274
      %v8276 = vpop.f32.mrb[0].mxu0
      %8277 = vmatprep.mubr.bf16.mxu0 0
      %8278 = vmatmul.mubr.bf16.gmra.mrb[0].mxu0 %v8140
      %v8279 = vpop.f32.mrb[0].mxu0
      %v8280 = vadd.f32 0.0, %v8279
      %v8281 = vpop.f32.mrb[0].mxu0
      %v8282 = vpop.f32.mrb[0].mxu0
      %v8283 = vadd.f32 0.0, %v8282
      %v8284 = vpop.f32.mrb[0].mxu0
      %8285 = vmatprep.mubr.bf16.mxu0 0
      %8286 = vmatmul.mubr.bf16.gmra.mrb[0].mxu0 %v8143
      %v8287 = vpop.f32.mrb[0].mxu0
      %v8288 = vadd.f32 0.0, %v8287
      %v8289 = vpop.f32.mrb[0].mxu0
      %v8290 = vpop.f32.mrb[0].mxu0
      %v8291 = vadd.f32 0.0, %v8290
      %v8292 = vpop.f32.mrb[0].mxu0
      %8293 = vmatprep.mubr.bf16.mxu0 0
      %8294 = vmatmul.mubr.bf16.gmra.mrb[0].mxu0 %v8146
      %v8295 = vpop.f32.mrb[0].mxu0
      %v8296 = vadd.f32 0.0, %v8295
      %v8297 = vpop.f32.mrb[0].mxu0
      %v8298 = vpop.f32.mrb[0].mxu0
      %v8299 = vadd.f32 0.0, %v8298
      %v8300 = vpop.f32.mrb[0].mxu0
      %8301 = vmatprep.mubr.bf16.mxu0 0
      %8302 = vmatmul.mubr.bf16.gmra.mrb[0].mxu0 %v8149
      %v8303 = vpop.f32.mrb[0].mxu0
      %v8304 = vadd.f32 0.0, %v8303
      %v8305 = vpop.f32.mrb[0].mxu0
      %v8306 = vpop.f32.mrb[0].mxu0
      %v8307 = vadd.f32 0.0, %v8306
      %v8308 = vpop.f32.mrb[0].mxu0
      %8309 = vmatprep.mubr.bf16.mxu0 0
      %8310 = vmatmul.mubr.bf16.gmra.mrb[0].mxu0 %v8152
      %v8311 = vpop.f32.mrb[0].mxu0
      %v8312 = vadd.f32 0.0, %v8311
      %v8313 = vpop.f32.mrb[0].mxu0
      %v8314 = vpop.f32.mrb[0].mxu0
      %v8315 = vadd.f32 0.0, %v8314
      %v8316 = vpop.f32.mrb[0].mxu0
      %8317 = vdwg.mxu0
      %v8318 = vadd.f32 %v7992, %v8192
      %v8319 = vadd.f32 %v7993, %v8195
      %v8320 = vadd.f32 %v7994, %v8200
      %v8321 = vadd.f32 %v7995, %v8203
      %v8322 = vadd.f32 %v7996, %v8208
      %v8323 = vadd.f32 %v7997, %v8211
      %v8324 = vadd.f32 %v7998, %v8216
      %v8325 = vadd.f32 %v7999, %v8219
      %v8326 = vadd.f32 %v8000, %v8224
      %v8327 = vadd.f32 %v8001, %v8227
      %v8328 = vadd.f32 %v8002, %v8232
      %v8329 = vadd.f32 %v8003, %v8235
      %v8330 = vadd.f32 %v8004, %v8240
      %v8331 = vadd.f32 %v8005, %v8243
      %v8332 = vadd.f32 %v8006, %v8248
      %v8333 = vadd.f32 %v8007, %v8251
      %v8334 = vadd.f32 %v8008, %v8256
      %v8335 = vadd.f32 %v8009, %v8259
      %v8336 = vadd.f32 %v8010, %v8264
      %v8337 = vadd.f32 %v8011, %v8267
      %v8338 = vadd.f32 %v8012, %v8272
      %v8339 = vadd.f32 %v8013, %v8275
      %v8340 = vadd.f32 %v8014, %v8280
      %v8341 = vadd.f32 %v8015, %v8283
      %v8342 = vadd.f32 %v8016, %v8288
      %v8343 = vadd.f32 %v8017, %v8291
      %v8344 = vadd.f32 %v8018, %v8296
      %v8345 = vadd.f32 %v8019, %v8299
      %v8346 = vadd.f32 %v8020, %v8304
      %v8347 = vadd.f32 %v8021, %v8307
      %v8348 = vadd.f32 %v8022, %v8312
      %v8349 = vadd.f32 %v8023, %v8315
      %v8350 = vld [vmem:[#allocation5 + $0x18] sm:$0xff]
      %v8351 = vld [vmem:[#allocation5 + $0x20] sm:$0xff]
      %v8352 = vld [vmem:[#allocation5 + $0x28] sm:$0xff]
      %v8353 = vld [vmem:[#allocation5 + $0x30] sm:$0xff]
      %v8354 = vld [vmem:[#allocation5 + $0x38] sm:$0xff]
      %v8355 = vld [vmem:[#allocation5 + $0x40] sm:$0xff]
      %v8356 = vld [vmem:[#allocation5 + $0x48] sm:$0xff]
      %v8357 = vld [vmem:[#allocation5 + $0x50] sm:$0xff]
      %v8358 = vld [vmem:[#allocation5 + $0x58] sm:$0xff]
      %v8359 = vld [vmem:[#allocation5 + $0x60] sm:$0xff]
      %v8360 = vld [vmem:[#allocation5 + $0x68] sm:$0xff]
      %v8361 = vld [vmem:[#allocation5 + $0x70] sm:$0xff]
      %v8362 = vld [vmem:[#allocation5 + $0x78] sm:$0xff]
      %v8363 = vld [vmem:[#allocation5 + $0x80] sm:$0xff]
      %v8364 = vld [vmem:[#allocation5 + $0x88] sm:$0xff]
      %v8365 = vld [vmem:[#allocation5 + $0x90] sm:$0xff]
      %v8366 = vld [vmem:[#allocation5 + $0x98] sm:$0xff]
      %v8367 = vld [vmem:[#allocation5 + $0xa0] sm:$0xff]
      %v8368 = vld [vmem:[#allocation5 + $0xa8] sm:$0xff]
      %v8369 = vld [vmem:[#allocation5 + $0xb0] sm:$0xff]
      %v8370 = vld [vmem:[#allocation5 + $0xb8] sm:$0xff]
      %v8371 = vld [vmem:[#allocation5 + $0xc0] sm:$0xff]
      %v8372 = vld [vmem:[#allocation5 + $0xc8] sm:$0xff]
      %v8373 = vld [vmem:[#allocation5 + $0xd0] sm:$0xff]
      %v8374 = vld [vmem:[#allocation5 + $0xd8] sm:$0xff]
      %v8375 = vld [vmem:[#allocation5 + $0xe0] sm:$0xff]
      %v8376 = vld [vmem:[#allocation5 + $0xe8] sm:$0xff]
      %v8377 = vld [vmem:[#allocation5 + $0xf0] sm:$0xff]
      %v8378 = vld [vmem:[#allocation5 + $0xf8] sm:$0xff]
      %v8379 = vld [vmem:[#allocation5 + $0x100] sm:$0xff]
      %v8380 = vld [vmem:[#allocation5 + $0x108] sm:$0xff]
      %v8381 = vld [vmem:[#allocation5 + $0x110] sm:$0xff]
      %v8382 = vpack.c.bf16 %v8351, %v8350
      %v8383 = vpack.c.bf16 %v8353, %v8352
      %v8384 = vpack.c.bf16 %v8355, %v8354
      %v8385 = vpack.c.bf16 %v8357, %v8356
      %v8386 = vpack.c.bf16 %v8359, %v8358
      %v8387 = vpack.c.bf16 %v8361, %v8360
      %v8388 = vpack.c.bf16 %v8363, %v8362
      %v8389 = vpack.c.bf16 %v8365, %v8364
      %v8390 = vpack.c.bf16 %v8367, %v8366
      %v8391 = vpack.c.bf16 %v8369, %v8368
      %v8392 = vpack.c.bf16 %v8371, %v8370
      %v8393 = vpack.c.bf16 %v8373, %v8372
      %v8394 = vpack.c.bf16 %v8375, %v8374
      %v8395 = vpack.c.bf16 %v8377, %v8376
      %v8396 = vpack.c.bf16 %v8379, %v8378
      %v8397 = vpack.c.bf16 %v8381, %v8380
      %s8398 = scalar_lea.vmem %s10, 16
      %v8399 = vld [vmem:[%s8398] sm:$0xf]
      %v8401 = vsel %vm4337, %v8382, 0
      %v8404 = vsel %vm4337, %v8383, 0
      %v8407 = vsel %vm4337, %v8384, 0
      %v8410 = vsel %vm4337, %v8385, 0
      %v8413 = vsel %vm4337, %v8386, 0
      %v8416 = vsel %vm4337, %v8387, 0
      %v8419 = vsel %vm4337, %v8388, 0
      %v8422 = vsel %vm4337, %v8389, 0
      %v8425 = vsel %vm4337, %v8390, 0
      %v8428 = vsel %vm4337, %v8391, 0
      %v8431 = vsel %vm4337, %v8392, 0
      %v8434 = vsel %vm4337, %v8393, 0
      %v8437 = vsel %vm4337, %v8394, 0
      %v8440 = vsel %vm4337, %v8395, 0
      %v8443 = vsel %vm4337, %v8396, 0
      %v8446 = vsel %vm4337, %v8397, 0
      %v8449 = vsel %vm4509, %v8399, 0
      %8451 = vmatprep.subr.bf16.mxu0 0
      %8452 = vmatpush1.bf16.msra.mxu0 %v8449
      %8453 = vmatprep.subr.bf16.mxu0 0
      %8454 = vmatpush1.bf16.msra.mxu0 0
      %8455 = vmatprep.subr.bf16.mxu0 0
      %8456 = vmatpush1.bf16.msra.mxu0 0
      %8457 = vmatprep.subr.bf16.mxu0 0
      %8458 = vmatpush1.bf16.msra.mxu0 0
      %8459 = vmatprep.subr.bf16.mxu0 0
      %8460 = vmatpush1.bf16.msra.mxu0 0
      %8461 = vmatprep.subr.bf16.mxu0 0
      %8462 = vmatpush1.bf16.msra.mxu0 0
      %8463 = vmatprep.subr.bf16.mxu0 0
      %8464 = vmatpush1.bf16.msra.mxu0 0
      %8465 = vmatprep.subr.bf16.mxu0 0
      %8466 = vmatpush1.bf16.msra.mxu0 0
      %8467 = vmatprep.subr.bf16.mxu0 0
      %8468 = vmatpush1.bf16.msra.mxu0 0
      %8469 = vmatprep.subr.bf16.mxu0 0
      %8470 = vmatpush1.bf16.msra.mxu0 0
      %8471 = vmatprep.subr.bf16.mxu0 0
      %8472 = vmatpush1.bf16.msra.mxu0 0
      %8473 = vmatprep.subr.bf16.mxu0 0
      %8474 = vmatpush1.bf16.msra.mxu0 0
      %8475 = vmatprep.subr.bf16.mxu0 0
      %8476 = vmatpush1.bf16.msra.mxu0 0
      %8477 = vmatprep.subr.bf16.mxu0 0
      %8478 = vmatpush1.bf16.msra.mxu0 0
      %8479 = vmatprep.subr.bf16.mxu0 0
      %8480 = vmatpush1.bf16.msra.mxu0 0
      %8481 = vmatprep.subr.bf16.mxu0 0
      %8482 = vmatpush1.bf16.msra.mxu0 0
      %8483 = vmatprep.mubr.bf16.mxu0 0
      %8484 = vmatmul.mubr.bf16.gmra.mrb[0].mxu0 %v8401
      %v8485 = vpop.f32.mrb[0].mxu0
      %v8486 = vadd.f32 0.0, %v8485
      %v8487 = vpop.f32.mrb[0].mxu0
      %v8488 = vpop.f32.mrb[0].mxu0
      %v8489 = vadd.f32 0.0, %v8488
      %v8490 = vpop.f32.mrb[0].mxu0
      %8491 = vmatprep.mubr.bf16.mxu0 0
      %8492 = vmatmul.mubr.bf16.gmra.mrb[0].mxu0 %v8404
      %v8493 = vpop.f32.mrb[0].mxu0
      %v8494 = vadd.f32 0.0, %v8493
      %v8495 = vpop.f32.mrb[0].mxu0
      %v8496 = vpop.f32.mrb[0].mxu0
      %v8497 = vadd.f32 0.0, %v8496
      %v8498 = vpop.f32.mrb[0].mxu0
      %8499 = vmatprep.mubr.bf16.mxu0 0
      %8500 = vmatmul.mubr.bf16.gmra.mrb[0].mxu0 %v8407
      %v8501 = vpop.f32.mrb[0].mxu0
      %v8502 = vadd.f32 0.0, %v8501
      %v8503 = vpop.f32.mrb[0].mxu0
      %v8504 = vpop.f32.mrb[0].mxu0
      %v8505 = vadd.f32 0.0, %v8504
      %v8506 = vpop.f32.mrb[0].mxu0
      %8507 = vmatprep.mubr.bf16.mxu0 0
      %8508 = vmatmul.mubr.bf16.gmra.mrb[0].mxu0 %v8410
      %v8509 = vpop.f32.mrb[0].mxu0
      %v8510 = vadd.f32 0.0, %v8509
      %v8511 = vpop.f32.mrb[0].mxu0
      %v8512 = vpop.f32.mrb[0].mxu0
      %v8513 = vadd.f32 0.0, %v8512
      %v8514 = vpop.f32.mrb[0].mxu0
      %8515 = vmatprep.mubr.bf16.mxu0 0
      %8516 = vmatmul.mubr.bf16.gmra.mrb[0].mxu0 %v8413
      %v8517 = vpop.f32.mrb[0].mxu0
      %v8518 = vadd.f32 0.0, %v8517
      %v8519 = vpop.f32.mrb[0].mxu0
      %v8520 = vpop.f32.mrb[0].mxu0
      %v8521 = vadd.f32 0.0, %v8520
      %v8522 = vpop.f32.mrb[0].mxu0
      %8523 = vmatprep.mubr.bf16.mxu0 0
      %8524 = vmatmul.mubr.bf16.gmra.mrb[0].mxu0 %v8416
      %v8525 = vpop.f32.mrb[0].mxu0
      %v8526 = vadd.f32 0.0, %v8525
      %v8527 = vpop.f32.mrb[0].mxu0
      %v8528 = vpop.f32.mrb[0].mxu0
      %v8529 = vadd.f32 0.0, %v8528
      %v8530 = vpop.f32.mrb[0].mxu0
      %8531 = vmatprep.mubr.bf16.mxu0 0
      %8532 = vmatmul.mubr.bf16.gmra.mrb[0].mxu0 %v8419
      %v8533 = vpop.f32.mrb[0].mxu0
      %v8534 = vadd.f32 0.0, %v8533
      %v8535 = vpop.f32.mrb[0].mxu0
      %v8536 = vpop.f32.mrb[0].mxu0
      %v8537 = vadd.f32 0.0, %v8536
      %v8538 = vpop.f32.mrb[0].mxu0
      %8539 = vmatprep.mubr.bf16.mxu0 0
      %8540 = vmatmul.mubr.bf16.gmra.mrb[0].mxu0 %v8422
      %v8541 = vpop.f32.mrb[0].mxu0
      %v8542 = vadd.f32 0.0, %v8541
      %v8543 = vpop.f32.mrb[0].mxu0
      %v8544 = vpop.f32.mrb[0].mxu0
      %v8545 = vadd.f32 0.0, %v8544
      %v8546 = vpop.f32.mrb[0].mxu0
      %8547 = vmatprep.mubr.bf16.mxu0 0
      %8548 = vmatmul.mubr.bf16.gmra.mrb[0].mxu0 %v8425
      %v8549 = vpop.f32.mrb[0].mxu0
      %v8550 = vadd.f32 0.0, %v8549
      %v8551 = vpop.f32.mrb[0].mxu0
      %v8552 = vpop.f32.mrb[0].mxu0
      %v8553 = vadd.f32 0.0, %v8552
      %v8554 = vpop.f32.mrb[0].mxu0
      %8555 = vmatprep.mubr.bf16.mxu0 0
      %8556 = vmatmul.mubr.bf16.gmra.mrb[0].mxu0 %v8428
      %v8557 = vpop.f32.mrb[0].mxu0
      %v8558 = vadd.f32 0.0, %v8557
      %v8559 = vpop.f32.mrb[0].mxu0
      %v8560 = vpop.f32.mrb[0].mxu0
      %v8561 = vadd.f32 0.0, %v8560
      %v8562 = vpop.f32.mrb[0].mxu0
      %8563 = vmatprep.mubr.bf16.mxu0 0
      %8564 = vmatmul.mubr.bf16.gmra.mrb[0].mxu0 %v8431
      %v8565 = vpop.f32.mrb[0].mxu0
      %v8566 = vadd.f32 0.0, %v8565
      %v8567 = vpop.f32.mrb[0].mxu0
      %v8568 = vpop.f32.mrb[0].mxu0
      %v8569 = vadd.f32 0.0, %v8568
      %v8570 = vpop.f32.mrb[0].mxu0
      %8571 = vmatprep.mubr.bf16.mxu0 0
      %8572 = vmatmul.mubr.bf16.gmra.mrb[0].mxu0 %v8434
      %v8573 = vpop.f32.mrb[0].mxu0
      %v8574 = vadd.f32 0.0, %v8573
      %v8575 = vpop.f32.mrb[0].mxu0
      %v8576 = vpop.f32.mrb[0].mxu0
      %v8577 = vadd.f32 0.0, %v8576
      %v8578 = vpop.f32.mrb[0].mxu0
      %8579 = vmatprep.mubr.bf16.mxu0 0
      %8580 = vmatmul.mubr.bf16.gmra.mrb[0].mxu0 %v8437
      %v8581 = vpop.f32.mrb[0].mxu0
      %v8582 = vadd.f32 0.0, %v8581
      %v8583 = vpop.f32.mrb[0].mxu0
      %v8584 = vpop.f32.mrb[0].mxu0
      %v8585 = vadd.f32 0.0, %v8584
      %v8586 = vpop.f32.mrb[0].mxu0
      %8587 = vmatprep.mubr.bf16.mxu0 0
      %8588 = vmatmul.mubr.bf16.gmra.mrb[0].mxu0 %v8440
      %v8589 = vpop.f32.mrb[0].mxu0
      %v8590 = vadd.f32 0.0, %v8589
      %v8591 = vpop.f32.mrb[0].mxu0
      %v8592 = vpop.f32.mrb[0].mxu0
      %v8593 = vadd.f32 0.0, %v8592
      %v8594 = vpop.f32.mrb[0].mxu0
      %8595 = vmatprep.mubr.bf16.mxu0 0
      %8596 = vmatmul.mubr.bf16.gmra.mrb[0].mxu0 %v8443
      %v8597 = vpop.f32.mrb[0].mxu0
      %v8598 = vadd.f32 0.0, %v8597
      %v8599 = vpop.f32.mrb[0].mxu0
      %v8600 = vpop.f32.mrb[0].mxu0
      %v8601 = vadd.f32 0.0, %v8600
      %v8602 = vpop.f32.mrb[0].mxu0
      %8603 = vmatprep.mubr.bf16.mxu0 0
      %8604 = vmatmul.mubr.bf16.gmra.mrb[0].mxu0 %v8446
      %v8605 = vpop.f32.mrb[0].mxu0
      %v8606 = vadd.f32 0.0, %v8605
      %v8607 = vpop.f32.mrb[0].mxu0
      %v8608 = vpop.f32.mrb[0].mxu0
      %v8609 = vadd.f32 0.0, %v8608
      %v8610 = vpop.f32.mrb[0].mxu0
      %8611 = vdwg.mxu0
      %v8612 = vadd.f32 %v8318, %v8486
      %v8613 = vadd.f32 %v8319, %v8489
      %v8614 = vadd.f32 %v8320, %v8494
      %v8615 = vadd.f32 %v8321, %v8497
      %v8616 = vadd.f32 %v8322, %v8502
      %v8617 = vadd.f32 %v8323, %v8505
      %v8618 = vadd.f32 %v8324, %v8510
      %v8619 = vadd.f32 %v8325, %v8513
      %v8620 = vadd.f32 %v8326, %v8518
      %v8621 = vadd.f32 %v8327, %v8521
      %v8622 = vadd.f32 %v8328, %v8526
      %v8623 = vadd.f32 %v8329, %v8529
      %v8624 = vadd.f32 %v8330, %v8534
      %v8625 = vadd.f32 %v8331, %v8537
      %v8626 = vadd.f32 %v8332, %v8542
      %v8627 = vadd.f32 %v8333, %v8545
      %v8628 = vadd.f32 %v8334, %v8550
      %v8629 = vadd.f32 %v8335, %v8553
      %v8630 = vadd.f32 %v8336, %v8558
      %v8631 = vadd.f32 %v8337, %v8561
      %v8632 = vadd.f32 %v8338, %v8566
      %v8633 = vadd.f32 %v8339, %v8569
      %v8634 = vadd.f32 %v8340, %v8574
      %v8635 = vadd.f32 %v8341, %v8577
      %v8636 = vadd.f32 %v8342, %v8582
      %v8637 = vadd.f32 %v8343, %v8585
      %v8638 = vadd.f32 %v8344, %v8590
      %v8639 = vadd.f32 %v8345, %v8593
      %v8640 = vadd.f32 %v8346, %v8598
      %v8641 = vadd.f32 %v8347, %v8601
      %v8642 = vadd.f32 %v8348, %v8606
      %v8643 = vadd.f32 %v8349, %v8609
      %v8644 = vld [vmem:[#allocation5 + $0x19] sm:$0xff]
      %v8645 = vld [vmem:[#allocation5 + $0x21] sm:$0xff]
      %v8646 = vld [vmem:[#allocation5 + $0x29] sm:$0xff]
      %v8647 = vld [vmem:[#allocation5 + $0x31] sm:$0xff]
      %v8648 = vld [vmem:[#allocation5 + $0x39] sm:$0xff]
      %v8649 = vld [vmem:[#allocation5 + $0x41] sm:$0xff]
      %v8650 = vld [vmem:[#allocation5 + $0x49] sm:$0xff]
      %v8651 = vld [vmem:[#allocation5 + $0x51] sm:$0xff]
      %v8652 = vld [vmem:[#allocation5 + $0x59] sm:$0xff]
      %v8653 = vld [vmem:[#allocation5 + $0x61] sm:$0xff]
      %v8654 = vld [vmem:[#allocation5 + $0x69] sm:$0xff]
      %v8655 = vld [vmem:[#allocation5 + $0x71] sm:$0xff]
      %v8656 = vld [vmem:[#allocation5 + $0x79] sm:$0xff]
      %v8657 = vld [vmem:[#allocation5 + $0x81] sm:$0xff]
      %v8658 = vld [vmem:[#allocation5 + $0x89] sm:$0xff]
      %v8659 = vld [vmem:[#allocation5 + $0x91] sm:$0xff]
      %v8660 = vld [vmem:[#allocation5 + $0x99] sm:$0xff]
      %v8661 = vld [vmem:[#allocation5 + $0xa1] sm:$0xff]
      %v8662 = vld [vmem:[#allocation5 + $0xa9] sm:$0xff]
      %v8663 = vld [vmem:[#allocation5 + $0xb1] sm:$0xff]
      %v8664 = vld [vmem:[#allocation5 + $0xb9] sm:$0xff]
      %v8665 = vld [vmem:[#allocation5 + $0xc1] sm:$0xff]
      %v8666 = vld [vmem:[#allocation5 + $0xc9] sm:$0xff]
      %v8667 = vld [vmem:[#allocation5 + $0xd1] sm:$0xff]
      %v8668 = vld [vmem:[#allocation5 + $0xd9] sm:$0xff]
      %v8669 = vld [vmem:[#allocation5 + $0xe1] sm:$0xff]
      %v8670 = vld [vmem:[#allocation5 + $0xe9] sm:$0xff]
      %v8671 = vld [vmem:[#allocation5 + $0xf1] sm:$0xff]
      %v8672 = vld [vmem:[#allocation5 + $0xf9] sm:$0xff]
      %v8673 = vld [vmem:[#allocation5 + $0x101] sm:$0xff]
      %v8674 = vld [vmem:[#allocation5 + $0x109] sm:$0xff]
      %v8675 = vld [vmem:[#allocation5 + $0x111] sm:$0xff]
      %v8676 = vsel %vm962, %v8644, 0.0
      %v8677 = vsel %vm963, %v8645, 0.0
      %v8678 = vsel %vm964, %v8646, 0.0
      %v8679 = vsel %vm965, %v8647, 0.0
      %v8680 = vsel %vm966, %v8648, 0.0
      %v8681 = vsel %vm967, %v8649, 0.0
      %v8682 = vsel %vm968, %v8650, 0.0
      %v8683 = vsel %vm969, %v8651, 0.0
      %v8684 = vsel %vm970, %v8652, 0.0
      %v8685 = vsel %vm971, %v8653, 0.0
      %v8686 = vsel %vm972, %v8654, 0.0
      %v8687 = vsel %vm973, %v8655, 0.0
      %v8688 = vsel %vm974, %v8656, 0.0
      %v8689 = vsel %vm975, %v8657, 0.0
      %v8690 = vsel %vm976, %v8658, 0.0
      %v8691 = vsel %vm977, %v8659, 0.0
      %v8692 = vsel %vm978, %v8660, 0.0
      %v8693 = vsel %vm979, %v8661, 0.0
      %v8694 = vsel %vm980, %v8662, 0.0
      %v8695 = vsel %vm981, %v8663, 0.0
      %v8696 = vsel %vm982, %v8664, 0.0
      %v8697 = vsel %vm983, %v8665, 0.0
      %v8698 = vsel %vm984, %v8666, 0.0
      %v8699 = vsel %vm985, %v8667, 0.0
      %v8700 = vsel %vm986, %v8668, 0.0
      %v8701 = vsel %vm987, %v8669, 0.0
      %v8702 = vsel %vm988, %v8670, 0.0
      %v8703 = vsel %vm989, %v8671, 0.0
      %v8704 = vsel %vm990, %v8672, 0.0
      %v8705 = vsel %vm991, %v8673, 0.0
      %v8706 = vsel %vm992, %v8674, 0.0
      %v8707 = vsel %vm993, %v8675, 0.0
      %v8708 = vpack.c.bf16 %v8677, %v8676
      %v8709 = vpack.c.bf16 %v8679, %v8678
      %v8710 = vpack.c.bf16 %v8681, %v8680
      %v8711 = vpack.c.bf16 %v8683, %v8682
      %v8712 = vpack.c.bf16 %v8685, %v8684
      %v8713 = vpack.c.bf16 %v8687, %v8686
      %v8714 = vpack.c.bf16 %v8689, %v8688
      %v8715 = vpack.c.bf16 %v8691, %v8690
      %v8716 = vpack.c.bf16 %v8693, %v8692
      %v8717 = vpack.c.bf16 %v8695, %v8694
      %v8718 = vpack.c.bf16 %v8697, %v8696
      %v8719 = vpack.c.bf16 %v8699, %v8698
      %v8720 = vpack.c.bf16 %v8701, %v8700
      %v8721 = vpack.c.bf16 %v8703, %v8702
      %v8722 = vpack.c.bf16 %v8705, %v8704
      %v8723 = vpack.c.bf16 %v8707, %v8706
      %s8724 = scalar_lea.vmem %s10, 20
      %v8725 = vld [vmem:[%s8724] sm:$0xf]
      %v8727 = vsel %vm4337, %v8708, 0
      %v8730 = vsel %vm4337, %v8709, 0
      %v8733 = vsel %vm4337, %v8710, 0
      %v8736 = vsel %vm4337, %v8711, 0
      %v8739 = vsel %vm4337, %v8712, 0
      %v8742 = vsel %vm4337, %v8713, 0
      %v8745 = vsel %vm4337, %v8714, 0
      %v8748 = vsel %vm4337, %v8715, 0
      %v8751 = vsel %vm4337, %v8716, 0
      %v8754 = vsel %vm4337, %v8717, 0
      %v8757 = vsel %vm4337, %v8718, 0
      %v8760 = vsel %vm4337, %v8719, 0
      %v8763 = vsel %vm4337, %v8720, 0
      %v8766 = vsel %vm4337, %v8721, 0
      %v8769 = vsel %vm4337, %v8722, 0
      %v8772 = vsel %vm4337, %v8723, 0
      %v8775 = vsel %vm4509, %v8725, 0
      %8777 = vmatprep.subr.bf16.mxu0 0
      %8778 = vmatpush1.bf16.msra.mxu0 %v8775
      %8779 = vmatprep.subr.bf16.mxu0 0
      %8780 = vmatpush1.bf16.msra.mxu0 0
      %8781 = vmatprep.subr.bf16.mxu0 0
      %8782 = vmatpush1.bf16.msra.mxu0 0
      %8783 = vmatprep.subr.bf16.mxu0 0
      %8784 = vmatpush1.bf16.msra.mxu0 0
      %8785 = vmatprep.subr.bf16.mxu0 0
      %8786 = vmatpush1.bf16.msra.mxu0 0
      %8787 = vmatprep.subr.bf16.mxu0 0
      %8788 = vmatpush1.bf16.msra.mxu0 0
      %8789 = vmatprep.subr.bf16.mxu0 0
      %8790 = vmatpush1.bf16.msra.mxu0 0
      %8791 = vmatprep.subr.bf16.mxu0 0
      %8792 = vmatpush1.bf16.msra.mxu0 0
      %8793 = vmatprep.subr.bf16.mxu0 0
      %8794 = vmatpush1.bf16.msra.mxu0 0
      %8795 = vmatprep.subr.bf16.mxu0 0
      %8796 = vmatpush1.bf16.msra.mxu0 0
      %8797 = vmatprep.subr.bf16.mxu0 0
      %8798 = vmatpush1.bf16.msra.mxu0 0
      %8799 = vmatprep.subr.bf16.mxu0 0
      %8800 = vmatpush1.bf16.msra.mxu0 0
      %8801 = vmatprep.subr.bf16.mxu0 0
      %8802 = vmatpush1.bf16.msra.mxu0 0
      %8803 = vmatprep.subr.bf16.mxu0 0
      %8804 = vmatpush1.bf16.msra.mxu0 0
      %8805 = vmatprep.subr.bf16.mxu0 0
      %8806 = vmatpush1.bf16.msra.mxu0 0
      %8807 = vmatprep.subr.bf16.mxu0 0
      %8808 = vmatpush1.bf16.msra.mxu0 0
      %8809 = vmatprep.mubr.bf16.mxu0 0
      %8810 = vmatmul.mubr.bf16.gmra.mrb[0].mxu0 %v8727
      %v8811 = vpop.f32.mrb[0].mxu0
      %v8812 = vadd.f32 0.0, %v8811
      %v8813 = vpop.f32.mrb[0].mxu0
      %v8814 = vpop.f32.mrb[0].mxu0
      %v8815 = vadd.f32 0.0, %v8814
      %v8816 = vpop.f32.mrb[0].mxu0
      %8817 = vmatprep.mubr.bf16.mxu0 0
      %8818 = vmatmul.mubr.bf16.gmra.mrb[0].mxu0 %v8730
      %v8819 = vpop.f32.mrb[0].mxu0
      %v8820 = vadd.f32 0.0, %v8819
      %v8821 = vpop.f32.mrb[0].mxu0
      %v8822 = vpop.f32.mrb[0].mxu0
      %v8823 = vadd.f32 0.0, %v8822
      %v8824 = vpop.f32.mrb[0].mxu0
      %8825 = vmatprep.mubr.bf16.mxu0 0
      %8826 = vmatmul.mubr.bf16.gmra.mrb[0].mxu0 %v8733
      %v8827 = vpop.f32.mrb[0].mxu0
      %v8828 = vadd.f32 0.0, %v8827
      %v8829 = vpop.f32.mrb[0].mxu0
      %v8830 = vpop.f32.mrb[0].mxu0
      %v8831 = vadd.f32 0.0, %v8830
      %v8832 = vpop.f32.mrb[0].mxu0
      %8833 = vmatprep.mubr.bf16.mxu0 0
      %8834 = vmatmul.mubr.bf16.gmra.mrb[0].mxu0 %v8736
      %v8835 = vpop.f32.mrb[0].mxu0
      %v8836 = vadd.f32 0.0, %v8835
      %v8837 = vpop.f32.mrb[0].mxu0
      %v8838 = vpop.f32.mrb[0].mxu0
      %v8839 = vadd.f32 0.0, %v8838
      %v8840 = vpop.f32.mrb[0].mxu0
      %8841 = vmatprep.mubr.bf16.mxu0 0
      %8842 = vmatmul.mubr.bf16.gmra.mrb[0].mxu0 %v8739
      %v8843 = vpop.f32.mrb[0].mxu0
      %v8844 = vadd.f32 0.0, %v8843
      %v8845 = vpop.f32.mrb[0].mxu0
      %v8846 = vpop.f32.mrb[0].mxu0
      %v8847 = vadd.f32 0.0, %v8846
      %v8848 = vpop.f32.mrb[0].mxu0
      %8849 = vmatprep.mubr.bf16.mxu0 0
      %8850 = vmatmul.mubr.bf16.gmra.mrb[0].mxu0 %v8742
      %v8851 = vpop.f32.mrb[0].mxu0
      %v8852 = vadd.f32 0.0, %v8851
      %v8853 = vpop.f32.mrb[0].mxu0
      %v8854 = vpop.f32.mrb[0].mxu0
      %v8855 = vadd.f32 0.0, %v8854
      %v8856 = vpop.f32.mrb[0].mxu0
      %8857 = vmatprep.mubr.bf16.mxu0 0
      %8858 = vmatmul.mubr.bf16.gmra.mrb[0].mxu0 %v8745
      %v8859 = vpop.f32.mrb[0].mxu0
      %v8860 = vadd.f32 0.0, %v8859
      %v8861 = vpop.f32.mrb[0].mxu0
      %v8862 = vpop.f32.mrb[0].mxu0
      %v8863 = vadd.f32 0.0, %v8862
      %v8864 = vpop.f32.mrb[0].mxu0
      %8865 = vmatprep.mubr.bf16.mxu0 0
      %8866 = vmatmul.mubr.bf16.gmra.mrb[0].mxu0 %v8748
      %v8867 = vpop.f32.mrb[0].mxu0
      %v8868 = vadd.f32 0.0, %v8867
      %v8869 = vpop.f32.mrb[0].mxu0
      %v8870 = vpop.f32.mrb[0].mxu0
      %v8871 = vadd.f32 0.0, %v8870
      %v8872 = vpop.f32.mrb[0].mxu0
      %8873 = vmatprep.mubr.bf16.mxu0 0
      %8874 = vmatmul.mubr.bf16.gmra.mrb[0].mxu0 %v8751
      %v8875 = vpop.f32.mrb[0].mxu0
      %v8876 = vadd.f32 0.0, %v8875
      %v8877 = vpop.f32.mrb[0].mxu0
      %v8878 = vpop.f32.mrb[0].mxu0
      %v8879 = vadd.f32 0.0, %v8878
      %v8880 = vpop.f32.mrb[0].mxu0
      %8881 = vmatprep.mubr.bf16.mxu0 0
      %8882 = vmatmul.mubr.bf16.gmra.mrb[0].mxu0 %v8754
      %v8883 = vpop.f32.mrb[0].mxu0
      %v8884 = vadd.f32 0.0, %v8883
      %v8885 = vpop.f32.mrb[0].mxu0
      %v8886 = vpop.f32.mrb[0].mxu0
      %v8887 = vadd.f32 0.0, %v8886
      %v8888 = vpop.f32.mrb[0].mxu0
      %8889 = vmatprep.mubr.bf16.mxu0 0
      %8890 = vmatmul.mubr.bf16.gmra.mrb[0].mxu0 %v8757
      %v8891 = vpop.f32.mrb[0].mxu0
      %v8892 = vadd.f32 0.0, %v8891
      %v8893 = vpop.f32.mrb[0].mxu0
      %v8894 = vpop.f32.mrb[0].mxu0
      %v8895 = vadd.f32 0.0, %v8894
      %v8896 = vpop.f32.mrb[0].mxu0
      %8897 = vmatprep.mubr.bf16.mxu0 0
      %8898 = vmatmul.mubr.bf16.gmra.mrb[0].mxu0 %v8760
      %v8899 = vpop.f32.mrb[0].mxu0
      %v8900 = vadd.f32 0.0, %v8899
      %v8901 = vpop.f32.mrb[0].mxu0
      %v8902 = vpop.f32.mrb[0].mxu0
      %v8903 = vadd.f32 0.0, %v8902
      %v8904 = vpop.f32.mrb[0].mxu0
      %8905 = vmatprep.mubr.bf16.mxu0 0
      %8906 = vmatmul.mubr.bf16.gmra.mrb[0].mxu0 %v8763
      %v8907 = vpop.f32.mrb[0].mxu0
      %v8908 = vadd.f32 0.0, %v8907
      %v8909 = vpop.f32.mrb[0].mxu0
      %v8910 = vpop.f32.mrb[0].mxu0
      %v8911 = vadd.f32 0.0, %v8910
      %v8912 = vpop.f32.mrb[0].mxu0
      %8913 = vmatprep.mubr.bf16.mxu0 0
      %8914 = vmatmul.mubr.bf16.gmra.mrb[0].mxu0 %v8766
      %v8915 = vpop.f32.mrb[0].mxu0
      %v8916 = vadd.f32 0.0, %v8915
      %v8917 = vpop.f32.mrb[0].mxu0
      %v8918 = vpop.f32.mrb[0].mxu0
      %v8919 = vadd.f32 0.0, %v8918
      %v8920 = vpop.f32.mrb[0].mxu0
      %8921 = vmatprep.mubr.bf16.mxu0 0
      %8922 = vmatmul.mubr.bf16.gmra.mrb[0].mxu0 %v8769
      %v8923 = vpop.f32.mrb[0].mxu0
      %v8924 = vadd.f32 0.0, %v8923
      %v8925 = vpop.f32.mrb[0].mxu0
      %v8926 = vpop.f32.mrb[0].mxu0
      %v8927 = vadd.f32 0.0, %v8926
      %v8928 = vpop.f32.mrb[0].mxu0
      %8929 = vmatprep.mubr.bf16.mxu0 0
      %8930 = vmatmul.mubr.bf16.gmra.mrb[0].mxu0 %v8772
      %v8931 = vpop.f32.mrb[0].mxu0
      %v8932 = vadd.f32 0.0, %v8931
      %v8933 = vpop.f32.mrb[0].mxu0
      %v8934 = vpop.f32.mrb[0].mxu0
      %v8935 = vadd.f32 0.0, %v8934
      %v8936 = vpop.f32.mrb[0].mxu0
      %8937 = vdwg.mxu0
      %v8938 = vadd.f32 %v8612, %v8812
      %v8939 = vadd.f32 %v8613, %v8815
      %v8940 = vadd.f32 %v8614, %v8820
      %v8941 = vadd.f32 %v8615, %v8823
      %v8942 = vadd.f32 %v8616, %v8828
      %v8943 = vadd.f32 %v8617, %v8831
      %v8944 = vadd.f32 %v8618, %v8836
      %v8945 = vadd.f32 %v8619, %v8839
      %v8946 = vadd.f32 %v8620, %v8844
      %v8947 = vadd.f32 %v8621, %v8847
      %v8948 = vadd.f32 %v8622, %v8852
      %v8949 = vadd.f32 %v8623, %v8855
      %v8950 = vadd.f32 %v8624, %v8860
      %v8951 = vadd.f32 %v8625, %v8863
      %v8952 = vadd.f32 %v8626, %v8868
      %v8953 = vadd.f32 %v8627, %v8871
      %v8954 = vadd.f32 %v8628, %v8876
      %v8955 = vadd.f32 %v8629, %v8879
      %v8956 = vadd.f32 %v8630, %v8884
      %v8957 = vadd.f32 %v8631, %v8887
      %v8958 = vadd.f32 %v8632, %v8892
      %v8959 = vadd.f32 %v8633, %v8895
      %v8960 = vadd.f32 %v8634, %v8900
      %v8961 = vadd.f32 %v8635, %v8903
      %v8962 = vadd.f32 %v8636, %v8908
      %v8963 = vadd.f32 %v8637, %v8911
      %v8964 = vadd.f32 %v8638, %v8916
      %v8965 = vadd.f32 %v8639, %v8919
      %v8966 = vadd.f32 %v8640, %v8924
      %v8967 = vadd.f32 %v8641, %v8927
      %v8968 = vadd.f32 %v8642, %v8932
      %v8969 = vadd.f32 %v8643, %v8935
      %v8970 = vld [vmem:[#allocation5 + $0x27] sm:$0xff]
      %v8971 = vld [vmem:[#allocation5 + $0x2f] sm:$0xff]
      %v8972 = vld [vmem:[#allocation5 + $0x37] sm:$0xff]
      %v8973 = vld [vmem:[#allocation5 + $0x3f] sm:$0xff]
      %v8974 = vld [vmem:[#allocation5 + $0x47] sm:$0xff]
      %v8975 = vld [vmem:[#allocation5 + $0x4f] sm:$0xff]
      %v8976 = vld [vmem:[#allocation5 + $0x57] sm:$0xff]
      %v8977 = vld [vmem:[#allocation5 + $0x5f] sm:$0xff]
      %v8978 = vld [vmem:[#allocation5 + $0x67] sm:$0xff]
      %v8979 = vld [vmem:[#allocation5 + $0x6f] sm:$0xff]
      %v8980 = vld [vmem:[#allocation5 + $0x77] sm:$0xff]
      %v8981 = vld [vmem:[#allocation5 + $0x7f] sm:$0xff]
      %v8982 = vld [vmem:[#allocation5 + $0x87] sm:$0xff]
      %v8983 = vld [vmem:[#allocation5 + $0x8f] sm:$0xff]
      %v8984 = vld [vmem:[#allocation5 + $0x97] sm:$0xff]
      %v8985 = vld [vmem:[#allocation5 + $0x9f] sm:$0xff]
      %v8986 = vld [vmem:[#allocation5 + $0xa7] sm:$0xff]
      %v8987 = vld [vmem:[#allocation5 + $0xaf] sm:$0xff]
      %v8988 = vld [vmem:[#allocation5 + $0xb7] sm:$0xff]
      %v8989 = vld [vmem:[#allocation5 + $0xbf] sm:$0xff]
      %v8990 = vld [vmem:[#allocation5 + $0xc7] sm:$0xff]
      %v8991 = vld [vmem:[#allocation5 + $0xcf] sm:$0xff]
      %v8992 = vld [vmem:[#allocation5 + $0xd7] sm:$0xff]
      %v8993 = vld [vmem:[#allocation5 + $0xdf] sm:$0xff]
      %v8994 = vld [vmem:[#allocation5 + $0xe7] sm:$0xff]
      %v8995 = vld [vmem:[#allocation5 + $0xef] sm:$0xff]
      %v8996 = vld [vmem:[#allocation5 + $0xf7] sm:$0xff]
      %v8997 = vld [vmem:[#allocation5 + $0xff] sm:$0xff]
      %v8998 = vld [vmem:[#allocation5 + $0x107] sm:$0xff]
      %v8999 = vld [vmem:[#allocation5 + $0x10f] sm:$0xff]
      %v9000 = vld [vmem:[#allocation5 + $0x117] sm:$0xff]
      %v9001 = vld [vmem:[#allocation5 + $0x11f] sm:$0xff]
      %v9002 = vsel %vm930, %v8970, 0.0
      %v9003 = vsel %vm931, %v8971, 0.0
      %v9004 = vsel %vm932, %v8972, 0.0
      %v9005 = vsel %vm933, %v8973, 0.0
      %v9006 = vsel %vm934, %v8974, 0.0
      %v9007 = vsel %vm935, %v8975, 0.0
      %v9008 = vsel %vm936, %v8976, 0.0
      %v9009 = vsel %vm937, %v8977, 0.0
      %v9010 = vsel %vm938, %v8978, 0.0
      %v9011 = vsel %vm939, %v8979, 0.0
      %v9012 = vsel %vm940, %v8980, 0.0
      %v9013 = vsel %vm941, %v8981, 0.0
      %v9014 = vsel %vm942, %v8982, 0.0
      %v9015 = vsel %vm943, %v8983, 0.0
      %v9016 = vsel %vm944, %v8984, 0.0
      %v9017 = vsel %vm945, %v8985, 0.0
      %v9018 = vsel %vm946, %v8986, 0.0
      %v9019 = vsel %vm947, %v8987, 0.0
      %v9020 = vsel %vm948, %v8988, 0.0
      %v9021 = vsel %vm949, %v8989, 0.0
      %v9022 = vsel %vm950, %v8990, 0.0
      %v9023 = vsel %vm951, %v8991, 0.0
      %v9024 = vsel %vm952, %v8992, 0.0
      %v9025 = vsel %vm953, %v8993, 0.0
      %v9026 = vsel %vm954, %v8994, 0.0
      %v9027 = vsel %vm955, %v8995, 0.0
      %v9028 = vsel %vm956, %v8996, 0.0
      %v9029 = vsel %vm957, %v8997, 0.0
      %v9030 = vsel %vm958, %v8998, 0.0
      %v9031 = vsel %vm959, %v8999, 0.0
      %v9032 = vsel %vm960, %v9000, 0.0
      %v9033 = vsel %vm961, %v9001, 0.0
      %v9034 = vpack.c.bf16 %v9003, %v9002
      %v9035 = vpack.c.bf16 %v9005, %v9004
      %v9036 = vpack.c.bf16 %v9007, %v9006
      %v9037 = vpack.c.bf16 %v9009, %v9008
      %v9038 = vpack.c.bf16 %v9011, %v9010
      %v9039 = vpack.c.bf16 %v9013, %v9012
      %v9040 = vpack.c.bf16 %v9015, %v9014
      %v9041 = vpack.c.bf16 %v9017, %v9016
      %v9042 = vpack.c.bf16 %v9019, %v9018
      %v9043 = vpack.c.bf16 %v9021, %v9020
      %v9044 = vpack.c.bf16 %v9023, %v9022
      %v9045 = vpack.c.bf16 %v9025, %v9024
      %v9046 = vpack.c.bf16 %v9027, %v9026
      %v9047 = vpack.c.bf16 %v9029, %v9028
      %v9048 = vpack.c.bf16 %v9031, %v9030
      %v9049 = vpack.c.bf16 %v9033, %v9032
      %s9050 = scalar_lea.vmem %s10, 24
      %v9051 = vld [vmem:[%s9050] sm:$0xf]
      %v9053 = vsel %vm4337, %v9034, 0
      %v9056 = vsel %vm4337, %v9035, 0
      %v9059 = vsel %vm4337, %v9036, 0
      %v9062 = vsel %vm4337, %v9037, 0
      %v9065 = vsel %vm4337, %v9038, 0
      %v9068 = vsel %vm4337, %v9039, 0
      %v9071 = vsel %vm4337, %v9040, 0
      %v9074 = vsel %vm4337, %v9041, 0
      %v9077 = vsel %vm4337, %v9042, 0
      %v9080 = vsel %vm4337, %v9043, 0
      %v9083 = vsel %vm4337, %v9044, 0
      %v9086 = vsel %vm4337, %v9045, 0
      %v9089 = vsel %vm4337, %v9046, 0
      %v9092 = vsel %vm4337, %v9047, 0
      %v9095 = vsel %vm4337, %v9048, 0
      %v9098 = vsel %vm4337, %v9049, 0
      %v9101 = vsel %vm4509, %v9051, 0
      %9103 = vmatprep.subr.bf16.mxu0 0
      %9104 = vmatpush1.bf16.msra.mxu0 %v9101
      %9105 = vmatprep.subr.bf16.mxu0 0
      %9106 = vmatpush1.bf16.msra.mxu0 0
      %9107 = vmatprep.subr.bf16.mxu0 0
      %9108 = vmatpush1.bf16.msra.mxu0 0
      %9109 = vmatprep.subr.bf16.mxu0 0
      %9110 = vmatpush1.bf16.msra.mxu0 0
      %9111 = vmatprep.subr.bf16.mxu0 0
      %9112 = vmatpush1.bf16.msra.mxu0 0
      %9113 = vmatprep.subr.bf16.mxu0 0
      %9114 = vmatpush1.bf16.msra.mxu0 0
      %9115 = vmatprep.subr.bf16.mxu0 0
      %9116 = vmatpush1.bf16.msra.mxu0 0
      %9117 = vmatprep.subr.bf16.mxu0 0
      %9118 = vmatpush1.bf16.msra.mxu0 0
      %9119 = vmatprep.subr.bf16.mxu0 0
      %9120 = vmatpush1.bf16.msra.mxu0 0
      %9121 = vmatprep.subr.bf16.mxu0 0
      %9122 = vmatpush1.bf16.msra.mxu0 0
      %9123 = vmatprep.subr.bf16.mxu0 0
      %9124 = vmatpush1.bf16.msra.mxu0 0
      %9125 = vmatprep.subr.bf16.mxu0 0
      %9126 = vmatpush1.bf16.msra.mxu0 0
      %9127 = vmatprep.subr.bf16.mxu0 0
      %9128 = vmatpush1.bf16.msra.mxu0 0
      %9129 = vmatprep.subr.bf16.mxu0 0
      %9130 = vmatpush1.bf16.msra.mxu0 0
      %9131 = vmatprep.subr.bf16.mxu0 0
      %9132 = vmatpush1.bf16.msra.mxu0 0
      %9133 = vmatprep.subr.bf16.mxu0 0
      %9134 = vmatpush1.bf16.msra.mxu0 0
      %9135 = vmatprep.mubr.bf16.mxu0 0
      %9136 = vmatmul.mubr.bf16.gmra.mrb[0].mxu0 %v9053
      %v9137 = vpop.f32.mrb[0].mxu0
      %v9138 = vadd.f32 0.0, %v9137
      %v9139 = vpop.f32.mrb[0].mxu0
      %v9140 = vpop.f32.mrb[0].mxu0
      %v9141 = vadd.f32 0.0, %v9140
      %v9142 = vpop.f32.mrb[0].mxu0
      %9143 = vmatprep.mubr.bf16.mxu0 0
      %9144 = vmatmul.mubr.bf16.gmra.mrb[0].mxu0 %v9056
      %v9145 = vpop.f32.mrb[0].mxu0
      %v9146 = vadd.f32 0.0, %v9145
      %v9147 = vpop.f32.mrb[0].mxu0
      %v9148 = vpop.f32.mrb[0].mxu0
      %v9149 = vadd.f32 0.0, %v9148
      %v9150 = vpop.f32.mrb[0].mxu0
      %9151 = vmatprep.mubr.bf16.mxu0 0
      %9152 = vmatmul.mubr.bf16.gmra.mrb[0].mxu0 %v9059
      %v9153 = vpop.f32.mrb[0].mxu0
      %v9154 = vadd.f32 0.0, %v9153
      %v9155 = vpop.f32.mrb[0].mxu0
      %v9156 = vpop.f32.mrb[0].mxu0
      %v9157 = vadd.f32 0.0, %v9156
      %v9158 = vpop.f32.mrb[0].mxu0
      %9159 = vmatprep.mubr.bf16.mxu0 0
      %9160 = vmatmul.mubr.bf16.gmra.mrb[0].mxu0 %v9062
      %v9161 = vpop.f32.mrb[0].mxu0
      %v9162 = vadd.f32 0.0, %v9161
      %v9163 = vpop.f32.mrb[0].mxu0
      %v9164 = vpop.f32.mrb[0].mxu0
      %v9165 = vadd.f32 0.0, %v9164
      %v9166 = vpop.f32.mrb[0].mxu0
      %9167 = vmatprep.mubr.bf16.mxu0 0
      %9168 = vmatmul.mubr.bf16.gmra.mrb[0].mxu0 %v9065
      %v9169 = vpop.f32.mrb[0].mxu0
      %v9170 = vadd.f32 0.0, %v9169
      %v9171 = vpop.f32.mrb[0].mxu0
      %v9172 = vpop.f32.mrb[0].mxu0
      %v9173 = vadd.f32 0.0, %v9172
      %v9174 = vpop.f32.mrb[0].mxu0
      %9175 = vmatprep.mubr.bf16.mxu0 0
      %9176 = vmatmul.mubr.bf16.gmra.mrb[0].mxu0 %v9068
      %v9177 = vpop.f32.mrb[0].mxu0
      %v9178 = vadd.f32 0.0, %v9177
      %v9179 = vpop.f32.mrb[0].mxu0
      %v9180 = vpop.f32.mrb[0].mxu0
      %v9181 = vadd.f32 0.0, %v9180
      %v9182 = vpop.f32.mrb[0].mxu0
      %9183 = vmatprep.mubr.bf16.mxu0 0
      %9184 = vmatmul.mubr.bf16.gmra.mrb[0].mxu0 %v9071
      %v9185 = vpop.f32.mrb[0].mxu0
      %v9186 = vadd.f32 0.0, %v9185
      %v9187 = vpop.f32.mrb[0].mxu0
      %v9188 = vpop.f32.mrb[0].mxu0
      %v9189 = vadd.f32 0.0, %v9188
      %v9190 = vpop.f32.mrb[0].mxu0
      %9191 = vmatprep.mubr.bf16.mxu0 0
      %9192 = vmatmul.mubr.bf16.gmra.mrb[0].mxu0 %v9074
      %v9193 = vpop.f32.mrb[0].mxu0
      %v9194 = vadd.f32 0.0, %v9193
      %v9195 = vpop.f32.mrb[0].mxu0
      %v9196 = vpop.f32.mrb[0].mxu0
      %v9197 = vadd.f32 0.0, %v9196
      %v9198 = vpop.f32.mrb[0].mxu0
      %9199 = vmatprep.mubr.bf16.mxu0 0
      %9200 = vmatmul.mubr.bf16.gmra.mrb[0].mxu0 %v9077
      %v9201 = vpop.f32.mrb[0].mxu0
      %v9202 = vadd.f32 0.0, %v9201
      %v9203 = vpop.f32.mrb[0].mxu0
      %v9204 = vpop.f32.mrb[0].mxu0
      %v9205 = vadd.f32 0.0, %v9204
      %v9206 = vpop.f32.mrb[0].mxu0
      %9207 = vmatprep.mubr.bf16.mxu0 0
      %9208 = vmatmul.mubr.bf16.gmra.mrb[0].mxu0 %v9080
      %v9209 = vpop.f32.mrb[0].mxu0
      %v9210 = vadd.f32 0.0, %v9209
      %v9211 = vpop.f32.mrb[0].mxu0
      %v9212 = vpop.f32.mrb[0].mxu0
      %v9213 = vadd.f32 0.0, %v9212
      %v9214 = vpop.f32.mrb[0].mxu0
      %9215 = vmatprep.mubr.bf16.mxu0 0
      %9216 = vmatmul.mubr.bf16.gmra.mrb[0].mxu0 %v9083
      %v9217 = vpop.f32.mrb[0].mxu0
      %v9218 = vadd.f32 0.0, %v9217
      %v9219 = vpop.f32.mrb[0].mxu0
      %v9220 = vpop.f32.mrb[0].mxu0
      %v9221 = vadd.f32 0.0, %v9220
      %v9222 = vpop.f32.mrb[0].mxu0
      %9223 = vmatprep.mubr.bf16.mxu0 0
      %9224 = vmatmul.mubr.bf16.gmra.mrb[0].mxu0 %v9086
      %v9225 = vpop.f32.mrb[0].mxu0
      %v9226 = vadd.f32 0.0, %v9225
      %v9227 = vpop.f32.mrb[0].mxu0
      %v9228 = vpop.f32.mrb[0].mxu0
      %v9229 = vadd.f32 0.0, %v9228
      %v9230 = vpop.f32.mrb[0].mxu0
      %9231 = vmatprep.mubr.bf16.mxu0 0
      %9232 = vmatmul.mubr.bf16.gmra.mrb[0].mxu0 %v9089
      %v9233 = vpop.f32.mrb[0].mxu0
      %v9234 = vadd.f32 0.0, %v9233
      %v9235 = vpop.f32.mrb[0].mxu0
      %v9236 = vpop.f32.mrb[0].mxu0
      %v9237 = vadd.f32 0.0, %v9236
      %v9238 = vpop.f32.mrb[0].mxu0
      %9239 = vmatprep.mubr.bf16.mxu0 0
      %9240 = vmatmul.mubr.bf16.gmra.mrb[0].mxu0 %v9092
      %v9241 = vpop.f32.mrb[0].mxu0
      %v9242 = vadd.f32 0.0, %v9241
      %v9243 = vpop.f32.mrb[0].mxu0
      %v9244 = vpop.f32.mrb[0].mxu0
      %v9245 = vadd.f32 0.0, %v9244
      %v9246 = vpop.f32.mrb[0].mxu0
      %9247 = vmatprep.mubr.bf16.mxu0 0
      %9248 = vmatmul.mubr.bf16.gmra.mrb[0].mxu0 %v9095
      %v9249 = vpop.f32.mrb[0].mxu0
      %v9250 = vadd.f32 0.0, %v9249
      %v9251 = vpop.f32.mrb[0].mxu0
      %v9252 = vpop.f32.mrb[0].mxu0
      %v9253 = vadd.f32 0.0, %v9252
      %v9254 = vpop.f32.mrb[0].mxu0
      %9255 = vmatprep.mubr.bf16.mxu0 0
      %9256 = vmatmul.mubr.bf16.gmra.mrb[0].mxu0 %v9098
      %v9257 = vpop.f32.mrb[0].mxu0
      %v9258 = vadd.f32 0.0, %v9257
      %v9259 = vpop.f32.mrb[0].mxu0
      %v9260 = vpop.f32.mrb[0].mxu0
      %v9261 = vadd.f32 0.0, %v9260
      %v9262 = vpop.f32.mrb[0].mxu0
      %9263 = vdwg.mxu0
      %v9264 = vadd.f32 %v8938, %v9138
      %v9265 = vadd.f32 %v8939, %v9141
      %v9266 = vadd.f32 %v8940, %v9146
      %v9267 = vadd.f32 %v8941, %v9149
      %v9268 = vadd.f32 %v8942, %v9154
      %v9269 = vadd.f32 %v8943, %v9157
      %v9270 = vadd.f32 %v8944, %v9162
      %v9271 = vadd.f32 %v8945, %v9165
      %v9272 = vadd.f32 %v8946, %v9170
      %v9273 = vadd.f32 %v8947, %v9173
      %v9274 = vadd.f32 %v8948, %v9178
      %v9275 = vadd.f32 %v8949, %v9181
      %v9276 = vadd.f32 %v8950, %v9186
      %v9277 = vadd.f32 %v8951, %v9189
      %v9278 = vadd.f32 %v8952, %v9194
      %v9279 = vadd.f32 %v8953, %v9197
      %v9280 = vadd.f32 %v8954, %v9202
      %v9281 = vadd.f32 %v8955, %v9205
      %v9282 = vadd.f32 %v8956, %v9210
      %v9283 = vadd.f32 %v8957, %v9213
      %v9284 = vadd.f32 %v8958, %v9218
      %v9285 = vadd.f32 %v8959, %v9221
      %v9286 = vadd.f32 %v8960, %v9226
      %v9287 = vadd.f32 %v8961, %v9229
      %v9288 = vadd.f32 %v8962, %v9234
      %v9289 = vadd.f32 %v8963, %v9237
      %v9290 = vadd.f32 %v8964, %v9242
      %v9291 = vadd.f32 %v8965, %v9245
      %v9292 = vadd.f32 %v8966, %v9250
      %v9293 = vadd.f32 %v8967, %v9253
      %v9294 = vadd.f32 %v8968, %v9258
      %v9295 = vadd.f32 %v8969, %v9261
      %v9296 = vld [vmem:[#allocation5 + $0x28] sm:$0xff]
      %v9297 = vld [vmem:[#allocation5 + $0x30] sm:$0xff]
      %v9298 = vld [vmem:[#allocation5 + $0x38] sm:$0xff]
      %v9299 = vld [vmem:[#allocation5 + $0x40] sm:$0xff]
      %v9300 = vld [vmem:[#allocation5 + $0x48] sm:$0xff]
      %v9301 = vld [vmem:[#allocation5 + $0x50] sm:$0xff]
      %v9302 = vld [vmem:[#allocation5 + $0x58] sm:$0xff]
      %v9303 = vld [vmem:[#allocation5 + $0x60] sm:$0xff]
      %v9304 = vld [vmem:[#allocation5 + $0x68] sm:$0xff]
      %v9305 = vld [vmem:[#allocation5 + $0x70] sm:$0xff]
      %v9306 = vld [vmem:[#allocation5 + $0x78] sm:$0xff]
      %v9307 = vld [vmem:[#allocation5 + $0x80] sm:$0xff]
      %v9308 = vld [vmem:[#allocation5 + $0x88] sm:$0xff]
      %v9309 = vld [vmem:[#allocation5 + $0x90] sm:$0xff]
      %v9310 = vld [vmem:[#allocation5 + $0x98] sm:$0xff]
      %v9311 = vld [vmem:[#allocation5 + $0xa0] sm:$0xff]
      %v9312 = vld [vmem:[#allocation5 + $0xa8] sm:$0xff]
      %v9313 = vld [vmem:[#allocation5 + $0xb0] sm:$0xff]
      %v9314 = vld [vmem:[#allocation5 + $0xb8] sm:$0xff]
      %v9315 = vld [vmem:[#allocation5 + $0xc0] sm:$0xff]
      %v9316 = vld [vmem:[#allocation5 + $0xc8] sm:$0xff]
      %v9317 = vld [vmem:[#allocation5 + $0xd0] sm:$0xff]
      %v9318 = vld [vmem:[#allocation5 + $0xd8] sm:$0xff]
      %v9319 = vld [vmem:[#allocation5 + $0xe0] sm:$0xff]
      %v9320 = vld [vmem:[#allocation5 + $0xe8] sm:$0xff]
      %v9321 = vld [vmem:[#allocation5 + $0xf0] sm:$0xff]
      %v9322 = vld [vmem:[#allocation5 + $0xf8] sm:$0xff]
      %v9323 = vld [vmem:[#allocation5 + $0x100] sm:$0xff]
      %v9324 = vld [vmem:[#allocation5 + $0x108] sm:$0xff]
      %v9325 = vld [vmem:[#allocation5 + $0x110] sm:$0xff]
      %v9326 = vld [vmem:[#allocation5 + $0x118] sm:$0xff]
      %v9327 = vld [vmem:[#allocation5 + $0x120] sm:$0xff]
      %v9328 = vpack.c.bf16 %v9297, %v9296
      %v9329 = vpack.c.bf16 %v9299, %v9298
      %v9330 = vpack.c.bf16 %v9301, %v9300
      %v9331 = vpack.c.bf16 %v9303, %v9302
      %v9332 = vpack.c.bf16 %v9305, %v9304
      %v9333 = vpack.c.bf16 %v9307, %v9306
      %v9334 = vpack.c.bf16 %v9309, %v9308
      %v9335 = vpack.c.bf16 %v9311, %v9310
      %v9336 = vpack.c.bf16 %v9313, %v9312
      %v9337 = vpack.c.bf16 %v9315, %v9314
      %v9338 = vpack.c.bf16 %v9317, %v9316
      %v9339 = vpack.c.bf16 %v9319, %v9318
      %v9340 = vpack.c.bf16 %v9321, %v9320
      %v9341 = vpack.c.bf16 %v9323, %v9322
      %v9342 = vpack.c.bf16 %v9325, %v9324
      %v9343 = vpack.c.bf16 %v9327, %v9326
      %s9344 = scalar_lea.vmem %s10, 28
      %v9345 = vld [vmem:[%s9344] sm:$0xf]
      %v9347 = vsel %vm4337, %v9328, 0
      %v9350 = vsel %vm4337, %v9329, 0
      %v9353 = vsel %vm4337, %v9330, 0
      %v9356 = vsel %vm4337, %v9331, 0
      %v9359 = vsel %vm4337, %v9332, 0
      %v9362 = vsel %vm4337, %v9333, 0
      %v9365 = vsel %vm4337, %v9334, 0
      %v9368 = vsel %vm4337, %v9335, 0
      %v9371 = vsel %vm4337, %v9336, 0
      %v9374 = vsel %vm4337, %v9337, 0
      %v9377 = vsel %vm4337, %v9338, 0
      %v9380 = vsel %vm4337, %v9339, 0
      %v9383 = vsel %vm4337, %v9340, 0
      %v9386 = vsel %vm4337, %v9341, 0
      %v9389 = vsel %vm4337, %v9342, 0
      %v9392 = vsel %vm4337, %v9343, 0
      %v9395 = vsel %vm4509, %v9345, 0
      %9397 = vmatprep.subr.bf16.mxu0 0
      %9398 = vmatpush1.bf16.msra.mxu0 %v9395
      %9399 = vmatprep.subr.bf16.mxu0 0
      %9400 = vmatpush1.bf16.msra.mxu0 0
      %9401 = vmatprep.subr.bf16.mxu0 0
      %9402 = vmatpush1.bf16.msra.mxu0 0
      %9403 = vmatprep.subr.bf16.mxu0 0
      %9404 = vmatpush1.bf16.msra.mxu0 0
      %9405 = vmatprep.subr.bf16.mxu0 0
      %9406 = vmatpush1.bf16.msra.mxu0 0
      %9407 = vmatprep.subr.bf16.mxu0 0
      %9408 = vmatpush1.bf16.msra.mxu0 0
      %9409 = vmatprep.subr.bf16.mxu0 0
      %9410 = vmatpush1.bf16.msra.mxu0 0
      %9411 = vmatprep.subr.bf16.mxu0 0
      %9412 = vmatpush1.bf16.msra.mxu0 0
      %9413 = vmatprep.subr.bf16.mxu0 0
      %9414 = vmatpush1.bf16.msra.mxu0 0
      %9415 = vmatprep.subr.bf16.mxu0 0
      %9416 = vmatpush1.bf16.msra.mxu0 0
      %9417 = vmatprep.subr.bf16.mxu0 0
      %9418 = vmatpush1.bf16.msra.mxu0 0
      %9419 = vmatprep.subr.bf16.mxu0 0
      %9420 = vmatpush1.bf16.msra.mxu0 0
      %9421 = vmatprep.subr.bf16.mxu0 0
      %9422 = vmatpush1.bf16.msra.mxu0 0
      %9423 = vmatprep.subr.bf16.mxu0 0
      %9424 = vmatpush1.bf16.msra.mxu0 0
      %9425 = vmatprep.subr.bf16.mxu0 0
      %9426 = vmatpush1.bf16.msra.mxu0 0
      %9427 = vmatprep.subr.bf16.mxu0 0
      %9428 = vmatpush1.bf16.msra.mxu0 0
      %9429 = vmatprep.mubr.bf16.mxu0 0
      %9430 = vmatmul.mubr.bf16.gmra.mrb[0].mxu0 %v9347
      %v9431 = vpop.f32.mrb[0].mxu0
      %v9432 = vadd.f32 0.0, %v9431
      %v9433 = vpop.f32.mrb[0].mxu0
      %v9434 = vpop.f32.mrb[0].mxu0
      %v9435 = vadd.f32 0.0, %v9434
      %v9436 = vpop.f32.mrb[0].mxu0
      %9437 = vmatprep.mubr.bf16.mxu0 0
      %9438 = vmatmul.mubr.bf16.gmra.mrb[0].mxu0 %v9350
      %v9439 = vpop.f32.mrb[0].mxu0
      %v9440 = vadd.f32 0.0, %v9439
      %v9441 = vpop.f32.mrb[0].mxu0
      %v9442 = vpop.f32.mrb[0].mxu0
      %v9443 = vadd.f32 0.0, %v9442
      %v9444 = vpop.f32.mrb[0].mxu0
      %9445 = vmatprep.mubr.bf16.mxu0 0
      %9446 = vmatmul.mubr.bf16.gmra.mrb[0].mxu0 %v9353
      %v9447 = vpop.f32.mrb[0].mxu0
      %v9448 = vadd.f32 0.0, %v9447
      %v9449 = vpop.f32.mrb[0].mxu0
      %v9450 = vpop.f32.mrb[0].mxu0
      %v9451 = vadd.f32 0.0, %v9450
      %v9452 = vpop.f32.mrb[0].mxu0
      %9453 = vmatprep.mubr.bf16.mxu0 0
      %9454 = vmatmul.mubr.bf16.gmra.mrb[0].mxu0 %v9356
      %v9455 = vpop.f32.mrb[0].mxu0
      %v9456 = vadd.f32 0.0, %v9455
      %v9457 = vpop.f32.mrb[0].mxu0
      %v9458 = vpop.f32.mrb[0].mxu0
      %v9459 = vadd.f32 0.0, %v9458
      %v9460 = vpop.f32.mrb[0].mxu0
      %9461 = vmatprep.mubr.bf16.mxu0 0
      %9462 = vmatmul.mubr.bf16.gmra.mrb[0].mxu0 %v9359
      %v9463 = vpop.f32.mrb[0].mxu0
      %v9464 = vadd.f32 0.0, %v9463
      %v9465 = vpop.f32.mrb[0].mxu0
      %v9466 = vpop.f32.mrb[0].mxu0
      %v9467 = vadd.f32 0.0, %v9466
      %v9468 = vpop.f32.mrb[0].mxu0
      %9469 = vmatprep.mubr.bf16.mxu0 0
      %9470 = vmatmul.mubr.bf16.gmra.mrb[0].mxu0 %v9362
      %v9471 = vpop.f32.mrb[0].mxu0
      %v9472 = vadd.f32 0.0, %v9471
      %v9473 = vpop.f32.mrb[0].mxu0
      %v9474 = vpop.f32.mrb[0].mxu0
      %v9475 = vadd.f32 0.0, %v9474
      %v9476 = vpop.f32.mrb[0].mxu0
      %9477 = vmatprep.mubr.bf16.mxu0 0
      %9478 = vmatmul.mubr.bf16.gmra.mrb[0].mxu0 %v9365
      %v9479 = vpop.f32.mrb[0].mxu0
      %v9480 = vadd.f32 0.0, %v9479
      %v9481 = vpop.f32.mrb[0].mxu0
      %v9482 = vpop.f32.mrb[0].mxu0
      %v9483 = vadd.f32 0.0, %v9482
      %v9484 = vpop.f32.mrb[0].mxu0
      %9485 = vmatprep.mubr.bf16.mxu0 0
      %9486 = vmatmul.mubr.bf16.gmra.mrb[0].mxu0 %v9368
      %v9487 = vpop.f32.mrb[0].mxu0
      %v9488 = vadd.f32 0.0, %v9487
      %v9489 = vpop.f32.mrb[0].mxu0
      %v9490 = vpop.f32.mrb[0].mxu0
      %v9491 = vadd.f32 0.0, %v9490
      %v9492 = vpop.f32.mrb[0].mxu0
      %9493 = vmatprep.mubr.bf16.mxu0 0
      %9494 = vmatmul.mubr.bf16.gmra.mrb[0].mxu0 %v9371
      %v9495 = vpop.f32.mrb[0].mxu0
      %v9496 = vadd.f32 0.0, %v9495
      %v9497 = vpop.f32.mrb[0].mxu0
      %v9498 = vpop.f32.mrb[0].mxu0
      %v9499 = vadd.f32 0.0, %v9498
      %v9500 = vpop.f32.mrb[0].mxu0
      %9501 = vmatprep.mubr.bf16.mxu0 0
      %9502 = vmatmul.mubr.bf16.gmra.mrb[0].mxu0 %v9374
      %v9503 = vpop.f32.mrb[0].mxu0
      %v9504 = vadd.f32 0.0, %v9503
      %v9505 = vpop.f32.mrb[0].mxu0
      %v9506 = vpop.f32.mrb[0].mxu0
      %v9507 = vadd.f32 0.0, %v9506
      %v9508 = vpop.f32.mrb[0].mxu0
      %9509 = vmatprep.mubr.bf16.mxu0 0
      %9510 = vmatmul.mubr.bf16.gmra.mrb[0].mxu0 %v9377
      %v9511 = vpop.f32.mrb[0].mxu0
      %v9512 = vadd.f32 0.0, %v9511
      %v9513 = vpop.f32.mrb[0].mxu0
      %v9514 = vpop.f32.mrb[0].mxu0
      %v9515 = vadd.f32 0.0, %v9514
      %v9516 = vpop.f32.mrb[0].mxu0
      %9517 = vmatprep.mubr.bf16.mxu0 0
      %9518 = vmatmul.mubr.bf16.gmra.mrb[0].mxu0 %v9380
      %v9519 = vpop.f32.mrb[0].mxu0
      %v9520 = vadd.f32 0.0, %v9519
      %v9521 = vpop.f32.mrb[0].mxu0
      %v9522 = vpop.f32.mrb[0].mxu0
      %v9523 = vadd.f32 0.0, %v9522
      %v9524 = vpop.f32.mrb[0].mxu0
      %9525 = vmatprep.mubr.bf16.mxu0 0
      %9526 = vmatmul.mubr.bf16.gmra.mrb[0].mxu0 %v9383
      %v9527 = vpop.f32.mrb[0].mxu0
      %v9528 = vadd.f32 0.0, %v9527
      %v9529 = vpop.f32.mrb[0].mxu0
      %v9530 = vpop.f32.mrb[0].mxu0
      %v9531 = vadd.f32 0.0, %v9530
      %v9532 = vpop.f32.mrb[0].mxu0
      %9533 = vmatprep.mubr.bf16.mxu0 0
      %9534 = vmatmul.mubr.bf16.gmra.mrb[0].mxu0 %v9386
      %v9535 = vpop.f32.mrb[0].mxu0
      %v9536 = vadd.f32 0.0, %v9535
      %v9537 = vpop.f32.mrb[0].mxu0
      %v9538 = vpop.f32.mrb[0].mxu0
      %v9539 = vadd.f32 0.0, %v9538
      %v9540 = vpop.f32.mrb[0].mxu0
      %9541 = vmatprep.mubr.bf16.mxu0 0
      %9542 = vmatmul.mubr.bf16.gmra.mrb[0].mxu0 %v9389
      %v9543 = vpop.f32.mrb[0].mxu0
      %v9544 = vadd.f32 0.0, %v9543
      %v9545 = vpop.f32.mrb[0].mxu0
      %v9546 = vpop.f32.mrb[0].mxu0
      %v9547 = vadd.f32 0.0, %v9546
      %v9548 = vpop.f32.mrb[0].mxu0
      %9549 = vmatprep.mubr.bf16.mxu0 0
      %9550 = vmatmul.mubr.bf16.gmra.mrb[0].mxu0 %v9392
      %v9551 = vpop.f32.mrb[0].mxu0
      %v9552 = vadd.f32 0.0, %v9551
      %v9553 = vpop.f32.mrb[0].mxu0
      %v9554 = vpop.f32.mrb[0].mxu0
      %v9555 = vadd.f32 0.0, %v9554
      %v9556 = vpop.f32.mrb[0].mxu0
      %9557 = vdwg.mxu0
      %v9558 = vadd.f32 %v9264, %v9432
      %v9559 = vadd.f32 %v9265, %v9435
      %v9560 = vadd.f32 %v9266, %v9440
      %v9561 = vadd.f32 %v9267, %v9443
      %v9562 = vadd.f32 %v9268, %v9448
      %v9563 = vadd.f32 %v9269, %v9451
      %v9564 = vadd.f32 %v9270, %v9456
      %v9565 = vadd.f32 %v9271, %v9459
      %v9566 = vadd.f32 %v9272, %v9464
      %v9567 = vadd.f32 %v9273, %v9467
      %v9568 = vadd.f32 %v9274, %v9472
      %v9569 = vadd.f32 %v9275, %v9475
      %v9570 = vadd.f32 %v9276, %v9480
      %v9571 = vadd.f32 %v9277, %v9483
      %v9572 = vadd.f32 %v9278, %v9488
      %v9573 = vadd.f32 %v9279, %v9491
      %v9574 = vadd.f32 %v9280, %v9496
      %v9575 = vadd.f32 %v9281, %v9499
      %v9576 = vadd.f32 %v9282, %v9504
      %v9577 = vadd.f32 %v9283, %v9507
      %v9578 = vadd.f32 %v9284, %v9512
      %v9579 = vadd.f32 %v9285, %v9515
      %v9580 = vadd.f32 %v9286, %v9520
      %v9581 = vadd.f32 %v9287, %v9523
      %v9582 = vadd.f32 %v9288, %v9528
      %v9583 = vadd.f32 %v9289, %v9531
      %v9584 = vadd.f32 %v9290, %v9536
      %v9585 = vadd.f32 %v9291, %v9539
      %v9586 = vadd.f32 %v9292, %v9544
      %v9587 = vadd.f32 %v9293, %v9547
      %v9588 = vadd.f32 %v9294, %v9552
      %v9589 = vadd.f32 %v9295, %v9555
      %v9590 = vld [vmem:[#allocation5 + $0x29] sm:$0xff]
      %v9591 = vld [vmem:[#allocation5 + $0x31] sm:$0xff]
      %v9592 = vld [vmem:[#allocation5 + $0x39] sm:$0xff]
      %v9593 = vld [vmem:[#allocation5 + $0x41] sm:$0xff]
      %v9594 = vld [vmem:[#allocation5 + $0x49] sm:$0xff]
      %v9595 = vld [vmem:[#allocation5 + $0x51] sm:$0xff]
      %v9596 = vld [vmem:[#allocation5 + $0x59] sm:$0xff]
      %v9597 = vld [vmem:[#allocation5 + $0x61] sm:$0xff]
      %v9598 = vld [vmem:[#allocation5 + $0x69] sm:$0xff]
      %v9599 = vld [vmem:[#allocation5 + $0x71] sm:$0xff]
      %v9600 = vld [vmem:[#allocation5 + $0x79] sm:$0xff]
      %v9601 = vld [vmem:[#allocation5 + $0x81] sm:$0xff]
      %v9602 = vld [vmem:[#allocation5 + $0x89] sm:$0xff]
      %v9603 = vld [vmem:[#allocation5 + $0x91] sm:$0xff]
      %v9604 = vld [vmem:[#allocation5 + $0x99] sm:$0xff]
      %v9605 = vld [vmem:[#allocation5 + $0xa1] sm:$0xff]
      %v9606 = vld [vmem:[#allocation5 + $0xa9] sm:$0xff]
      %v9607 = vld [vmem:[#allocation5 + $0xb1] sm:$0xff]
      %v9608 = vld [vmem:[#allocation5 + $0xb9] sm:$0xff]
      %v9609 = vld [vmem:[#allocation5 + $0xc1] sm:$0xff]
      %v9610 = vld [vmem:[#allocation5 + $0xc9] sm:$0xff]
      %v9611 = vld [vmem:[#allocation5 + $0xd1] sm:$0xff]
      %v9612 = vld [vmem:[#allocation5 + $0xd9] sm:$0xff]
      %v9613 = vld [vmem:[#allocation5 + $0xe1] sm:$0xff]
      %v9614 = vld [vmem:[#allocation5 + $0xe9] sm:$0xff]
      %v9615 = vld [vmem:[#allocation5 + $0xf1] sm:$0xff]
      %v9616 = vld [vmem:[#allocation5 + $0xf9] sm:$0xff]
      %v9617 = vld [vmem:[#allocation5 + $0x101] sm:$0xff]
      %v9618 = vld [vmem:[#allocation5 + $0x109] sm:$0xff]
      %v9619 = vld [vmem:[#allocation5 + $0x111] sm:$0xff]
      %v9620 = vld [vmem:[#allocation5 + $0x119] sm:$0xff]
      %v9621 = vld [vmem:[#allocation5 + $0x121] sm:$0xff]
      %v9622 = vsel %vm962, %v9590, 0.0
      %v9623 = vsel %vm963, %v9591, 0.0
      %v9624 = vsel %vm964, %v9592, 0.0
      %v9625 = vsel %vm965, %v9593, 0.0
      %v9626 = vsel %vm966, %v9594, 0.0
      %v9627 = vsel %vm967, %v9595, 0.0
      %v9628 = vsel %vm968, %v9596, 0.0
      %v9629 = vsel %vm969, %v9597, 0.0
      %v9630 = vsel %vm970, %v9598, 0.0
      %v9631 = vsel %vm971, %v9599, 0.0
      %v9632 = vsel %vm972, %v9600, 0.0
      %v9633 = vsel %vm973, %v9601, 0.0
      %v9634 = vsel %vm974, %v9602, 0.0
      %v9635 = vsel %vm975, %v9603, 0.0
      %v9636 = vsel %vm976, %v9604, 0.0
      %v9637 = vsel %vm977, %v9605, 0.0
      %v9638 = vsel %vm978, %v9606, 0.0
      %v9639 = vsel %vm979, %v9607, 0.0
      %v9640 = vsel %vm980, %v9608, 0.0
      %v9641 = vsel %vm981, %v9609, 0.0
      %v9642 = vsel %vm982, %v9610, 0.0
      %v9643 = vsel %vm983, %v9611, 0.0
      %v9644 = vsel %vm984, %v9612, 0.0
      %v9645 = vsel %vm985, %v9613, 0.0
      %v9646 = vsel %vm986, %v9614, 0.0
      %v9647 = vsel %vm987, %v9615, 0.0
      %v9648 = vsel %vm988, %v9616, 0.0
      %v9649 = vsel %vm989, %v9617, 0.0
      %v9650 = vsel %vm990, %v9618, 0.0
      %v9651 = vsel %vm991, %v9619, 0.0
      %v9652 = vsel %vm992, %v9620, 0.0
      %v9653 = vsel %vm993, %v9621, 0.0
      %v9654 = vpack.c.bf16 %v9623, %v9622
      %v9655 = vpack.c.bf16 %v9625, %v9624
      %v9656 = vpack.c.bf16 %v9627, %v9626
      %v9657 = vpack.c.bf16 %v9629, %v9628
      %v9658 = vpack.c.bf16 %v9631, %v9630
      %v9659 = vpack.c.bf16 %v9633, %v9632
      %v9660 = vpack.c.bf16 %v9635, %v9634
      %v9661 = vpack.c.bf16 %v9637, %v9636
      %v9662 = vpack.c.bf16 %v9639, %v9638
      %v9663 = vpack.c.bf16 %v9641, %v9640
      %v9664 = vpack.c.bf16 %v9643, %v9642
      %v9665 = vpack.c.bf16 %v9645, %v9644
      %v9666 = vpack.c.bf16 %v9647, %v9646
      %v9667 = vpack.c.bf16 %v9649, %v9648
      %v9668 = vpack.c.bf16 %v9651, %v9650
      %v9669 = vpack.c.bf16 %v9653, %v9652
      %s9670 = scalar_lea.vmem %s10, 32
      %v9671 = vld [vmem:[%s9670] sm:$0xf]
      %v9673 = vsel %vm4337, %v9654, 0
      %v9676 = vsel %vm4337, %v9655, 0
      %v9679 = vsel %vm4337, %v9656, 0
      %v9682 = vsel %vm4337, %v9657, 0
      %v9685 = vsel %vm4337, %v9658, 0
      %v9688 = vsel %vm4337, %v9659, 0
      %v9691 = vsel %vm4337, %v9660, 0
      %v9694 = vsel %vm4337, %v9661, 0
      %v9697 = vsel %vm4337, %v9662, 0
      %v9700 = vsel %vm4337, %v9663, 0
      %v9703 = vsel %vm4337, %v9664, 0
      %v9706 = vsel %vm4337, %v9665, 0
      %v9709 = vsel %vm4337, %v9666, 0
      %v9712 = vsel %vm4337, %v9667, 0
      %v9715 = vsel %vm4337, %v9668, 0
      %v9718 = vsel %vm4337, %v9669, 0
      %v9721 = vsel %vm4509, %v9671, 0
      %9723 = vmatprep.subr.bf16.mxu0 0
      %9724 = vmatpush1.bf16.msra.mxu0 %v9721
      %9725 = vmatprep.subr.bf16.mxu0 0
      %9726 = vmatpush1.bf16.msra.mxu0 0
      %9727 = vmatprep.subr.bf16.mxu0 0
      %9728 = vmatpush1.bf16.msra.mxu0 0
      %9729 = vmatprep.subr.bf16.mxu0 0
      %9730 = vmatpush1.bf16.msra.mxu0 0
      %9731 = vmatprep.subr.bf16.mxu0 0
      %9732 = vmatpush1.bf16.msra.mxu0 0
      %9733 = vmatprep.subr.bf16.mxu0 0
      %9734 = vmatpush1.bf16.msra.mxu0 0
      %9735 = vmatprep.subr.bf16.mxu0 0
      %9736 = vmatpush1.bf16.msra.mxu0 0
      %9737 = vmatprep.subr.bf16.mxu0 0
      %9738 = vmatpush1.bf16.msra.mxu0 0
      %9739 = vmatprep.subr.bf16.mxu0 0
      %9740 = vmatpush1.bf16.msra.mxu0 0
      %9741 = vmatprep.subr.bf16.mxu0 0
      %9742 = vmatpush1.bf16.msra.mxu0 0
      %9743 = vmatprep.subr.bf16.mxu0 0
      %9744 = vmatpush1.bf16.msra.mxu0 0
      %9745 = vmatprep.subr.bf16.mxu0 0
      %9746 = vmatpush1.bf16.msra.mxu0 0
      %9747 = vmatprep.subr.bf16.mxu0 0
      %9748 = vmatpush1.bf16.msra.mxu0 0
      %9749 = vmatprep.subr.bf16.mxu0 0
      %9750 = vmatpush1.bf16.msra.mxu0 0
      %9751 = vmatprep.subr.bf16.mxu0 0
      %9752 = vmatpush1.bf16.msra.mxu0 0
      %9753 = vmatprep.subr.bf16.mxu0 0
      %9754 = vmatpush1.bf16.msra.mxu0 0
      %9755 = vmatprep.mubr.bf16.mxu0 0
      %9756 = vmatmul.mubr.bf16.gmra.mrb[0].mxu0 %v9673
      %v9757 = vpop.f32.mrb[0].mxu0
      %v9758 = vadd.f32 0.0, %v9757
      %v9759 = vpop.f32.mrb[0].mxu0
      %v9760 = vpop.f32.mrb[0].mxu0
      %v9761 = vadd.f32 0.0, %v9760
      %v9762 = vpop.f32.mrb[0].mxu0
      %9763 = vmatprep.mubr.bf16.mxu0 0
      %9764 = vmatmul.mubr.bf16.gmra.mrb[0].mxu0 %v9676
      %v9765 = vpop.f32.mrb[0].mxu0
      %v9766 = vadd.f32 0.0, %v9765
      %v9767 = vpop.f32.mrb[0].mxu0
      %v9768 = vpop.f32.mrb[0].mxu0
      %v9769 = vadd.f32 0.0, %v9768
      %v9770 = vpop.f32.mrb[0].mxu0
      %9771 = vmatprep.mubr.bf16.mxu0 0
      %9772 = vmatmul.mubr.bf16.gmra.mrb[0].mxu0 %v9679
      %v9773 = vpop.f32.mrb[0].mxu0
      %v9774 = vadd.f32 0.0, %v9773
      %v9775 = vpop.f32.mrb[0].mxu0
      %v9776 = vpop.f32.mrb[0].mxu0
      %v9777 = vadd.f32 0.0, %v9776
      %v9778 = vpop.f32.mrb[0].mxu0
      %9779 = vmatprep.mubr.bf16.mxu0 0
      %9780 = vmatmul.mubr.bf16.gmra.mrb[0].mxu0 %v9682
      %v9781 = vpop.f32.mrb[0].mxu0
      %v9782 = vadd.f32 0.0, %v9781
      %v9783 = vpop.f32.mrb[0].mxu0
      %v9784 = vpop.f32.mrb[0].mxu0
      %v9785 = vadd.f32 0.0, %v9784
      %v9786 = vpop.f32.mrb[0].mxu0
      %9787 = vmatprep.mubr.bf16.mxu0 0
      %9788 = vmatmul.mubr.bf16.gmra.mrb[0].mxu0 %v9685
      %v9789 = vpop.f32.mrb[0].mxu0
      %v9790 = vadd.f32 0.0, %v9789
      %v9791 = vpop.f32.mrb[0].mxu0
      %v9792 = vpop.f32.mrb[0].mxu0
      %v9793 = vadd.f32 0.0, %v9792
      %v9794 = vpop.f32.mrb[0].mxu0
      %9795 = vmatprep.mubr.bf16.mxu0 0
      %9796 = vmatmul.mubr.bf16.gmra.mrb[0].mxu0 %v9688
      %v9797 = vpop.f32.mrb[0].mxu0
      %v9798 = vadd.f32 0.0, %v9797
      %v9799 = vpop.f32.mrb[0].mxu0
      %v9800 = vpop.f32.mrb[0].mxu0
      %v9801 = vadd.f32 0.0, %v9800
      %v9802 = vpop.f32.mrb[0].mxu0
      %9803 = vmatprep.mubr.bf16.mxu0 0
      %9804 = vmatmul.mubr.bf16.gmra.mrb[0].mxu0 %v9691
      %v9805 = vpop.f32.mrb[0].mxu0
      %v9806 = vadd.f32 0.0, %v9805
      %v9807 = vpop.f32.mrb[0].mxu0
      %v9808 = vpop.f32.mrb[0].mxu0
      %v9809 = vadd.f32 0.0, %v9808
      %v9810 = vpop.f32.mrb[0].mxu0
      %9811 = vmatprep.mubr.bf16.mxu0 0
      %9812 = vmatmul.mubr.bf16.gmra.mrb[0].mxu0 %v9694
      %v9813 = vpop.f32.mrb[0].mxu0
      %v9814 = vadd.f32 0.0, %v9813
      %v9815 = vpop.f32.mrb[0].mxu0
      %v9816 = vpop.f32.mrb[0].mxu0
      %v9817 = vadd.f32 0.0, %v9816
      %v9818 = vpop.f32.mrb[0].mxu0
      %9819 = vmatprep.mubr.bf16.mxu0 0
      %9820 = vmatmul.mubr.bf16.gmra.mrb[0].mxu0 %v9697
      %v9821 = vpop.f32.mrb[0].mxu0
      %v9822 = vadd.f32 0.0, %v9821
      %v9823 = vpop.f32.mrb[0].mxu0
      %v9824 = vpop.f32.mrb[0].mxu0
      %v9825 = vadd.f32 0.0, %v9824
      %v9826 = vpop.f32.mrb[0].mxu0
      %9827 = vmatprep.mubr.bf16.mxu0 0
      %9828 = vmatmul.mubr.bf16.gmra.mrb[0].mxu0 %v9700
      %v9829 = vpop.f32.mrb[0].mxu0
      %v9830 = vadd.f32 0.0, %v9829
      %v9831 = vpop.f32.mrb[0].mxu0
      %v9832 = vpop.f32.mrb[0].mxu0
      %v9833 = vadd.f32 0.0, %v9832
      %v9834 = vpop.f32.mrb[0].mxu0
      %9835 = vmatprep.mubr.bf16.mxu0 0
      %9836 = vmatmul.mubr.bf16.gmra.mrb[0].mxu0 %v9703
      %v9837 = vpop.f32.mrb[0].mxu0
      %v9838 = vadd.f32 0.0, %v9837
      %v9839 = vpop.f32.mrb[0].mxu0
      %v9840 = vpop.f32.mrb[0].mxu0
      %v9841 = vadd.f32 0.0, %v9840
      %v9842 = vpop.f32.mrb[0].mxu0
      %9843 = vmatprep.mubr.bf16.mxu0 0
      %9844 = vmatmul.mubr.bf16.gmra.mrb[0].mxu0 %v9706
      %v9845 = vpop.f32.mrb[0].mxu0
      %v9846 = vadd.f32 0.0, %v9845
      %v9847 = vpop.f32.mrb[0].mxu0
      %v9848 = vpop.f32.mrb[0].mxu0
      %v9849 = vadd.f32 0.0, %v9848
      %v9850 = vpop.f32.mrb[0].mxu0
      %9851 = vmatprep.mubr.bf16.mxu0 0
      %9852 = vmatmul.mubr.bf16.gmra.mrb[0].mxu0 %v9709
      %v9853 = vpop.f32.mrb[0].mxu0
      %v9854 = vadd.f32 0.0, %v9853
      %v9855 = vpop.f32.mrb[0].mxu0
      %v9856 = vpop.f32.mrb[0].mxu0
      %v9857 = vadd.f32 0.0, %v9856
      %v9858 = vpop.f32.mrb[0].mxu0
      %9859 = vmatprep.mubr.bf16.mxu0 0
      %9860 = vmatmul.mubr.bf16.gmra.mrb[0].mxu0 %v9712
      %v9861 = vpop.f32.mrb[0].mxu0
      %v9862 = vadd.f32 0.0, %v9861
      %v9863 = vpop.f32.mrb[0].mxu0
      %v9864 = vpop.f32.mrb[0].mxu0
      %v9865 = vadd.f32 0.0, %v9864
      %v9866 = vpop.f32.mrb[0].mxu0
      %9867 = vmatprep.mubr.bf16.mxu0 0
      %9868 = vmatmul.mubr.bf16.gmra.mrb[0].mxu0 %v9715
      %v9869 = vpop.f32.mrb[0].mxu0
      %v9870 = vadd.f32 0.0, %v9869
      %v9871 = vpop.f32.mrb[0].mxu0
      %v9872 = vpop.f32.mrb[0].mxu0
      %v9873 = vadd.f32 0.0, %v9872
      %v9874 = vpop.f32.mrb[0].mxu0
      %9875 = vmatprep.mubr.bf16.mxu0 0
      %9876 = vmatmul.mubr.bf16.gmra.mrb[0].mxu0 %v9718
      %v9877 = vpop.f32.mrb[0].mxu0
      %v9878 = vadd.f32 0.0, %v9877
      %v9879 = vpop.f32.mrb[0].mxu0
      %v9880 = vpop.f32.mrb[0].mxu0
      %v9881 = vadd.f32 0.0, %v9880
      %v9882 = vpop.f32.mrb[0].mxu0
      %9883 = vdwg.mxu0
      %v9884 = vadd.f32 %v9558, %v9758
      %v9885 = vadd.f32 %v9559, %v9761
      %v9886 = vadd.f32 %v9560, %v9766
      %v9887 = vadd.f32 %v9561, %v9769
      %v9888 = vadd.f32 %v9562, %v9774
      %v9889 = vadd.f32 %v9563, %v9777
      %v9890 = vadd.f32 %v9564, %v9782
      %v9891 = vadd.f32 %v9565, %v9785
      %v9892 = vadd.f32 %v9566, %v9790
      %v9893 = vadd.f32 %v9567, %v9793
      %v9894 = vadd.f32 %v9568, %v9798
      %v9895 = vadd.f32 %v9569, %v9801
      %v9896 = vadd.f32 %v9570, %v9806
      %v9897 = vadd.f32 %v9571, %v9809
      %v9898 = vadd.f32 %v9572, %v9814
      %v9899 = vadd.f32 %v9573, %v9817
      %v9900 = vadd.f32 %v9574, %v9822
      %v9901 = vadd.f32 %v9575, %v9825
      %v9902 = vadd.f32 %v9576, %v9830
      %v9903 = vadd.f32 %v9577, %v9833
      %v9904 = vadd.f32 %v9578, %v9838
      %v9905 = vadd.f32 %v9579, %v9841
      %v9906 = vadd.f32 %v9580, %v9846
      %v9907 = vadd.f32 %v9581, %v9849
      %v9908 = vadd.f32 %v9582, %v9854
      %v9909 = vadd.f32 %v9583, %v9857
      %v9910 = vadd.f32 %v9584, %v9862
      %v9911 = vadd.f32 %v9585, %v9865
      %v9912 = vadd.f32 %v9586, %v9870
      %v9913 = vadd.f32 %v9587, %v9873
      %v9914 = vadd.f32 %v9588, %v9878
      %v9915 = vadd.f32 %v9589, %v9881
      %v9916 = vld [vmem:[%s11] sm:$0x1]
      %v9918 = vlaneseq
      %v9919 = vshrl.u32 %v9918, 7
      %v9920 = vsub.s32 0, %v9919
      %v9921 = vrot.slane %v9916, %v9920
      %v9923 = vadd.f32 %v9884, %v9921
      %v9924 = vadd.f32 %v9885, %v9921
      %v9925 = vadd.f32 %v9886, %v9921
      %v9926 = vadd.f32 %v9887, %v9921
      %v9927 = vadd.f32 %v9888, %v9921
      %v9928 = vadd.f32 %v9889, %v9921
      %v9929 = vadd.f32 %v9890, %v9921
      %v9930 = vadd.f32 %v9891, %v9921
      %v9931 = vadd.f32 %v9892, %v9921
      %v9932 = vadd.f32 %v9893, %v9921
      %v9933 = vadd.f32 %v9894, %v9921
      %v9934 = vadd.f32 %v9895, %v9921
      %v9935 = vadd.f32 %v9896, %v9921
      %v9936 = vadd.f32 %v9897, %v9921
      %v9937 = vadd.f32 %v9898, %v9921
      %v9938 = vadd.f32 %v9899, %v9921
      %v9939 = vadd.f32 %v9900, %v9921
      %v9940 = vadd.f32 %v9901, %v9921
      %v9941 = vadd.f32 %v9902, %v9921
      %v9942 = vadd.f32 %v9903, %v9921
      %v9943 = vadd.f32 %v9904, %v9921
      %v9944 = vadd.f32 %v9905, %v9921
      %v9945 = vadd.f32 %v9906, %v9921
      %v9946 = vadd.f32 %v9907, %v9921
      %v9947 = vadd.f32 %v9908, %v9921
      %v9948 = vadd.f32 %v9909, %v9921
      %v9949 = vadd.f32 %v9910, %v9921
      %v9950 = vadd.f32 %v9911, %v9921
      %v9951 = vadd.f32 %v9912, %v9921
      %v9952 = vadd.f32 %v9913, %v9921
      %v9953 = vadd.f32 %v9914, %v9921
      %v9954 = vadd.f32 %v9915, %v9921
      %v9955 = vxor.u32 %v9923, 2147483648
      %v9956 = vxor.u32 %v9924, 2147483648
      %v9957 = vxor.u32 %v9925, 2147483648
      %v9958 = vxor.u32 %v9926, 2147483648
      %v9959 = vxor.u32 %v9927, 2147483648
      %v9960 = vxor.u32 %v9928, 2147483648
      %v9961 = vxor.u32 %v9929, 2147483648
      %v9962 = vxor.u32 %v9930, 2147483648
      %v9963 = vxor.u32 %v9931, 2147483648
      %v9964 = vxor.u32 %v9932, 2147483648
      %v9965 = vxor.u32 %v9933, 2147483648
      %v9966 = vxor.u32 %v9934, 2147483648
      %v9967 = vxor.u32 %v9935, 2147483648
      %v9968 = vxor.u32 %v9936, 2147483648
      %v9969 = vxor.u32 %v9937, 2147483648
      %v9970 = vxor.u32 %v9938, 2147483648
      %v9971 = vxor.u32 %v9939, 2147483648
      %v9972 = vxor.u32 %v9940, 2147483648
      %v9973 = vxor.u32 %v9941, 2147483648
      %v9974 = vxor.u32 %v9942, 2147483648
      %v9975 = vxor.u32 %v9943, 2147483648
      %v9976 = vxor.u32 %v9944, 2147483648
      %v9977 = vxor.u32 %v9945, 2147483648
      %v9978 = vxor.u32 %v9946, 2147483648
      %v9979 = vxor.u32 %v9947, 2147483648
      %v9980 = vxor.u32 %v9948, 2147483648
      %v9981 = vxor.u32 %v9949, 2147483648
      %v9982 = vxor.u32 %v9950, 2147483648
      %v9983 = vxor.u32 %v9951, 2147483648
      %v9984 = vxor.u32 %v9952, 2147483648
      %v9985 = vxor.u32 %v9953, 2147483648
      %v9986 = vxor.u32 %v9954, 2147483648
      %v9987 = vmul.f32 %v9955, 1.442695
      %v9988 = vpow.pop %v9987
      %v9989 = vmul.f32 %v9956, 1.442695
      %v9990 = vpow.pop %v9989
      %v9991 = vmul.f32 %v9957, 1.442695
      %v9992 = vpow.pop %v9991
      %v9993 = vmul.f32 %v9958, 1.442695
      %v9994 = vpow.pop %v9993
      %v9995 = vmul.f32 %v9959, 1.442695
      %v9996 = vpow.pop %v9995
      %v9997 = vmul.f32 %v9960, 1.442695
      %v9998 = vpow.pop %v9997
      %v9999 = vmul.f32 %v9961, 1.442695
      %v10000 = vpow.pop %v9999
      %v10001 = vmul.f32 %v9962, 1.442695
      %v10002 = vpow.pop %v10001
      %v10003 = vmul.f32 %v9963, 1.442695
      %v10004 = vpow.pop %v10003
      %v10005 = vmul.f32 %v9964, 1.442695
      %v10006 = vpow.pop %v10005
      %v10007 = vmul.f32 %v9965, 1.442695
      %v10008 = vpow.pop %v10007
      %v10009 = vmul.f32 %v9966, 1.442695
      %v10010 = vpow.pop %v10009
      %v10011 = vmul.f32 %v9967, 1.442695
      %v10012 = vpow.pop %v10011
      %v10013 = vmul.f32 %v9968, 1.442695
      %v10014 = vpow.pop %v10013
      %v10015 = vmul.f32 %v9969, 1.442695
      %v10016 = vpow.pop %v10015
      %v10017 = vmul.f32 %v9970, 1.442695
      %v10018 = vpow.pop %v10017
      %v10019 = vmul.f32 %v9971, 1.442695
      %v10020 = vpow.pop %v10019
      %v10021 = vmul.f32 %v9972, 1.442695
      %v10022 = vpow.pop %v10021
      %v10023 = vmul.f32 %v9973, 1.442695
      %v10024 = vpow.pop %v10023
      %v10025 = vmul.f32 %v9974, 1.442695
      %v10026 = vpow.pop %v10025
      %v10027 = vmul.f32 %v9975, 1.442695
      %v10028 = vpow.pop %v10027
      %v10029 = vmul.f32 %v9976, 1.442695
      %v10030 = vpow.pop %v10029
      %v10031 = vmul.f32 %v9977, 1.442695
      %v10032 = vpow.pop %v10031
      %v10033 = vmul.f32 %v9978, 1.442695
      %v10034 = vpow.pop %v10033
      %v10035 = vmul.f32 %v9979, 1.442695
      %v10036 = vpow.pop %v10035
      %v10037 = vmul.f32 %v9980, 1.442695
      %v10038 = vpow.pop %v10037
      %v10039 = vmul.f32 %v9981, 1.442695
      %v10040 = vpow.pop %v10039
      %v10041 = vmul.f32 %v9982, 1.442695
      %v10042 = vpow.pop %v10041
      %v10043 = vmul.f32 %v9983, 1.442695
      %v10044 = vpow.pop %v10043
      %v10045 = vmul.f32 %v9984, 1.442695
      %v10046 = vpow.pop %v10045
      %v10047 = vmul.f32 %v9985, 1.442695
      %v10048 = vpow.pop %v10047
      %v10049 = vmul.f32 %v9986, 1.442695
      %v10050 = vpow.pop %v10049
      %v10051 = vadd.f32 %v9988, 1.0
      %v10052 = vadd.f32 %v9990, 1.0
      %v10053 = vadd.f32 %v9992, 1.0
      %v10054 = vadd.f32 %v9994, 1.0
      %v10055 = vadd.f32 %v9996, 1.0
      %v10056 = vadd.f32 %v9998, 1.0
      %v10057 = vadd.f32 %v10000, 1.0
      %v10058 = vadd.f32 %v10002, 1.0
      %v10059 = vadd.f32 %v10004, 1.0
      %v10060 = vadd.f32 %v10006, 1.0
      %v10061 = vadd.f32 %v10008, 1.0
      %v10062 = vadd.f32 %v10010, 1.0
      %v10063 = vadd.f32 %v10012, 1.0
      %v10064 = vadd.f32 %v10014, 1.0
      %v10065 = vadd.f32 %v10016, 1.0
      %v10066 = vadd.f32 %v10018, 1.0
      %v10067 = vadd.f32 %v10020, 1.0
      %v10068 = vadd.f32 %v10022, 1.0
      %v10069 = vadd.f32 %v10024, 1.0
      %v10070 = vadd.f32 %v10026, 1.0
      %v10071 = vadd.f32 %v10028, 1.0
      %v10072 = vadd.f32 %v10030, 1.0
      %v10073 = vadd.f32 %v10032, 1.0
      %v10074 = vadd.f32 %v10034, 1.0
      %v10075 = vadd.f32 %v10036, 1.0
      %v10076 = vadd.f32 %v10038, 1.0
      %v10077 = vadd.f32 %v10040, 1.0
      %v10078 = vadd.f32 %v10042, 1.0
      %v10079 = vadd.f32 %v10044, 1.0
      %v10080 = vadd.f32 %v10046, 1.0
      %v10081 = vadd.f32 %v10048, 1.0
      %v10082 = vadd.f32 %v10050, 1.0
      %v10083 = vrcp.pop %v10051
      %v10084 = vmul.f32 1.0, %v10083
      %v10085 = vrcp.pop %v10052
      %v10086 = vmul.f32 1.0, %v10085
      %v10087 = vrcp.pop %v10053
      %v10088 = vmul.f32 1.0, %v10087
      %v10089 = vrcp.pop %v10054
      %v10090 = vmul.f32 1.0, %v10089
      %v10091 = vrcp.pop %v10055
      %v10092 = vmul.f32 1.0, %v10091
      %v10093 = vrcp.pop %v10056
      %v10094 = vmul.f32 1.0, %v10093
      %v10095 = vrcp.pop %v10057
      %v10096 = vmul.f32 1.0, %v10095
      %v10097 = vrcp.pop %v10058
      %v10098 = vmul.f32 1.0, %v10097
      %v10099 = vrcp.pop %v10059
      %v10100 = vmul.f32 1.0, %v10099
      %v10101 = vrcp.pop %v10060
      %v10102 = vmul.f32 1.0, %v10101
      %v10103 = vrcp.pop %v10061
      %v10104 = vmul.f32 1.0, %v10103
      %v10105 = vrcp.pop %v10062
      %v10106 = vmul.f32 1.0, %v10105
      %v10107 = vrcp.pop %v10063
      %v10108 = vmul.f32 1.0, %v10107
      %v10109 = vrcp.pop %v10064
      %v10110 = vmul.f32 1.0, %v10109
      %v10111 = vrcp.pop %v10065
      %v10112 = vmul.f32 1.0, %v10111
      %v10113 = vrcp.pop %v10066
      %v10114 = vmul.f32 1.0, %v10113
      %v10115 = vrcp.pop %v10067
      %v10116 = vmul.f32 1.0, %v10115
      %v10117 = vrcp.pop %v10068
      %v10118 = vmul.f32 1.0, %v10117
      %v10119 = vrcp.pop %v10069
      %v10120 = vmul.f32 1.0, %v10119
      %v10121 = vrcp.pop %v10070
      %v10122 = vmul.f32 1.0, %v10121
      %v10123 = vrcp.pop %v10071
      %v10124 = vmul.f32 1.0, %v10123
      %v10125 = vrcp.pop %v10072
      %v10126 = vmul.f32 1.0, %v10125
      %v10127 = vrcp.pop %v10073
      %v10128 = vmul.f32 1.0, %v10127
      %v10129 = vrcp.pop %v10074
      %v10130 = vmul.f32 1.0, %v10129
      %v10131 = vrcp.pop %v10075
      %v10132 = vmul.f32 1.0, %v10131
      %v10133 = vrcp.pop %v10076
      %v10134 = vmul.f32 1.0, %v10133
      %v10135 = vrcp.pop %v10077
      %v10136 = vmul.f32 1.0, %v10135
      %v10137 = vrcp.pop %v10078
      %v10138 = vmul.f32 1.0, %v10137
      %v10139 = vrcp.pop %v10079
      %v10140 = vmul.f32 1.0, %v10139
      %v10141 = vrcp.pop %v10080
      %v10142 = vmul.f32 1.0, %v10141
      %v10143 = vrcp.pop %v10081
      %v10144 = vmul.f32 1.0, %v10143
      %v10145 = vrcp.pop %v10082
      %v10146 = vmul.f32 1.0, %v10145
      %10147 = vst.msk [vmem:[%s440] sm:$0xff] %vm474, %v10084
      %10148 = vst.msk [vmem:[%s440 + $0x8] sm:$0xff] %vm474, %v10086
      %10149 = vst.msk [vmem:[%s440 + $0x10] sm:$0xff] %vm474, %v10088
      %10150 = vst.msk [vmem:[%s440 + $0x18] sm:$0xff] %vm474, %v10090
      %10151 = vst.msk [vmem:[%s440 + $0x20] sm:$0xff] %vm474, %v10092
      %10152 = vst.msk [vmem:[%s440 + $0x28] sm:$0xff] %vm474, %v10094
      %10153 = vst.msk [vmem:[%s440 + $0x30] sm:$0xff] %vm474, %v10096
      %10154 = vst.msk [vmem:[%s440 + $0x38] sm:$0xff] %vm474, %v10098
      %10155 = vst.msk [vmem:[%s440 + $0x40] sm:$0xff] %vm474, %v10100
      %10156 = vst.msk [vmem:[%s440 + $0x48] sm:$0xff] %vm474, %v10102
      %10157 = vst.msk [vmem:[%s440 + $0x50] sm:$0xff] %vm474, %v10104
      %10158 = vst.msk [vmem:[%s440 + $0x58] sm:$0xff] %vm474, %v10106
      %10159 = vst.msk [vmem:[%s440 + $0x60] sm:$0xff] %vm474, %v10108
      %10160 = vst.msk [vmem:[%s440 + $0x68] sm:$0xff] %vm474, %v10110
      %10161 = vst.msk [vmem:[%s440 + $0x70] sm:$0xff] %vm474, %v10112
      %10162 = vst.msk [vmem:[%s440 + $0x78] sm:$0xff] %vm474, %v10114
      %10163 = vst.msk [vmem:[%s440 + $0x80] sm:$0xff] %vm474, %v10116
      %10164 = vst.msk [vmem:[%s440 + $0x88] sm:$0xff] %vm474, %v10118
      %10165 = vst.msk [vmem:[%s440 + $0x90] sm:$0xff] %vm474, %v10120
      %10166 = vst.msk [vmem:[%s440 + $0x98] sm:$0xff] %vm474, %v10122
      %10167 = vst.msk [vmem:[%s440 + $0xa0] sm:$0xff] %vm474, %v10124
      %10168 = vst.msk [vmem:[%s440 + $0xa8] sm:$0xff] %vm474, %v10126
      %10169 = vst.msk [vmem:[%s440 + $0xb0] sm:$0xff] %vm474, %v10128
      %10170 = vst.msk [vmem:[%s440 + $0xb8] sm:$0xff] %vm474, %v10130
      %10171 = vst.msk [vmem:[%s440 + $0xc0] sm:$0xff] %vm474, %v10132
      %10172 = vst.msk [vmem:[%s440 + $0xc8] sm:$0xff] %vm474, %v10134
      %10173 = vst.msk [vmem:[%s440 + $0xd0] sm:$0xff] %vm474, %v10136
      %10174 = vst.msk [vmem:[%s440 + $0xd8] sm:$0xff] %vm474, %v10138
      %10175 = vst.msk [vmem:[%s440 + $0xe0] sm:$0xff] %vm474, %v10140
      %10176 = vst.msk [vmem:[%s440 + $0xe8] sm:$0xff] %vm474, %v10142
      %10177 = vst.msk [vmem:[%s440 + $0xf0] sm:$0xff] %vm474, %v10144
      %10178 = vst.msk [vmem:[%s440 + $0xf8] sm:$0xff] %vm474, %v10146
      %p10179 = scmp.lt.s32.totalorder %s24, 1
      %s10180 = scalar_select %p10179, %s24, 1
      %s10181 = smul.addr %s10180, 32
      %s10182 = smul.addr %s10181, 8
      %s10183 = scalar_lea.vmem %s13, %s10182
      // Predicated region
      $region73: #{tpu_custom_call.1} parent=71 // pred_check
        %p10184 = pneg %p320
      $region74: #{tpu_custom_call.1} parent=71 // pred_check_branch
        %10186 = sbr.rel (%p10184) target = $region76
      $region75: #{tpu_custom_call.1} parent=71 // pred_region
        _
      $region76: #{tpu_custom_call.1} parent=71 // pred_fallthru
        _
    $region72: #{tpu_custom_call.1} parent=5 // pred_fallthru
      _
    %p10187 = scmp.le.s32.totalorder 2, %s19
    // Predicated region
    $region77: #{tpu_custom_call.1} parent=5 // pred_check
      %p10188 = pneg %p10187
    $region78: #{tpu_custom_call.1} parent=5 // pred_check_branch
      %10190 = sbr.rel (%p10188) target = $region80
    $region79: #{tpu_custom_call.1} parent=5 // pred_region
      %s10191 = ssub.s32 %s19, 2
      // Predicated region
      $region81: #{tpu_custom_call.1} parent=79 // pred_check
        %p10192 = pneg %p326
      $region82: #{tpu_custom_call.1} parent=79 // pred_check_branch
        %10194 = sbr.rel (%p10192) target = $region84
      $region83: #{tpu_custom_call.1} parent=79 // pred_region
        %p10195 = scmp.lt.s32.totalorder %s25, 1
        %s10196 = scalar_select %p10195, %s25, 1
        %s10197 = smul.addr %s10196, 32
        %s10198 = smul.addr %s10197, 8
        %s10199 = scalar_lea.vmem %s13, %s10198
      $region84: #{tpu_custom_call.1} parent=79 // pred_fallthru
        _
    $region80: #{tpu_custom_call.1} parent=5 // pred_fallthru
      _
  $region6: #{tpu_custom_call.1} parent=0 // loop_footer
    %s23 = sadd.s32 1, %s19
  $region7: #{tpu_custom_call.1} parent=0 // loop_footer_branch
    %18 = sbr.rel target = $region3
  $region8: #{tpu_custom_call.1} parent=0 // loop_exit
    _

</llo_original>
